<compile_context>
chip_gen: v7x
topology: tpu7x:2x2x1
jax: 0.10.0
libtpu: 0.0.40
codegen_flags: <defaults>
</compile_context>

<pallas_src>
import math

import jax
import jax.numpy as jnp
from jax.experimental import pallas as pl
from jax.experimental.pallas import tpu as pltpu

_LANE = 128
_EPS = 1e-5


def _round_up(n, m):
    return (n + m - 1) // m * m


def _vmem_limit_bytes(resident_bytes):
    # ~2x for the double-buffered auto-pipeline + headroom for compiler scratch,
    # clamped under 48 MiB so the limit is valid on v7x (64 MiB/TC) as well as
    # v5e/v6e (128 MiB).
    return int(min(max(2 * resident_bytes + (4 << 20), 32 << 20), 48 << 20))


# ---------------------------------------------------------------------------
# In-kernel helpers
# ---------------------------------------------------------------------------
def _instance_norm_rows(acc, n_rows, eps):
    # acc: (n_rows, C) f32. Single-pass sum / sum-of-squares (biased variance,
    # PyTorch InstanceNorm2d semantics), EUP rsqrt for the normalization.
    s1 = jnp.sum(acc, axis=0, keepdims=True)
    s2 = jnp.sum(acc * acc, axis=0, keepdims=True)
    inv_n = 1.0 / float(n_rows)
    mean = s1 * inv_n
    var = jnp.maximum(s2 * inv_n - mean * mean, 0.0)
    return (acc - mean) * jax.lax.rsqrt(var + eps)


def _conv3x3_from_padded(pad_ref, w_ref, h, w, c, cout):
    # Stride-1 3x3 conv from a zero-halo'd bf16 VMEM scratch.
    # dx-unfold per kernel-row slab -> 3 MXU matmuls with K = 3*c.
    acc = jnp.zeros((h * w, cout), jnp.float32)
    for dy in range(3):
        rows = pad_ref[dy:dy + h, :, :]                               # (h, w+2, c)
        unf = jnp.concatenate(
            [rows[:, 0:w, :], rows[:, 1:w + 1, :], rows[:, 2:w + 2, :]],
            axis=-1)                                                  # (h, w, 3c)
        acc = acc + jnp.dot(unf.reshape(h * w, 3 * c), w_ref[dy],
                            preferred_element_type=jnp.float32)
    return acc


# ---------------------------------------------------------------------------
# Fused ResNetBasicBlock kernels
# ---------------------------------------------------------------------------
def _make_identity_block_kernel(H, W, c, eps):
    # stride 1, identity residual (Cin == Cout), channels already lane-padded.
    def kernel(x_ref, w1_ref, w2_ref, o_ref, xpad_ref, mid_ref):
        # conv1: build the 1-pixel zero halo in VMEM (no HBM pad copy), bf16 MXU.
        xpad_ref[...] = jnp.zeros_like(xpad_ref)
        xpad_ref[1:H + 1, 1:W + 1, :] = x_ref[0].astype(jnp.bfloat16)
        a1 = _conv3x3_from_padded(xpad_ref, w1_ref, H, W, c, c)
        h1 = jnp.maximum(_instance_norm_rows(a1, H * W, eps), 0.0)

        # conv2 on the VMEM-resident intermediate (no HBM round trip).
        mid_ref[...] = jnp.zeros_like(mid_ref)
        mid_ref[1:H + 1, 1:W + 1, :] = h1.reshape(H, W, c).astype(jnp.bfloat16)
        a2 = _conv3x3_from_padded(mid_ref, w2_ref, H, W, c, c)
        n2 = _instance_norm_rows(a2, H * W, eps)

        # identity residual kept in f32 + final ReLU
        res = x_ref[0].reshape(H * W, c)
        o_ref[0] = jnp.maximum(n2 + res, 0.0).reshape(H, W, c).astype(o_ref.dtype)

    return kernel


def _make_downsample_block_kernel(H, W, Ho, Wo, cin, cmid, cout, eps):
    # stride 2 + (1x1 conv + eval-mode BatchNorm) shortcut.
    def kernel(xe_ref, xo_ref, w1_ref, w2_ref, wsc_ref, bns_ref, bno_ref,
               o_ref, pe_ref, po_ref, mid_ref):
        # Zero-padded even / odd column planes of the input (bf16). With the
        # column-parity split done in the wrapper, every stride-2 tap below is
        # a plain contiguous slice -- no strided VMEM access.
        pe_ref[...] = jnp.zeros_like(pe_ref)   # padded cols 0, 2, ..., W
        po_ref[...] = jnp.zeros_like(po_ref)   # padded cols 1, 3, ..., W-1
        pe_ref[1:H + 1, 1:Wo + 1, :] = xo_ref[0].astype(jnp.bfloat16)
        po_ref[1:H + 1, 0:Wo, :] = xe_ref[0].astype(jnp.bfloat16)

        def _even_rows(ref, dy, ncols):
            # rows dy, dy+2, ..., dy+2*(Ho-1): leading-dim reshape keeps the
            # (sublane, lane) layout untouched -> no relayout / strided load.
            return ref[dy:dy + 2 * Ho, :, :].reshape(Ho, 2, ncols, cin)[:, 0]

        # conv1: 3x3, stride 2 -> InstanceNorm -> ReLU
        acc = jnp.zeros((Ho * Wo, cmid), jnp.float32)
        for dy in range(3):
            re = _even_rows(pe_ref, dy, Wo + 1)            # cols 2*xo and 2*xo+2
            ro = _even_rows(po_ref, dy, Wo)                # cols 2*xo+1
            unf = jnp.concatenate(
                [re[:, 0:Wo, :], ro, re[:, 1:Wo + 1, :]], axis=-1)  # (Ho,Wo,3cin)
            acc = acc + jnp.dot(unf.reshape(Ho * Wo, 3 * cin), w1_ref[dy],
                                preferred_element_type=jnp.float32)
        h1 = jnp.maximum(_instance_norm_rows(acc, Ho * Wo, eps), 0.0)

        # conv2: 3x3, stride 1, on the VMEM-resident intermediate
        mid_ref[...] = jnp.zeros_like(mid_ref)
        mid_ref[1:Ho + 1, 1:Wo + 1, :] = h1.reshape(Ho, Wo, cmid).astype(jnp.bfloat16)
        a2 = _conv3x3_from_padded(mid_ref, w2_ref, Ho, Wo, cmid, cout)
        n2 = _instance_norm_rows(a2, Ho * Wo, eps)

        # shortcut: 1x1 stride-2 conv + eval-mode BatchNorm (folded scale/offset)
        xss = xe_ref[0].reshape(Ho, 2, Wo, cin)[:, 0]      # x[::2, ::2, :]
        r = jnp.dot(xss.reshape(Ho * Wo, cin).astype(jnp.bfloat16), wsc_ref[...],
                    preferred_element_type=jnp.float32)
        r = r * bns_ref[...] + bno_ref[...]

        o_ref[0] = jnp.maximum(n2 + r, 0.0).reshape(Ho, Wo, cout).astype(o_ref.dtype)

    return kernel


# ---------------------------------------------------------------------------
# Wrappers (weight packing + pallas_call)
# ---------------------------------------------------------------------------
def _pack_conv_weight(w, cip, cop):
    # (3,3,cin,cout) f32 -> (3, 3*cip, cop) bf16, row index = dx*cip + ci
    # (matches the in-kernel dx-unfold ordering); zero-padded channels.
    kh, kw, cin, cout = w.shape
    wp = jnp.zeros((kh, kw, cip, cop), jnp.float32).at[:, :, :cin, :cout].set(w)
    return wp.reshape(kh, kw * cip, cop).astype(jnp.bfloat16)


def _pad_channels(x, cp):
    c = x.shape[-1]
    if c == cp:
        return x
    return jnp.pad(x, ((0, 0),) * (x.ndim - 1) + ((0, cp - c),))


def _identity_block_call(x_p, blk, eps=_EPS):
    B, H, W, cp = x_p.shape
    cin, cout = blk["w1"].shape[2], blk["w1"].shape[3]
    assert cin == cout and cp == _round_up(cin, _LANE)
    w1 = _pack_conv_weight(blk["w1"], cp, cp)
    w2 = _pack_conv_weight(blk["w2"], cp, cp)

    kernel = _make_identity_block_kernel(H, W, cp, eps)
    vmem = _vmem_limit_bytes(
        2 * H * W * cp * 4                      # in + out f32 blocks
        + 2 * 3 * 3 * cp * cp * 2               # both bf16 weight tensors
        + 2 * (H + 2) * (W + 2) * cp * 2)       # halo scratches (bf16)

    return pl.pallas_call(
        kernel,
        out_shape=jax.ShapeDtypeStruct((B, H, W, cp), jnp.float32),
        grid=(B,),
        in_specs=[
            pl.BlockSpec((1, H, W, cp), lambda i: (i, 0, 0, 0)),
            pl.BlockSpec((3, 3 * cp, cp), lambda i: (0, 0, 0)),
            pl.BlockSpec((3, 3 * cp, cp), lambda i: (0, 0, 0)),
        ],
        out_specs=pl.BlockSpec((1, H, W, cp), lambda i: (i, 0, 0, 0)),
        scratch_shapes=[
            pltpu.VMEM((H + 2, W + 2, cp), jnp.bfloat16),
            pltpu.VMEM((H + 2, W + 2, cp), jnp.bfloat16),
        ],
        compiler_params=pltpu.CompilerParams(
            dimension_semantics=("parallel",), vmem_limit_bytes=vmem),
    )(x_p, w1, w2)


def _downsample_block_call(x_p, blk, eps=_EPS):
    B, H, W, cip = x_p.shape
    assert H % 2 == 0 and W % 2 == 0, "stride-2 block expects even H, W"
    cin, cmid = blk["w1"].shape[2], blk["w1"].shape[3]
    cout = blk["w2"].shape[3]
    cmp_, cop = _round_up(cmid, _LANE), _round_up(cout, _LANE)
    Ho, Wo = H // 2, W // 2
    sc = blk["shortcut"]

    w1 = _pack_conv_weight(blk["w1"], cip, cmp_)
    w2 = _pack_conv_weight(blk["w2"], cmp_, cop)
    wsc = (jnp.zeros((cip, cop), jnp.float32)
           .at[:cin, :cout].set(sc["w"][0, 0]).astype(jnp.bfloat16))
    scale = sc["gamma"] * jax.lax.rsqrt(sc["running_var"] + eps)
    offset = sc["beta"] - sc["running_mean"] * scale
    bns = jnp.zeros((1, cop), jnp.float32).at[0, :cout].set(scale)
    bno = jnp.zeros((1, cop), jnp.float32).at[0, :cout].set(offset)

    # even/odd input columns -> all stride-2 taps are contiguous slices in-kernel
    x_even = x_p[:, :, 0::2, :]
    x_odd = x_p[:, :, 1::2, :]

    kernel = _make_downsample_block_kernel(H, W, Ho, Wo, cip, cmp_, cop, eps)
    vmem = _vmem_limit_bytes(
        2 * H * Wo * cip * 4 + Ho * Wo * cop * 4
        + 3 * 3 * cip * cmp_ * 2 + 3 * 3 * cmp_ * cop * 2 + cip * cop * 2
        + (H + 2) * (2 * Wo + 1) * cip * 2 + (Ho + 2) * (Wo + 2) * cmp_ * 2)

    return pl.pallas_call(
        kernel,
        out_shape=jax.ShapeDtypeStruct((B, Ho, Wo, cop), jnp.float32),
        grid=(B,),
        in_specs=[
            pl.BlockSpec((1, H, Wo, cip), lambda i: (i, 0, 0, 0)),   # x_even
            pl.BlockSpec((1, H, Wo, cip), lambda i: (i, 0, 0, 0)),   # x_odd
            pl.BlockSpec((3, 3 * cip, cmp_), lambda i: (0, 0, 0)),
            pl.BlockSpec((3, 3 * cmp_, cop), lambda i: (0, 0, 0)),
            pl.BlockSpec((cip, cop), lambda i: (0, 0)),
            pl.BlockSpec((1, cop), lambda i: (0, 0)),
            pl.BlockSpec((1, cop), lambda i: (0, 0)),
        ],
        out_specs=pl.BlockSpec((1, Ho, Wo, cop), lambda i: (i, 0, 0, 0)),
        scratch_shapes=[
            pltpu.VMEM((H + 2, Wo + 1, cip), jnp.bfloat16),
            pltpu.VMEM((H + 2, Wo, cip), jnp.bfloat16),
            pltpu.VMEM((Ho + 2, Wo + 2, cmp_), jnp.bfloat16),
        ],
        compiler_params=pltpu.CompilerParams(
            dimension_semantics=("parallel",), vmem_limit_bytes=vmem),
    )(x_even, x_odd, w1, w2, wsc, bns, bno)


# ---------------------------------------------------------------------------
# ResNetLayer forward (NCHW in, NCHW out)
# ---------------------------------------------------------------------------
def resnet_layer_forward(params, x_nchw):
    x = jnp.transpose(x_nchw, (0, 2, 3, 1)).astype(jnp.float32)     # NHWC
    cin = x.shape[-1]
    x = _pad_channels(x, _round_up(cin, _LANE))
    cout = cin
    for blk in params["blocks"]:
        cout = blk["w2"].shape[-1]
        # Within ResNetLayer: shortcut present <=> downsampling == 2.
        if blk["shortcut"] is None:
            x = _identity_block_call(x, blk)
        else:
            x = _downsample_block_call(x, blk)
    x = x[..., :cout]
    return jnp.transpose(x, (0, 3, 1, 2))


# ---------------------------------------------------------------------------
# Pure-XLA reference (for correctness check)
# ---------------------------------------------------------------------------
_DN = ("NHWC", "HWIO", "NHWC")


def _in_ref(y, eps=_EPS):
    mean = jnp.mean(y, axis=(1, 2), keepdims=True)
    var = jnp.mean(jnp.square(y - mean), axis=(1, 2), keepdims=True)
    return (y - mean) * jax.lax.rsqrt(var + eps)


def resnet_layer_reference(params, x_nchw, eps=_EPS):
    x = jnp.transpose(x_nchw, (0, 2, 3, 1)).astype(jnp.float32)
    hi = jax.lax.Precision.HIGHEST
    for blk in params["blocks"]:
        stride = 1 if blk["shortcut"] is None else 2
        y = jax.lax.conv_general_dilated(x, blk["w1"], (stride, stride),
                                         ((1, 1), (1, 1)), dimension_numbers=_DN,
                                         precision=hi)
        y = jnp.maximum(_in_ref(y, eps), 0.0)
        y = jax.lax.conv_general_dilated(y, blk["w2"], (1, 1),
                                         ((1, 1), (1, 1)), dimension_numbers=_DN,
                                         precision=hi)
        y = _in_ref(y, eps)
        if blk["shortcut"] is None:
            r = x
        else:
            sc = blk["shortcut"]
            r = jax.lax.conv_general_dilated(x, sc["w"], (stride, stride),
                                             ((0, 0), (0, 0)),
                                             dimension_numbers=_DN, precision=hi)
            scale = sc["gamma"] * jax.lax.rsqrt(sc["running_var"] + eps)
            r = r * scale + (sc["beta"] - sc["running_mean"] * scale)
        x = jnp.maximum(y + r, 0.0)
    return jnp.transpose(x, (0, 3, 1, 2))


# ---------------------------------------------------------------------------
# Parameter init (shapes/inits mirror ResNetLayer / ResNetBasicBlock)
# ---------------------------------------------------------------------------
def init_resnet_layer_params(key, in_channels, out_channels, n=1):
    downsampling = 2 if in_channels != out_channels else 1
    blocks = []
    keys = jax.random.split(key, n)
    cin, stride = in_channels, downsampling
    for i in range(n):
        k1, k2, k3 = jax.random.split(keys[i], 3)
        lim1 = 1.0 / math.sqrt(cin * 9)
        lim2 = 1.0 / math.sqrt(out_channels * 9)
        blk = {
            "w1": jax.random.uniform(k1, (3, 3, cin, out_channels),
                                     jnp.float32, -lim1, lim1),
            "w2": jax.random.uniform(k2, (3, 3, out_channels, out_channels),
                                     jnp.float32, -lim2, lim2),
            "shortcut": None,
        }
        if cin != out_channels:
            lims = 1.0 / math.sqrt(cin)
            blk["shortcut"] = {
                "w": jax.random.uniform(k3, (1, 1, cin, out_channels),
                                        jnp.float32, -lims, lims),
                "gamma": jnp.ones((out_channels,), jnp.float32),
                "beta": jnp.zeros((out_channels,), jnp.float32),
                "running_mean": jnp.zeros((out_channels,), jnp.float32),
                "running_var": jnp.ones((out_channels,), jnp.float32),
            }
        blocks.append(blk)
        cin, stride = out_channels, 1
    return {"blocks": blocks}


if __name__ == "__main__":
    key = jax.random.PRNGKey(0)
    kp, kx = jax.random.split(key)

    B, Cin, Cout, H, W, n = 2, 64, 128, 16, 16, 2
    params = init_resnet_layer_params(kp, Cin, Cout, n=n)
    x = jax.random.normal(kx, (B, Cin, H, W), jnp.float32)

    fwd = jax.jit(resnet_layer_forward)
    out = jax.block_until_ready(fwd(params, x))

    assert out.shape == (B, Cout, H // 2, W // 2), out.shape
    assert out.dtype == jnp.float32
    assert bool(jnp.all(jnp.isfinite(out)))

    # correctness vs plain-XLA reference (loose tol: bf16 MXU operands in kernel)
    ref = jax.block_until_ready(jax.jit(resnet_layer_reference)(params, x))
    rel = float(jnp.linalg.norm(out - ref) /
                jnp.maximum(jnp.linalg.norm(ref), 1e-6))
    assert rel < 0.05, f"relative error too large: {rel}"

    print("KERNEL_OK")
</pallas_src>

<mosaic_0001>
module attributes {stable_mosaic.version = 11 : i64} {
  func.func @kernel(%arg0: i32, %arg1: memref<1x16x8x128xf32, #tpu.memory_space<vmem>>, %arg2: memref<1x16x8x128xf32, #tpu.memory_space<vmem>>, %arg3: memref<3x384x128xbf16, #tpu.memory_space<vmem>>, %arg4: memref<3x384x128xbf16, #tpu.memory_space<vmem>>, %arg5: memref<128x128xbf16, #tpu.memory_space<vmem>>, %arg6: memref<1x128xf32, #tpu.memory_space<vmem>>, %arg7: memref<1x128xf32, #tpu.memory_space<vmem>>, %arg8: memref<1x8x8x128xf32, #tpu.memory_space<vmem>>, %arg9: memref<18x9x128xbf16, #tpu.memory_space<vmem>>, %arg10: memref<18x8x128xbf16, #tpu.memory_space<vmem>>, %arg11: memref<10x10x128xbf16, #tpu.memory_space<vmem>>) attributes {dimension_semantics = [#tpu.dimension_semantics<parallel>], iteration_bounds = array<i64: 2>, scalar_prefetch = 0 : i64, scratch_operands = 3 : i64, tpu.core_type = #tpu.core_type<tc>, window_params = [{transform_indices = @transform_0, window_bounds = array<i64: 1, 16, 8, 128>}, {transform_indices = @transform_1, window_bounds = array<i64: 1, 16, 8, 128>}, {pipeline_mode = #tpu.pipeline_mode<synchronous>, transform_indices = @transform_2, window_bounds = array<i64: 3, 384, 128>}, {pipeline_mode = #tpu.pipeline_mode<synchronous>, transform_indices = @transform_3, window_bounds = array<i64: 3, 384, 128>}, {pipeline_mode = #tpu.pipeline_mode<synchronous>, transform_indices = @transform_4, window_bounds = array<i64: 128, 128>}, {pipeline_mode = #tpu.pipeline_mode<synchronous>, transform_indices = @transform_5, window_bounds = array<i64: 1, 128>}, {pipeline_mode = #tpu.pipeline_mode<synchronous>, transform_indices = @transform_6, window_bounds = array<i64: 1, 128>}, {transform_indices = @transform_7, window_bounds = array<i64: 1, 8, 8, 128>}]} {
    %cst = arith.constant 0.000000e+00 : bf16
    %0 = vector.broadcast %cst : bf16 to vector<18x9x128xbf16>
    %c0 = arith.constant 0 : index
    %c0_0 = arith.constant 0 : index
    %c0_1 = arith.constant 0 : index
    %1 = vector.load %arg9[%c0, %c0_0, %c0_1] : memref<18x9x128xbf16, #tpu.memory_space<vmem>>, vector<18x9x128xbf16>
    tpu.vector_store %arg9[%c0, %c0_0, %c0_1], %0 {strides = array<i32>} : memref<18x9x128xbf16, #tpu.memory_space<vmem>>, vector<18x9x128xbf16>,
    %cst_2 = arith.constant 0.000000e+00 : bf16
    %2 = vector.broadcast %cst_2 : bf16 to vector<18x8x128xbf16>
    %c0_3 = arith.constant 0 : index
    %c0_4 = arith.constant 0 : index
    %c0_5 = arith.constant 0 : index
    %3 = vector.load %arg10[%c0_3, %c0_4, %c0_5] : memref<18x8x128xbf16, #tpu.memory_space<vmem>>, vector<18x8x128xbf16>
    tpu.vector_store %arg10[%c0_3, %c0_4, %c0_5], %2 {strides = array<i32>} : memref<18x8x128xbf16, #tpu.memory_space<vmem>>, vector<18x8x128xbf16>,
    %c0_6 = arith.constant 0 : index
    %c0_7 = arith.constant 0 : index
    %c0_8 = arith.constant 0 : index
    %c0_9 = arith.constant 0 : index
    %4 = vector.load %arg2[%c0_6, %c0_7, %c0_8, %c0_9] : memref<1x16x8x128xf32, #tpu.memory_space<vmem>>, vector<1x16x8x128xf32>
    %5 = vector.shape_cast %4 : vector<1x16x8x128xf32> to vector<16x8x128xf32>
    %6 = arith.truncf %5 : vector<16x8x128xf32> to vector<16x8x128xbf16>
    %c1 = arith.constant 1 : index
    %c1_10 = arith.constant 1 : index
    %c0_11 = arith.constant 0 : index
    %7 = vector.load %arg9[%c1, %c1_10, %c0_11] : memref<18x9x128xbf16, #tpu.memory_space<vmem>>, vector<16x8x128xbf16>
    tpu.vector_store %arg9[%c1, %c1_10, %c0_11], %6 {strides = array<i32>} : memref<18x9x128xbf16, #tpu.memory_space<vmem>>, vector<16x8x128xbf16>,
    %c0_12 = arith.constant 0 : index
    %c0_13 = arith.constant 0 : index
    %c0_14 = arith.constant 0 : index
    %c0_15 = arith.constant 0 : index
    %8 = vector.load %arg1[%c0_12, %c0_13, %c0_14, %c0_15] : memref<1x16x8x128xf32, #tpu.memory_space<vmem>>, vector<1x16x8x128xf32>
    %9 = vector.shape_cast %8 : vector<1x16x8x128xf32> to vector<16x8x128xf32>
    %10 = arith.truncf %9 : vector<16x8x128xf32> to vector<16x8x128xbf16>
    %c1_16 = arith.constant 1 : index
    %c0_17 = arith.constant 0 : index
    %c0_18 = arith.constant 0 : index
    %11 = vector.load %arg10[%c1_16, %c0_17, %c0_18] : memref<18x8x128xbf16, #tpu.memory_space<vmem>>, vector<16x8x128xbf16>
    tpu.vector_store %arg10[%c1_16, %c0_17, %c0_18], %10 {strides = array<i32>} : memref<18x8x128xbf16, #tpu.memory_space<vmem>>, vector<16x8x128xbf16>,
    %cst_19 = arith.constant 0.000000e+00 : f32
    %12 = vector.broadcast %cst_19 : f32 to vector<64x128xf32>
    %c0_20 = arith.constant 0 : index
    %c0_21 = arith.constant 0 : index
    %c0_22 = arith.constant 0 : index
    %13 = vector.load %arg9[%c0_20, %c0_21, %c0_22] : memref<18x9x128xbf16, #tpu.memory_space<vmem>>, vector<16x9x128xbf16>
    %14 = vector.shape_cast %13 : vector<16x9x128xbf16> to vector<8x2x9x128xbf16>
    %15 = vector.extract_strided_slice %14 {offsets = [0, 0, 0, 0], sizes = [8, 1, 9, 128], strides = [1, 1, 1, 1]} : vector<8x2x9x128xbf16> to vector<8x1x9x128xbf16>
    %16 = vector.shape_cast %15 : vector<8x1x9x128xbf16> to vector<8x9x128xbf16>
    %c0_23 = arith.constant 0 : index
    %c0_24 = arith.constant 0 : index
    %c0_25 = arith.constant 0 : index
    %17 = vector.load %arg10[%c0_23, %c0_24, %c0_25] : memref<18x8x128xbf16, #tpu.memory_space<vmem>>, vector<16x8x128xbf16>
    %18 = vector.shape_cast %17 : vector<16x8x128xbf16> to vector<8x2x8x128xbf16>
    %19 = vector.extract_strided_slice %18 {offsets = [0, 0, 0, 0], sizes = [8, 1, 8, 128], strides = [1, 1, 1, 1]} : vector<8x2x8x128xbf16> to vector<8x1x8x128xbf16>
    %20 = vector.shape_cast %19 : vector<8x1x8x128xbf16> to vector<8x8x128xbf16>
    %21 = vector.extract_strided_slice %16 {offsets = [0, 0, 0], sizes = [8, 8, 128], strides = [1, 1, 1]} : vector<8x9x128xbf16> to vector<8x8x128xbf16>
    %22 = vector.extract_strided_slice %16 {offsets = [0, 1, 0], sizes = [8, 8, 128], strides = [1, 1, 1]} : vector<8x9x128xbf16> to vector<8x8x128xbf16>
    %23 = tpu.concatenate %21, %20, %22 in 2 : vector<8x8x128xbf16>, vector<8x8x128xbf16>, vector<8x8x128xbf16> -> vector<8x8x384xbf16>
    %24 = vector.shape_cast %23 : vector<8x8x384xbf16> to vector<64x384xbf16>
    %c0_26 = arith.constant 0 : index
    %c0_27 = arith.constant 0 : index
    %c0_28 = arith.constant 0 : index
    %25 = vector.load %arg3[%c0_26, %c0_27, %c0_28] : memref<3x384x128xbf16, #tpu.memory_space<vmem>>, vector<1x384x128xbf16>
    %26 = vector.shape_cast %25 : vector<1x384x128xbf16> to vector<384x128xbf16>
    %cst_29 = arith.constant dense<0.000000e+00> : vector<64x128xf32>
    %27 = tpu.matmul %24, %26, %cst_29 {dimension_numbers = #tpu.dot_dimension_numbers<[1], [0], [0], [1], [0, 0, 1, 1], [], []>} : vector<64x384xbf16>, vector<384x128xbf16>, vector<64x128xf32> -> vector<64x128xf32>
    %28 = arith.addf %12, %27 : vector<64x128xf32>
    %c1_30 = arith.constant 1 : index
    %c0_31 = arith.constant 0 : index
    %c0_32 = arith.constant 0 : index
    %29 = vector.load %arg9[%c1_30, %c0_31, %c0_32] : memref<18x9x128xbf16, #tpu.memory_space<vmem>>, vector<16x9x128xbf16>
    %30 = vector.shape_cast %29 : vector<16x9x128xbf16> to vector<8x2x9x128xbf16>
    %31 = vector.extract_strided_slice %30 {offsets = [0, 0, 0, 0], sizes = [8, 1, 9, 128], strides = [1, 1, 1, 1]} : vector<8x2x9x128xbf16> to vector<8x1x9x128xbf16>
    %32 = vector.shape_cast %31 : vector<8x1x9x128xbf16> to vector<8x9x128xbf16>
    %c1_33 = arith.constant 1 : index
    %c0_34 = arith.constant 0 : index
    %c0_35 = arith.constant 0 : index
    %33 = vector.load %arg10[%c1_33, %c0_34, %c0_35] : memref<18x8x128xbf16, #tpu.memory_space<vmem>>, vector<16x8x128xbf16>
    %34 = vector.shape_cast %33 : vector<16x8x128xbf16> to vector<8x2x8x128xbf16>
    %35 = vector.extract_strided_slice %34 {offsets = [0, 0, 0, 0], sizes = [8, 1, 8, 128], strides = [1, 1, 1, 1]} : vector<8x2x8x128xbf16> to vector<8x1x8x128xbf16>
    %36 = vector.shape_cast %35 : vector<8x1x8x128xbf16> to vector<8x8x128xbf16>
    %37 = vector.extract_strided_slice %32 {offsets = [0, 0, 0], sizes = [8, 8, 128], strides = [1, 1, 1]} : vector<8x9x128xbf16> to vector<8x8x128xbf16>
    %38 = vector.extract_strided_slice %32 {offsets = [0, 1, 0], sizes = [8, 8, 128], strides = [1, 1, 1]} : vector<8x9x128xbf16> to vector<8x8x128xbf16>
    %39 = tpu.concatenate %37, %36, %38 in 2 : vector<8x8x128xbf16>, vector<8x8x128xbf16>, vector<8x8x128xbf16> -> vector<8x8x384xbf16>
    %40 = vector.shape_cast %39 : vector<8x8x384xbf16> to vector<64x384xbf16>
    %c1_36 = arith.constant 1 : index
    %c0_37 = arith.constant 0 : index
    %c0_38 = arith.constant 0 : index
    %41 = vector.load %arg3[%c1_36, %c0_37, %c0_38] : memref<3x384x128xbf16, #tpu.memory_space<vmem>>, vector<1x384x128xbf16>
    %42 = vector.shape_cast %41 : vector<1x384x128xbf16> to vector<384x128xbf16>
    %cst_39 = arith.constant dense<0.000000e+00> : vector<64x128xf32>
    %43 = tpu.matmul %40, %42, %cst_39 {dimension_numbers = #tpu.dot_dimension_numbers<[1], [0], [0], [1], [0, 0, 1, 1], [], []>} : vector<64x384xbf16>, vector<384x128xbf16>, vector<64x128xf32> -> vector<64x128xf32>
    %44 = arith.addf %28, %43 : vector<64x128xf32>
    %c2 = arith.constant 2 : index
    %c0_40 = arith.constant 0 : index
    %c0_41 = arith.constant 0 : index
    %45 = vector.load %arg9[%c2, %c0_40, %c0_41] : memref<18x9x128xbf16, #tpu.memory_space<vmem>>, vector<16x9x128xbf16>
    %46 = vector.shape_cast %45 : vector<16x9x128xbf16> to vector<8x2x9x128xbf16>
    %47 = vector.extract_strided_slice %46 {offsets = [0, 0, 0, 0], sizes = [8, 1, 9, 128], strides = [1, 1, 1, 1]} : vector<8x2x9x128xbf16> to vector<8x1x9x128xbf16>
    %48 = vector.shape_cast %47 : vector<8x1x9x128xbf16> to vector<8x9x128xbf16>
    %c2_42 = arith.constant 2 : index
    %c0_43 = arith.constant 0 : index
    %c0_44 = arith.constant 0 : index
    %49 = vector.load %arg10[%c2_42, %c0_43, %c0_44] : memref<18x8x128xbf16, #tpu.memory_space<vmem>>, vector<16x8x128xbf16>
    %50 = vector.shape_cast %49 : vector<16x8x128xbf16> to vector<8x2x8x128xbf16>
    %51 = vector.extract_strided_slice %50 {offsets = [0, 0, 0, 0], sizes = [8, 1, 8, 128], strides = [1, 1, 1, 1]} : vector<8x2x8x128xbf16> to vector<8x1x8x128xbf16>
    %52 = vector.shape_cast %51 : vector<8x1x8x128xbf16> to vector<8x8x128xbf16>
    %53 = vector.extract_strided_slice %48 {offsets = [0, 0, 0], sizes = [8, 8, 128], strides = [1, 1, 1]} : vector<8x9x128xbf16> to vector<8x8x128xbf16>
    %54 = vector.extract_strided_slice %48 {offsets = [0, 1, 0], sizes = [8, 8, 128], strides = [1, 1, 1]} : vector<8x9x128xbf16> to vector<8x8x128xbf16>
    %55 = tpu.concatenate %53, %52, %54 in 2 : vector<8x8x128xbf16>, vector<8x8x128xbf16>, vector<8x8x128xbf16> -> vector<8x8x384xbf16>
    %56 = vector.shape_cast %55 : vector<8x8x384xbf16> to vector<64x384xbf16>
    %c2_45 = arith.constant 2 : index
    %c0_46 = arith.constant 0 : index
    %c0_47 = arith.constant 0 : index
    %57 = vector.load %arg3[%c2_45, %c0_46, %c0_47] : memref<3x384x128xbf16, #tpu.memory_space<vmem>>, vector<1x384x128xbf16>
    %58 = vector.shape_cast %57 : vector<1x384x128xbf16> to vector<384x128xbf16>
    %cst_48 = arith.constant dense<0.000000e+00> : vector<64x128xf32>
    %59 = tpu.matmul %56, %58, %cst_48 {dimension_numbers = #tpu.dot_dimension_numbers<[1], [0], [0], [1], [0, 0, 1, 1], [], []>} : vector<64x384xbf16>, vector<384x128xbf16>, vector<64x128xf32> -> vector<64x128xf32>
    %60 = arith.addf %44, %59 : vector<64x128xf32>
    %cst_49 = arith.constant dense<0.000000e+00> : vector<128xf32>
    %61 = vector.multi_reduction <add>, %60, %cst_49 [0] : vector<64x128xf32> to vector<128xf32>
    %62 = vector.shape_cast %61 : vector<128xf32> to vector<1x128xf32>
    %63 = arith.mulf %60, %60 : vector<64x128xf32>
    %cst_50 = arith.constant dense<0.000000e+00> : vector<128xf32>
    %64 = vector.multi_reduction <add>, %63, %cst_50 [0] : vector<64x128xf32> to vector<128xf32>
    %65 = vector.shape_cast %64 : vector<128xf32> to vector<1x128xf32>
    %cst_51 = arith.constant 1.562500e-02 : f32
    %66 = vector.broadcast %cst_51 : f32 to vector<1x128xf32>
    %67 = arith.mulf %62, %66 : vector<1x128xf32>
    %cst_52 = arith.constant 1.562500e-02 : f32
    %68 = vector.broadcast %cst_52 : f32 to vector<1x128xf32>
    %69 = arith.mulf %65, %68 : vector<1x128xf32>
    %70 = arith.mulf %67, %67 : vector<1x128xf32>
    %71 = arith.subf %69, %70 : vector<1x128xf32>
    %cst_53 = arith.constant 0.000000e+00 : f32
    %72 = vector.broadcast %cst_53 : f32 to vector<1x128xf32>
    %73 = arith.maximumf %71, %72 : vector<1x128xf32>
    %74 = vector.broadcast %67 : vector<1x128xf32> to vector<64x128xf32>
    %75 = arith.subf %60, %74 : vector<64x128xf32>
    %cst_54 = arith.constant 9.99999974E-6 : f32
    %76 = vector.broadcast %cst_54 : f32 to vector<1x128xf32>
    %77 = arith.addf %73, %76 : vector<1x128xf32>
    %78 = math.rsqrt %77 : vector<1x128xf32>
    %79 = vector.broadcast %78 : vector<1x128xf32> to vector<64x128xf32>
    %80 = arith.mulf %75, %79 : vector<64x128xf32>
    %cst_55 = arith.constant 0.000000e+00 : f32
    %81 = vector.broadcast %cst_55 : f32 to vector<64x128xf32>
    %82 = arith.maximumf %80, %81 : vector<64x128xf32>
    %cst_56 = arith.constant 0.000000e+00 : bf16
    %83 = vector.broadcast %cst_56 : bf16 to vector<10x10x128xbf16>
    %c0_57 = arith.constant 0 : index
    %c0_58 = arith.constant 0 : index
    %c0_59 = arith.constant 0 : index
    %84 = vector.load %arg11[%c0_57, %c0_58, %c0_59] : memref<10x10x128xbf16, #tpu.memory_space<vmem>>, vector<10x10x128xbf16>
    tpu.vector_store %arg11[%c0_57, %c0_58, %c0_59], %83 {strides = array<i32>} : memref<10x10x128xbf16, #tpu.memory_space<vmem>>, vector<10x10x128xbf16>,
    %85 = vector.shape_cast %82 : vector<64x128xf32> to vector<8x8x128xf32>
    %86 = arith.truncf %85 : vector<8x8x128xf32> to vector<8x8x128xbf16>
    %c1_60 = arith.constant 1 : index
    %c1_61 = arith.constant 1 : index
    %c0_62 = arith.constant 0 : index
    %87 = vector.load %arg11[%c1_60, %c1_61, %c0_62] : memref<10x10x128xbf16, #tpu.memory_space<vmem>>, vector<8x8x128xbf16>
    tpu.vector_store %arg11[%c1_60, %c1_61, %c0_62], %86 {strides = array<i32>} : memref<10x10x128xbf16, #tpu.memory_space<vmem>>, vector<8x8x128xbf16>,
    %cst_63 = arith.constant 0.000000e+00 : f32
    %88 = vector.broadcast %cst_63 : f32 to vector<64x128xf32>
    %c0_64 = arith.constant 0 : index
    %c0_65 = arith.constant 0 : index
    %c0_66 = arith.constant 0 : index
    %89 = vector.load %arg11[%c0_64, %c0_65, %c0_66] : memref<10x10x128xbf16, #tpu.memory_space<vmem>>, vector<8x10x128xbf16>
    %90 = vector.extract_strided_slice %89 {offsets = [0, 0, 0], sizes = [8, 8, 128], strides = [1, 1, 1]} : vector<8x10x128xbf16> to vector<8x8x128xbf16>
    %91 = vector.extract_strided_slice %89 {offsets = [0, 1, 0], sizes = [8, 8, 128], strides = [1, 1, 1]} : vector<8x10x128xbf16> to vector<8x8x128xbf16>
    %92 = vector.extract_strided_slice %89 {offsets = [0, 2, 0], sizes = [8, 8, 128], strides = [1, 1, 1]} : vector<8x10x128xbf16> to vector<8x8x128xbf16>
    %93 = tpu.concatenate %90, %91, %92 in 2 : vector<8x8x128xbf16>, vector<8x8x128xbf16>, vector<8x8x128xbf16> -> vector<8x8x384xbf16>
    %94 = vector.shape_cast %93 : vector<8x8x384xbf16> to vector<64x384xbf16>
    %c0_67 = arith.constant 0 : index
    %c0_68 = arith.constant 0 : index
    %c0_69 = arith.constant 0 : index
    %95 = vector.load %arg4[%c0_67, %c0_68, %c0_69] : memref<3x384x128xbf16, #tpu.memory_space<vmem>>, vector<1x384x128xbf16>
    %96 = vector.shape_cast %95 : vector<1x384x128xbf16> to vector<384x128xbf16>
    %cst_70 = arith.constant dense<0.000000e+00> : vector<64x128xf32>
    %97 = tpu.matmul %94, %96, %cst_70 {dimension_numbers = #tpu.dot_dimension_numbers<[1], [0], [0], [1], [0, 0, 1, 1], [], []>} : vector<64x384xbf16>, vector<384x128xbf16>, vector<64x128xf32> -> vector<64x128xf32>
    %98 = arith.addf %88, %97 : vector<64x128xf32>
    %c1_71 = arith.constant 1 : index
    %c0_72 = arith.constant 0 : index
    %c0_73 = arith.constant 0 : index
    %99 = vector.load %arg11[%c1_71, %c0_72, %c0_73] : memref<10x10x128xbf16, #tpu.memory_space<vmem>>, vector<8x10x128xbf16>
    %100 = vector.extract_strided_slice %99 {offsets = [0, 0, 0], sizes = [8, 8, 128], strides = [1, 1, 1]} : vector<8x10x128xbf16> to vector<8x8x128xbf16>
    %101 = vector.extract_strided_slice %99 {offsets = [0, 1, 0], sizes = [8, 8, 128], strides = [1, 1, 1]} : vector<8x10x128xbf16> to vector<8x8x128xbf16>
    %102 = vector.extract_strided_slice %99 {offsets = [0, 2, 0], sizes = [8, 8, 128], strides = [1, 1, 1]} : vector<8x10x128xbf16> to vector<8x8x128xbf16>
    %103 = tpu.concatenate %100, %101, %102 in 2 : vector<8x8x128xbf16>, vector<8x8x128xbf16>, vector<8x8x128xbf16> -> vector<8x8x384xbf16>
    %104 = vector.shape_cast %103 : vector<8x8x384xbf16> to vector<64x384xbf16>
    %c1_74 = arith.constant 1 : index
    %c0_75 = arith.constant 0 : index
    %c0_76 = arith.constant 0 : index
    %105 = vector.load %arg4[%c1_74, %c0_75, %c0_76] : memref<3x384x128xbf16, #tpu.memory_space<vmem>>, vector<1x384x128xbf16>
    %106 = vector.shape_cast %105 : vector<1x384x128xbf16> to vector<384x128xbf16>
    %cst_77 = arith.constant dense<0.000000e+00> : vector<64x128xf32>
    %107 = tpu.matmul %104, %106, %cst_77 {dimension_numbers = #tpu.dot_dimension_numbers<[1], [0], [0], [1], [0, 0, 1, 1], [], []>} : vector<64x384xbf16>, vector<384x128xbf16>, vector<64x128xf32> -> vector<64x128xf32>
    %108 = arith.addf %98, %107 : vector<64x128xf32>
    %c2_78 = arith.constant 2 : index
    %c0_79 = arith.constant 0 : index
    %c0_80 = arith.constant 0 : index
    %109 = vector.load %arg11[%c2_78, %c0_79, %c0_80] : memref<10x10x128xbf16, #tpu.memory_space<vmem>>, vector<8x10x128xbf16>
    %110 = vector.extract_strided_slice %109 {offsets = [0, 0, 0], sizes = [8, 8, 128], strides = [1, 1, 1]} : vector<8x10x128xbf16> to vector<8x8x128xbf16>
    %111 = vector.extract_strided_slice %109 {offsets = [0, 1, 0], sizes = [8, 8, 128], strides = [1, 1, 1]} : vector<8x10x128xbf16> to vector<8x8x128xbf16>
    %112 = vector.extract_strided_slice %109 {offsets = [0, 2, 0], sizes = [8, 8, 128], strides = [1, 1, 1]} : vector<8x10x128xbf16> to vector<8x8x128xbf16>
    %113 = tpu.concatenate %110, %111, %112 in 2 : vector<8x8x128xbf16>, vector<8x8x128xbf16>, vector<8x8x128xbf16> -> vector<8x8x384xbf16>
    %114 = vector.shape_cast %113 : vector<8x8x384xbf16> to vector<64x384xbf16>
    %c2_81 = arith.constant 2 : index
    %c0_82 = arith.constant 0 : index
    %c0_83 = arith.constant 0 : index
    %115 = vector.load %arg4[%c2_81, %c0_82, %c0_83] : memref<3x384x128xbf16, #tpu.memory_space<vmem>>, vector<1x384x128xbf16>
    %116 = vector.shape_cast %115 : vector<1x384x128xbf16> to vector<384x128xbf16>
    %cst_84 = arith.constant dense<0.000000e+00> : vector<64x128xf32>
    %117 = tpu.matmul %114, %116, %cst_84 {dimension_numbers = #tpu.dot_dimension_numbers<[1], [0], [0], [1], [0, 0, 1, 1], [], []>} : vector<64x384xbf16>, vector<384x128xbf16>, vector<64x128xf32> -> vector<64x128xf32>
    %118 = arith.addf %108, %117 : vector<64x128xf32>
    %cst_85 = arith.constant dense<0.000000e+00> : vector<128xf32>
    %119 = vector.multi_reduction <add>, %118, %cst_85 [0] : vector<64x128xf32> to vector<128xf32>
    %120 = vector.shape_cast %119 : vector<128xf32> to vector<1x128xf32>
    %121 = arith.mulf %118, %118 : vector<64x128xf32>
    %cst_86 = arith.constant dense<0.000000e+00> : vector<128xf32>
    %122 = vector.multi_reduction <add>, %121, %cst_86 [0] : vector<64x128xf32> to vector<128xf32>
    %123 = vector.shape_cast %122 : vector<128xf32> to vector<1x128xf32>
    %cst_87 = arith.constant 1.562500e-02 : f32
    %124 = vector.broadcast %cst_87 : f32 to vector<1x128xf32>
    %125 = arith.mulf %120, %124 : vector<1x128xf32>
    %cst_88 = arith.constant 1.562500e-02 : f32
    %126 = vector.broadcast %cst_88 : f32 to vector<1x128xf32>
    %127 = arith.mulf %123, %126 : vector<1x128xf32>
    %128 = arith.mulf %125, %125 : vector<1x128xf32>
    %129 = arith.subf %127, %128 : vector<1x128xf32>
    %cst_89 = arith.constant 0.000000e+00 : f32
    %130 = vector.broadcast %cst_89 : f32 to vector<1x128xf32>
    %131 = arith.maximumf %129, %130 : vector<1x128xf32>
    %132 = vector.broadcast %125 : vector<1x128xf32> to vector<64x128xf32>
    %133 = arith.subf %118, %132 : vector<64x128xf32>
    %cst_90 = arith.constant 9.99999974E-6 : f32
    %134 = vector.broadcast %cst_90 : f32 to vector<1x128xf32>
    %135 = arith.addf %131, %134 : vector<1x128xf32>
    %136 = math.rsqrt %135 : vector<1x128xf32>
    %137 = vector.broadcast %136 : vector<1x128xf32> to vector<64x128xf32>
    %138 = arith.mulf %133, %137 : vector<64x128xf32>
    %c0_91 = arith.constant 0 : index
    %c0_92 = arith.constant 0 : index
    %c0_93 = arith.constant 0 : index
    %c0_94 = arith.constant 0 : index
    %139 = vector.load %arg1[%c0_91, %c0_92, %c0_93, %c0_94] : memref<1x16x8x128xf32, #tpu.memory_space<vmem>>, vector<1x16x8x128xf32>
    %140 = vector.shape_cast %139 : vector<1x16x8x128xf32> to vector<16x8x128xf32>
    %141 = vector.shape_cast %140 : vector<16x8x128xf32> to vector<8x2x8x128xf32>
    %142 = vector.extract_strided_slice %141 {offsets = [0, 0, 0, 0], sizes = [8, 1, 8, 128], strides = [1, 1, 1, 1]} : vector<8x2x8x128xf32> to vector<8x1x8x128xf32>
    %143 = vector.shape_cast %142 : vector<8x1x8x128xf32> to vector<8x8x128xf32>
    %144 = vector.shape_cast %143 : vector<8x8x128xf32> to vector<64x128xf32>
    %145 = arith.truncf %144 : vector<64x128xf32> to vector<64x128xbf16>
    %c0_95 = arith.constant 0 : index
    %c0_96 = arith.constant 0 : index
    %146 = vector.load %arg5[%c0_95, %c0_96] : memref<128x128xbf16, #tpu.memory_space<vmem>>, vector<128x128xbf16>
    %cst_97 = arith.constant dense<0.000000e+00> : vector<64x128xf32>
    %147 = tpu.matmul %145, %146, %cst_97 {dimension_numbers = #tpu.dot_dimension_numbers<[1], [0], [0], [1], [0, 0, 1, 1], [], []>} : vector<64x128xbf16>, vector<128x128xbf16>, vector<64x128xf32> -> vector<64x128xf32>
    %c0_98 = arith.constant 0 : index
    %c0_99 = arith.constant 0 : index
    %148 = vector.load %arg6[%c0_98, %c0_99] : memref<1x128xf32, #tpu.memory_space<vmem>>, vector<1x128xf32>
    %149 = vector.broadcast %148 : vector<1x128xf32> to vector<64x128xf32>
    %150 = arith.mulf %147, %149 : vector<64x128xf32>
    %c0_100 = arith.constant 0 : index
    %c0_101 = arith.constant 0 : index
    %151 = vector.load %arg7[%c0_100, %c0_101] : memref<1x128xf32, #tpu.memory_space<vmem>>, vector<1x128xf32>
    %152 = vector.broadcast %151 : vector<1x128xf32> to vector<64x128xf32>
    %153 = arith.addf %150, %152 : vector<64x128xf32>
    %154 = arith.addf %138, %153 : vector<64x128xf32>
    %cst_102 = arith.constant 0.000000e+00 : f32
    %155 = vector.broadcast %cst_102 : f32 to vector<64x128xf32>
    %156 = arith.maximumf %154, %155 : vector<64x128xf32>
    %157 = vector.shape_cast %156 : vector<64x128xf32> to vector<8x8x128xf32>
    %c0_103 = arith.constant 0 : index
    %c0_104 = arith.constant 0 : index
    %c0_105 = arith.constant 0 : index
    %c0_106 = arith.constant 0 : index
    %158 = vector.load %arg8[%c0_103, %c0_104, %c0_105, %c0_106] : memref<1x8x8x128xf32, #tpu.memory_space<vmem>>, vector<1x8x8x128xf32>
    %159 = vector.shape_cast %158 : vector<1x8x8x128xf32> to vector<8x8x128xf32>
    %160 = vector.shape_cast %157 : vector<8x8x128xf32> to vector<1x8x8x128xf32>
    tpu.vector_store %arg8[%c0_103, %c0_104, %c0_105, %c0_106], %160 {strides = array<i32>} : memref<1x8x8x128xf32, #tpu.memory_space<vmem>>, vector<1x8x8x128xf32>,
    return
  }
  func.func @transform_0(%arg0: i32) -> (i32, i32, i32, i32) {
    %c0_i32 = arith.constant 0 : i32
    %c0_i32_0 = arith.constant 0 : i32
    %c0_i32_1 = arith.constant 0 : i32
    %c0_i32_2 = arith.constant 0 : i32
    return %arg0, %c0_i32, %c0_i32_0, %c0_i32_1 : i32, i32, i32, i32
  }
  func.func @transform_1(%arg0: i32) -> (i32, i32, i32, i32) {
    %c0_i32 = arith.constant 0 : i32
    %c0_i32_0 = arith.constant 0 : i32
    %c0_i32_1 = arith.constant 0 : i32
    %c0_i32_2 = arith.constant 0 : i32
    return %arg0, %c0_i32, %c0_i32_0, %c0_i32_1 : i32, i32, i32, i32
  }
  func.func @transform_2(%arg0: i32) -> (i32, i32, i32) {
    %c0_i32 = arith.constant 0 : i32
    %c0_i32_0 = arith.constant 0 : i32
    %c0_i32_1 = arith.constant 0 : i32
    %c0_i32_2 = arith.constant 0 : i32
    return %c0_i32, %c0_i32_0, %c0_i32_1 : i32, i32, i32
  }
  func.func @transform_3(%arg0: i32) -> (i32, i32, i32) {
    %c0_i32 = arith.constant 0 : i32
    %c0_i32_0 = arith.constant 0 : i32
    %c0_i32_1 = arith.constant 0 : i32
    %c0_i32_2 = arith.constant 0 : i32
    return %c0_i32, %c0_i32_0, %c0_i32_1 : i32, i32, i32
  }
  func.func @transform_4(%arg0: i32) -> (i32, i32) {
    %c0_i32 = arith.constant 0 : i32
    %c0_i32_0 = arith.constant 0 : i32
    %c0_i32_1 = arith.constant 0 : i32
    return %c0_i32, %c0_i32_0 : i32, i32
  }
  func.func @transform_5(%arg0: i32) -> (i32, i32) {
    %c0_i32 = arith.constant 0 : i32
    %c0_i32_0 = arith.constant 0 : i32
    %c0_i32_1 = arith.constant 0 : i32
    return %c0_i32, %c0_i32_0 : i32, i32
  }
  func.func @transform_6(%arg0: i32) -> (i32, i32) {
    %c0_i32 = arith.constant 0 : i32
    %c0_i32_0 = arith.constant 0 : i32
    %c0_i32_1 = arith.constant 0 : i32
    return %c0_i32, %c0_i32_0 : i32, i32
  }
  func.func @transform_7(%arg0: i32) -> (i32, i32, i32, i32) {
    %c0_i32 = arith.constant 0 : i32
    %c0_i32_0 = arith.constant 0 : i32
    %c0_i32_1 = arith.constant 0 : i32
    %c0_i32_2 = arith.constant 0 : i32
    return %arg0, %c0_i32, %c0_i32_0, %c0_i32_1 : i32, i32, i32, i32
  }
}

module attributes {stable_mosaic.version = 11 : i64} {
  func.func @kernel(%arg0: i32, %arg1: memref<1x8x8x128xf32, #tpu.memory_space<vmem>>, %arg2: memref<3x384x128xbf16, #tpu.memory_space<vmem>>, %arg3: memref<3x384x128xbf16, #tpu.memory_space<vmem>>, %arg4: memref<1x8x8x128xf32, #tpu.memory_space<vmem>>, %arg5: memref<10x10x128xbf16, #tpu.memory_space<vmem>>, %arg6: memref<10x10x128xbf16, #tpu.memory_space<vmem>>) attributes {dimension_semantics = [#tpu.dimension_semantics<parallel>], iteration_bounds = array<i64: 2>, scalar_prefetch = 0 : i64, scratch_operands = 2 : i64, tpu.core_type = #tpu.core_type<tc>, window_params = [{transform_indices = @transform_0, window_bounds = array<i64: 1, 8, 8, 128>}, {pipeline_mode = #tpu.pipeline_mode<synchronous>, transform_indices = @transform_1, window_bounds = array<i64: 3, 384, 128>}, {pipeline_mode = #tpu.pipeline_mode<synchronous>, transform_indices = @transform_2, window_bounds = array<i64: 3, 384, 128>}, {transform_indices = @transform_3, window_bounds = array<i64: 1, 8, 8, 128>}]} {
    %cst = arith.constant 0.000000e+00 : bf16
    %0 = vector.broadcast %cst : bf16 to vector<10x10x128xbf16>
    %c0 = arith.constant 0 : index
    %c0_0 = arith.constant 0 : index
    %c0_1 = arith.constant 0 : index
    %1 = vector.load %arg5[%c0, %c0_0, %c0_1] : memref<10x10x128xbf16, #tpu.memory_space<vmem>>, vector<10x10x128xbf16>
    tpu.vector_store %arg5[%c0, %c0_0, %c0_1], %0 {strides = array<i32>} : memref<10x10x128xbf16, #tpu.memory_space<vmem>>, vector<10x10x128xbf16>,
    %c0_2 = arith.constant 0 : index
    %c0_3 = arith.constant 0 : index
    %c0_4 = arith.constant 0 : index
    %c0_5 = arith.constant 0 : index
    %2 = vector.load %arg1[%c0_2, %c0_3, %c0_4, %c0_5] : memref<1x8x8x128xf32, #tpu.memory_space<vmem>>, vector<1x8x8x128xf32>
    %3 = vector.shape_cast %2 : vector<1x8x8x128xf32> to vector<8x8x128xf32>
    %4 = arith.truncf %3 : vector<8x8x128xf32> to vector<8x8x128xbf16>
    %c1 = arith.constant 1 : index
    %c1_6 = arith.constant 1 : index
    %c0_7 = arith.constant 0 : index
    %5 = vector.load %arg5[%c1, %c1_6, %c0_7] : memref<10x10x128xbf16, #tpu.memory_space<vmem>>, vector<8x8x128xbf16>
    tpu.vector_store %arg5[%c1, %c1_6, %c0_7], %4 {strides = array<i32>} : memref<10x10x128xbf16, #tpu.memory_space<vmem>>, vector<8x8x128xbf16>,
    %cst_8 = arith.constant 0.000000e+00 : f32
    %6 = vector.broadcast %cst_8 : f32 to vector<64x128xf32>
    %c0_9 = arith.constant 0 : index
    %c0_10 = arith.constant 0 : index
    %c0_11 = arith.constant 0 : index
    %7 = vector.load %arg5[%c0_9, %c0_10, %c0_11] : memref<10x10x128xbf16, #tpu.memory_space<vmem>>, vector<8x10x128xbf16>
    %8 = vector.extract_strided_slice %7 {offsets = [0, 0, 0], sizes = [8, 8, 128], strides = [1, 1, 1]} : vector<8x10x128xbf16> to vector<8x8x128xbf16>
    %9 = vector.extract_strided_slice %7 {offsets = [0, 1, 0], sizes = [8, 8, 128], strides = [1, 1, 1]} : vector<8x10x128xbf16> to vector<8x8x128xbf16>
    %10 = vector.extract_strided_slice %7 {offsets = [0, 2, 0], sizes = [8, 8, 128], strides = [1, 1, 1]} : vector<8x10x128xbf16> to vector<8x8x128xbf16>
    %11 = tpu.concatenate %8, %9, %10 in 2 : vector<8x8x128xbf16>, vector<8x8x128xbf16>, vector<8x8x128xbf16> -> vector<8x8x384xbf16>
    %12 = vector.shape_cast %11 : vector<8x8x384xbf16> to vector<64x384xbf16>
    %c0_12 = arith.constant 0 : index
    %c0_13 = arith.constant 0 : index
    %c0_14 = arith.constant 0 : index
    %13 = vector.load %arg2[%c0_12, %c0_13, %c0_14] : memref<3x384x128xbf16, #tpu.memory_space<vmem>>, vector<1x384x128xbf16>
    %14 = vector.shape_cast %13 : vector<1x384x128xbf16> to vector<384x128xbf16>
    %cst_15 = arith.constant dense<0.000000e+00> : vector<64x128xf32>
    %15 = tpu.matmul %12, %14, %cst_15 {dimension_numbers = #tpu.dot_dimension_numbers<[1], [0], [0], [1], [0, 0, 1, 1], [], []>} : vector<64x384xbf16>, vector<384x128xbf16>, vector<64x128xf32> -> vector<64x128xf32>
    %16 = arith.addf %6, %15 : vector<64x128xf32>
    %c1_16 = arith.constant 1 : index
    %c0_17 = arith.constant 0 : index
    %c0_18 = arith.constant 0 : index
    %17 = vector.load %arg5[%c1_16, %c0_17, %c0_18] : memref<10x10x128xbf16, #tpu.memory_space<vmem>>, vector<8x10x128xbf16>
    %18 = vector.extract_strided_slice %17 {offsets = [0, 0, 0], sizes = [8, 8, 128], strides = [1, 1, 1]} : vector<8x10x128xbf16> to vector<8x8x128xbf16>
    %19 = vector.extract_strided_slice %17 {offsets = [0, 1, 0], sizes = [8, 8, 128], strides = [1, 1, 1]} : vector<8x10x128xbf16> to vector<8x8x128xbf16>
    %20 = vector.extract_strided_slice %17 {offsets = [0, 2, 0], sizes = [8, 8, 128], strides = [1, 1, 1]} : vector<8x10x128xbf16> to vector<8x8x128xbf16>
    %21 = tpu.concatenate %18, %19, %20 in 2 : vector<8x8x128xbf16>, vector<8x8x128xbf16>, vector<8x8x128xbf16> -> vector<8x8x384xbf16>
    %22 = vector.shape_cast %21 : vector<8x8x384xbf16> to vector<64x384xbf16>
    %c1_19 = arith.constant 1 : index
    %c0_20 = arith.constant 0 : index
    %c0_21 = arith.constant 0 : index
    %23 = vector.load %arg2[%c1_19, %c0_20, %c0_21] : memref<3x384x128xbf16, #tpu.memory_space<vmem>>, vector<1x384x128xbf16>
    %24 = vector.shape_cast %23 : vector<1x384x128xbf16> to vector<384x128xbf16>
    %cst_22 = arith.constant dense<0.000000e+00> : vector<64x128xf32>
    %25 = tpu.matmul %22, %24, %cst_22 {dimension_numbers = #tpu.dot_dimension_numbers<[1], [0], [0], [1], [0, 0, 1, 1], [], []>} : vector<64x384xbf16>, vector<384x128xbf16>, vector<64x128xf32> -> vector<64x128xf32>
    %26 = arith.addf %16, %25 : vector<64x128xf32>
    %c2 = arith.constant 2 : index
    %c0_23 = arith.constant 0 : index
    %c0_24 = arith.constant 0 : index
    %27 = vector.load %arg5[%c2, %c0_23, %c0_24] : memref<10x10x128xbf16, #tpu.memory_space<vmem>>, vector<8x10x128xbf16>
    %28 = vector.extract_strided_slice %27 {offsets = [0, 0, 0], sizes = [8, 8, 128], strides = [1, 1, 1]} : vector<8x10x128xbf16> to vector<8x8x128xbf16>
    %29 = vector.extract_strided_slice %27 {offsets = [0, 1, 0], sizes = [8, 8, 128], strides = [1, 1, 1]} : vector<8x10x128xbf16> to vector<8x8x128xbf16>
    %30 = vector.extract_strided_slice %27 {offsets = [0, 2, 0], sizes = [8, 8, 128], strides = [1, 1, 1]} : vector<8x10x128xbf16> to vector<8x8x128xbf16>
    %31 = tpu.concatenate %28, %29, %30 in 2 : vector<8x8x128xbf16>, vector<8x8x128xbf16>, vector<8x8x128xbf16> -> vector<8x8x384xbf16>
    %32 = vector.shape_cast %31 : vector<8x8x384xbf16> to vector<64x384xbf16>
    %c2_25 = arith.constant 2 : index
    %c0_26 = arith.constant 0 : index
    %c0_27 = arith.constant 0 : index
    %33 = vector.load %arg2[%c2_25, %c0_26, %c0_27] : memref<3x384x128xbf16, #tpu.memory_space<vmem>>, vector<1x384x128xbf16>
    %34 = vector.shape_cast %33 : vector<1x384x128xbf16> to vector<384x128xbf16>
    %cst_28 = arith.constant dense<0.000000e+00> : vector<64x128xf32>
    %35 = tpu.matmul %32, %34, %cst_28 {dimension_numbers = #tpu.dot_dimension_numbers<[1], [0], [0], [1], [0, 0, 1, 1], [], []>} : vector<64x384xbf16>, vector<384x128xbf16>, vector<64x128xf32> -> vector<64x128xf32>
    %36 = arith.addf %26, %35 : vector<64x128xf32>
    %cst_29 = arith.constant dense<0.000000e+00> : vector<128xf32>
    %37 = vector.multi_reduction <add>, %36, %cst_29 [0] : vector<64x128xf32> to vector<128xf32>
    %38 = vector.shape_cast %37 : vector<128xf32> to vector<1x128xf32>
    %39 = arith.mulf %36, %36 : vector<64x128xf32>
    %cst_30 = arith.constant dense<0.000000e+00> : vector<128xf32>
    %40 = vector.multi_reduction <add>, %39, %cst_30 [0] : vector<64x128xf32> to vector<128xf32>
    %41 = vector.shape_cast %40 : vector<128xf32> to vector<1x128xf32>
    %cst_31 = arith.constant 1.562500e-02 : f32
    %42 = vector.broadcast %cst_31 : f32 to vector<1x128xf32>
    %43 = arith.mulf %38, %42 : vector<1x128xf32>
    %cst_32 = arith.constant 1.562500e-02 : f32
    %44 = vector.broadcast %cst_32 : f32 to vector<1x128xf32>
    %45 = arith.mulf %41, %44 : vector<1x128xf32>
    %46 = arith.mulf %43, %43 : vector<1x128xf32>
    %47 = arith.subf %45, %46 : vector<1x128xf32>
    %cst_33 = arith.constant 0.000000e+00 : f32
    %48 = vector.broadcast %cst_33 : f32 to vector<1x128xf32>
    %49 = arith.maximumf %47, %48 : vector<1x128xf32>
    %50 = vector.broadcast %43 : vector<1x128xf32> to vector<64x128xf32>
    %51 = arith.subf %36, %50 : vector<64x128xf32>
    %cst_34 = arith.constant 9.99999974E-6 : f32
    %52 = vector.broadcast %cst_34 : f32 to vector<1x128xf32>
    %53 = arith.addf %49, %52 : vector<1x128xf32>
    %54 = math.rsqrt %53 : vector<1x128xf32>
    %55 = vector.broadcast %54 : vector<1x128xf32> to vector<64x128xf32>
    %56 = arith.mulf %51, %55 : vector<64x128xf32>
    %cst_35 = arith.constant 0.000000e+00 : f32
    %57 = vector.broadcast %cst_35 : f32 to vector<64x128xf32>
    %58 = arith.maximumf %56, %57 : vector<64x128xf32>
    %cst_36 = arith.constant 0.000000e+00 : bf16
    %59 = vector.broadcast %cst_36 : bf16 to vector<10x10x128xbf16>
    %c0_37 = arith.constant 0 : index
    %c0_38 = arith.constant 0 : index
    %c0_39 = arith.constant 0 : index
    %60 = vector.load %arg6[%c0_37, %c0_38, %c0_39] : memref<10x10x128xbf16, #tpu.memory_space<vmem>>, vector<10x10x128xbf16>
    tpu.vector_store %arg6[%c0_37, %c0_38, %c0_39], %59 {strides = array<i32>} : memref<10x10x128xbf16, #tpu.memory_space<vmem>>, vector<10x10x128xbf16>,
    %61 = vector.shape_cast %58 : vector<64x128xf32> to vector<8x8x128xf32>
    %62 = arith.truncf %61 : vector<8x8x128xf32> to vector<8x8x128xbf16>
    %c1_40 = arith.constant 1 : index
    %c1_41 = arith.constant 1 : index
    %c0_42 = arith.constant 0 : index
    %63 = vector.load %arg6[%c1_40, %c1_41, %c0_42] : memref<10x10x128xbf16, #tpu.memory_space<vmem>>, vector<8x8x128xbf16>
    tpu.vector_store %arg6[%c1_40, %c1_41, %c0_42], %62 {strides = array<i32>} : memref<10x10x128xbf16, #tpu.memory_space<vmem>>, vector<8x8x128xbf16>,
    %cst_43 = arith.constant 0.000000e+00 : f32
    %64 = vector.broadcast %cst_43 : f32 to vector<64x128xf32>
    %c0_44 = arith.constant 0 : index
    %c0_45 = arith.constant 0 : index
    %c0_46 = arith.constant 0 : index
    %65 = vector.load %arg6[%c0_44, %c0_45, %c0_46] : memref<10x10x128xbf16, #tpu.memory_space<vmem>>, vector<8x10x128xbf16>
    %66 = vector.extract_strided_slice %65 {offsets = [0, 0, 0], sizes = [8, 8, 128], strides = [1, 1, 1]} : vector<8x10x128xbf16> to vector<8x8x128xbf16>
    %67 = vector.extract_strided_slice %65 {offsets = [0, 1, 0], sizes = [8, 8, 128], strides = [1, 1, 1]} : vector<8x10x128xbf16> to vector<8x8x128xbf16>
    %68 = vector.extract_strided_slice %65 {offsets = [0, 2, 0], sizes = [8, 8, 128], strides = [1, 1, 1]} : vector<8x10x128xbf16> to vector<8x8x128xbf16>
    %69 = tpu.concatenate %66, %67, %68 in 2 : vector<8x8x128xbf16>, vector<8x8x128xbf16>, vector<8x8x128xbf16> -> vector<8x8x384xbf16>
    %70 = vector.shape_cast %69 : vector<8x8x384xbf16> to vector<64x384xbf16>
    %c0_47 = arith.constant 0 : index
    %c0_48 = arith.constant 0 : index
    %c0_49 = arith.constant 0 : index
    %71 = vector.load %arg3[%c0_47, %c0_48, %c0_49] : memref<3x384x128xbf16, #tpu.memory_space<vmem>>, vector<1x384x128xbf16>
    %72 = vector.shape_cast %71 : vector<1x384x128xbf16> to vector<384x128xbf16>
    %cst_50 = arith.constant dense<0.000000e+00> : vector<64x128xf32>
    %73 = tpu.matmul %70, %72, %cst_50 {dimension_numbers = #tpu.dot_dimension_numbers<[1], [0], [0], [1], [0, 0, 1, 1], [], []>} : vector<64x384xbf16>, vector<384x128xbf16>, vector<64x128xf32> -> vector<64x128xf32>
    %74 = arith.addf %64, %73 : vector<64x128xf32>
    %c1_51 = arith.constant 1 : index
    %c0_52 = arith.constant 0 : index
    %c0_53 = arith.constant 0 : index
    %75 = vector.load %arg6[%c1_51, %c0_52, %c0_53] : memref<10x10x128xbf16, #tpu.memory_space<vmem>>, vector<8x10x128xbf16>
    %76 = vector.extract_strided_slice %75 {offsets = [0, 0, 0], sizes = [8, 8, 128], strides = [1, 1, 1]} : vector<8x10x128xbf16> to vector<8x8x128xbf16>
    %77 = vector.extract_strided_slice %75 {offsets = [0, 1, 0], sizes = [8, 8, 128], strides = [1, 1, 1]} : vector<8x10x128xbf16> to vector<8x8x128xbf16>
    %78 = vector.extract_strided_slice %75 {offsets = [0, 2, 0], sizes = [8, 8, 128], strides = [1, 1, 1]} : vector<8x10x128xbf16> to vector<8x8x128xbf16>
    %79 = tpu.concatenate %76, %77, %78 in 2 : vector<8x8x128xbf16>, vector<8x8x128xbf16>, vector<8x8x128xbf16> -> vector<8x8x384xbf16>
    %80 = vector.shape_cast %79 : vector<8x8x384xbf16> to vector<64x384xbf16>
    %c1_54 = arith.constant 1 : index
    %c0_55 = arith.constant 0 : index
    %c0_56 = arith.constant 0 : index
    %81 = vector.load %arg3[%c1_54, %c0_55, %c0_56] : memref<3x384x128xbf16, #tpu.memory_space<vmem>>, vector<1x384x128xbf16>
    %82 = vector.shape_cast %81 : vector<1x384x128xbf16> to vector<384x128xbf16>
    %cst_57 = arith.constant dense<0.000000e+00> : vector<64x128xf32>
    %83 = tpu.matmul %80, %82, %cst_57 {dimension_numbers = #tpu.dot_dimension_numbers<[1], [0], [0], [1], [0, 0, 1, 1], [], []>} : vector<64x384xbf16>, vector<384x128xbf16>, vector<64x128xf32> -> vector<64x128xf32>
    %84 = arith.addf %74, %83 : vector<64x128xf32>
    %c2_58 = arith.constant 2 : index
    %c0_59 = arith.constant 0 : index
    %c0_60 = arith.constant 0 : index
    %85 = vector.load %arg6[%c2_58, %c0_59, %c0_60] : memref<10x10x128xbf16, #tpu.memory_space<vmem>>, vector<8x10x128xbf16>
    %86 = vector.extract_strided_slice %85 {offsets = [0, 0, 0], sizes = [8, 8, 128], strides = [1, 1, 1]} : vector<8x10x128xbf16> to vector<8x8x128xbf16>
    %87 = vector.extract_strided_slice %85 {offsets = [0, 1, 0], sizes = [8, 8, 128], strides = [1, 1, 1]} : vector<8x10x128xbf16> to vector<8x8x128xbf16>
    %88 = vector.extract_strided_slice %85 {offsets = [0, 2, 0], sizes = [8, 8, 128], strides = [1, 1, 1]} : vector<8x10x128xbf16> to vector<8x8x128xbf16>
    %89 = tpu.concatenate %86, %87, %88 in 2 : vector<8x8x128xbf16>, vector<8x8x128xbf16>, vector<8x8x128xbf16> -> vector<8x8x384xbf16>
    %90 = vector.shape_cast %89 : vector<8x8x384xbf16> to vector<64x384xbf16>
    %c2_61 = arith.constant 2 : index
    %c0_62 = arith.constant 0 : index
    %c0_63 = arith.constant 0 : index
    %91 = vector.load %arg3[%c2_61, %c0_62, %c0_63] : memref<3x384x128xbf16, #tpu.memory_space<vmem>>, vector<1x384x128xbf16>
    %92 = vector.shape_cast %91 : vector<1x384x128xbf16> to vector<384x128xbf16>
    %cst_64 = arith.constant dense<0.000000e+00> : vector<64x128xf32>
    %93 = tpu.matmul %90, %92, %cst_64 {dimension_numbers = #tpu.dot_dimension_numbers<[1], [0], [0], [1], [0, 0, 1, 1], [], []>} : vector<64x384xbf16>, vector<384x128xbf16>, vector<64x128xf32> -> vector<64x128xf32>
    %94 = arith.addf %84, %93 : vector<64x128xf32>
    %cst_65 = arith.constant dense<0.000000e+00> : vector<128xf32>
    %95 = vector.multi_reduction <add>, %94, %cst_65 [0] : vector<64x128xf32> to vector<128xf32>
    %96 = vector.shape_cast %95 : vector<128xf32> to vector<1x128xf32>
    %97 = arith.mulf %94, %94 : vector<64x128xf32>
    %cst_66 = arith.constant dense<0.000000e+00> : vector<128xf32>
    %98 = vector.multi_reduction <add>, %97, %cst_66 [0] : vector<64x128xf32> to vector<128xf32>
    %99 = vector.shape_cast %98 : vector<128xf32> to vector<1x128xf32>
    %cst_67 = arith.constant 1.562500e-02 : f32
    %100 = vector.broadcast %cst_67 : f32 to vector<1x128xf32>
    %101 = arith.mulf %96, %100 : vector<1x128xf32>
    %cst_68 = arith.constant 1.562500e-02 : f32
    %102 = vector.broadcast %cst_68 : f32 to vector<1x128xf32>
    %103 = arith.mulf %99, %102 : vector<1x128xf32>
    %104 = arith.mulf %101, %101 : vector<1x128xf32>
    %105 = arith.subf %103, %104 : vector<1x128xf32>
    %cst_69 = arith.constant 0.000000e+00 : f32
    %106 = vector.broadcast %cst_69 : f32 to vector<1x128xf32>
    %107 = arith.maximumf %105, %106 : vector<1x128xf32>
    %108 = vector.broadcast %101 : vector<1x128xf32> to vector<64x128xf32>
    %109 = arith.subf %94, %108 : vector<64x128xf32>
    %cst_70 = arith.constant 9.99999974E-6 : f32
    %110 = vector.broadcast %cst_70 : f32 to vector<1x128xf32>
    %111 = arith.addf %107, %110 : vector<1x128xf32>
    %112 = math.rsqrt %111 : vector<1x128xf32>
    %113 = vector.broadcast %112 : vector<1x128xf32> to vector<64x128xf32>
    %114 = arith.mulf %109, %113 : vector<64x128xf32>
    %c0_71 = arith.constant 0 : index
    %c0_72 = arith.constant 0 : index
    %c0_73 = arith.constant 0 : index
    %c0_74 = arith.constant 0 : index
    %115 = vector.load %arg1[%c0_71, %c0_72, %c0_73, %c0_74] : memref<1x8x8x128xf32, #tpu.memory_space<vmem>>, vector<1x8x8x128xf32>
    %116 = vector.shape_cast %115 : vector<1x8x8x128xf32> to vector<8x8x128xf32>
    %117 = vector.shape_cast %116 : vector<8x8x128xf32> to vector<64x128xf32>
    %118 = arith.addf %114, %117 : vector<64x128xf32>
    %cst_75 = arith.constant 0.000000e+00 : f32
    %119 = vector.broadcast %cst_75 : f32 to vector<64x128xf32>
    %120 = arith.maximumf %118, %119 : vector<64x128xf32>
    %121 = vector.shape_cast %120 : vector<64x128xf32> to vector<8x8x128xf32>
    %c0_76 = arith.constant 0 : index
    %c0_77 = arith.constant 0 : index
    %c0_78 = arith.constant 0 : index
    %c0_79 = arith.constant 0 : index
    %122 = vector.load %arg4[%c0_76, %c0_77, %c0_78, %c0_79] : memref<1x8x8x128xf32, #tpu.memory_space<vmem>>, vector<1x8x8x128xf32>
    %123 = vector.shape_cast %122 : vector<1x8x8x128xf32> to vector<8x8x128xf32>
    %124 = vector.shape_cast %121 : vector<8x8x128xf32> to vector<1x8x8x128xf32>
    tpu.vector_store %arg4[%c0_76, %c0_77, %c0_78, %c0_79], %124 {strides = array<i32>} : memref<1x8x8x128xf32, #tpu.memory_space<vmem>>, vector<1x8x8x128xf32>,
    return
  }
  func.func @transform_0(%arg0: i32) -> (i32, i32, i32, i32) {
    %c0_i32 = arith.constant 0 : i32
    %c0_i32_0 = arith.constant 0 : i32
    %c0_i32_1 = arith.constant 0 : i32
    %c0_i32_2 = arith.constant 0 : i32
    return %arg0, %c0_i32, %c0_i32_0, %c0_i32_1 : i32, i32, i32, i32
  }
  func.func @transform_1(%arg0: i32) -> (i32, i32, i32) {
    %c0_i32 = arith.constant 0 : i32
    %c0_i32_0 = arith.constant 0 : i32
    %c0_i32_1 = arith.constant 0 : i32
    %c0_i32_2 = arith.constant 0 : i32
    return %c0_i32, %c0_i32_0, %c0_i32_1 : i32, i32, i32
  }
  func.func @transform_2(%arg0: i32) -> (i32, i32, i32) {
    %c0_i32 = arith.constant 0 : i32
    %c0_i32_0 = arith.constant 0 : i32
    %c0_i32_1 = arith.constant 0 : i32
    %c0_i32_2 = arith.constant 0 : i32
    return %c0_i32, %c0_i32_0, %c0_i32_1 : i32, i32, i32
  }
  func.func @transform_3(%arg0: i32) -> (i32, i32, i32, i32) {
    %c0_i32 = arith.constant 0 : i32
    %c0_i32_0 = arith.constant 0 : i32
    %c0_i32_1 = arith.constant 0 : i32
    %c0_i32_2 = arith.constant 0 : i32
    return %arg0, %c0_i32, %c0_i32_0, %c0_i32_1 : i32, i32, i32, i32
  }
}

</mosaic_0001>

<llo_original>
// kernel: resnet_layer_forward.3
$region0: #{resnet_layer_forward.3}
  #allocation0 [shape = 'u32[]', space=smem, size = 0x4, offset = 0x4, fixed_abs, tag = 'smem constant byte address 0x4 - core index']
  #allocation1 [shape = 'u32[144,128]{1,0:T(1,128)}', space=vmem, size = 0x12000, scoped, tag = 'internal scratch']
  #allocation2 [shape = 'bf16[10,10,128]{2,1,0:T(8,128)(2,1)}', space=vmem, size = 0xa000, scoped, tag = 'scratch operand']
  #allocation3 [shape = 'bf16[10,10,128]{2,1,0:T(8,128)(2,1)}', space=vmem, size = 0xa000, scoped, tag = 'scratch operand']
  %s0 = inlined_call_operand.vmem [shape: f32[2,8,8,128], index: 0, kind: input, shape index: {}]
  %s1 = inlined_call_operand.vmem [shape: bf16[3,384,128], index: 1, kind: input, shape index: {}]
  %s2 = inlined_call_operand.vmem [shape: bf16[3,384,128], index: 2, kind: input, shape index: {}]
  %s3 = inlined_call_operand.hbm [shape: f32[2,8,8,128], index: 3, kind: output, shape index: {}]
  %s4 = sld [smem:[#allocation0]]
  $region45: #{resnet_layer_forward.3} parent=0
    _
  %s6 = ssub.s32 1, %s4
  %s7 = scalar_select 0, %s6, %s4
  $region1: #{resnet_layer_forward.3} parent=0
    #allocation4 [shape = 'u8[65536]{0}', space=vmem, size = 0x10000, scoped, tag = 'output window, operand 0']
    #allocation5 [shape = 's32[2]{0}', space=sflag, size = 0x8, scoped, tag = 'scoped memory for resnet_layer_forward.3']
    %8 = vsyncpa [#allocation5], 0
    %s9 = scalar_lea.sflag [#allocation5], 1
    %10 = vsyncpa %s9, 0
    loop: start=0, step=1, limit=4
    $region2: #{resnet_layer_forward.3} parent=1 // loop_pre_header
      _
    $region3: #{resnet_layer_forward.3} parent=1 // loop_header
      %s12 = sphi 0, %s16
      %p13 = scmp.ge.s32.totalorder %s12, 4
      %s22 = sphi 0, %s24
      %s25 = sphi 0, %s22
      %s26 = sphi 0, %s25
      %s42 = sphi 0, %s26
      %s46 = sphi 0, %s46
      %s48 = sphi 0, %s46
      %s49 = sphi 0, %s48
      %s63 = sphi 0, %s49
      %s67 = sphi 0, %s67
      %s69 = sphi 0, %s67
      %s70 = sphi 0, %s69
      %s84 = sphi 0, %s70
      %s90 = sphi 0, %s92
      %s93 = sphi 0, %s90
      %s94 = sphi 0, %s93
      %s110 = sphi 0, %s94
    $region4: #{resnet_layer_forward.3} parent=1 // loop_header_branch
      %15 = sbr.rel (%p13) target = $region8
    $region5: #{resnet_layer_forward.3} parent=1 // loop_body
      %s17 = ssub.s32 %s12, 1
      %s18 = ssub.s32 %s12, 2
      %s19 = sadd.s32 %s12, 1
      %s20 = ssub.s32 %s12, %s19
      %p21 = scmp.eq.s32.totalorder %s20, 0
      %s23 = sadd.s32 %s22, 1
      %s24 = scalar_select %p21, %s22, %s23
      %p27 = pneg %p21
      %p28 = scmp.eq.s32.totalorder %s12, 1
      %p29 = por %p27, %p28
      %p30 = scmp.ne.s32.totalorder %s22, %s25
      %p31 = scmp.eq.s32.totalorder %s12, 0
      %p32 = por %p30, %p31
      %p33 = scmp.ne.s32.totalorder %s22, %s25
      %p34 = scmp.eq.s32.totalorder %s17, 1
      %p35 = por %p33, %p34
      %p36 = scmp.ne.s32.totalorder %s25, %s26
      %p37 = scmp.eq.s32.totalorder %s17, 0
      %p38 = por %p36, %p37
      %p39 = scmp.ne.s32.totalorder %s25, %s26
      %p40 = scmp.eq.s32.totalorder %s18, 1
      %p41 = por %p39, %p40
      %p43 = scmp.ne.s32.totalorder %s26, %s42
      %p44 = scmp.eq.s32.totalorder %s18, 0
      %p45 = por %p43, %p44
      %s47 = sadd.s32 %s46, 1
      %p50 = scmp.eq.s32.totalorder %s12, 1
      %p51 = scmp.ne.s32.totalorder %s46, %s48
      %p52 = scmp.eq.s32.totalorder %s12, 0
      %p53 = por %p51, %p52
      %p54 = scmp.ne.s32.totalorder %s46, %s48
      %p55 = scmp.eq.s32.totalorder %s17, 1
      %p56 = por %p54, %p55
      %p57 = scmp.ne.s32.totalorder %s48, %s49
      %p58 = scmp.eq.s32.totalorder %s17, 0
      %p59 = por %p57, %p58
      %p60 = scmp.ne.s32.totalorder %s48, %s49
      %p61 = scmp.eq.s32.totalorder %s18, 1
      %p62 = por %p60, %p61
      %p64 = scmp.ne.s32.totalorder %s49, %s63
      %p65 = scmp.eq.s32.totalorder %s18, 0
      %p66 = por %p64, %p65
      %s68 = sadd.s32 %s67, 1
      %p71 = scmp.eq.s32.totalorder %s12, 1
      %p72 = scmp.ne.s32.totalorder %s67, %s69
      %p73 = scmp.eq.s32.totalorder %s12, 0
      %p74 = por %p72, %p73
      %p75 = scmp.ne.s32.totalorder %s67, %s69
      %p76 = scmp.eq.s32.totalorder %s17, 1
      %p77 = por %p75, %p76
      %p78 = scmp.ne.s32.totalorder %s69, %s70
      %p79 = scmp.eq.s32.totalorder %s17, 0
      %p80 = por %p78, %p79
      %p81 = scmp.ne.s32.totalorder %s69, %s70
      %p82 = scmp.eq.s32.totalorder %s18, 1
      %p83 = por %p81, %p82
      %p85 = scmp.ne.s32.totalorder %s70, %s84
      %p86 = scmp.eq.s32.totalorder %s18, 0
      %p87 = por %p85, %p86
      %s88 = ssub.s32 %s12, %s19
      %p89 = scmp.eq.s32.totalorder %s88, 0
      %s91 = sadd.s32 %s90, 1
      %s92 = scalar_select %p89, %s90, %s91
      %p95 = pneg %p89
      %p96 = scmp.eq.s32.totalorder %s12, 1
      %p97 = por %p95, %p96
      %p98 = scmp.ne.s32.totalorder %s90, %s93
      %p99 = scmp.eq.s32.totalorder %s12, 0
      %p100 = por %p98, %p99
      %p101 = scmp.ne.s32.totalorder %s90, %s93
      %p102 = scmp.eq.s32.totalorder %s17, 1
      %p103 = por %p101, %p102
      %p104 = scmp.ne.s32.totalorder %s93, %s94
      %p105 = scmp.eq.s32.totalorder %s17, 0
      %p106 = por %p104, %p105
      %p107 = scmp.ne.s32.totalorder %s93, %s94
      %p108 = scmp.eq.s32.totalorder %s18, 1
      %p109 = por %p107, %p108
      %p111 = scmp.ne.s32.totalorder %s94, %s110
      %p112 = scmp.eq.s32.totalorder %s18, 0
      %p113 = por %p111, %p112
      %p114 = scmp.le.s32.totalorder 1, %s12
      %p115 = scmp.lt.s32.totalorder %s12, 3
      %p116 = pnand %p114, %p115
      %p117 = pneg %p116
      // Predicated region
      $region9: #{resnet_layer_forward.3} parent=5 // pred_check
        _
      $region10: #{resnet_layer_forward.3} parent=5 // pred_check_branch
        %119 = sbr.rel (%p116) target = $region12
      $region11: #{resnet_layer_forward.3} parent=5 // pred_region
        %s120 = ssub.s32 %s12, 1
        // Predicated region
        $region13: #{resnet_layer_forward.3} parent=11 // pred_check
          %p121 = pneg %p59
        $region14: #{resnet_layer_forward.3} parent=11 // pred_check_branch
          %123 = sbr.rel (%p121) target = $region16
        $region15: #{resnet_layer_forward.3} parent=11 // pred_region
          _
        $region16: #{resnet_layer_forward.3} parent=11 // pred_fallthru
          _
        // Predicated region
        $region17: #{resnet_layer_forward.3} parent=11 // pred_check
          %p124 = pneg %p80
        $region18: #{resnet_layer_forward.3} parent=11 // pred_check_branch
          %126 = sbr.rel (%p124) target = $region20
        $region19: #{resnet_layer_forward.3} parent=11 // pred_region
          _
        $region20: #{resnet_layer_forward.3} parent=11 // pred_fallthru
          _
      $region12: #{resnet_layer_forward.3} parent=5 // pred_fallthru
        _
      %p127 = scmp.lt.s32.totalorder %s12, 2
      // Predicated region
      $region21: #{resnet_layer_forward.3} parent=5 // pred_check
        %p128 = pneg %p127
      $region22: #{resnet_layer_forward.3} parent=5 // pred_check_branch
        %130 = sbr.rel (%p128) target = $region24
      $region23: #{resnet_layer_forward.3} parent=5 // pred_region
        // Predicated region
        $region25: #{resnet_layer_forward.3} parent=23 // pred_check
          %p131 = pneg %p32
        $region26: #{resnet_layer_forward.3} parent=23 // pred_check_branch
          %133 = sbr.rel (%p131) target = $region28
        $region27: #{resnet_layer_forward.3} parent=23 // pred_region
          %p134 = scmp.lt.s32.totalorder %s12, 1
          %s135 = scalar_select %p134, %s12, 1
          %s136 = smul.addr %s135, 8
          %s137 = smul.addr %s136, 8
          %s138 = scalar_lea.vmem %s0, %s137
        $region28: #{resnet_layer_forward.3} parent=23 // pred_fallthru
          _
      $region24: #{resnet_layer_forward.3} parent=5 // pred_fallthru
        _
      %p139 = scmp.le.s32.totalorder 1, %s12
      %p140 = scmp.lt.s32.totalorder %s12, 3
      %p141 = pnand %p139, %p140
      %p142 = pneg %p141
      // Predicated region
      $region29: #{resnet_layer_forward.3} parent=5 // pred_check
        _
      $region30: #{resnet_layer_forward.3} parent=5 // pred_check_branch
        %144 = sbr.rel (%p141) target = $region32
      $region31: #{resnet_layer_forward.3} parent=5 // pred_region
        %s145 = ssub.s32 %s12, 1
        %p146 = scmp.lt.s32.totalorder %s17, 1
        %s147 = scalar_select %p146, %s17, 1
        %s148 = smul.addr %s147, 8
        %s149 = smul.addr %s148, 8
        %s150 = scalar_lea.vmem %s0, %s149
        %p151 = pneg %p38
        %p152 = pneg %p35
        %p153 = pneg %p59
        %p154 = pneg %p56
        %p155 = pneg %p80
        %p156 = pneg %p77
        %p157 = pneg %p106
        %p158 = pneg %p103
        %s159 = sand.u32 %s93, 1
        %s160 = scalar_lea.sflag [#allocation5], %s159
        %s161 = sand.u32 %s93, 1
        %s162 = smul.addr %s161, 64
        %s163 = scalar_lea.vmem [#allocation4], %s162
        %p164 = scmp.lt.s32.totalorder %s17, 1
        %s165 = scalar_select %p164, %s17, 1
        %s166 = smul.addr %s165, 8
        %s167 = smul.addr %s166, 8
        %s168 = scalar_lea.vmem %s0, %s167
        %170 = vst [vmem:[#allocation2] sm:$0xf] 0
        %171 = vst [vmem:[#allocation2 + $0x4] sm:$0x1] 0
        %172 = vst [vmem:[#allocation2 + $0x8] sm:$0xf] 0
        %173 = vst [vmem:[#allocation2 + $0xc] sm:$0x1] 0
        %174 = vst [vmem:[#allocation2 + $0x10] sm:$0xf] 0
        %175 = vst [vmem:[#allocation2 + $0x14] sm:$0x1] 0
        %176 = vst [vmem:[#allocation2 + $0x18] sm:$0xf] 0
        %177 = vst [vmem:[#allocation2 + $0x1c] sm:$0x1] 0
        %178 = vst [vmem:[#allocation2 + $0x20] sm:$0xf] 0
        %179 = vst [vmem:[#allocation2 + $0x24] sm:$0x1] 0
        %180 = vst [vmem:[#allocation2 + $0x28] sm:$0xf] 0
        %181 = vst [vmem:[#allocation2 + $0x2c] sm:$0x1] 0
        %182 = vst [vmem:[#allocation2 + $0x30] sm:$0xf] 0
        %183 = vst [vmem:[#allocation2 + $0x34] sm:$0x1] 0
        %184 = vst [vmem:[#allocation2 + $0x38] sm:$0xf] 0
        %185 = vst [vmem:[#allocation2 + $0x3c] sm:$0x1] 0
        %186 = vst [vmem:[#allocation2 + $0x40] sm:$0xf] 0
        %187 = vst [vmem:[#allocation2 + $0x44] sm:$0x1] 0
        %188 = vst [vmem:[#allocation2 + $0x48] sm:$0xf] 0
        %189 = vst [vmem:[#allocation2 + $0x4c] sm:$0x1] 0
        %v190 = vld [vmem:[%s168] sm:$0xff]
        %v191 = vld [vmem:[%s168 + $0x8] sm:$0xff]
        %v192 = vld [vmem:[%s168 + $0x10] sm:$0xff]
        %v193 = vld [vmem:[%s168 + $0x18] sm:$0xff]
        %v194 = vld [vmem:[%s168 + $0x20] sm:$0xff]
        %v195 = vld [vmem:[%s168 + $0x28] sm:$0xff]
        %v196 = vld [vmem:[%s168 + $0x30] sm:$0xff]
        %v197 = vld [vmem:[%s168 + $0x38] sm:$0xff]
        %v198 = vpack.c.bf16 %v190, %v190
        %v199 = vpack.c.bf16 %v191, %v191
        %v200 = vpack.c.bf16 %v192, %v192
        %v201 = vpack.c.bf16 %v193, %v193
        %v202 = vpack.c.bf16 %v194, %v194
        %v203 = vpack.c.bf16 %v195, %v195
        %v204 = vpack.c.bf16 %v196, %v196
        %v205 = vpack.c.bf16 %v197, %v197
        %v214 = vunpack.c.l.b16 %v198
        %v215 = vunpack.c.l.b16 %v199
        %v216 = vunpack.c.l.b16 %v200
        %v217 = vunpack.c.l.b16 %v201
        %v218 = vunpack.c.l.b16 %v202
        %v219 = vunpack.c.l.b16 %v203
        %v220 = vunpack.c.l.b16 %v204
        %v221 = vunpack.c.l.b16 %v205
        %v222 = vpack.c.b16 %v214, %v214
        %v223 = vpack.c.b16 %v215, %v215
        %v224 = vpack.c.b16 %v216, %v216
        %v225 = vpack.c.b16 %v217, %v217
        %v226 = vpack.c.b16 %v218, %v218
        %v227 = vpack.c.b16 %v219, %v219
        %v228 = vpack.c.b16 %v220, %v220
        %v229 = vpack.c.b16 %v221, %v221
        %v231 = vshrl.u32 %v222, 16
        %v233 = vrot.slane %v231, 7
        %v234 = vshll.u32 %v222, 16
        %v236 = vor.u32 %v233, %v234
        %v237 = vrot.slane %v233, 4
        %v239 = vshrl.u32 %v223, 16
        %v241 = vrot.slane %v239, 7
        %v242 = vshll.u32 %v223, 16
        %v244 = vor.u32 %v241, %v242
        %v245 = vrot.slane %v241, 4
        %v247 = vshrl.u32 %v224, 16
        %v249 = vrot.slane %v247, 7
        %v250 = vshll.u32 %v224, 16
        %v252 = vor.u32 %v249, %v250
        %v253 = vrot.slane %v249, 4
        %v255 = vshrl.u32 %v225, 16
        %v257 = vrot.slane %v255, 7
        %v258 = vshll.u32 %v225, 16
        %v260 = vor.u32 %v257, %v258
        %v261 = vrot.slane %v257, 4
        %v263 = vshrl.u32 %v226, 16
        %v265 = vrot.slane %v263, 7
        %v266 = vshll.u32 %v226, 16
        %v268 = vor.u32 %v265, %v266
        %v269 = vrot.slane %v265, 4
        %v271 = vshrl.u32 %v227, 16
        %v273 = vrot.slane %v271, 7
        %v274 = vshll.u32 %v227, 16
        %v276 = vor.u32 %v273, %v274
        %v277 = vrot.slane %v273, 4
        %v279 = vshrl.u32 %v228, 16
        %v281 = vrot.slane %v279, 7
        %v282 = vshll.u32 %v228, 16
        %v284 = vor.u32 %v281, %v282
        %v285 = vrot.slane %v281, 4
        %v287 = vshrl.u32 %v229, 16
        %v289 = vrot.slane %v287, 7
        %v290 = vshll.u32 %v229, 16
        %v292 = vor.u32 %v289, %v290
        %v293 = vrot.slane %v289, 4
        %s310 = scalar_lea.vmem [#allocation2], 8
        %vm311 = vcmask 1043456
        %vm312 = vsmask.f32 7938
        %vm313 = vmand %vm311, %vm312
        %v314 = vld [vmem:[%s310] sm:$0xf]
        %v315 = vsel %vm313, %v236, %v314
        %316 = vst [vmem:[%s310] sm:$0xf] %v315
        %vm317 = vcmask 1040384
        %vm318 = vsmask.f32 256
        %vm319 = vmand %vm317, %vm318
        %v320 = vld [vmem:[%s310 + $0x4] sm:$0x1]
        %v321 = vsel %vm319, %v237, %v320
        %322 = vst [vmem:[%s310 + $0x4] sm:$0x1] %v321
        %v323 = vld [vmem:[%s310 + $0x8] sm:$0xf]
        %v324 = vsel %vm313, %v244, %v323
        %325 = vst [vmem:[%s310 + $0x8] sm:$0xf] %v324
        %v326 = vld [vmem:[%s310 + $0xc] sm:$0x1]
        %v327 = vsel %vm319, %v245, %v326
        %328 = vst [vmem:[%s310 + $0xc] sm:$0x1] %v327
        %v329 = vld [vmem:[%s310 + $0x10] sm:$0xf]
        %v330 = vsel %vm313, %v252, %v329
        %331 = vst [vmem:[%s310 + $0x10] sm:$0xf] %v330
        %v332 = vld [vmem:[%s310 + $0x14] sm:$0x1]
        %v333 = vsel %vm319, %v253, %v332
        %334 = vst [vmem:[%s310 + $0x14] sm:$0x1] %v333
        %v335 = vld [vmem:[%s310 + $0x18] sm:$0xf]
        %v336 = vsel %vm313, %v260, %v335
        %337 = vst [vmem:[%s310 + $0x18] sm:$0xf] %v336
        %v338 = vld [vmem:[%s310 + $0x1c] sm:$0x1]
        %v339 = vsel %vm319, %v261, %v338
        %340 = vst [vmem:[%s310 + $0x1c] sm:$0x1] %v339
        %v341 = vld [vmem:[%s310 + $0x20] sm:$0xf]
        %v342 = vsel %vm313, %v268, %v341
        %343 = vst [vmem:[%s310 + $0x20] sm:$0xf] %v342
        %v344 = vld [vmem:[%s310 + $0x24] sm:$0x1]
        %v345 = vsel %vm319, %v269, %v344
        %346 = vst [vmem:[%s310 + $0x24] sm:$0x1] %v345
        %v347 = vld [vmem:[%s310 + $0x28] sm:$0xf]
        %v348 = vsel %vm313, %v276, %v347
        %349 = vst [vmem:[%s310 + $0x28] sm:$0xf] %v348
        %v350 = vld [vmem:[%s310 + $0x2c] sm:$0x1]
        %v351 = vsel %vm319, %v277, %v350
        %352 = vst [vmem:[%s310 + $0x2c] sm:$0x1] %v351
        %v353 = vld [vmem:[%s310 + $0x30] sm:$0xf]
        %v354 = vsel %vm313, %v284, %v353
        %355 = vst [vmem:[%s310 + $0x30] sm:$0xf] %v354
        %v356 = vld [vmem:[%s310 + $0x34] sm:$0x1]
        %v357 = vsel %vm319, %v285, %v356
        %358 = vst [vmem:[%s310 + $0x34] sm:$0x1] %v357
        %v359 = vld [vmem:[%s310 + $0x38] sm:$0xf]
        %v360 = vsel %vm313, %v292, %v359
        %361 = vst [vmem:[%s310 + $0x38] sm:$0xf] %v360
        %v362 = vld [vmem:[%s310 + $0x3c] sm:$0x1]
        %v363 = vsel %vm319, %v293, %v362
        %364 = vst [vmem:[%s310 + $0x3c] sm:$0x1] %v363
        %v365 = vld [vmem:[#allocation2] sm:$0xf]
        %v366 = vld [vmem:[#allocation2 + $0x4] sm:$0x1]
        %v367 = vld [vmem:[#allocation2 + $0x8] sm:$0xf]
        %v368 = vld [vmem:[#allocation2 + $0xc] sm:$0x1]
        %v369 = vld [vmem:[#allocation2 + $0x10] sm:$0xf]
        %v370 = vld [vmem:[#allocation2 + $0x14] sm:$0x1]
        %v371 = vld [vmem:[#allocation2 + $0x18] sm:$0xf]
        %v372 = vld [vmem:[#allocation2 + $0x1c] sm:$0x1]
        %v373 = vld [vmem:[#allocation2 + $0x20] sm:$0xf]
        %v374 = vld [vmem:[#allocation2 + $0x24] sm:$0x1]
        %v375 = vld [vmem:[#allocation2 + $0x28] sm:$0xf]
        %v376 = vld [vmem:[#allocation2 + $0x2c] sm:$0x1]
        %v377 = vld [vmem:[#allocation2 + $0x30] sm:$0xf]
        %v378 = vld [vmem:[#allocation2 + $0x34] sm:$0x1]
        %v379 = vld [vmem:[#allocation2 + $0x38] sm:$0xf]
        %v380 = vld [vmem:[#allocation2 + $0x3c] sm:$0x1]
        %v397 = vunpack.c.l.b16 %v365
        %v398 = vunpack.c.l.b16 %v366
        %v399 = vunpack.c.l.b16 %v367
        %v400 = vunpack.c.l.b16 %v368
        %v401 = vunpack.c.l.b16 %v369
        %v402 = vunpack.c.l.b16 %v370
        %v403 = vunpack.c.l.b16 %v371
        %v404 = vunpack.c.l.b16 %v372
        %v405 = vunpack.c.l.b16 %v373
        %v406 = vunpack.c.l.b16 %v374
        %v407 = vunpack.c.l.b16 %v375
        %v408 = vunpack.c.l.b16 %v376
        %v409 = vunpack.c.l.b16 %v377
        %v410 = vunpack.c.l.b16 %v378
        %v411 = vunpack.c.l.b16 %v379
        %v412 = vunpack.c.l.b16 %v380
        %v413 = vpack.c.b16 %v398, %v397
        %v414 = vpack.c.b16 %v400, %v399
        %v415 = vpack.c.b16 %v402, %v401
        %v416 = vpack.c.b16 %v404, %v403
        %v417 = vpack.c.b16 %v406, %v405
        %v418 = vpack.c.b16 %v408, %v407
        %v419 = vpack.c.b16 %v410, %v409
        %v420 = vpack.c.b16 %v412, %v411
        %v422 = vshrl.u32 %v413, 16
        %v424 = vshll.u32 %v413, 16
        %v426 = vrot.slane %v424, 1
        %v427 = vor.u32 %v422, %v426
        %v429 = vshrl.u32 %v414, 16
        %v431 = vshll.u32 %v414, 16
        %v433 = vrot.slane %v431, 1
        %v434 = vor.u32 %v429, %v433
        %v436 = vshrl.u32 %v415, 16
        %v438 = vshll.u32 %v415, 16
        %v440 = vrot.slane %v438, 1
        %v441 = vor.u32 %v436, %v440
        %v443 = vshrl.u32 %v416, 16
        %v445 = vshll.u32 %v416, 16
        %v447 = vrot.slane %v445, 1
        %v448 = vor.u32 %v443, %v447
        %v450 = vshrl.u32 %v417, 16
        %v452 = vshll.u32 %v417, 16
        %v454 = vrot.slane %v452, 1
        %v455 = vor.u32 %v450, %v454
        %v457 = vshrl.u32 %v418, 16
        %v459 = vshll.u32 %v418, 16
        %v461 = vrot.slane %v459, 1
        %v462 = vor.u32 %v457, %v461
        %v464 = vshrl.u32 %v419, 16
        %v466 = vshll.u32 %v419, 16
        %v468 = vrot.slane %v466, 1
        %v469 = vor.u32 %v464, %v468
        %v471 = vshrl.u32 %v420, 16
        %v473 = vshll.u32 %v420, 16
        %v475 = vrot.slane %v473, 1
        %v476 = vor.u32 %v471, %v475
        %v477 = vrot.slane %v413, 1
        %v478 = vrot.slane %v414, 1
        %v479 = vrot.slane %v415, 1
        %v480 = vrot.slane %v416, 1
        %v481 = vrot.slane %v417, 1
        %v482 = vrot.slane %v418, 1
        %v483 = vrot.slane %v419, 1
        %v484 = vrot.slane %v420, 1
        %v485 = vunpack.c.l.b16 %v427
        %v486 = vunpack.c.l.b16 %v477
        %v487 = vunpack.c.l.b16 %v434
        %v488 = vunpack.c.l.b16 %v478
        %v489 = vunpack.c.l.b16 %v441
        %v490 = vunpack.c.l.b16 %v479
        %v491 = vunpack.c.l.b16 %v448
        %v492 = vunpack.c.l.b16 %v480
        %v493 = vunpack.c.l.b16 %v455
        %v494 = vunpack.c.l.b16 %v481
        %v495 = vunpack.c.l.b16 %v462
        %v496 = vunpack.c.l.b16 %v482
        %v497 = vunpack.c.l.b16 %v469
        %v498 = vunpack.c.l.b16 %v483
        %v499 = vunpack.c.l.b16 %v476
        %v500 = vunpack.c.l.b16 %v484
        %v501 = vld [vmem:[%s1] sm:$0xf]
        %v502 = vld [vmem:[%s1 + $0x4] sm:$0xf]
        %v503 = vld [vmem:[%s1 + $0x8] sm:$0xf]
        %v504 = vld [vmem:[%s1 + $0xc] sm:$0xf]
        %v505 = vld [vmem:[%s1 + $0x10] sm:$0xf]
        %v506 = vld [vmem:[%s1 + $0x14] sm:$0xf]
        %v507 = vld [vmem:[%s1 + $0x18] sm:$0xf]
        %v508 = vld [vmem:[%s1 + $0x1c] sm:$0xf]
        %v509 = vld [vmem:[%s1 + $0x20] sm:$0xf]
        %v510 = vld [vmem:[%s1 + $0x24] sm:$0xf]
        %v511 = vld [vmem:[%s1 + $0x28] sm:$0xf]
        %v512 = vld [vmem:[%s1 + $0x2c] sm:$0xf]
        %v513 = vld [vmem:[%s1 + $0x30] sm:$0xf]
        %v514 = vld [vmem:[%s1 + $0x34] sm:$0xf]
        %v515 = vld [vmem:[%s1 + $0x38] sm:$0xf]
        %v516 = vld [vmem:[%s1 + $0x3c] sm:$0xf]
        %v517 = vld [vmem:[%s1 + $0x40] sm:$0xf]
        %v518 = vld [vmem:[%s1 + $0x44] sm:$0xf]
        %v519 = vld [vmem:[%s1 + $0x48] sm:$0xf]
        %v520 = vld [vmem:[%s1 + $0x4c] sm:$0xf]
        %v521 = vld [vmem:[%s1 + $0x50] sm:$0xf]
        %v522 = vld [vmem:[%s1 + $0x54] sm:$0xf]
        %v523 = vld [vmem:[%s1 + $0x58] sm:$0xf]
        %v524 = vld [vmem:[%s1 + $0x5c] sm:$0xf]
        %v525 = vld [vmem:[%s1 + $0x60] sm:$0xf]
        %v526 = vld [vmem:[%s1 + $0x64] sm:$0xf]
        %v527 = vld [vmem:[%s1 + $0x68] sm:$0xf]
        %v528 = vld [vmem:[%s1 + $0x6c] sm:$0xf]
        %v529 = vld [vmem:[%s1 + $0x70] sm:$0xf]
        %v530 = vld [vmem:[%s1 + $0x74] sm:$0xf]
        %v531 = vld [vmem:[%s1 + $0x78] sm:$0xf]
        %v532 = vld [vmem:[%s1 + $0x7c] sm:$0xf]
        %v533 = vld [vmem:[%s1 + $0x80] sm:$0xf]
        %v534 = vld [vmem:[%s1 + $0x84] sm:$0xf]
        %v535 = vld [vmem:[%s1 + $0x88] sm:$0xf]
        %v536 = vld [vmem:[%s1 + $0x8c] sm:$0xf]
        %v537 = vld [vmem:[%s1 + $0x90] sm:$0xf]
        %v538 = vld [vmem:[%s1 + $0x94] sm:$0xf]
        %v539 = vld [vmem:[%s1 + $0x98] sm:$0xf]
        %v540 = vld [vmem:[%s1 + $0x9c] sm:$0xf]
        %v541 = vld [vmem:[%s1 + $0xa0] sm:$0xf]
        %v542 = vld [vmem:[%s1 + $0xa4] sm:$0xf]
        %v543 = vld [vmem:[%s1 + $0xa8] sm:$0xf]
        %v544 = vld [vmem:[%s1 + $0xac] sm:$0xf]
        %v545 = vld [vmem:[%s1 + $0xb0] sm:$0xf]
        %v546 = vld [vmem:[%s1 + $0xb4] sm:$0xf]
        %v547 = vld [vmem:[%s1 + $0xb8] sm:$0xf]
        %v548 = vld [vmem:[%s1 + $0xbc] sm:$0xf]
        %v549 = vld [vmem:[%s310] sm:$0xf]
        %v550 = vld [vmem:[%s310 + $0x4] sm:$0x1]
        %v551 = vld [vmem:[%s310 + $0x8] sm:$0xf]
        %v552 = vld [vmem:[%s310 + $0xc] sm:$0x1]
        %v553 = vld [vmem:[%s310 + $0x10] sm:$0xf]
        %v554 = vld [vmem:[%s310 + $0x14] sm:$0x1]
        %v555 = vld [vmem:[%s310 + $0x18] sm:$0xf]
        %v556 = vld [vmem:[%s310 + $0x1c] sm:$0x1]
        %v557 = vld [vmem:[%s310 + $0x20] sm:$0xf]
        %v558 = vld [vmem:[%s310 + $0x24] sm:$0x1]
        %v559 = vld [vmem:[%s310 + $0x28] sm:$0xf]
        %v560 = vld [vmem:[%s310 + $0x2c] sm:$0x1]
        %v561 = vld [vmem:[%s310 + $0x30] sm:$0xf]
        %v562 = vld [vmem:[%s310 + $0x34] sm:$0x1]
        %v563 = vld [vmem:[%s310 + $0x38] sm:$0xf]
        %v564 = vld [vmem:[%s310 + $0x3c] sm:$0x1]
        %v581 = vunpack.c.l.b16 %v549
        %v582 = vunpack.c.l.b16 %v550
        %v583 = vunpack.c.l.b16 %v551
        %v584 = vunpack.c.l.b16 %v552
        %v585 = vunpack.c.l.b16 %v553
        %v586 = vunpack.c.l.b16 %v554
        %v587 = vunpack.c.l.b16 %v555
        %v588 = vunpack.c.l.b16 %v556
        %v589 = vunpack.c.l.b16 %v557
        %v590 = vunpack.c.l.b16 %v558
        %v591 = vunpack.c.l.b16 %v559
        %v592 = vunpack.c.l.b16 %v560
        %v593 = vunpack.c.l.b16 %v561
        %v594 = vunpack.c.l.b16 %v562
        %v595 = vunpack.c.l.b16 %v563
        %v596 = vunpack.c.l.b16 %v564
        %v597 = vpack.c.b16 %v582, %v581
        %v598 = vpack.c.b16 %v584, %v583
        %v599 = vpack.c.b16 %v586, %v585
        %v600 = vpack.c.b16 %v588, %v587
        %v601 = vpack.c.b16 %v590, %v589
        %v602 = vpack.c.b16 %v592, %v591
        %v603 = vpack.c.b16 %v594, %v593
        %v604 = vpack.c.b16 %v596, %v595
        %v606 = vshrl.u32 %v597, 16
        %v608 = vshll.u32 %v597, 16
        %v610 = vrot.slane %v608, 1
        %v611 = vor.u32 %v606, %v610
        %v613 = vshrl.u32 %v598, 16
        %v615 = vshll.u32 %v598, 16
        %v617 = vrot.slane %v615, 1
        %v618 = vor.u32 %v613, %v617
        %v620 = vshrl.u32 %v599, 16
        %v622 = vshll.u32 %v599, 16
        %v624 = vrot.slane %v622, 1
        %v625 = vor.u32 %v620, %v624
        %v627 = vshrl.u32 %v600, 16
        %v629 = vshll.u32 %v600, 16
        %v631 = vrot.slane %v629, 1
        %v632 = vor.u32 %v627, %v631
        %v634 = vshrl.u32 %v601, 16
        %v636 = vshll.u32 %v601, 16
        %v638 = vrot.slane %v636, 1
        %v639 = vor.u32 %v634, %v638
        %v641 = vshrl.u32 %v602, 16
        %v643 = vshll.u32 %v602, 16
        %v645 = vrot.slane %v643, 1
        %v646 = vor.u32 %v641, %v645
        %v648 = vshrl.u32 %v603, 16
        %v650 = vshll.u32 %v603, 16
        %v652 = vrot.slane %v650, 1
        %v653 = vor.u32 %v648, %v652
        %v655 = vshrl.u32 %v604, 16
        %v657 = vshll.u32 %v604, 16
        %v659 = vrot.slane %v657, 1
        %v660 = vor.u32 %v655, %v659
        %v661 = vrot.slane %v597, 1
        %v662 = vrot.slane %v598, 1
        %v663 = vrot.slane %v599, 1
        %v664 = vrot.slane %v600, 1
        %v665 = vrot.slane %v601, 1
        %v666 = vrot.slane %v602, 1
        %v667 = vrot.slane %v603, 1
        %v668 = vrot.slane %v604, 1
        %v669 = vunpack.c.l.b16 %v611
        %v670 = vunpack.c.l.b16 %v661
        %v671 = vunpack.c.l.b16 %v618
        %v672 = vunpack.c.l.b16 %v662
        %v673 = vunpack.c.l.b16 %v625
        %v674 = vunpack.c.l.b16 %v663
        %v675 = vunpack.c.l.b16 %v632
        %v676 = vunpack.c.l.b16 %v664
        %v677 = vunpack.c.l.b16 %v639
        %v678 = vunpack.c.l.b16 %v665
        %v679 = vunpack.c.l.b16 %v646
        %v680 = vunpack.c.l.b16 %v666
        %v681 = vunpack.c.l.b16 %v653
        %v682 = vunpack.c.l.b16 %v667
        %v683 = vunpack.c.l.b16 %v660
        %v684 = vunpack.c.l.b16 %v668
        %s685 = scalar_lea.vmem %s1, 192
        %v686 = vld [vmem:[%s685] sm:$0xf]
        %v687 = vld [vmem:[%s685 + $0x4] sm:$0xf]
        %v688 = vld [vmem:[%s685 + $0x8] sm:$0xf]
        %v689 = vld [vmem:[%s685 + $0xc] sm:$0xf]
        %v690 = vld [vmem:[%s685 + $0x10] sm:$0xf]
        %v691 = vld [vmem:[%s685 + $0x14] sm:$0xf]
        %v692 = vld [vmem:[%s685 + $0x18] sm:$0xf]
        %v693 = vld [vmem:[%s685 + $0x1c] sm:$0xf]
        %v694 = vld [vmem:[%s685 + $0x20] sm:$0xf]
        %v695 = vld [vmem:[%s685 + $0x24] sm:$0xf]
        %v696 = vld [vmem:[%s685 + $0x28] sm:$0xf]
        %v697 = vld [vmem:[%s685 + $0x2c] sm:$0xf]
        %v698 = vld [vmem:[%s685 + $0x30] sm:$0xf]
        %v699 = vld [vmem:[%s685 + $0x34] sm:$0xf]
        %v700 = vld [vmem:[%s685 + $0x38] sm:$0xf]
        %v701 = vld [vmem:[%s685 + $0x3c] sm:$0xf]
        %v702 = vld [vmem:[%s685 + $0x40] sm:$0xf]
        %v703 = vld [vmem:[%s685 + $0x44] sm:$0xf]
        %v704 = vld [vmem:[%s685 + $0x48] sm:$0xf]
        %v705 = vld [vmem:[%s685 + $0x4c] sm:$0xf]
        %v706 = vld [vmem:[%s685 + $0x50] sm:$0xf]
        %v707 = vld [vmem:[%s685 + $0x54] sm:$0xf]
        %v708 = vld [vmem:[%s685 + $0x58] sm:$0xf]
        %v709 = vld [vmem:[%s685 + $0x5c] sm:$0xf]
        %v710 = vld [vmem:[%s685 + $0x60] sm:$0xf]
        %v711 = vld [vmem:[%s685 + $0x64] sm:$0xf]
        %v712 = vld [vmem:[%s685 + $0x68] sm:$0xf]
        %v713 = vld [vmem:[%s685 + $0x6c] sm:$0xf]
        %v714 = vld [vmem:[%s685 + $0x70] sm:$0xf]
        %v715 = vld [vmem:[%s685 + $0x74] sm:$0xf]
        %v716 = vld [vmem:[%s685 + $0x78] sm:$0xf]
        %v717 = vld [vmem:[%s685 + $0x7c] sm:$0xf]
        %v718 = vld [vmem:[%s685 + $0x80] sm:$0xf]
        %v719 = vld [vmem:[%s685 + $0x84] sm:$0xf]
        %v720 = vld [vmem:[%s685 + $0x88] sm:$0xf]
        %v721 = vld [vmem:[%s685 + $0x8c] sm:$0xf]
        %v722 = vld [vmem:[%s685 + $0x90] sm:$0xf]
        %v723 = vld [vmem:[%s685 + $0x94] sm:$0xf]
        %v724 = vld [vmem:[%s685 + $0x98] sm:$0xf]
        %v725 = vld [vmem:[%s685 + $0x9c] sm:$0xf]
        %v726 = vld [vmem:[%s685 + $0xa0] sm:$0xf]
        %v727 = vld [vmem:[%s685 + $0xa4] sm:$0xf]
        %v728 = vld [vmem:[%s685 + $0xa8] sm:$0xf]
        %v729 = vld [vmem:[%s685 + $0xac] sm:$0xf]
        %v730 = vld [vmem:[%s685 + $0xb0] sm:$0xf]
        %v731 = vld [vmem:[%s685 + $0xb4] sm:$0xf]
        %v732 = vld [vmem:[%s685 + $0xb8] sm:$0xf]
        %v733 = vld [vmem:[%s685 + $0xbc] sm:$0xf]
        %v734 = vpack.c.b16 %v583, %v581
        %v735 = vpack.c.b16 %v671, %v669
        %v736 = vpack.c.b16 %v672, %v670
        %v737 = vpack.c.b16 %v587, %v585
        %v738 = vpack.c.b16 %v675, %v673
        %v739 = vpack.c.b16 %v676, %v674
        %v740 = vpack.c.b16 %v591, %v589
        %v741 = vpack.c.b16 %v679, %v677
        %v742 = vpack.c.b16 %v680, %v678
        %v743 = vpack.c.b16 %v595, %v593
        %v744 = vpack.c.b16 %v683, %v681
        %v745 = vpack.c.b16 %v684, %v682
        %v806 = vunpack.c.l.b16 %v686
        %v807 = vunpack.c.l.b16 %v687
        %v808 = vunpack.c.l.b16 %v688
        %v809 = vunpack.c.l.b16 %v689
        %v810 = vunpack.c.l.b16 %v690
        %v811 = vunpack.c.l.b16 %v691
        %v812 = vunpack.c.l.b16 %v692
        %v813 = vunpack.c.l.b16 %v693
        %v814 = vunpack.c.l.b16 %v694
        %v815 = vunpack.c.l.b16 %v695
        %v816 = vunpack.c.l.b16 %v696
        %v817 = vunpack.c.l.b16 %v697
        %v818 = vunpack.c.l.b16 %v698
        %v819 = vunpack.c.l.b16 %v699
        %v820 = vunpack.c.l.b16 %v700
        %v821 = vunpack.c.l.b16 %v701
        %v822 = vunpack.c.l.b16 %v702
        %v823 = vunpack.c.l.b16 %v703
        %v824 = vunpack.c.l.b16 %v704
        %v825 = vunpack.c.l.b16 %v705
        %v826 = vunpack.c.l.b16 %v706
        %v827 = vunpack.c.l.b16 %v707
        %v828 = vunpack.c.l.b16 %v708
        %v829 = vunpack.c.l.b16 %v709
        %v830 = vunpack.c.l.b16 %v710
        %v831 = vunpack.c.l.b16 %v711
        %v832 = vunpack.c.l.b16 %v712
        %v833 = vunpack.c.l.b16 %v713
        %v834 = vunpack.c.l.b16 %v714
        %v835 = vunpack.c.l.b16 %v715
        %v836 = vunpack.c.l.b16 %v716
        %v837 = vunpack.c.l.b16 %v717
        %v838 = vunpack.c.l.b16 %v718
        %v839 = vunpack.c.l.b16 %v719
        %v840 = vunpack.c.l.b16 %v720
        %v841 = vunpack.c.l.b16 %v721
        %v842 = vunpack.c.l.b16 %v722
        %v843 = vunpack.c.l.b16 %v723
        %v844 = vunpack.c.l.b16 %v724
        %v845 = vunpack.c.l.b16 %v725
        %v846 = vunpack.c.l.b16 %v726
        %v847 = vunpack.c.l.b16 %v727
        %v848 = vunpack.c.l.b16 %v728
        %v849 = vunpack.c.l.b16 %v729
        %v850 = vunpack.c.l.b16 %v730
        %v851 = vunpack.c.l.b16 %v731
        %v852 = vunpack.c.l.b16 %v732
        %v853 = vunpack.c.l.b16 %v733
        %v854 = vpack.c.b16 %v807, %v806
        %v855 = vpack.c.b16 %v809, %v808
        %v856 = vpack.c.b16 %v811, %v810
        %v857 = vpack.c.b16 %v813, %v812
        %v858 = vpack.c.b16 %v815, %v814
        %v859 = vpack.c.b16 %v817, %v816
        %v860 = vpack.c.b16 %v819, %v818
        %v861 = vpack.c.b16 %v821, %v820
        %v862 = vpack.c.b16 %v823, %v822
        %v863 = vpack.c.b16 %v825, %v824
        %v864 = vpack.c.b16 %v827, %v826
        %v865 = vpack.c.b16 %v829, %v828
        %v866 = vpack.c.b16 %v831, %v830
        %v867 = vpack.c.b16 %v833, %v832
        %v868 = vpack.c.b16 %v835, %v834
        %v869 = vpack.c.b16 %v837, %v836
        %v870 = vpack.c.b16 %v839, %v838
        %v871 = vpack.c.b16 %v841, %v840
        %v872 = vpack.c.b16 %v843, %v842
        %v873 = vpack.c.b16 %v845, %v844
        %v874 = vpack.c.b16 %v847, %v846
        %v875 = vpack.c.b16 %v849, %v848
        %v876 = vpack.c.b16 %v851, %v850
        %v877 = vpack.c.b16 %v853, %v852
        %902 = vmatprep.subr.bf16.mxu0 0
        %903 = vmatpush1.bf16.msra.mxu0 %v854
        %904 = vmatprep.subr.bf16.mxu0 0
        %905 = vmatpush1.bf16.msra.mxu0 %v855
        %906 = vmatprep.subr.bf16.mxu0 0
        %907 = vmatpush1.bf16.msra.mxu0 %v856
        %908 = vmatprep.subr.bf16.mxu0 0
        %909 = vmatpush1.bf16.msra.mxu0 %v857
        %910 = vmatprep.subr.bf16.mxu0 0
        %911 = vmatpush1.bf16.msra.mxu0 %v858
        %912 = vmatprep.subr.bf16.mxu0 0
        %913 = vmatpush1.bf16.msra.mxu0 %v859
        %914 = vmatprep.subr.bf16.mxu0 0
        %915 = vmatpush1.bf16.msra.mxu0 %v860
        %916 = vmatprep.subr.bf16.mxu0 0
        %917 = vmatpush1.bf16.msra.mxu0 %v861
        %918 = vmatprep.subr.bf16.mxu0 0
        %919 = vmatpush1.bf16.msra.mxu0 %v862
        %920 = vmatprep.subr.bf16.mxu0 0
        %921 = vmatpush1.bf16.msra.mxu0 %v863
        %922 = vmatprep.subr.bf16.mxu0 0
        %923 = vmatpush1.bf16.msra.mxu0 %v864
        %924 = vmatprep.subr.bf16.mxu0 0
        %925 = vmatpush1.bf16.msra.mxu0 %v865
        %926 = vmatprep.subr.bf16.mxu0 0
        %927 = vmatpush1.bf16.msra.mxu0 %v866
        %928 = vmatprep.subr.bf16.mxu0 0
        %929 = vmatpush1.bf16.msra.mxu0 %v867
        %930 = vmatprep.subr.bf16.mxu0 0
        %931 = vmatpush1.bf16.msra.mxu0 %v868
        %932 = vmatprep.subr.bf16.mxu0 0
        %933 = vmatpush1.bf16.msra.mxu0 %v869
        %934 = vmatprep.mubr.bf16.mxu0 %v735
        %935 = vmatmul.mubr.bf16.gmra.mrb[0].mxu0 %v734
        %v936 = vpop.f32.mrb[0].mxu0
        %v937 = vadd.f32 0.0, %v936
        %v938 = vpop.f32.mrb[0].mxu0
        %v939 = vpop.f32.mrb[0].mxu0
        %v940 = vadd.f32 0.0, %v939
        %v941 = vpop.f32.mrb[0].mxu0
        %942 = vmatprep.mubr.bf16.mxu0 %v738
        %943 = vmatmul.mubr.bf16.gmra.mrb[0].mxu0 %v737
        %v944 = vpop.f32.mrb[0].mxu0
        %v945 = vadd.f32 0.0, %v944
        %v946 = vpop.f32.mrb[0].mxu0
        %v947 = vpop.f32.mrb[0].mxu0
        %v948 = vadd.f32 0.0, %v947
        %v949 = vpop.f32.mrb[0].mxu0
        %950 = vmatprep.mubr.bf16.mxu0 %v741
        %951 = vmatmul.mubr.bf16.gmra.mrb[0].mxu0 %v740
        %v952 = vpop.f32.mrb[0].mxu0
        %v953 = vadd.f32 0.0, %v952
        %v954 = vpop.f32.mrb[0].mxu0
        %v955 = vpop.f32.mrb[0].mxu0
        %v956 = vadd.f32 0.0, %v955
        %v957 = vpop.f32.mrb[0].mxu0
        %958 = vmatprep.mubr.bf16.mxu0 %v744
        %959 = vmatmul.mubr.bf16.gmra.mrb[0].mxu0 %v743
        %v960 = vpop.f32.mrb[0].mxu0
        %v961 = vadd.f32 0.0, %v960
        %v962 = vpop.f32.mrb[0].mxu0
        %v963 = vpop.f32.mrb[0].mxu0
        %v964 = vadd.f32 0.0, %v963
        %v965 = vpop.f32.mrb[0].mxu0
        %966 = vdwg.mxu0
        %967 = vmatprep.subr.bf16.mxu0 0
        %968 = vmatpush1.bf16.msra.mxu0 %v870
        %969 = vmatprep.subr.bf16.mxu0 0
        %970 = vmatpush1.bf16.msra.mxu0 %v871
        %971 = vmatprep.subr.bf16.mxu0 0
        %972 = vmatpush1.bf16.msra.mxu0 %v872
        %973 = vmatprep.subr.bf16.mxu0 0
        %974 = vmatpush1.bf16.msra.mxu0 %v873
        %975 = vmatprep.subr.bf16.mxu0 0
        %976 = vmatpush1.bf16.msra.mxu0 %v874
        %977 = vmatprep.subr.bf16.mxu0 0
        %978 = vmatpush1.bf16.msra.mxu0 %v875
        %979 = vmatprep.subr.bf16.mxu0 0
        %980 = vmatpush1.bf16.msra.mxu0 %v876
        %981 = vmatprep.subr.bf16.mxu0 0
        %982 = vmatpush1.bf16.msra.mxu0 %v877
        %983 = vmatprep.subr.bf16.mxu0 0
        %984 = vmatpush1.bf16.msra.mxu0 0
        %985 = vmatprep.subr.bf16.mxu0 0
        %986 = vmatpush1.bf16.msra.mxu0 0
        %987 = vmatprep.subr.bf16.mxu0 0
        %988 = vmatpush1.bf16.msra.mxu0 0
        %989 = vmatprep.subr.bf16.mxu0 0
        %990 = vmatpush1.bf16.msra.mxu0 0
        %991 = vmatprep.subr.bf16.mxu0 0
        %992 = vmatpush1.bf16.msra.mxu0 0
        %993 = vmatprep.subr.bf16.mxu0 0
        %994 = vmatpush1.bf16.msra.mxu0 0
        %995 = vmatprep.subr.bf16.mxu0 0
        %996 = vmatpush1.bf16.msra.mxu0 0
        %997 = vmatprep.subr.bf16.mxu0 0
        %998 = vmatpush1.bf16.msra.mxu0 0
        %999 = vmatprep.mubr.bf16.mxu0 0
        %1000 = vmatmul.mubr.bf16.gmra.mrb[0].mxu0 %v736
        %v1001 = vpop.f32.mrb[0].mxu0
        %v1002 = vadd.f32 %v937, %v1001
        %v1003 = vpop.f32.mrb[0].mxu0
        %v1004 = vpop.f32.mrb[0].mxu0
        %v1005 = vadd.f32 %v940, %v1004
        %v1006 = vpop.f32.mrb[0].mxu0
        %1007 = vmatprep.mubr.bf16.mxu0 0
        %1008 = vmatmul.mubr.bf16.gmra.mrb[0].mxu0 %v739
        %v1009 = vpop.f32.mrb[0].mxu0
        %v1010 = vadd.f32 %v945, %v1009
        %v1011 = vpop.f32.mrb[0].mxu0
        %v1012 = vpop.f32.mrb[0].mxu0
        %v1013 = vadd.f32 %v948, %v1012
        %v1014 = vpop.f32.mrb[0].mxu0
        %1015 = vmatprep.mubr.bf16.mxu0 0
        %1016 = vmatmul.mubr.bf16.gmra.mrb[0].mxu0 %v742
        %v1017 = vpop.f32.mrb[0].mxu0
        %v1018 = vadd.f32 %v953, %v1017
        %v1019 = vpop.f32.mrb[0].mxu0
        %v1020 = vpop.f32.mrb[0].mxu0
        %v1021 = vadd.f32 %v956, %v1020
        %v1022 = vpop.f32.mrb[0].mxu0
        %1023 = vmatprep.mubr.bf16.mxu0 0
        %1024 = vmatmul.mubr.bf16.gmra.mrb[0].mxu0 %v745
        %v1025 = vpop.f32.mrb[0].mxu0
        %v1026 = vadd.f32 %v961, %v1025
        %v1027 = vpop.f32.mrb[0].mxu0
        %v1028 = vpop.f32.mrb[0].mxu0
        %v1029 = vadd.f32 %v964, %v1028
        %v1030 = vpop.f32.mrb[0].mxu0
        %1031 = vdwg.mxu0
        %v1032 = vpack.c.b16 %v399, %v397
        %v1033 = vpack.c.b16 %v487, %v485
        %v1034 = vpack.c.b16 %v488, %v486
        %v1035 = vpack.c.b16 %v403, %v401
        %v1036 = vpack.c.b16 %v491, %v489
        %v1037 = vpack.c.b16 %v492, %v490
        %v1038 = vpack.c.b16 %v407, %v405
        %v1039 = vpack.c.b16 %v495, %v493
        %v1040 = vpack.c.b16 %v496, %v494
        %v1041 = vpack.c.b16 %v411, %v409
        %v1042 = vpack.c.b16 %v499, %v497
        %v1043 = vpack.c.b16 %v500, %v498
        %v1104 = vunpack.c.l.b16 %v501
        %v1105 = vunpack.c.l.b16 %v502
        %v1106 = vunpack.c.l.b16 %v503
        %v1107 = vunpack.c.l.b16 %v504
        %v1108 = vunpack.c.l.b16 %v505
        %v1109 = vunpack.c.l.b16 %v506
        %v1110 = vunpack.c.l.b16 %v507
        %v1111 = vunpack.c.l.b16 %v508
        %v1112 = vunpack.c.l.b16 %v509
        %v1113 = vunpack.c.l.b16 %v510
        %v1114 = vunpack.c.l.b16 %v511
        %v1115 = vunpack.c.l.b16 %v512
        %v1116 = vunpack.c.l.b16 %v513
        %v1117 = vunpack.c.l.b16 %v514
        %v1118 = vunpack.c.l.b16 %v515
        %v1119 = vunpack.c.l.b16 %v516
        %v1120 = vunpack.c.l.b16 %v517
        %v1121 = vunpack.c.l.b16 %v518
        %v1122 = vunpack.c.l.b16 %v519
        %v1123 = vunpack.c.l.b16 %v520
        %v1124 = vunpack.c.l.b16 %v521
        %v1125 = vunpack.c.l.b16 %v522
        %v1126 = vunpack.c.l.b16 %v523
        %v1127 = vunpack.c.l.b16 %v524
        %v1128 = vunpack.c.l.b16 %v525
        %v1129 = vunpack.c.l.b16 %v526
        %v1130 = vunpack.c.l.b16 %v527
        %v1131 = vunpack.c.l.b16 %v528
        %v1132 = vunpack.c.l.b16 %v529
        %v1133 = vunpack.c.l.b16 %v530
        %v1134 = vunpack.c.l.b16 %v531
        %v1135 = vunpack.c.l.b16 %v532
        %v1136 = vunpack.c.l.b16 %v533
        %v1137 = vunpack.c.l.b16 %v534
        %v1138 = vunpack.c.l.b16 %v535
        %v1139 = vunpack.c.l.b16 %v536
        %v1140 = vunpack.c.l.b16 %v537
        %v1141 = vunpack.c.l.b16 %v538
        %v1142 = vunpack.c.l.b16 %v539
        %v1143 = vunpack.c.l.b16 %v540
        %v1144 = vunpack.c.l.b16 %v541
        %v1145 = vunpack.c.l.b16 %v542
        %v1146 = vunpack.c.l.b16 %v543
        %v1147 = vunpack.c.l.b16 %v544
        %v1148 = vunpack.c.l.b16 %v545
        %v1149 = vunpack.c.l.b16 %v546
        %v1150 = vunpack.c.l.b16 %v547
        %v1151 = vunpack.c.l.b16 %v548
        %v1152 = vpack.c.b16 %v1105, %v1104
        %v1153 = vpack.c.b16 %v1107, %v1106
        %v1154 = vpack.c.b16 %v1109, %v1108
        %v1155 = vpack.c.b16 %v1111, %v1110
        %v1156 = vpack.c.b16 %v1113, %v1112
        %v1157 = vpack.c.b16 %v1115, %v1114
        %v1158 = vpack.c.b16 %v1117, %v1116
        %v1159 = vpack.c.b16 %v1119, %v1118
        %v1160 = vpack.c.b16 %v1121, %v1120
        %v1161 = vpack.c.b16 %v1123, %v1122
        %v1162 = vpack.c.b16 %v1125, %v1124
        %v1163 = vpack.c.b16 %v1127, %v1126
        %v1164 = vpack.c.b16 %v1129, %v1128
        %v1165 = vpack.c.b16 %v1131, %v1130
        %v1166 = vpack.c.b16 %v1133, %v1132
        %v1167 = vpack.c.b16 %v1135, %v1134
        %v1168 = vpack.c.b16 %v1137, %v1136
        %v1169 = vpack.c.b16 %v1139, %v1138
        %v1170 = vpack.c.b16 %v1141, %v1140
        %v1171 = vpack.c.b16 %v1143, %v1142
        %v1172 = vpack.c.b16 %v1145, %v1144
        %v1173 = vpack.c.b16 %v1147, %v1146
        %v1174 = vpack.c.b16 %v1149, %v1148
        %v1175 = vpack.c.b16 %v1151, %v1150
        %1200 = vmatprep.subr.bf16.mxu0 0
        %1201 = vmatpush1.bf16.msra.mxu0 %v1152
        %1202 = vmatprep.subr.bf16.mxu0 0
        %1203 = vmatpush1.bf16.msra.mxu0 %v1153
        %1204 = vmatprep.subr.bf16.mxu0 0
        %1205 = vmatpush1.bf16.msra.mxu0 %v1154
        %1206 = vmatprep.subr.bf16.mxu0 0
        %1207 = vmatpush1.bf16.msra.mxu0 %v1155
        %1208 = vmatprep.subr.bf16.mxu0 0
        %1209 = vmatpush1.bf16.msra.mxu0 %v1156
        %1210 = vmatprep.subr.bf16.mxu0 0
        %1211 = vmatpush1.bf16.msra.mxu0 %v1157
        %1212 = vmatprep.subr.bf16.mxu0 0
        %1213 = vmatpush1.bf16.msra.mxu0 %v1158
        %1214 = vmatprep.subr.bf16.mxu0 0
        %1215 = vmatpush1.bf16.msra.mxu0 %v1159
        %1216 = vmatprep.subr.bf16.mxu0 0
        %1217 = vmatpush1.bf16.msra.mxu0 %v1160
        %1218 = vmatprep.subr.bf16.mxu0 0
        %1219 = vmatpush1.bf16.msra.mxu0 %v1161
        %1220 = vmatprep.subr.bf16.mxu0 0
        %1221 = vmatpush1.bf16.msra.mxu0 %v1162
        %1222 = vmatprep.subr.bf16.mxu0 0
        %1223 = vmatpush1.bf16.msra.mxu0 %v1163
        %1224 = vmatprep.subr.bf16.mxu0 0
        %1225 = vmatpush1.bf16.msra.mxu0 %v1164
        %1226 = vmatprep.subr.bf16.mxu0 0
        %1227 = vmatpush1.bf16.msra.mxu0 %v1165
        %1228 = vmatprep.subr.bf16.mxu0 0
        %1229 = vmatpush1.bf16.msra.mxu0 %v1166
        %1230 = vmatprep.subr.bf16.mxu0 0
        %1231 = vmatpush1.bf16.msra.mxu0 %v1167
        %1232 = vmatprep.mubr.bf16.mxu0 %v1033
        %1233 = vmatmul.mubr.bf16.gmra.mrb[0].mxu0 %v1032
        %v1234 = vpop.f32.mrb[0].mxu0
        %v1235 = vadd.f32 %v1002, %v1234
        %v1236 = vpop.f32.mrb[0].mxu0
        %v1237 = vpop.f32.mrb[0].mxu0
        %v1238 = vadd.f32 %v1005, %v1237
        %v1239 = vpop.f32.mrb[0].mxu0
        %1240 = vmatprep.mubr.bf16.mxu0 %v1036
        %1241 = vmatmul.mubr.bf16.gmra.mrb[0].mxu0 %v1035
        %v1242 = vpop.f32.mrb[0].mxu0
        %v1243 = vadd.f32 %v1010, %v1242
        %v1244 = vpop.f32.mrb[0].mxu0
        %v1245 = vpop.f32.mrb[0].mxu0
        %v1246 = vadd.f32 %v1013, %v1245
        %v1247 = vpop.f32.mrb[0].mxu0
        %1248 = vmatprep.mubr.bf16.mxu0 %v1039
        %1249 = vmatmul.mubr.bf16.gmra.mrb[0].mxu0 %v1038
        %v1250 = vpop.f32.mrb[0].mxu0
        %v1251 = vadd.f32 %v1018, %v1250
        %v1252 = vpop.f32.mrb[0].mxu0
        %v1253 = vpop.f32.mrb[0].mxu0
        %v1254 = vadd.f32 %v1021, %v1253
        %v1255 = vpop.f32.mrb[0].mxu0
        %1256 = vmatprep.mubr.bf16.mxu0 %v1042
        %1257 = vmatmul.mubr.bf16.gmra.mrb[0].mxu0 %v1041
        %v1258 = vpop.f32.mrb[0].mxu0
        %v1259 = vadd.f32 %v1026, %v1258
        %v1260 = vpop.f32.mrb[0].mxu0
        %v1261 = vpop.f32.mrb[0].mxu0
        %v1262 = vadd.f32 %v1029, %v1261
        %v1263 = vpop.f32.mrb[0].mxu0
        %1264 = vdwg.mxu0
        %1265 = vmatprep.subr.bf16.mxu0 0
        %1266 = vmatpush1.bf16.msra.mxu0 %v1168
        %1267 = vmatprep.subr.bf16.mxu0 0
        %1268 = vmatpush1.bf16.msra.mxu0 %v1169
        %1269 = vmatprep.subr.bf16.mxu0 0
        %1270 = vmatpush1.bf16.msra.mxu0 %v1170
        %1271 = vmatprep.subr.bf16.mxu0 0
        %1272 = vmatpush1.bf16.msra.mxu0 %v1171
        %1273 = vmatprep.subr.bf16.mxu0 0
        %1274 = vmatpush1.bf16.msra.mxu0 %v1172
        %1275 = vmatprep.subr.bf16.mxu0 0
        %1276 = vmatpush1.bf16.msra.mxu0 %v1173
        %1277 = vmatprep.subr.bf16.mxu0 0
        %1278 = vmatpush1.bf16.msra.mxu0 %v1174
        %1279 = vmatprep.subr.bf16.mxu0 0
        %1280 = vmatpush1.bf16.msra.mxu0 %v1175
        %1281 = vmatprep.subr.bf16.mxu0 0
        %1282 = vmatpush1.bf16.msra.mxu0 0
        %1283 = vmatprep.subr.bf16.mxu0 0
        %1284 = vmatpush1.bf16.msra.mxu0 0
        %1285 = vmatprep.subr.bf16.mxu0 0
        %1286 = vmatpush1.bf16.msra.mxu0 0
        %1287 = vmatprep.subr.bf16.mxu0 0
        %1288 = vmatpush1.bf16.msra.mxu0 0
        %1289 = vmatprep.subr.bf16.mxu0 0
        %1290 = vmatpush1.bf16.msra.mxu0 0
        %1291 = vmatprep.subr.bf16.mxu0 0
        %1292 = vmatpush1.bf16.msra.mxu0 0
        %1293 = vmatprep.subr.bf16.mxu0 0
        %1294 = vmatpush1.bf16.msra.mxu0 0
        %1295 = vmatprep.subr.bf16.mxu0 0
        %1296 = vmatpush1.bf16.msra.mxu0 0
        %1297 = vmatprep.mubr.bf16.mxu0 0
        %1298 = vmatmul.mubr.bf16.gmra.mrb[0].mxu0 %v1034
        %v1299 = vpop.f32.mrb[0].mxu0
        %v1300 = vadd.f32 %v1235, %v1299
        %v1301 = vpop.f32.mrb[0].mxu0
        %v1302 = vpop.f32.mrb[0].mxu0
        %v1303 = vadd.f32 %v1238, %v1302
        %v1304 = vpop.f32.mrb[0].mxu0
        %1305 = vmatprep.mubr.bf16.mxu0 0
        %1306 = vmatmul.mubr.bf16.gmra.mrb[0].mxu0 %v1037
        %v1307 = vpop.f32.mrb[0].mxu0
        %v1308 = vadd.f32 %v1243, %v1307
        %v1309 = vpop.f32.mrb[0].mxu0
        %v1310 = vpop.f32.mrb[0].mxu0
        %v1311 = vadd.f32 %v1246, %v1310
        %v1312 = vpop.f32.mrb[0].mxu0
        %1313 = vmatprep.mubr.bf16.mxu0 0
        %1314 = vmatmul.mubr.bf16.gmra.mrb[0].mxu0 %v1040
        %v1315 = vpop.f32.mrb[0].mxu0
        %v1316 = vadd.f32 %v1251, %v1315
        %v1317 = vpop.f32.mrb[0].mxu0
        %v1318 = vpop.f32.mrb[0].mxu0
        %v1319 = vadd.f32 %v1254, %v1318
        %v1320 = vpop.f32.mrb[0].mxu0
        %1321 = vmatprep.mubr.bf16.mxu0 0
        %1322 = vmatmul.mubr.bf16.gmra.mrb[0].mxu0 %v1043
        %v1323 = vpop.f32.mrb[0].mxu0
        %v1324 = vadd.f32 %v1259, %v1323
        %v1325 = vpop.f32.mrb[0].mxu0
        %v1326 = vpop.f32.mrb[0].mxu0
        %v1327 = vadd.f32 %v1262, %v1326
        %v1328 = vpop.f32.mrb[0].mxu0
        %1329 = vdwg.mxu0
        %s1330 = scalar_lea.vmem [#allocation2], 16
        %v1331 = vld [vmem:[%s1330] sm:$0xf]
        %v1332 = vld [vmem:[%s1330 + $0x4] sm:$0x1]
        %v1333 = vld [vmem:[%s1330 + $0x8] sm:$0xf]
        %v1334 = vld [vmem:[%s1330 + $0xc] sm:$0x1]
        %v1335 = vld [vmem:[%s1330 + $0x10] sm:$0xf]
        %v1336 = vld [vmem:[%s1330 + $0x14] sm:$0x1]
        %v1337 = vld [vmem:[%s1330 + $0x18] sm:$0xf]
        %v1338 = vld [vmem:[%s1330 + $0x1c] sm:$0x1]
        %v1339 = vld [vmem:[%s1330 + $0x20] sm:$0xf]
        %v1340 = vld [vmem:[%s1330 + $0x24] sm:$0x1]
        %v1341 = vld [vmem:[%s1330 + $0x28] sm:$0xf]
        %v1342 = vld [vmem:[%s1330 + $0x2c] sm:$0x1]
        %v1343 = vld [vmem:[%s1330 + $0x30] sm:$0xf]
        %v1344 = vld [vmem:[%s1330 + $0x34] sm:$0x1]
        %v1345 = vld [vmem:[%s1330 + $0x38] sm:$0xf]
        %v1346 = vld [vmem:[%s1330 + $0x3c] sm:$0x1]
        %v1363 = vunpack.c.l.b16 %v1331
        %v1364 = vunpack.c.l.b16 %v1332
        %v1365 = vunpack.c.l.b16 %v1333
        %v1366 = vunpack.c.l.b16 %v1334
        %v1367 = vunpack.c.l.b16 %v1335
        %v1368 = vunpack.c.l.b16 %v1336
        %v1369 = vunpack.c.l.b16 %v1337
        %v1370 = vunpack.c.l.b16 %v1338
        %v1371 = vunpack.c.l.b16 %v1339
        %v1372 = vunpack.c.l.b16 %v1340
        %v1373 = vunpack.c.l.b16 %v1341
        %v1374 = vunpack.c.l.b16 %v1342
        %v1375 = vunpack.c.l.b16 %v1343
        %v1376 = vunpack.c.l.b16 %v1344
        %v1377 = vunpack.c.l.b16 %v1345
        %v1378 = vunpack.c.l.b16 %v1346
        %v1379 = vpack.c.b16 %v1364, %v1363
        %v1380 = vpack.c.b16 %v1366, %v1365
        %v1381 = vpack.c.b16 %v1368, %v1367
        %v1382 = vpack.c.b16 %v1370, %v1369
        %v1383 = vpack.c.b16 %v1372, %v1371
        %v1384 = vpack.c.b16 %v1374, %v1373
        %v1385 = vpack.c.b16 %v1376, %v1375
        %v1386 = vpack.c.b16 %v1378, %v1377
        %v1388 = vshrl.u32 %v1379, 16
        %v1390 = vshll.u32 %v1379, 16
        %v1392 = vrot.slane %v1390, 1
        %v1393 = vor.u32 %v1388, %v1392
        %v1395 = vshrl.u32 %v1380, 16
        %v1397 = vshll.u32 %v1380, 16
        %v1399 = vrot.slane %v1397, 1
        %v1400 = vor.u32 %v1395, %v1399
        %v1402 = vshrl.u32 %v1381, 16
        %v1404 = vshll.u32 %v1381, 16
        %v1406 = vrot.slane %v1404, 1
        %v1407 = vor.u32 %v1402, %v1406
        %v1409 = vshrl.u32 %v1382, 16
        %v1411 = vshll.u32 %v1382, 16
        %v1413 = vrot.slane %v1411, 1
        %v1414 = vor.u32 %v1409, %v1413
        %v1416 = vshrl.u32 %v1383, 16
        %v1418 = vshll.u32 %v1383, 16
        %v1420 = vrot.slane %v1418, 1
        %v1421 = vor.u32 %v1416, %v1420
        %v1423 = vshrl.u32 %v1384, 16
        %v1425 = vshll.u32 %v1384, 16
        %v1427 = vrot.slane %v1425, 1
        %v1428 = vor.u32 %v1423, %v1427
        %v1430 = vshrl.u32 %v1385, 16
        %v1432 = vshll.u32 %v1385, 16
        %v1434 = vrot.slane %v1432, 1
        %v1435 = vor.u32 %v1430, %v1434
        %v1437 = vshrl.u32 %v1386, 16
        %v1439 = vshll.u32 %v1386, 16
        %v1441 = vrot.slane %v1439, 1
        %v1442 = vor.u32 %v1437, %v1441
        %v1443 = vrot.slane %v1379, 1
        %v1444 = vrot.slane %v1380, 1
        %v1445 = vrot.slane %v1381, 1
        %v1446 = vrot.slane %v1382, 1
        %v1447 = vrot.slane %v1383, 1
        %v1448 = vrot.slane %v1384, 1
        %v1449 = vrot.slane %v1385, 1
        %v1450 = vrot.slane %v1386, 1
        %v1451 = vunpack.c.l.b16 %v1393
        %v1452 = vunpack.c.l.b16 %v1443
        %v1453 = vunpack.c.l.b16 %v1400
        %v1454 = vunpack.c.l.b16 %v1444
        %v1455 = vunpack.c.l.b16 %v1407
        %v1456 = vunpack.c.l.b16 %v1445
        %v1457 = vunpack.c.l.b16 %v1414
        %v1458 = vunpack.c.l.b16 %v1446
        %v1459 = vunpack.c.l.b16 %v1421
        %v1460 = vunpack.c.l.b16 %v1447
        %v1461 = vunpack.c.l.b16 %v1428
        %v1462 = vunpack.c.l.b16 %v1448
        %v1463 = vunpack.c.l.b16 %v1435
        %v1464 = vunpack.c.l.b16 %v1449
        %v1465 = vunpack.c.l.b16 %v1442
        %v1466 = vunpack.c.l.b16 %v1450
        %s1467 = scalar_lea.vmem %s1, 384
        %v1468 = vld [vmem:[%s1467] sm:$0xf]
        %v1469 = vld [vmem:[%s1467 + $0x4] sm:$0xf]
        %v1470 = vld [vmem:[%s1467 + $0x8] sm:$0xf]
        %v1471 = vld [vmem:[%s1467 + $0xc] sm:$0xf]
        %v1472 = vld [vmem:[%s1467 + $0x10] sm:$0xf]
        %v1473 = vld [vmem:[%s1467 + $0x14] sm:$0xf]
        %v1474 = vld [vmem:[%s1467 + $0x18] sm:$0xf]
        %v1475 = vld [vmem:[%s1467 + $0x1c] sm:$0xf]
        %v1476 = vld [vmem:[%s1467 + $0x20] sm:$0xf]
        %v1477 = vld [vmem:[%s1467 + $0x24] sm:$0xf]
        %v1478 = vld [vmem:[%s1467 + $0x28] sm:$0xf]
        %v1479 = vld [vmem:[%s1467 + $0x2c] sm:$0xf]
        %v1480 = vld [vmem:[%s1467 + $0x30] sm:$0xf]
        %v1481 = vld [vmem:[%s1467 + $0x34] sm:$0xf]
        %v1482 = vld [vmem:[%s1467 + $0x38] sm:$0xf]
        %v1483 = vld [vmem:[%s1467 + $0x3c] sm:$0xf]
        %v1484 = vld [vmem:[%s1467 + $0x40] sm:$0xf]
        %v1485 = vld [vmem:[%s1467 + $0x44] sm:$0xf]
        %v1486 = vld [vmem:[%s1467 + $0x48] sm:$0xf]
        %v1487 = vld [vmem:[%s1467 + $0x4c] sm:$0xf]
        %v1488 = vld [vmem:[%s1467 + $0x50] sm:$0xf]
        %v1489 = vld [vmem:[%s1467 + $0x54] sm:$0xf]
        %v1490 = vld [vmem:[%s1467 + $0x58] sm:$0xf]
        %v1491 = vld [vmem:[%s1467 + $0x5c] sm:$0xf]
        %v1492 = vld [vmem:[%s1467 + $0x60] sm:$0xf]
        %v1493 = vld [vmem:[%s1467 + $0x64] sm:$0xf]
        %v1494 = vld [vmem:[%s1467 + $0x68] sm:$0xf]
        %v1495 = vld [vmem:[%s1467 + $0x6c] sm:$0xf]
        %v1496 = vld [vmem:[%s1467 + $0x70] sm:$0xf]
        %v1497 = vld [vmem:[%s1467 + $0x74] sm:$0xf]
        %v1498 = vld [vmem:[%s1467 + $0x78] sm:$0xf]
        %v1499 = vld [vmem:[%s1467 + $0x7c] sm:$0xf]
        %v1500 = vld [vmem:[%s1467 + $0x80] sm:$0xf]
        %v1501 = vld [vmem:[%s1467 + $0x84] sm:$0xf]
        %v1502 = vld [vmem:[%s1467 + $0x88] sm:$0xf]
        %v1503 = vld [vmem:[%s1467 + $0x8c] sm:$0xf]
        %v1504 = vld [vmem:[%s1467 + $0x90] sm:$0xf]
        %v1505 = vld [vmem:[%s1467 + $0x94] sm:$0xf]
        %v1506 = vld [vmem:[%s1467 + $0x98] sm:$0xf]
        %v1507 = vld [vmem:[%s1467 + $0x9c] sm:$0xf]
        %v1508 = vld [vmem:[%s1467 + $0xa0] sm:$0xf]
        %v1509 = vld [vmem:[%s1467 + $0xa4] sm:$0xf]
        %v1510 = vld [vmem:[%s1467 + $0xa8] sm:$0xf]
        %v1511 = vld [vmem:[%s1467 + $0xac] sm:$0xf]
        %v1512 = vld [vmem:[%s1467 + $0xb0] sm:$0xf]
        %v1513 = vld [vmem:[%s1467 + $0xb4] sm:$0xf]
        %v1514 = vld [vmem:[%s1467 + $0xb8] sm:$0xf]
        %v1515 = vld [vmem:[%s1467 + $0xbc] sm:$0xf]
        %v1516 = vpack.c.b16 %v1365, %v1363
        %v1517 = vpack.c.b16 %v1453, %v1451
        %v1518 = vpack.c.b16 %v1454, %v1452
        %v1519 = vpack.c.b16 %v1369, %v1367
        %v1520 = vpack.c.b16 %v1457, %v1455
        %v1521 = vpack.c.b16 %v1458, %v1456
        %v1522 = vpack.c.b16 %v1373, %v1371
        %v1523 = vpack.c.b16 %v1461, %v1459
        %v1524 = vpack.c.b16 %v1462, %v1460
        %v1525 = vpack.c.b16 %v1377, %v1375
        %v1526 = vpack.c.b16 %v1465, %v1463
        %v1527 = vpack.c.b16 %v1466, %v1464
        %v1588 = vunpack.c.l.b16 %v1468
        %v1589 = vunpack.c.l.b16 %v1469
        %v1590 = vunpack.c.l.b16 %v1470
        %v1591 = vunpack.c.l.b16 %v1471
        %v1592 = vunpack.c.l.b16 %v1472
        %v1593 = vunpack.c.l.b16 %v1473
        %v1594 = vunpack.c.l.b16 %v1474
        %v1595 = vunpack.c.l.b16 %v1475
        %v1596 = vunpack.c.l.b16 %v1476
        %v1597 = vunpack.c.l.b16 %v1477
        %v1598 = vunpack.c.l.b16 %v1478
        %v1599 = vunpack.c.l.b16 %v1479
        %v1600 = vunpack.c.l.b16 %v1480
        %v1601 = vunpack.c.l.b16 %v1481
        %v1602 = vunpack.c.l.b16 %v1482
        %v1603 = vunpack.c.l.b16 %v1483
        %v1604 = vunpack.c.l.b16 %v1484
        %v1605 = vunpack.c.l.b16 %v1485
        %v1606 = vunpack.c.l.b16 %v1486
        %v1607 = vunpack.c.l.b16 %v1487
        %v1608 = vunpack.c.l.b16 %v1488
        %v1609 = vunpack.c.l.b16 %v1489
        %v1610 = vunpack.c.l.b16 %v1490
        %v1611 = vunpack.c.l.b16 %v1491
        %v1612 = vunpack.c.l.b16 %v1492
        %v1613 = vunpack.c.l.b16 %v1493
        %v1614 = vunpack.c.l.b16 %v1494
        %v1615 = vunpack.c.l.b16 %v1495
        %v1616 = vunpack.c.l.b16 %v1496
        %v1617 = vunpack.c.l.b16 %v1497
        %v1618 = vunpack.c.l.b16 %v1498
        %v1619 = vunpack.c.l.b16 %v1499
        %v1620 = vunpack.c.l.b16 %v1500
        %v1621 = vunpack.c.l.b16 %v1501
        %v1622 = vunpack.c.l.b16 %v1502
        %v1623 = vunpack.c.l.b16 %v1503
        %v1624 = vunpack.c.l.b16 %v1504
        %v1625 = vunpack.c.l.b16 %v1505
        %v1626 = vunpack.c.l.b16 %v1506
        %v1627 = vunpack.c.l.b16 %v1507
        %v1628 = vunpack.c.l.b16 %v1508
        %v1629 = vunpack.c.l.b16 %v1509
        %v1630 = vunpack.c.l.b16 %v1510
        %v1631 = vunpack.c.l.b16 %v1511
        %v1632 = vunpack.c.l.b16 %v1512
        %v1633 = vunpack.c.l.b16 %v1513
        %v1634 = vunpack.c.l.b16 %v1514
        %v1635 = vunpack.c.l.b16 %v1515
        %v1636 = vpack.c.b16 %v1589, %v1588
        %v1637 = vpack.c.b16 %v1591, %v1590
        %v1638 = vpack.c.b16 %v1593, %v1592
        %v1639 = vpack.c.b16 %v1595, %v1594
        %v1640 = vpack.c.b16 %v1597, %v1596
        %v1641 = vpack.c.b16 %v1599, %v1598
        %v1642 = vpack.c.b16 %v1601, %v1600
        %v1643 = vpack.c.b16 %v1603, %v1602
        %v1644 = vpack.c.b16 %v1605, %v1604
        %v1645 = vpack.c.b16 %v1607, %v1606
        %v1646 = vpack.c.b16 %v1609, %v1608
        %v1647 = vpack.c.b16 %v1611, %v1610
        %v1648 = vpack.c.b16 %v1613, %v1612
        %v1649 = vpack.c.b16 %v1615, %v1614
        %v1650 = vpack.c.b16 %v1617, %v1616
        %v1651 = vpack.c.b16 %v1619, %v1618
        %v1652 = vpack.c.b16 %v1621, %v1620
        %v1653 = vpack.c.b16 %v1623, %v1622
        %v1654 = vpack.c.b16 %v1625, %v1624
        %v1655 = vpack.c.b16 %v1627, %v1626
        %v1656 = vpack.c.b16 %v1629, %v1628
        %v1657 = vpack.c.b16 %v1631, %v1630
        %v1658 = vpack.c.b16 %v1633, %v1632
        %v1659 = vpack.c.b16 %v1635, %v1634
        %1684 = vmatprep.subr.bf16.mxu0 0
        %1685 = vmatpush1.bf16.msra.mxu0 %v1636
        %1686 = vmatprep.subr.bf16.mxu0 0
        %1687 = vmatpush1.bf16.msra.mxu0 %v1637
        %1688 = vmatprep.subr.bf16.mxu0 0
        %1689 = vmatpush1.bf16.msra.mxu0 %v1638
        %1690 = vmatprep.subr.bf16.mxu0 0
        %1691 = vmatpush1.bf16.msra.mxu0 %v1639
        %1692 = vmatprep.subr.bf16.mxu0 0
        %1693 = vmatpush1.bf16.msra.mxu0 %v1640
        %1694 = vmatprep.subr.bf16.mxu0 0
        %1695 = vmatpush1.bf16.msra.mxu0 %v1641
        %1696 = vmatprep.subr.bf16.mxu0 0
        %1697 = vmatpush1.bf16.msra.mxu0 %v1642
        %1698 = vmatprep.subr.bf16.mxu0 0
        %1699 = vmatpush1.bf16.msra.mxu0 %v1643
        %1700 = vmatprep.subr.bf16.mxu0 0
        %1701 = vmatpush1.bf16.msra.mxu0 %v1644
        %1702 = vmatprep.subr.bf16.mxu0 0
        %1703 = vmatpush1.bf16.msra.mxu0 %v1645
        %1704 = vmatprep.subr.bf16.mxu0 0
        %1705 = vmatpush1.bf16.msra.mxu0 %v1646
        %1706 = vmatprep.subr.bf16.mxu0 0
        %1707 = vmatpush1.bf16.msra.mxu0 %v1647
        %1708 = vmatprep.subr.bf16.mxu0 0
        %1709 = vmatpush1.bf16.msra.mxu0 %v1648
        %1710 = vmatprep.subr.bf16.mxu0 0
        %1711 = vmatpush1.bf16.msra.mxu0 %v1649
        %1712 = vmatprep.subr.bf16.mxu0 0
        %1713 = vmatpush1.bf16.msra.mxu0 %v1650
        %1714 = vmatprep.subr.bf16.mxu0 0
        %1715 = vmatpush1.bf16.msra.mxu0 %v1651
        %1716 = vmatprep.mubr.bf16.mxu0 %v1517
        %1717 = vmatmul.mubr.bf16.gmra.mrb[0].mxu0 %v1516
        %v1718 = vpop.f32.mrb[0].mxu0
        %v1719 = vadd.f32 0.0, %v1718
        %v1720 = vpop.f32.mrb[0].mxu0
        %v1721 = vpop.f32.mrb[0].mxu0
        %v1722 = vadd.f32 0.0, %v1721
        %v1723 = vpop.f32.mrb[0].mxu0
        %1724 = vmatprep.mubr.bf16.mxu0 %v1520
        %1725 = vmatmul.mubr.bf16.gmra.mrb[0].mxu0 %v1519
        %v1726 = vpop.f32.mrb[0].mxu0
        %v1727 = vadd.f32 0.0, %v1726
        %v1728 = vpop.f32.mrb[0].mxu0
        %v1729 = vpop.f32.mrb[0].mxu0
        %v1730 = vadd.f32 0.0, %v1729
        %v1731 = vpop.f32.mrb[0].mxu0
        %1732 = vmatprep.mubr.bf16.mxu0 %v1523
        %1733 = vmatmul.mubr.bf16.gmra.mrb[0].mxu0 %v1522
        %v1734 = vpop.f32.mrb[0].mxu0
        %v1735 = vadd.f32 0.0, %v1734
        %v1736 = vpop.f32.mrb[0].mxu0
        %v1737 = vpop.f32.mrb[0].mxu0
        %v1738 = vadd.f32 0.0, %v1737
        %v1739 = vpop.f32.mrb[0].mxu0
        %1740 = vmatprep.mubr.bf16.mxu0 %v1526
        %1741 = vmatmul.mubr.bf16.gmra.mrb[0].mxu0 %v1525
        %v1742 = vpop.f32.mrb[0].mxu0
        %v1743 = vadd.f32 0.0, %v1742
        %v1744 = vpop.f32.mrb[0].mxu0
        %v1745 = vpop.f32.mrb[0].mxu0
        %v1746 = vadd.f32 0.0, %v1745
        %v1747 = vpop.f32.mrb[0].mxu0
        %1748 = vdwg.mxu0
        %1749 = vmatprep.subr.bf16.mxu0 0
        %1750 = vmatpush1.bf16.msra.mxu0 %v1652
        %1751 = vmatprep.subr.bf16.mxu0 0
        %1752 = vmatpush1.bf16.msra.mxu0 %v1653
        %1753 = vmatprep.subr.bf16.mxu0 0
        %1754 = vmatpush1.bf16.msra.mxu0 %v1654
        %1755 = vmatprep.subr.bf16.mxu0 0
        %1756 = vmatpush1.bf16.msra.mxu0 %v1655
        %1757 = vmatprep.subr.bf16.mxu0 0
        %1758 = vmatpush1.bf16.msra.mxu0 %v1656
        %1759 = vmatprep.subr.bf16.mxu0 0
        %1760 = vmatpush1.bf16.msra.mxu0 %v1657
        %1761 = vmatprep.subr.bf16.mxu0 0
        %1762 = vmatpush1.bf16.msra.mxu0 %v1658
        %1763 = vmatprep.subr.bf16.mxu0 0
        %1764 = vmatpush1.bf16.msra.mxu0 %v1659
        %1765 = vmatprep.subr.bf16.mxu0 0
        %1766 = vmatpush1.bf16.msra.mxu0 0
        %1767 = vmatprep.subr.bf16.mxu0 0
        %1768 = vmatpush1.bf16.msra.mxu0 0
        %1769 = vmatprep.subr.bf16.mxu0 0
        %1770 = vmatpush1.bf16.msra.mxu0 0
        %1771 = vmatprep.subr.bf16.mxu0 0
        %1772 = vmatpush1.bf16.msra.mxu0 0
        %1773 = vmatprep.subr.bf16.mxu0 0
        %1774 = vmatpush1.bf16.msra.mxu0 0
        %1775 = vmatprep.subr.bf16.mxu0 0
        %1776 = vmatpush1.bf16.msra.mxu0 0
        %1777 = vmatprep.subr.bf16.mxu0 0
        %1778 = vmatpush1.bf16.msra.mxu0 0
        %1779 = vmatprep.subr.bf16.mxu0 0
        %1780 = vmatpush1.bf16.msra.mxu0 0
        %1781 = vmatprep.mubr.bf16.mxu0 0
        %1782 = vmatmul.mubr.bf16.gmra.mrb[0].mxu0 %v1518
        %v1783 = vpop.f32.mrb[0].mxu0
        %v1784 = vadd.f32 %v1719, %v1783
        %v1785 = vpop.f32.mrb[0].mxu0
        %v1786 = vpop.f32.mrb[0].mxu0
        %v1787 = vadd.f32 %v1722, %v1786
        %v1788 = vpop.f32.mrb[0].mxu0
        %1789 = vmatprep.mubr.bf16.mxu0 0
        %1790 = vmatmul.mubr.bf16.gmra.mrb[0].mxu0 %v1521
        %v1791 = vpop.f32.mrb[0].mxu0
        %v1792 = vadd.f32 %v1727, %v1791
        %v1793 = vpop.f32.mrb[0].mxu0
        %v1794 = vpop.f32.mrb[0].mxu0
        %v1795 = vadd.f32 %v1730, %v1794
        %v1796 = vpop.f32.mrb[0].mxu0
        %1797 = vmatprep.mubr.bf16.mxu0 0
        %1798 = vmatmul.mubr.bf16.gmra.mrb[0].mxu0 %v1524
        %v1799 = vpop.f32.mrb[0].mxu0
        %v1800 = vadd.f32 %v1735, %v1799
        %v1801 = vpop.f32.mrb[0].mxu0
        %v1802 = vpop.f32.mrb[0].mxu0
        %v1803 = vadd.f32 %v1738, %v1802
        %v1804 = vpop.f32.mrb[0].mxu0
        %1805 = vmatprep.mubr.bf16.mxu0 0
        %1806 = vmatmul.mubr.bf16.gmra.mrb[0].mxu0 %v1527
        %v1807 = vpop.f32.mrb[0].mxu0
        %v1808 = vadd.f32 %v1743, %v1807
        %v1809 = vpop.f32.mrb[0].mxu0
        %v1810 = vpop.f32.mrb[0].mxu0
        %v1811 = vadd.f32 %v1746, %v1810
        %v1812 = vpop.f32.mrb[0].mxu0
        %1813 = vdwg.mxu0
        %v1814 = vadd.f32 %v1300, %v1784
        %v1815 = vadd.f32 %v1303, %v1787
        %v1816 = vadd.f32 %v1308, %v1792
        %v1817 = vadd.f32 %v1311, %v1795
        %v1818 = vadd.f32 %v1316, %v1800
        %v1819 = vadd.f32 %v1319, %v1803
        %v1820 = vadd.f32 %v1324, %v1808
        %v1821 = vadd.f32 %v1327, %v1811
        %v1822 = vadd.f32 %v1814, %v1815
        %v1823 = vadd.f32 %v1822, %v1816
        %v1824 = vadd.f32 %v1823, %v1817
        %v1825 = vadd.f32 %v1824, %v1818
        %v1826 = vadd.f32 %v1825, %v1819
        %v1827 = vadd.f32 %v1826, %v1820
        %v1828 = vadd.f32 %v1827, %v1821
        %v1829 = vrot.slane %v1828, 4
        %v1830 = vadd.f32 %v1828, %v1829
        %v1831 = vrot.slane %v1830, 2
        %v1832 = vadd.f32 %v1830, %v1831
        %v1833 = vrot.slane %v1832, 1
        %v1834 = vadd.f32 %v1832, %v1833
        %v1835 = vmul.f32 %v1814, %v1814
        %v1836 = vmul.f32 %v1815, %v1815
        %v1837 = vmul.f32 %v1816, %v1816
        %v1838 = vmul.f32 %v1817, %v1817
        %v1839 = vmul.f32 %v1818, %v1818
        %v1840 = vmul.f32 %v1819, %v1819
        %v1841 = vmul.f32 %v1820, %v1820
        %v1842 = vmul.f32 %v1821, %v1821
        %v1843 = vadd.f32 %v1835, %v1836
        %v1844 = vadd.f32 %v1843, %v1837
        %v1845 = vadd.f32 %v1844, %v1838
        %v1846 = vadd.f32 %v1845, %v1839
        %v1847 = vadd.f32 %v1846, %v1840
        %v1848 = vadd.f32 %v1847, %v1841
        %v1849 = vadd.f32 %v1848, %v1842
        %v1850 = vrot.slane %v1849, 4
        %v1851 = vadd.f32 %v1849, %v1850
        %v1852 = vrot.slane %v1851, 2
        %v1853 = vadd.f32 %v1851, %v1852
        %v1854 = vrot.slane %v1853, 1
        %v1855 = vadd.f32 %v1853, %v1854
        %v1856 = vmul.f32 %v1834, 0.015625
        %v1857 = vmul.f32 %v1855, 0.015625
        %v1858 = vmul.f32 %v1856, %v1856
        %v1859 = vsub.f32 %v1857, %v1858
        %v1860 = vmax.f32 %v1859, 0.0
        %v1861 = vsub.f32 %v1814, %v1856
        %v1862 = vsub.f32 %v1815, %v1856
        %v1863 = vsub.f32 %v1816, %v1856
        %v1864 = vsub.f32 %v1817, %v1856
        %v1865 = vsub.f32 %v1818, %v1856
        %v1866 = vsub.f32 %v1819, %v1856
        %v1867 = vsub.f32 %v1820, %v1856
        %v1868 = vsub.f32 %v1821, %v1856
        %v1869 = vadd.f32 %v1860, 1e-05
        %v1870 = vrsqrt.pop %v1869
        %v1871 = vmul.f32 %v1861, %v1870
        %v1872 = vmul.f32 %v1862, %v1870
        %v1873 = vmul.f32 %v1863, %v1870
        %v1874 = vmul.f32 %v1864, %v1870
        %v1875 = vmul.f32 %v1865, %v1870
        %v1876 = vmul.f32 %v1866, %v1870
        %v1877 = vmul.f32 %v1867, %v1870
        %v1878 = vmul.f32 %v1868, %v1870
        %v1879 = vmax.f32 %v1871, 0.0
        %v1880 = vmax.f32 %v1872, 0.0
        %v1881 = vmax.f32 %v1873, 0.0
        %v1882 = vmax.f32 %v1874, 0.0
        %v1883 = vmax.f32 %v1875, 0.0
        %v1884 = vmax.f32 %v1876, 0.0
        %v1885 = vmax.f32 %v1877, 0.0
        %v1886 = vmax.f32 %v1878, 0.0
        %1887 = vst [vmem:[#allocation3] sm:$0xf] 0
        %1888 = vst [vmem:[#allocation3 + $0x4] sm:$0x1] 0
        %1889 = vst [vmem:[#allocation3 + $0x8] sm:$0xf] 0
        %1890 = vst [vmem:[#allocation3 + $0xc] sm:$0x1] 0
        %1891 = vst [vmem:[#allocation3 + $0x10] sm:$0xf] 0
        %1892 = vst [vmem:[#allocation3 + $0x14] sm:$0x1] 0
        %1893 = vst [vmem:[#allocation3 + $0x18] sm:$0xf] 0
        %1894 = vst [vmem:[#allocation3 + $0x1c] sm:$0x1] 0
        %1895 = vst [vmem:[#allocation3 + $0x20] sm:$0xf] 0
        %1896 = vst [vmem:[#allocation3 + $0x24] sm:$0x1] 0
        %1897 = vst [vmem:[#allocation3 + $0x28] sm:$0xf] 0
        %1898 = vst [vmem:[#allocation3 + $0x2c] sm:$0x1] 0
        %1899 = vst [vmem:[#allocation3 + $0x30] sm:$0xf] 0
        %1900 = vst [vmem:[#allocation3 + $0x34] sm:$0x1] 0
        %1901 = vst [vmem:[#allocation3 + $0x38] sm:$0xf] 0
        %1902 = vst [vmem:[#allocation3 + $0x3c] sm:$0x1] 0
        %1903 = vst [vmem:[#allocation3 + $0x40] sm:$0xf] 0
        %1904 = vst [vmem:[#allocation3 + $0x44] sm:$0x1] 0
        %1905 = vst [vmem:[#allocation3 + $0x48] sm:$0xf] 0
        %1906 = vst [vmem:[#allocation3 + $0x4c] sm:$0x1] 0
        %v1907 = vpack.c.bf16 %v1879, %v1879
        %v1908 = vpack.c.bf16 %v1880, %v1880
        %v1909 = vpack.c.bf16 %v1881, %v1881
        %v1910 = vpack.c.bf16 %v1882, %v1882
        %v1911 = vpack.c.bf16 %v1883, %v1883
        %v1912 = vpack.c.bf16 %v1884, %v1884
        %v1913 = vpack.c.bf16 %v1885, %v1885
        %v1914 = vpack.c.bf16 %v1886, %v1886
        %v1923 = vunpack.c.l.b16 %v1907
        %v1924 = vunpack.c.l.b16 %v1908
        %v1925 = vunpack.c.l.b16 %v1909
        %v1926 = vunpack.c.l.b16 %v1910
        %v1927 = vunpack.c.l.b16 %v1911
        %v1928 = vunpack.c.l.b16 %v1912
        %v1929 = vunpack.c.l.b16 %v1913
        %v1930 = vunpack.c.l.b16 %v1914
        %v1931 = vpack.c.b16 %v1923, %v1923
        %v1932 = vpack.c.b16 %v1924, %v1924
        %v1933 = vpack.c.b16 %v1925, %v1925
        %v1934 = vpack.c.b16 %v1926, %v1926
        %v1935 = vpack.c.b16 %v1927, %v1927
        %v1936 = vpack.c.b16 %v1928, %v1928
        %v1937 = vpack.c.b16 %v1929, %v1929
        %v1938 = vpack.c.b16 %v1930, %v1930
        %v1940 = vshrl.u32 %v1931, 16
        %v1942 = vrot.slane %v1940, 7
        %v1943 = vshll.u32 %v1931, 16
        %v1945 = vor.u32 %v1942, %v1943
        %v1946 = vrot.slane %v1942, 4
        %v1948 = vshrl.u32 %v1932, 16
        %v1950 = vrot.slane %v1948, 7
        %v1951 = vshll.u32 %v1932, 16
        %v1953 = vor.u32 %v1950, %v1951
        %v1954 = vrot.slane %v1950, 4
        %v1956 = vshrl.u32 %v1933, 16
        %v1958 = vrot.slane %v1956, 7
        %v1959 = vshll.u32 %v1933, 16
        %v1961 = vor.u32 %v1958, %v1959
        %v1962 = vrot.slane %v1958, 4
        %v1964 = vshrl.u32 %v1934, 16
        %v1966 = vrot.slane %v1964, 7
        %v1967 = vshll.u32 %v1934, 16
        %v1969 = vor.u32 %v1966, %v1967
        %v1970 = vrot.slane %v1966, 4
        %v1972 = vshrl.u32 %v1935, 16
        %v1974 = vrot.slane %v1972, 7
        %v1975 = vshll.u32 %v1935, 16
        %v1977 = vor.u32 %v1974, %v1975
        %v1978 = vrot.slane %v1974, 4
        %v1980 = vshrl.u32 %v1936, 16
        %v1982 = vrot.slane %v1980, 7
        %v1983 = vshll.u32 %v1936, 16
        %v1985 = vor.u32 %v1982, %v1983
        %v1986 = vrot.slane %v1982, 4
        %v1988 = vshrl.u32 %v1937, 16
        %v1990 = vrot.slane %v1988, 7
        %v1991 = vshll.u32 %v1937, 16
        %v1993 = vor.u32 %v1990, %v1991
        %v1994 = vrot.slane %v1990, 4
        %v1996 = vshrl.u32 %v1938, 16
        %v1998 = vrot.slane %v1996, 7
        %v1999 = vshll.u32 %v1938, 16
        %v2001 = vor.u32 %v1998, %v1999
        %v2002 = vrot.slane %v1998, 4
        %s2019 = scalar_lea.vmem [#allocation3], 8
        %v2020 = vld [vmem:[%s2019] sm:$0xf]
        %v2021 = vsel %vm313, %v1945, %v2020
        %2022 = vst [vmem:[%s2019] sm:$0xf] %v2021
        %v2023 = vld [vmem:[%s2019 + $0x4] sm:$0x1]
        %v2024 = vsel %vm319, %v1946, %v2023
        %2025 = vst [vmem:[%s2019 + $0x4] sm:$0x1] %v2024
        %v2026 = vld [vmem:[%s2019 + $0x8] sm:$0xf]
        %v2027 = vsel %vm313, %v1953, %v2026
        %2028 = vst [vmem:[%s2019 + $0x8] sm:$0xf] %v2027
        %v2029 = vld [vmem:[%s2019 + $0xc] sm:$0x1]
        %v2030 = vsel %vm319, %v1954, %v2029
        %2031 = vst [vmem:[%s2019 + $0xc] sm:$0x1] %v2030
        %v2032 = vld [vmem:[%s2019 + $0x10] sm:$0xf]
        %v2033 = vsel %vm313, %v1961, %v2032
        %2034 = vst [vmem:[%s2019 + $0x10] sm:$0xf] %v2033
        %v2035 = vld [vmem:[%s2019 + $0x14] sm:$0x1]
        %v2036 = vsel %vm319, %v1962, %v2035
        %2037 = vst [vmem:[%s2019 + $0x14] sm:$0x1] %v2036
        %v2038 = vld [vmem:[%s2019 + $0x18] sm:$0xf]
        %v2039 = vsel %vm313, %v1969, %v2038
        %2040 = vst [vmem:[%s2019 + $0x18] sm:$0xf] %v2039
        %v2041 = vld [vmem:[%s2019 + $0x1c] sm:$0x1]
        %v2042 = vsel %vm319, %v1970, %v2041
        %2043 = vst [vmem:[%s2019 + $0x1c] sm:$0x1] %v2042
        %v2044 = vld [vmem:[%s2019 + $0x20] sm:$0xf]
        %v2045 = vsel %vm313, %v1977, %v2044
        %2046 = vst [vmem:[%s2019 + $0x20] sm:$0xf] %v2045
        %v2047 = vld [vmem:[%s2019 + $0x24] sm:$0x1]
        %v2048 = vsel %vm319, %v1978, %v2047
        %2049 = vst [vmem:[%s2019 + $0x24] sm:$0x1] %v2048
        %v2050 = vld [vmem:[%s2019 + $0x28] sm:$0xf]
        %v2051 = vsel %vm313, %v1985, %v2050
        %2052 = vst [vmem:[%s2019 + $0x28] sm:$0xf] %v2051
        %v2053 = vld [vmem:[%s2019 + $0x2c] sm:$0x1]
        %v2054 = vsel %vm319, %v1986, %v2053
        %2055 = vst [vmem:[%s2019 + $0x2c] sm:$0x1] %v2054
        %v2056 = vld [vmem:[%s2019 + $0x30] sm:$0xf]
        %v2057 = vsel %vm313, %v1993, %v2056
        %2058 = vst [vmem:[%s2019 + $0x30] sm:$0xf] %v2057
        %v2059 = vld [vmem:[%s2019 + $0x34] sm:$0x1]
        %v2060 = vsel %vm319, %v1994, %v2059
        %2061 = vst [vmem:[%s2019 + $0x34] sm:$0x1] %v2060
        %v2062 = vld [vmem:[%s2019 + $0x38] sm:$0xf]
        %v2063 = vsel %vm313, %v2001, %v2062
        %2064 = vst [vmem:[%s2019 + $0x38] sm:$0xf] %v2063
        %v2065 = vld [vmem:[%s2019 + $0x3c] sm:$0x1]
        %v2066 = vsel %vm319, %v2002, %v2065
        %2067 = vst [vmem:[%s2019 + $0x3c] sm:$0x1] %v2066
        %v2068 = vld [vmem:[#allocation3] sm:$0xf]
        %v2069 = vld [vmem:[#allocation3 + $0x4] sm:$0x1]
        %v2070 = vld [vmem:[#allocation3 + $0x8] sm:$0xf]
        %v2071 = vld [vmem:[#allocation3 + $0xc] sm:$0x1]
        %v2072 = vld [vmem:[#allocation3 + $0x10] sm:$0xf]
        %v2073 = vld [vmem:[#allocation3 + $0x14] sm:$0x1]
        %v2074 = vld [vmem:[#allocation3 + $0x18] sm:$0xf]
        %v2075 = vld [vmem:[#allocation3 + $0x1c] sm:$0x1]
        %v2076 = vld [vmem:[#allocation3 + $0x20] sm:$0xf]
        %v2077 = vld [vmem:[#allocation3 + $0x24] sm:$0x1]
        %v2078 = vld [vmem:[#allocation3 + $0x28] sm:$0xf]
        %v2079 = vld [vmem:[#allocation3 + $0x2c] sm:$0x1]
        %v2080 = vld [vmem:[#allocation3 + $0x30] sm:$0xf]
        %v2081 = vld [vmem:[#allocation3 + $0x34] sm:$0x1]
        %v2082 = vld [vmem:[#allocation3 + $0x38] sm:$0xf]
        %v2083 = vld [vmem:[#allocation3 + $0x3c] sm:$0x1]
        %v2100 = vunpack.c.l.b16 %v2068
        %v2101 = vunpack.c.l.b16 %v2069
        %v2102 = vunpack.c.l.b16 %v2070
        %v2103 = vunpack.c.l.b16 %v2071
        %v2104 = vunpack.c.l.b16 %v2072
        %v2105 = vunpack.c.l.b16 %v2073
        %v2106 = vunpack.c.l.b16 %v2074
        %v2107 = vunpack.c.l.b16 %v2075
        %v2108 = vunpack.c.l.b16 %v2076
        %v2109 = vunpack.c.l.b16 %v2077
        %v2110 = vunpack.c.l.b16 %v2078
        %v2111 = vunpack.c.l.b16 %v2079
        %v2112 = vunpack.c.l.b16 %v2080
        %v2113 = vunpack.c.l.b16 %v2081
        %v2114 = vunpack.c.l.b16 %v2082
        %v2115 = vunpack.c.l.b16 %v2083
        %v2116 = vpack.c.b16 %v2101, %v2100
        %v2117 = vpack.c.b16 %v2103, %v2102
        %v2118 = vpack.c.b16 %v2105, %v2104
        %v2119 = vpack.c.b16 %v2107, %v2106
        %v2120 = vpack.c.b16 %v2109, %v2108
        %v2121 = vpack.c.b16 %v2111, %v2110
        %v2122 = vpack.c.b16 %v2113, %v2112
        %v2123 = vpack.c.b16 %v2115, %v2114
        %v2125 = vshrl.u32 %v2116, 16
        %v2127 = vshll.u32 %v2116, 16
        %v2129 = vrot.slane %v2127, 1
        %v2130 = vor.u32 %v2125, %v2129
        %v2132 = vshrl.u32 %v2117, 16
        %v2134 = vshll.u32 %v2117, 16
        %v2136 = vrot.slane %v2134, 1
        %v2137 = vor.u32 %v2132, %v2136
        %v2139 = vshrl.u32 %v2118, 16
        %v2141 = vshll.u32 %v2118, 16
        %v2143 = vrot.slane %v2141, 1
        %v2144 = vor.u32 %v2139, %v2143
        %v2146 = vshrl.u32 %v2119, 16
        %v2148 = vshll.u32 %v2119, 16
        %v2150 = vrot.slane %v2148, 1
        %v2151 = vor.u32 %v2146, %v2150
        %v2153 = vshrl.u32 %v2120, 16
        %v2155 = vshll.u32 %v2120, 16
        %v2157 = vrot.slane %v2155, 1
        %v2158 = vor.u32 %v2153, %v2157
        %v2160 = vshrl.u32 %v2121, 16
        %v2162 = vshll.u32 %v2121, 16
        %v2164 = vrot.slane %v2162, 1
        %v2165 = vor.u32 %v2160, %v2164
        %v2167 = vshrl.u32 %v2122, 16
        %v2169 = vshll.u32 %v2122, 16
        %v2171 = vrot.slane %v2169, 1
        %v2172 = vor.u32 %v2167, %v2171
        %v2174 = vshrl.u32 %v2123, 16
        %v2176 = vshll.u32 %v2123, 16
        %v2178 = vrot.slane %v2176, 1
        %v2179 = vor.u32 %v2174, %v2178
        %v2180 = vrot.slane %v2116, 1
        %v2181 = vrot.slane %v2117, 1
        %v2182 = vrot.slane %v2118, 1
        %v2183 = vrot.slane %v2119, 1
        %v2184 = vrot.slane %v2120, 1
        %v2185 = vrot.slane %v2121, 1
        %v2186 = vrot.slane %v2122, 1
        %v2187 = vrot.slane %v2123, 1
        %v2188 = vunpack.c.l.b16 %v2130
        %v2189 = vunpack.c.l.b16 %v2180
        %v2190 = vunpack.c.l.b16 %v2137
        %v2191 = vunpack.c.l.b16 %v2181
        %v2192 = vunpack.c.l.b16 %v2144
        %v2193 = vunpack.c.l.b16 %v2182
        %v2194 = vunpack.c.l.b16 %v2151
        %v2195 = vunpack.c.l.b16 %v2183
        %v2196 = vunpack.c.l.b16 %v2158
        %v2197 = vunpack.c.l.b16 %v2184
        %v2198 = vunpack.c.l.b16 %v2165
        %v2199 = vunpack.c.l.b16 %v2185
        %v2200 = vunpack.c.l.b16 %v2172
        %v2201 = vunpack.c.l.b16 %v2186
        %v2202 = vunpack.c.l.b16 %v2179
        %v2203 = vunpack.c.l.b16 %v2187
        %v2204 = vld [vmem:[%s2] sm:$0xf]
        %v2205 = vld [vmem:[%s2 + $0x4] sm:$0xf]
        %v2206 = vld [vmem:[%s2 + $0x8] sm:$0xf]
        %v2207 = vld [vmem:[%s2 + $0xc] sm:$0xf]
        %v2208 = vld [vmem:[%s2 + $0x10] sm:$0xf]
        %v2209 = vld [vmem:[%s2 + $0x14] sm:$0xf]
        %v2210 = vld [vmem:[%s2 + $0x18] sm:$0xf]
        %v2211 = vld [vmem:[%s2 + $0x1c] sm:$0xf]
        %v2212 = vld [vmem:[%s2 + $0x20] sm:$0xf]
        %v2213 = vld [vmem:[%s2 + $0x24] sm:$0xf]
        %v2214 = vld [vmem:[%s2 + $0x28] sm:$0xf]
        %v2215 = vld [vmem:[%s2 + $0x2c] sm:$0xf]
        %v2216 = vld [vmem:[%s2 + $0x30] sm:$0xf]
        %v2217 = vld [vmem:[%s2 + $0x34] sm:$0xf]
        %v2218 = vld [vmem:[%s2 + $0x38] sm:$0xf]
        %v2219 = vld [vmem:[%s2 + $0x3c] sm:$0xf]
        %v2220 = vld [vmem:[%s2 + $0x40] sm:$0xf]
        %v2221 = vld [vmem:[%s2 + $0x44] sm:$0xf]
        %v2222 = vld [vmem:[%s2 + $0x48] sm:$0xf]
        %v2223 = vld [vmem:[%s2 + $0x4c] sm:$0xf]
        %v2224 = vld [vmem:[%s2 + $0x50] sm:$0xf]
        %v2225 = vld [vmem:[%s2 + $0x54] sm:$0xf]
        %v2226 = vld [vmem:[%s2 + $0x58] sm:$0xf]
        %v2227 = vld [vmem:[%s2 + $0x5c] sm:$0xf]
        %v2228 = vld [vmem:[%s2 + $0x60] sm:$0xf]
        %v2229 = vld [vmem:[%s2 + $0x64] sm:$0xf]
        %v2230 = vld [vmem:[%s2 + $0x68] sm:$0xf]
        %v2231 = vld [vmem:[%s2 + $0x6c] sm:$0xf]
        %v2232 = vld [vmem:[%s2 + $0x70] sm:$0xf]
        %v2233 = vld [vmem:[%s2 + $0x74] sm:$0xf]
        %v2234 = vld [vmem:[%s2 + $0x78] sm:$0xf]
        %v2235 = vld [vmem:[%s2 + $0x7c] sm:$0xf]
        %v2236 = vld [vmem:[%s2 + $0x80] sm:$0xf]
        %v2237 = vld [vmem:[%s2 + $0x84] sm:$0xf]
        %v2238 = vld [vmem:[%s2 + $0x88] sm:$0xf]
        %v2239 = vld [vmem:[%s2 + $0x8c] sm:$0xf]
        %v2240 = vld [vmem:[%s2 + $0x90] sm:$0xf]
        %v2241 = vld [vmem:[%s2 + $0x94] sm:$0xf]
        %v2242 = vld [vmem:[%s2 + $0x98] sm:$0xf]
        %v2243 = vld [vmem:[%s2 + $0x9c] sm:$0xf]
        %v2244 = vld [vmem:[%s2 + $0xa0] sm:$0xf]
        %v2245 = vld [vmem:[%s2 + $0xa4] sm:$0xf]
        %v2246 = vld [vmem:[%s2 + $0xa8] sm:$0xf]
        %v2247 = vld [vmem:[%s2 + $0xac] sm:$0xf]
        %v2248 = vld [vmem:[%s2 + $0xb0] sm:$0xf]
        %v2249 = vld [vmem:[%s2 + $0xb4] sm:$0xf]
        %v2250 = vld [vmem:[%s2 + $0xb8] sm:$0xf]
        %v2251 = vld [vmem:[%s2 + $0xbc] sm:$0xf]
        %v2252 = vld [vmem:[%s2019] sm:$0xf]
        %v2253 = vld [vmem:[%s2019 + $0x4] sm:$0x1]
        %v2254 = vld [vmem:[%s2019 + $0x8] sm:$0xf]
        %v2255 = vld [vmem:[%s2019 + $0xc] sm:$0x1]
        %v2256 = vld [vmem:[%s2019 + $0x10] sm:$0xf]
        %v2257 = vld [vmem:[%s2019 + $0x14] sm:$0x1]
        %v2258 = vld [vmem:[%s2019 + $0x18] sm:$0xf]
        %v2259 = vld [vmem:[%s2019 + $0x1c] sm:$0x1]
        %v2260 = vld [vmem:[%s2019 + $0x20] sm:$0xf]
        %v2261 = vld [vmem:[%s2019 + $0x24] sm:$0x1]
        %v2262 = vld [vmem:[%s2019 + $0x28] sm:$0xf]
        %v2263 = vld [vmem:[%s2019 + $0x2c] sm:$0x1]
        %v2264 = vld [vmem:[%s2019 + $0x30] sm:$0xf]
        %v2265 = vld [vmem:[%s2019 + $0x34] sm:$0x1]
        %v2266 = vld [vmem:[%s2019 + $0x38] sm:$0xf]
        %v2267 = vld [vmem:[%s2019 + $0x3c] sm:$0x1]
        %v2284 = vunpack.c.l.b16 %v2252
        %v2285 = vunpack.c.l.b16 %v2253
        %v2286 = vunpack.c.l.b16 %v2254
        %v2287 = vunpack.c.l.b16 %v2255
        %v2288 = vunpack.c.l.b16 %v2256
        %v2289 = vunpack.c.l.b16 %v2257
        %v2290 = vunpack.c.l.b16 %v2258
        %v2291 = vunpack.c.l.b16 %v2259
        %v2292 = vunpack.c.l.b16 %v2260
        %v2293 = vunpack.c.l.b16 %v2261
        %v2294 = vunpack.c.l.b16 %v2262
        %v2295 = vunpack.c.l.b16 %v2263
        %v2296 = vunpack.c.l.b16 %v2264
        %v2297 = vunpack.c.l.b16 %v2265
        %v2298 = vunpack.c.l.b16 %v2266
        %v2299 = vunpack.c.l.b16 %v2267
        %v2300 = vpack.c.b16 %v2285, %v2284
        %v2301 = vpack.c.b16 %v2287, %v2286
        %v2302 = vpack.c.b16 %v2289, %v2288
        %v2303 = vpack.c.b16 %v2291, %v2290
        %v2304 = vpack.c.b16 %v2293, %v2292
        %v2305 = vpack.c.b16 %v2295, %v2294
        %v2306 = vpack.c.b16 %v2297, %v2296
        %v2307 = vpack.c.b16 %v2299, %v2298
        %v2309 = vshrl.u32 %v2300, 16
        %v2311 = vshll.u32 %v2300, 16
        %v2313 = vrot.slane %v2311, 1
        %v2314 = vor.u32 %v2309, %v2313
        %v2316 = vshrl.u32 %v2301, 16
        %v2318 = vshll.u32 %v2301, 16
        %v2320 = vrot.slane %v2318, 1
        %v2321 = vor.u32 %v2316, %v2320
        %v2323 = vshrl.u32 %v2302, 16
        %v2325 = vshll.u32 %v2302, 16
        %v2327 = vrot.slane %v2325, 1
        %v2328 = vor.u32 %v2323, %v2327
        %v2330 = vshrl.u32 %v2303, 16
        %v2332 = vshll.u32 %v2303, 16
        %v2334 = vrot.slane %v2332, 1
        %v2335 = vor.u32 %v2330, %v2334
        %v2337 = vshrl.u32 %v2304, 16
        %v2339 = vshll.u32 %v2304, 16
        %v2341 = vrot.slane %v2339, 1
        %v2342 = vor.u32 %v2337, %v2341
        %v2344 = vshrl.u32 %v2305, 16
        %v2346 = vshll.u32 %v2305, 16
        %v2348 = vrot.slane %v2346, 1
        %v2349 = vor.u32 %v2344, %v2348
        %v2351 = vshrl.u32 %v2306, 16
        %v2353 = vshll.u32 %v2306, 16
        %v2355 = vrot.slane %v2353, 1
        %v2356 = vor.u32 %v2351, %v2355
        %v2358 = vshrl.u32 %v2307, 16
        %v2360 = vshll.u32 %v2307, 16
        %v2362 = vrot.slane %v2360, 1
        %v2363 = vor.u32 %v2358, %v2362
        %v2364 = vrot.slane %v2300, 1
        %v2365 = vrot.slane %v2301, 1
        %v2366 = vrot.slane %v2302, 1
        %v2367 = vrot.slane %v2303, 1
        %v2368 = vrot.slane %v2304, 1
        %v2369 = vrot.slane %v2305, 1
        %v2370 = vrot.slane %v2306, 1
        %v2371 = vrot.slane %v2307, 1
        %v2372 = vunpack.c.l.b16 %v2314
        %v2373 = vunpack.c.l.b16 %v2364
        %v2374 = vunpack.c.l.b16 %v2321
        %v2375 = vunpack.c.l.b16 %v2365
        %v2376 = vunpack.c.l.b16 %v2328
        %v2377 = vunpack.c.l.b16 %v2366
        %v2378 = vunpack.c.l.b16 %v2335
        %v2379 = vunpack.c.l.b16 %v2367
        %v2380 = vunpack.c.l.b16 %v2342
        %v2381 = vunpack.c.l.b16 %v2368
        %v2382 = vunpack.c.l.b16 %v2349
        %v2383 = vunpack.c.l.b16 %v2369
        %v2384 = vunpack.c.l.b16 %v2356
        %v2385 = vunpack.c.l.b16 %v2370
        %v2386 = vunpack.c.l.b16 %v2363
        %v2387 = vunpack.c.l.b16 %v2371
        %s2388 = scalar_lea.vmem %s2, 192
        %v2389 = vld [vmem:[%s2388] sm:$0xf]
        %v2390 = vld [vmem:[%s2388 + $0x4] sm:$0xf]
        %v2391 = vld [vmem:[%s2388 + $0x8] sm:$0xf]
        %v2392 = vld [vmem:[%s2388 + $0xc] sm:$0xf]
        %v2393 = vld [vmem:[%s2388 + $0x10] sm:$0xf]
        %v2394 = vld [vmem:[%s2388 + $0x14] sm:$0xf]
        %v2395 = vld [vmem:[%s2388 + $0x18] sm:$0xf]
        %v2396 = vld [vmem:[%s2388 + $0x1c] sm:$0xf]
        %v2397 = vld [vmem:[%s2388 + $0x20] sm:$0xf]
        %v2398 = vld [vmem:[%s2388 + $0x24] sm:$0xf]
        %v2399 = vld [vmem:[%s2388 + $0x28] sm:$0xf]
        %v2400 = vld [vmem:[%s2388 + $0x2c] sm:$0xf]
        %v2401 = vld [vmem:[%s2388 + $0x30] sm:$0xf]
        %v2402 = vld [vmem:[%s2388 + $0x34] sm:$0xf]
        %v2403 = vld [vmem:[%s2388 + $0x38] sm:$0xf]
        %v2404 = vld [vmem:[%s2388 + $0x3c] sm:$0xf]
        %v2405 = vld [vmem:[%s2388 + $0x40] sm:$0xf]
        %v2406 = vld [vmem:[%s2388 + $0x44] sm:$0xf]
        %v2407 = vld [vmem:[%s2388 + $0x48] sm:$0xf]
        %v2408 = vld [vmem:[%s2388 + $0x4c] sm:$0xf]
        %v2409 = vld [vmem:[%s2388 + $0x50] sm:$0xf]
        %v2410 = vld [vmem:[%s2388 + $0x54] sm:$0xf]
        %v2411 = vld [vmem:[%s2388 + $0x58] sm:$0xf]
        %v2412 = vld [vmem:[%s2388 + $0x5c] sm:$0xf]
        %v2413 = vld [vmem:[%s2388 + $0x60] sm:$0xf]
        %v2414 = vld [vmem:[%s2388 + $0x64] sm:$0xf]
        %v2415 = vld [vmem:[%s2388 + $0x68] sm:$0xf]
        %v2416 = vld [vmem:[%s2388 + $0x6c] sm:$0xf]
        %v2417 = vld [vmem:[%s2388 + $0x70] sm:$0xf]
        %v2418 = vld [vmem:[%s2388 + $0x74] sm:$0xf]
        %v2419 = vld [vmem:[%s2388 + $0x78] sm:$0xf]
        %v2420 = vld [vmem:[%s2388 + $0x7c] sm:$0xf]
        %v2421 = vld [vmem:[%s2388 + $0x80] sm:$0xf]
        %v2422 = vld [vmem:[%s2388 + $0x84] sm:$0xf]
        %v2423 = vld [vmem:[%s2388 + $0x88] sm:$0xf]
        %v2424 = vld [vmem:[%s2388 + $0x8c] sm:$0xf]
        %v2425 = vld [vmem:[%s2388 + $0x90] sm:$0xf]
        %v2426 = vld [vmem:[%s2388 + $0x94] sm:$0xf]
        %v2427 = vld [vmem:[%s2388 + $0x98] sm:$0xf]
        %v2428 = vld [vmem:[%s2388 + $0x9c] sm:$0xf]
        %v2429 = vld [vmem:[%s2388 + $0xa0] sm:$0xf]
        %v2430 = vld [vmem:[%s2388 + $0xa4] sm:$0xf]
        %v2431 = vld [vmem:[%s2388 + $0xa8] sm:$0xf]
        %v2432 = vld [vmem:[%s2388 + $0xac] sm:$0xf]
        %v2433 = vld [vmem:[%s2388 + $0xb0] sm:$0xf]
        %v2434 = vld [vmem:[%s2388 + $0xb4] sm:$0xf]
        %v2435 = vld [vmem:[%s2388 + $0xb8] sm:$0xf]
        %v2436 = vld [vmem:[%s2388 + $0xbc] sm:$0xf]
        %v2437 = vpack.c.b16 %v2286, %v2284
        %v2438 = vpack.c.b16 %v2374, %v2372
        %v2439 = vpack.c.b16 %v2375, %v2373
        %v2440 = vpack.c.b16 %v2290, %v2288
        %v2441 = vpack.c.b16 %v2378, %v2376
        %v2442 = vpack.c.b16 %v2379, %v2377
        %v2443 = vpack.c.b16 %v2294, %v2292
        %v2444 = vpack.c.b16 %v2382, %v2380
        %v2445 = vpack.c.b16 %v2383, %v2381
        %v2446 = vpack.c.b16 %v2298, %v2296
        %v2447 = vpack.c.b16 %v2386, %v2384
        %v2448 = vpack.c.b16 %v2387, %v2385
        %v2509 = vunpack.c.l.b16 %v2389
        %v2510 = vunpack.c.l.b16 %v2390
        %v2511 = vunpack.c.l.b16 %v2391
        %v2512 = vunpack.c.l.b16 %v2392
        %v2513 = vunpack.c.l.b16 %v2393
        %v2514 = vunpack.c.l.b16 %v2394
        %v2515 = vunpack.c.l.b16 %v2395
        %v2516 = vunpack.c.l.b16 %v2396
        %v2517 = vunpack.c.l.b16 %v2397
        %v2518 = vunpack.c.l.b16 %v2398
        %v2519 = vunpack.c.l.b16 %v2399
        %v2520 = vunpack.c.l.b16 %v2400
        %v2521 = vunpack.c.l.b16 %v2401
        %v2522 = vunpack.c.l.b16 %v2402
        %v2523 = vunpack.c.l.b16 %v2403
        %v2524 = vunpack.c.l.b16 %v2404
        %v2525 = vunpack.c.l.b16 %v2405
        %v2526 = vunpack.c.l.b16 %v2406
        %v2527 = vunpack.c.l.b16 %v2407
        %v2528 = vunpack.c.l.b16 %v2408
        %v2529 = vunpack.c.l.b16 %v2409
        %v2530 = vunpack.c.l.b16 %v2410
        %v2531 = vunpack.c.l.b16 %v2411
        %v2532 = vunpack.c.l.b16 %v2412
        %v2533 = vunpack.c.l.b16 %v2413
        %v2534 = vunpack.c.l.b16 %v2414
        %v2535 = vunpack.c.l.b16 %v2415
        %v2536 = vunpack.c.l.b16 %v2416
        %v2537 = vunpack.c.l.b16 %v2417
        %v2538 = vunpack.c.l.b16 %v2418
        %v2539 = vunpack.c.l.b16 %v2419
        %v2540 = vunpack.c.l.b16 %v2420
        %v2541 = vunpack.c.l.b16 %v2421
        %v2542 = vunpack.c.l.b16 %v2422
        %v2543 = vunpack.c.l.b16 %v2423
        %v2544 = vunpack.c.l.b16 %v2424
        %v2545 = vunpack.c.l.b16 %v2425
        %v2546 = vunpack.c.l.b16 %v2426
        %v2547 = vunpack.c.l.b16 %v2427
        %v2548 = vunpack.c.l.b16 %v2428
        %v2549 = vunpack.c.l.b16 %v2429
        %v2550 = vunpack.c.l.b16 %v2430
        %v2551 = vunpack.c.l.b16 %v2431
        %v2552 = vunpack.c.l.b16 %v2432
        %v2553 = vunpack.c.l.b16 %v2433
        %v2554 = vunpack.c.l.b16 %v2434
        %v2555 = vunpack.c.l.b16 %v2435
        %v2556 = vunpack.c.l.b16 %v2436
        %v2557 = vpack.c.b16 %v2510, %v2509
        %v2558 = vpack.c.b16 %v2512, %v2511
        %v2559 = vpack.c.b16 %v2514, %v2513
        %v2560 = vpack.c.b16 %v2516, %v2515
        %v2561 = vpack.c.b16 %v2518, %v2517
        %v2562 = vpack.c.b16 %v2520, %v2519
        %v2563 = vpack.c.b16 %v2522, %v2521
        %v2564 = vpack.c.b16 %v2524, %v2523
        %v2565 = vpack.c.b16 %v2526, %v2525
        %v2566 = vpack.c.b16 %v2528, %v2527
        %v2567 = vpack.c.b16 %v2530, %v2529
        %v2568 = vpack.c.b16 %v2532, %v2531
        %v2569 = vpack.c.b16 %v2534, %v2533
        %v2570 = vpack.c.b16 %v2536, %v2535
        %v2571 = vpack.c.b16 %v2538, %v2537
        %v2572 = vpack.c.b16 %v2540, %v2539
        %v2573 = vpack.c.b16 %v2542, %v2541
        %v2574 = vpack.c.b16 %v2544, %v2543
        %v2575 = vpack.c.b16 %v2546, %v2545
        %v2576 = vpack.c.b16 %v2548, %v2547
        %v2577 = vpack.c.b16 %v2550, %v2549
        %v2578 = vpack.c.b16 %v2552, %v2551
        %v2579 = vpack.c.b16 %v2554, %v2553
        %v2580 = vpack.c.b16 %v2556, %v2555
        %2605 = vmatprep.subr.bf16.mxu0 0
        %2606 = vmatpush1.bf16.msra.mxu0 %v2557
        %2607 = vmatprep.subr.bf16.mxu0 0
        %2608 = vmatpush1.bf16.msra.mxu0 %v2558
        %2609 = vmatprep.subr.bf16.mxu0 0
        %2610 = vmatpush1.bf16.msra.mxu0 %v2559
        %2611 = vmatprep.subr.bf16.mxu0 0
        %2612 = vmatpush1.bf16.msra.mxu0 %v2560
        %2613 = vmatprep.subr.bf16.mxu0 0
        %2614 = vmatpush1.bf16.msra.mxu0 %v2561
        %2615 = vmatprep.subr.bf16.mxu0 0
        %2616 = vmatpush1.bf16.msra.mxu0 %v2562
        %2617 = vmatprep.subr.bf16.mxu0 0
        %2618 = vmatpush1.bf16.msra.mxu0 %v2563
        %2619 = vmatprep.subr.bf16.mxu0 0
        %2620 = vmatpush1.bf16.msra.mxu0 %v2564
        %2621 = vmatprep.subr.bf16.mxu0 0
        %2622 = vmatpush1.bf16.msra.mxu0 %v2565
        %2623 = vmatprep.subr.bf16.mxu0 0
        %2624 = vmatpush1.bf16.msra.mxu0 %v2566
        %2625 = vmatprep.subr.bf16.mxu0 0
        %2626 = vmatpush1.bf16.msra.mxu0 %v2567
        %2627 = vmatprep.subr.bf16.mxu0 0
        %2628 = vmatpush1.bf16.msra.mxu0 %v2568
        %2629 = vmatprep.subr.bf16.mxu0 0
        %2630 = vmatpush1.bf16.msra.mxu0 %v2569
        %2631 = vmatprep.subr.bf16.mxu0 0
        %2632 = vmatpush1.bf16.msra.mxu0 %v2570
        %2633 = vmatprep.subr.bf16.mxu0 0
        %2634 = vmatpush1.bf16.msra.mxu0 %v2571
        %2635 = vmatprep.subr.bf16.mxu0 0
        %2636 = vmatpush1.bf16.msra.mxu0 %v2572
        %2637 = vmatprep.mubr.bf16.mxu0 %v2438
        %2638 = vmatmul.mubr.bf16.gmra.mrb[0].mxu0 %v2437
        %v2639 = vpop.f32.mrb[0].mxu0
        %v2640 = vadd.f32 0.0, %v2639
        %v2641 = vpop.f32.mrb[0].mxu0
        %v2642 = vpop.f32.mrb[0].mxu0
        %v2643 = vadd.f32 0.0, %v2642
        %v2644 = vpop.f32.mrb[0].mxu0
        %2645 = vmatprep.mubr.bf16.mxu0 %v2441
        %2646 = vmatmul.mubr.bf16.gmra.mrb[0].mxu0 %v2440
        %v2647 = vpop.f32.mrb[0].mxu0
        %v2648 = vadd.f32 0.0, %v2647
        %v2649 = vpop.f32.mrb[0].mxu0
        %v2650 = vpop.f32.mrb[0].mxu0
        %v2651 = vadd.f32 0.0, %v2650
        %v2652 = vpop.f32.mrb[0].mxu0
        %2653 = vmatprep.mubr.bf16.mxu0 %v2444
        %2654 = vmatmul.mubr.bf16.gmra.mrb[0].mxu0 %v2443
        %v2655 = vpop.f32.mrb[0].mxu0
        %v2656 = vadd.f32 0.0, %v2655
        %v2657 = vpop.f32.mrb[0].mxu0
        %v2658 = vpop.f32.mrb[0].mxu0
        %v2659 = vadd.f32 0.0, %v2658
        %v2660 = vpop.f32.mrb[0].mxu0
        %2661 = vmatprep.mubr.bf16.mxu0 %v2447
        %2662 = vmatmul.mubr.bf16.gmra.mrb[0].mxu0 %v2446
        %v2663 = vpop.f32.mrb[0].mxu0
        %v2664 = vadd.f32 0.0, %v2663
        %v2665 = vpop.f32.mrb[0].mxu0
        %v2666 = vpop.f32.mrb[0].mxu0
        %v2667 = vadd.f32 0.0, %v2666
        %v2668 = vpop.f32.mrb[0].mxu0
        %2669 = vdwg.mxu0
        %2670 = vmatprep.subr.bf16.mxu0 0
        %2671 = vmatpush1.bf16.msra.mxu0 %v2573
        %2672 = vmatprep.subr.bf16.mxu0 0
        %2673 = vmatpush1.bf16.msra.mxu0 %v2574
        %2674 = vmatprep.subr.bf16.mxu0 0
        %2675 = vmatpush1.bf16.msra.mxu0 %v2575
        %2676 = vmatprep.subr.bf16.mxu0 0
        %2677 = vmatpush1.bf16.msra.mxu0 %v2576
        %2678 = vmatprep.subr.bf16.mxu0 0
        %2679 = vmatpush1.bf16.msra.mxu0 %v2577
        %2680 = vmatprep.subr.bf16.mxu0 0
        %2681 = vmatpush1.bf16.msra.mxu0 %v2578
        %2682 = vmatprep.subr.bf16.mxu0 0
        %2683 = vmatpush1.bf16.msra.mxu0 %v2579
        %2684 = vmatprep.subr.bf16.mxu0 0
        %2685 = vmatpush1.bf16.msra.mxu0 %v2580
        %2686 = vmatprep.subr.bf16.mxu0 0
        %2687 = vmatpush1.bf16.msra.mxu0 0
        %2688 = vmatprep.subr.bf16.mxu0 0
        %2689 = vmatpush1.bf16.msra.mxu0 0
        %2690 = vmatprep.subr.bf16.mxu0 0
        %2691 = vmatpush1.bf16.msra.mxu0 0
        %2692 = vmatprep.subr.bf16.mxu0 0
        %2693 = vmatpush1.bf16.msra.mxu0 0
        %2694 = vmatprep.subr.bf16.mxu0 0
        %2695 = vmatpush1.bf16.msra.mxu0 0
        %2696 = vmatprep.subr.bf16.mxu0 0
        %2697 = vmatpush1.bf16.msra.mxu0 0
        %2698 = vmatprep.subr.bf16.mxu0 0
        %2699 = vmatpush1.bf16.msra.mxu0 0
        %2700 = vmatprep.subr.bf16.mxu0 0
        %2701 = vmatpush1.bf16.msra.mxu0 0
        %2702 = vmatprep.mubr.bf16.mxu0 0
        %2703 = vmatmul.mubr.bf16.gmra.mrb[0].mxu0 %v2439
        %v2704 = vpop.f32.mrb[0].mxu0
        %v2705 = vadd.f32 %v2640, %v2704
        %v2706 = vpop.f32.mrb[0].mxu0
        %v2707 = vpop.f32.mrb[0].mxu0
        %v2708 = vadd.f32 %v2643, %v2707
        %v2709 = vpop.f32.mrb[0].mxu0
        %2710 = vmatprep.mubr.bf16.mxu0 0
        %2711 = vmatmul.mubr.bf16.gmra.mrb[0].mxu0 %v2442
        %v2712 = vpop.f32.mrb[0].mxu0
        %v2713 = vadd.f32 %v2648, %v2712
        %v2714 = vpop.f32.mrb[0].mxu0
        %v2715 = vpop.f32.mrb[0].mxu0
        %v2716 = vadd.f32 %v2651, %v2715
        %v2717 = vpop.f32.mrb[0].mxu0
        %2718 = vmatprep.mubr.bf16.mxu0 0
        %2719 = vmatmul.mubr.bf16.gmra.mrb[0].mxu0 %v2445
        %v2720 = vpop.f32.mrb[0].mxu0
        %v2721 = vadd.f32 %v2656, %v2720
        %v2722 = vpop.f32.mrb[0].mxu0
        %v2723 = vpop.f32.mrb[0].mxu0
        %v2724 = vadd.f32 %v2659, %v2723
        %v2725 = vpop.f32.mrb[0].mxu0
        %2726 = vmatprep.mubr.bf16.mxu0 0
        %2727 = vmatmul.mubr.bf16.gmra.mrb[0].mxu0 %v2448
        %v2728 = vpop.f32.mrb[0].mxu0
        %v2729 = vadd.f32 %v2664, %v2728
        %v2730 = vpop.f32.mrb[0].mxu0
        %v2731 = vpop.f32.mrb[0].mxu0
        %v2732 = vadd.f32 %v2667, %v2731
        %v2733 = vpop.f32.mrb[0].mxu0
        %2734 = vdwg.mxu0
        %v2735 = vpack.c.b16 %v2102, %v2100
        %v2736 = vpack.c.b16 %v2190, %v2188
        %v2737 = vpack.c.b16 %v2191, %v2189
        %v2738 = vpack.c.b16 %v2106, %v2104
        %v2739 = vpack.c.b16 %v2194, %v2192
        %v2740 = vpack.c.b16 %v2195, %v2193
        %v2741 = vpack.c.b16 %v2110, %v2108
        %v2742 = vpack.c.b16 %v2198, %v2196
        %v2743 = vpack.c.b16 %v2199, %v2197
        %v2744 = vpack.c.b16 %v2114, %v2112
        %v2745 = vpack.c.b16 %v2202, %v2200
        %v2746 = vpack.c.b16 %v2203, %v2201
        %v2807 = vunpack.c.l.b16 %v2204
        %v2808 = vunpack.c.l.b16 %v2205
        %v2809 = vunpack.c.l.b16 %v2206
        %v2810 = vunpack.c.l.b16 %v2207
        %v2811 = vunpack.c.l.b16 %v2208
        %v2812 = vunpack.c.l.b16 %v2209
        %v2813 = vunpack.c.l.b16 %v2210
        %v2814 = vunpack.c.l.b16 %v2211
        %v2815 = vunpack.c.l.b16 %v2212
        %v2816 = vunpack.c.l.b16 %v2213
        %v2817 = vunpack.c.l.b16 %v2214
        %v2818 = vunpack.c.l.b16 %v2215
        %v2819 = vunpack.c.l.b16 %v2216
        %v2820 = vunpack.c.l.b16 %v2217
        %v2821 = vunpack.c.l.b16 %v2218
        %v2822 = vunpack.c.l.b16 %v2219
        %v2823 = vunpack.c.l.b16 %v2220
        %v2824 = vunpack.c.l.b16 %v2221
        %v2825 = vunpack.c.l.b16 %v2222
        %v2826 = vunpack.c.l.b16 %v2223
        %v2827 = vunpack.c.l.b16 %v2224
        %v2828 = vunpack.c.l.b16 %v2225
        %v2829 = vunpack.c.l.b16 %v2226
        %v2830 = vunpack.c.l.b16 %v2227
        %v2831 = vunpack.c.l.b16 %v2228
        %v2832 = vunpack.c.l.b16 %v2229
        %v2833 = vunpack.c.l.b16 %v2230
        %v2834 = vunpack.c.l.b16 %v2231
        %v2835 = vunpack.c.l.b16 %v2232
        %v2836 = vunpack.c.l.b16 %v2233
        %v2837 = vunpack.c.l.b16 %v2234
        %v2838 = vunpack.c.l.b16 %v2235
        %v2839 = vunpack.c.l.b16 %v2236
        %v2840 = vunpack.c.l.b16 %v2237
        %v2841 = vunpack.c.l.b16 %v2238
        %v2842 = vunpack.c.l.b16 %v2239
        %v2843 = vunpack.c.l.b16 %v2240
        %v2844 = vunpack.c.l.b16 %v2241
        %v2845 = vunpack.c.l.b16 %v2242
        %v2846 = vunpack.c.l.b16 %v2243
        %v2847 = vunpack.c.l.b16 %v2244
        %v2848 = vunpack.c.l.b16 %v2245
        %v2849 = vunpack.c.l.b16 %v2246
        %v2850 = vunpack.c.l.b16 %v2247
        %v2851 = vunpack.c.l.b16 %v2248
        %v2852 = vunpack.c.l.b16 %v2249
        %v2853 = vunpack.c.l.b16 %v2250
        %v2854 = vunpack.c.l.b16 %v2251
        %v2855 = vpack.c.b16 %v2808, %v2807
        %v2856 = vpack.c.b16 %v2810, %v2809
        %v2857 = vpack.c.b16 %v2812, %v2811
        %v2858 = vpack.c.b16 %v2814, %v2813
        %v2859 = vpack.c.b16 %v2816, %v2815
        %v2860 = vpack.c.b16 %v2818, %v2817
        %v2861 = vpack.c.b16 %v2820, %v2819
        %v2862 = vpack.c.b16 %v2822, %v2821
        %v2863 = vpack.c.b16 %v2824, %v2823
        %v2864 = vpack.c.b16 %v2826, %v2825
        %v2865 = vpack.c.b16 %v2828, %v2827
        %v2866 = vpack.c.b16 %v2830, %v2829
        %v2867 = vpack.c.b16 %v2832, %v2831
        %v2868 = vpack.c.b16 %v2834, %v2833
        %v2869 = vpack.c.b16 %v2836, %v2835
        %v2870 = vpack.c.b16 %v2838, %v2837
        %v2871 = vpack.c.b16 %v2840, %v2839
        %v2872 = vpack.c.b16 %v2842, %v2841
        %v2873 = vpack.c.b16 %v2844, %v2843
        %v2874 = vpack.c.b16 %v2846, %v2845
        %v2875 = vpack.c.b16 %v2848, %v2847
        %v2876 = vpack.c.b16 %v2850, %v2849
        %v2877 = vpack.c.b16 %v2852, %v2851
        %v2878 = vpack.c.b16 %v2854, %v2853
        %2903 = vmatprep.subr.bf16.mxu0 0
        %2904 = vmatpush1.bf16.msra.mxu0 %v2855
        %2905 = vmatprep.subr.bf16.mxu0 0
        %2906 = vmatpush1.bf16.msra.mxu0 %v2856
        %2907 = vmatprep.subr.bf16.mxu0 0
        %2908 = vmatpush1.bf16.msra.mxu0 %v2857
        %2909 = vmatprep.subr.bf16.mxu0 0
        %2910 = vmatpush1.bf16.msra.mxu0 %v2858
        %2911 = vmatprep.subr.bf16.mxu0 0
        %2912 = vmatpush1.bf16.msra.mxu0 %v2859
        %2913 = vmatprep.subr.bf16.mxu0 0
        %2914 = vmatpush1.bf16.msra.mxu0 %v2860
        %2915 = vmatprep.subr.bf16.mxu0 0
        %2916 = vmatpush1.bf16.msra.mxu0 %v2861
        %2917 = vmatprep.subr.bf16.mxu0 0
        %2918 = vmatpush1.bf16.msra.mxu0 %v2862
        %2919 = vmatprep.subr.bf16.mxu0 0
        %2920 = vmatpush1.bf16.msra.mxu0 %v2863
        %2921 = vmatprep.subr.bf16.mxu0 0
        %2922 = vmatpush1.bf16.msra.mxu0 %v2864
        %2923 = vmatprep.subr.bf16.mxu0 0
        %2924 = vmatpush1.bf16.msra.mxu0 %v2865
        %2925 = vmatprep.subr.bf16.mxu0 0
        %2926 = vmatpush1.bf16.msra.mxu0 %v2866
        %2927 = vmatprep.subr.bf16.mxu0 0
        %2928 = vmatpush1.bf16.msra.mxu0 %v2867
        %2929 = vmatprep.subr.bf16.mxu0 0
        %2930 = vmatpush1.bf16.msra.mxu0 %v2868
        %2931 = vmatprep.subr.bf16.mxu0 0
        %2932 = vmatpush1.bf16.msra.mxu0 %v2869
        %2933 = vmatprep.subr.bf16.mxu0 0
        %2934 = vmatpush1.bf16.msra.mxu0 %v2870
        %2935 = vmatprep.mubr.bf16.mxu0 %v2736
        %2936 = vmatmul.mubr.bf16.gmra.mrb[0].mxu0 %v2735
        %v2937 = vpop.f32.mrb[0].mxu0
        %v2938 = vadd.f32 %v2705, %v2937
        %v2939 = vpop.f32.mrb[0].mxu0
        %v2940 = vpop.f32.mrb[0].mxu0
        %v2941 = vadd.f32 %v2708, %v2940
        %v2942 = vpop.f32.mrb[0].mxu0
        %2943 = vmatprep.mubr.bf16.mxu0 %v2739
        %2944 = vmatmul.mubr.bf16.gmra.mrb[0].mxu0 %v2738
        %v2945 = vpop.f32.mrb[0].mxu0
        %v2946 = vadd.f32 %v2713, %v2945
        %v2947 = vpop.f32.mrb[0].mxu0
        %v2948 = vpop.f32.mrb[0].mxu0
        %v2949 = vadd.f32 %v2716, %v2948
        %v2950 = vpop.f32.mrb[0].mxu0
        %2951 = vmatprep.mubr.bf16.mxu0 %v2742
        %2952 = vmatmul.mubr.bf16.gmra.mrb[0].mxu0 %v2741
        %v2953 = vpop.f32.mrb[0].mxu0
        %v2954 = vadd.f32 %v2721, %v2953
        %v2955 = vpop.f32.mrb[0].mxu0
        %v2956 = vpop.f32.mrb[0].mxu0
        %v2957 = vadd.f32 %v2724, %v2956
        %v2958 = vpop.f32.mrb[0].mxu0
        %2959 = vmatprep.mubr.bf16.mxu0 %v2745
        %2960 = vmatmul.mubr.bf16.gmra.mrb[0].mxu0 %v2744
        %v2961 = vpop.f32.mrb[0].mxu0
        %v2962 = vadd.f32 %v2729, %v2961
        %v2963 = vpop.f32.mrb[0].mxu0
        %v2964 = vpop.f32.mrb[0].mxu0
        %v2965 = vadd.f32 %v2732, %v2964
        %v2966 = vpop.f32.mrb[0].mxu0
        %2967 = vdwg.mxu0
        %2968 = vmatprep.subr.bf16.mxu0 0
        %2969 = vmatpush1.bf16.msra.mxu0 %v2871
        %2970 = vmatprep.subr.bf16.mxu0 0
        %2971 = vmatpush1.bf16.msra.mxu0 %v2872
        %2972 = vmatprep.subr.bf16.mxu0 0
        %2973 = vmatpush1.bf16.msra.mxu0 %v2873
        %2974 = vmatprep.subr.bf16.mxu0 0
        %2975 = vmatpush1.bf16.msra.mxu0 %v2874
        %2976 = vmatprep.subr.bf16.mxu0 0
        %2977 = vmatpush1.bf16.msra.mxu0 %v2875
        %2978 = vmatprep.subr.bf16.mxu0 0
        %2979 = vmatpush1.bf16.msra.mxu0 %v2876
        %2980 = vmatprep.subr.bf16.mxu0 0
        %2981 = vmatpush1.bf16.msra.mxu0 %v2877
        %2982 = vmatprep.subr.bf16.mxu0 0
        %2983 = vmatpush1.bf16.msra.mxu0 %v2878
        %2984 = vmatprep.subr.bf16.mxu0 0
        %2985 = vmatpush1.bf16.msra.mxu0 0
        %2986 = vmatprep.subr.bf16.mxu0 0
        %2987 = vmatpush1.bf16.msra.mxu0 0
        %2988 = vmatprep.subr.bf16.mxu0 0
        %2989 = vmatpush1.bf16.msra.mxu0 0
        %2990 = vmatprep.subr.bf16.mxu0 0
        %2991 = vmatpush1.bf16.msra.mxu0 0
        %2992 = vmatprep.subr.bf16.mxu0 0
        %2993 = vmatpush1.bf16.msra.mxu0 0
        %2994 = vmatprep.subr.bf16.mxu0 0
        %2995 = vmatpush1.bf16.msra.mxu0 0
        %2996 = vmatprep.subr.bf16.mxu0 0
        %2997 = vmatpush1.bf16.msra.mxu0 0
        %2998 = vmatprep.subr.bf16.mxu0 0
        %2999 = vmatpush1.bf16.msra.mxu0 0
        %3000 = vmatprep.mubr.bf16.mxu0 0
        %3001 = vmatmul.mubr.bf16.gmra.mrb[0].mxu0 %v2737
        %v3002 = vpop.f32.mrb[0].mxu0
        %v3003 = vadd.f32 %v2938, %v3002
        %v3004 = vpop.f32.mrb[0].mxu0
        %v3005 = vpop.f32.mrb[0].mxu0
        %v3006 = vadd.f32 %v2941, %v3005
        %v3007 = vpop.f32.mrb[0].mxu0
        %3008 = vmatprep.mubr.bf16.mxu0 0
        %3009 = vmatmul.mubr.bf16.gmra.mrb[0].mxu0 %v2740
        %v3010 = vpop.f32.mrb[0].mxu0
        %v3011 = vadd.f32 %v2946, %v3010
        %v3012 = vpop.f32.mrb[0].mxu0
        %v3013 = vpop.f32.mrb[0].mxu0
        %v3014 = vadd.f32 %v2949, %v3013
        %v3015 = vpop.f32.mrb[0].mxu0
        %3016 = vmatprep.mubr.bf16.mxu0 0
        %3017 = vmatmul.mubr.bf16.gmra.mrb[0].mxu0 %v2743
        %v3018 = vpop.f32.mrb[0].mxu0
        %v3019 = vadd.f32 %v2954, %v3018
        %v3020 = vpop.f32.mrb[0].mxu0
        %v3021 = vpop.f32.mrb[0].mxu0
        %v3022 = vadd.f32 %v2957, %v3021
        %v3023 = vpop.f32.mrb[0].mxu0
        %3024 = vmatprep.mubr.bf16.mxu0 0
        %3025 = vmatmul.mubr.bf16.gmra.mrb[0].mxu0 %v2746
        %v3026 = vpop.f32.mrb[0].mxu0
        %v3027 = vadd.f32 %v2962, %v3026
        %v3028 = vpop.f32.mrb[0].mxu0
        %v3029 = vpop.f32.mrb[0].mxu0
        %v3030 = vadd.f32 %v2965, %v3029
        %v3031 = vpop.f32.mrb[0].mxu0
        %3032 = vdwg.mxu0
        %s3033 = scalar_lea.vmem [#allocation3], 16
        %v3034 = vld [vmem:[%s3033] sm:$0xf]
        %v3035 = vld [vmem:[%s3033 + $0x4] sm:$0x1]
        %v3036 = vld [vmem:[%s3033 + $0x8] sm:$0xf]
        %v3037 = vld [vmem:[%s3033 + $0xc] sm:$0x1]
        %v3038 = vld [vmem:[%s3033 + $0x10] sm:$0xf]
        %v3039 = vld [vmem:[%s3033 + $0x14] sm:$0x1]
        %v3040 = vld [vmem:[%s3033 + $0x18] sm:$0xf]
        %v3041 = vld [vmem:[%s3033 + $0x1c] sm:$0x1]
        %v3042 = vld [vmem:[%s3033 + $0x20] sm:$0xf]
        %v3043 = vld [vmem:[%s3033 + $0x24] sm:$0x1]
        %v3044 = vld [vmem:[%s3033 + $0x28] sm:$0xf]
        %v3045 = vld [vmem:[%s3033 + $0x2c] sm:$0x1]
        %v3046 = vld [vmem:[%s3033 + $0x30] sm:$0xf]
        %v3047 = vld [vmem:[%s3033 + $0x34] sm:$0x1]
        %v3048 = vld [vmem:[%s3033 + $0x38] sm:$0xf]
        %v3049 = vld [vmem:[%s3033 + $0x3c] sm:$0x1]
        %v3066 = vunpack.c.l.b16 %v3034
        %v3067 = vunpack.c.l.b16 %v3035
        %v3068 = vunpack.c.l.b16 %v3036
        %v3069 = vunpack.c.l.b16 %v3037
        %v3070 = vunpack.c.l.b16 %v3038
        %v3071 = vunpack.c.l.b16 %v3039
        %v3072 = vunpack.c.l.b16 %v3040
        %v3073 = vunpack.c.l.b16 %v3041
        %v3074 = vunpack.c.l.b16 %v3042
        %v3075 = vunpack.c.l.b16 %v3043
        %v3076 = vunpack.c.l.b16 %v3044
        %v3077 = vunpack.c.l.b16 %v3045
        %v3078 = vunpack.c.l.b16 %v3046
        %v3079 = vunpack.c.l.b16 %v3047
        %v3080 = vunpack.c.l.b16 %v3048
        %v3081 = vunpack.c.l.b16 %v3049
        %v3082 = vpack.c.b16 %v3067, %v3066
        %v3083 = vpack.c.b16 %v3069, %v3068
        %v3084 = vpack.c.b16 %v3071, %v3070
        %v3085 = vpack.c.b16 %v3073, %v3072
        %v3086 = vpack.c.b16 %v3075, %v3074
        %v3087 = vpack.c.b16 %v3077, %v3076
        %v3088 = vpack.c.b16 %v3079, %v3078
        %v3089 = vpack.c.b16 %v3081, %v3080
        %v3091 = vshrl.u32 %v3082, 16
        %v3093 = vshll.u32 %v3082, 16
        %v3095 = vrot.slane %v3093, 1
        %v3096 = vor.u32 %v3091, %v3095
        %v3098 = vshrl.u32 %v3083, 16
        %v3100 = vshll.u32 %v3083, 16
        %v3102 = vrot.slane %v3100, 1
        %v3103 = vor.u32 %v3098, %v3102
        %v3105 = vshrl.u32 %v3084, 16
        %v3107 = vshll.u32 %v3084, 16
        %v3109 = vrot.slane %v3107, 1
        %v3110 = vor.u32 %v3105, %v3109
        %v3112 = vshrl.u32 %v3085, 16
        %v3114 = vshll.u32 %v3085, 16
        %v3116 = vrot.slane %v3114, 1
        %v3117 = vor.u32 %v3112, %v3116
        %v3119 = vshrl.u32 %v3086, 16
        %v3121 = vshll.u32 %v3086, 16
        %v3123 = vrot.slane %v3121, 1
        %v3124 = vor.u32 %v3119, %v3123
        %v3126 = vshrl.u32 %v3087, 16
        %v3128 = vshll.u32 %v3087, 16
        %v3130 = vrot.slane %v3128, 1
        %v3131 = vor.u32 %v3126, %v3130
        %v3133 = vshrl.u32 %v3088, 16
        %v3135 = vshll.u32 %v3088, 16
        %v3137 = vrot.slane %v3135, 1
        %v3138 = vor.u32 %v3133, %v3137
        %v3140 = vshrl.u32 %v3089, 16
        %v3142 = vshll.u32 %v3089, 16
        %v3144 = vrot.slane %v3142, 1
        %v3145 = vor.u32 %v3140, %v3144
        %v3146 = vrot.slane %v3082, 1
        %v3147 = vrot.slane %v3083, 1
        %v3148 = vrot.slane %v3084, 1
        %v3149 = vrot.slane %v3085, 1
        %v3150 = vrot.slane %v3086, 1
        %v3151 = vrot.slane %v3087, 1
        %v3152 = vrot.slane %v3088, 1
        %v3153 = vrot.slane %v3089, 1
        %v3154 = vunpack.c.l.b16 %v3096
        %v3155 = vunpack.c.l.b16 %v3146
        %v3156 = vunpack.c.l.b16 %v3103
        %v3157 = vunpack.c.l.b16 %v3147
        %v3158 = vunpack.c.l.b16 %v3110
        %v3159 = vunpack.c.l.b16 %v3148
        %v3160 = vunpack.c.l.b16 %v3117
        %v3161 = vunpack.c.l.b16 %v3149
        %v3162 = vunpack.c.l.b16 %v3124
        %v3163 = vunpack.c.l.b16 %v3150
        %v3164 = vunpack.c.l.b16 %v3131
        %v3165 = vunpack.c.l.b16 %v3151
        %v3166 = vunpack.c.l.b16 %v3138
        %v3167 = vunpack.c.l.b16 %v3152
        %v3168 = vunpack.c.l.b16 %v3145
        %v3169 = vunpack.c.l.b16 %v3153
        %s3170 = scalar_lea.vmem %s2, 384
        %v3171 = vld [vmem:[%s3170] sm:$0xf]
        %v3172 = vld [vmem:[%s3170 + $0x4] sm:$0xf]
        %v3173 = vld [vmem:[%s3170 + $0x8] sm:$0xf]
        %v3174 = vld [vmem:[%s3170 + $0xc] sm:$0xf]
        %v3175 = vld [vmem:[%s3170 + $0x10] sm:$0xf]
        %v3176 = vld [vmem:[%s3170 + $0x14] sm:$0xf]
        %v3177 = vld [vmem:[%s3170 + $0x18] sm:$0xf]
        %v3178 = vld [vmem:[%s3170 + $0x1c] sm:$0xf]
        %v3179 = vld [vmem:[%s3170 + $0x20] sm:$0xf]
        %v3180 = vld [vmem:[%s3170 + $0x24] sm:$0xf]
        %v3181 = vld [vmem:[%s3170 + $0x28] sm:$0xf]
        %v3182 = vld [vmem:[%s3170 + $0x2c] sm:$0xf]
        %v3183 = vld [vmem:[%s3170 + $0x30] sm:$0xf]
        %v3184 = vld [vmem:[%s3170 + $0x34] sm:$0xf]
        %v3185 = vld [vmem:[%s3170 + $0x38] sm:$0xf]
        %v3186 = vld [vmem:[%s3170 + $0x3c] sm:$0xf]
        %v3187 = vld [vmem:[%s3170 + $0x40] sm:$0xf]
        %v3188 = vld [vmem:[%s3170 + $0x44] sm:$0xf]
        %v3189 = vld [vmem:[%s3170 + $0x48] sm:$0xf]
        %v3190 = vld [vmem:[%s3170 + $0x4c] sm:$0xf]
        %v3191 = vld [vmem:[%s3170 + $0x50] sm:$0xf]
        %v3192 = vld [vmem:[%s3170 + $0x54] sm:$0xf]
        %v3193 = vld [vmem:[%s3170 + $0x58] sm:$0xf]
        %v3194 = vld [vmem:[%s3170 + $0x5c] sm:$0xf]
        %v3195 = vld [vmem:[%s3170 + $0x60] sm:$0xf]
        %v3196 = vld [vmem:[%s3170 + $0x64] sm:$0xf]
        %v3197 = vld [vmem:[%s3170 + $0x68] sm:$0xf]
        %v3198 = vld [vmem:[%s3170 + $0x6c] sm:$0xf]
        %v3199 = vld [vmem:[%s3170 + $0x70] sm:$0xf]
        %v3200 = vld [vmem:[%s3170 + $0x74] sm:$0xf]
        %v3201 = vld [vmem:[%s3170 + $0x78] sm:$0xf]
        %v3202 = vld [vmem:[%s3170 + $0x7c] sm:$0xf]
        %v3203 = vld [vmem:[%s3170 + $0x80] sm:$0xf]
        %v3204 = vld [vmem:[%s3170 + $0x84] sm:$0xf]
        %v3205 = vld [vmem:[%s3170 + $0x88] sm:$0xf]
        %v3206 = vld [vmem:[%s3170 + $0x8c] sm:$0xf]
        %v3207 = vld [vmem:[%s3170 + $0x90] sm:$0xf]
        %v3208 = vld [vmem:[%s3170 + $0x94] sm:$0xf]
        %v3209 = vld [vmem:[%s3170 + $0x98] sm:$0xf]
        %v3210 = vld [vmem:[%s3170 + $0x9c] sm:$0xf]
        %v3211 = vld [vmem:[%s3170 + $0xa0] sm:$0xf]
        %v3212 = vld [vmem:[%s3170 + $0xa4] sm:$0xf]
        %v3213 = vld [vmem:[%s3170 + $0xa8] sm:$0xf]
        %v3214 = vld [vmem:[%s3170 + $0xac] sm:$0xf]
        %v3215 = vld [vmem:[%s3170 + $0xb0] sm:$0xf]
        %v3216 = vld [vmem:[%s3170 + $0xb4] sm:$0xf]
        %v3217 = vld [vmem:[%s3170 + $0xb8] sm:$0xf]
        %v3218 = vld [vmem:[%s3170 + $0xbc] sm:$0xf]
        %v3219 = vpack.c.b16 %v3068, %v3066
        %v3220 = vpack.c.b16 %v3156, %v3154
        %v3221 = vpack.c.b16 %v3157, %v3155
        %v3222 = vpack.c.b16 %v3072, %v3070
        %v3223 = vpack.c.b16 %v3160, %v3158
        %v3224 = vpack.c.b16 %v3161, %v3159
        %v3225 = vpack.c.b16 %v3076, %v3074
        %v3226 = vpack.c.b16 %v3164, %v3162
        %v3227 = vpack.c.b16 %v3165, %v3163
        %v3228 = vpack.c.b16 %v3080, %v3078
        %v3229 = vpack.c.b16 %v3168, %v3166
        %v3230 = vpack.c.b16 %v3169, %v3167
        %v3291 = vunpack.c.l.b16 %v3171
        %v3292 = vunpack.c.l.b16 %v3172
        %v3293 = vunpack.c.l.b16 %v3173
        %v3294 = vunpack.c.l.b16 %v3174
        %v3295 = vunpack.c.l.b16 %v3175
        %v3296 = vunpack.c.l.b16 %v3176
        %v3297 = vunpack.c.l.b16 %v3177
        %v3298 = vunpack.c.l.b16 %v3178
        %v3299 = vunpack.c.l.b16 %v3179
        %v3300 = vunpack.c.l.b16 %v3180
        %v3301 = vunpack.c.l.b16 %v3181
        %v3302 = vunpack.c.l.b16 %v3182
        %v3303 = vunpack.c.l.b16 %v3183
        %v3304 = vunpack.c.l.b16 %v3184
        %v3305 = vunpack.c.l.b16 %v3185
        %v3306 = vunpack.c.l.b16 %v3186
        %v3307 = vunpack.c.l.b16 %v3187
        %v3308 = vunpack.c.l.b16 %v3188
        %v3309 = vunpack.c.l.b16 %v3189
        %v3310 = vunpack.c.l.b16 %v3190
        %v3311 = vunpack.c.l.b16 %v3191
        %v3312 = vunpack.c.l.b16 %v3192
        %v3313 = vunpack.c.l.b16 %v3193
        %v3314 = vunpack.c.l.b16 %v3194
        %v3315 = vunpack.c.l.b16 %v3195
        %v3316 = vunpack.c.l.b16 %v3196
        %v3317 = vunpack.c.l.b16 %v3197
        %v3318 = vunpack.c.l.b16 %v3198
        %v3319 = vunpack.c.l.b16 %v3199
        %v3320 = vunpack.c.l.b16 %v3200
        %v3321 = vunpack.c.l.b16 %v3201
        %v3322 = vunpack.c.l.b16 %v3202
        %v3323 = vunpack.c.l.b16 %v3203
        %v3324 = vunpack.c.l.b16 %v3204
        %v3325 = vunpack.c.l.b16 %v3205
        %v3326 = vunpack.c.l.b16 %v3206
        %v3327 = vunpack.c.l.b16 %v3207
        %v3328 = vunpack.c.l.b16 %v3208
        %v3329 = vunpack.c.l.b16 %v3209
        %v3330 = vunpack.c.l.b16 %v3210
        %v3331 = vunpack.c.l.b16 %v3211
        %v3332 = vunpack.c.l.b16 %v3212
        %v3333 = vunpack.c.l.b16 %v3213
        %v3334 = vunpack.c.l.b16 %v3214
        %v3335 = vunpack.c.l.b16 %v3215
        %v3336 = vunpack.c.l.b16 %v3216
        %v3337 = vunpack.c.l.b16 %v3217
        %v3338 = vunpack.c.l.b16 %v3218
        %v3339 = vpack.c.b16 %v3292, %v3291
        %v3340 = vpack.c.b16 %v3294, %v3293
        %v3341 = vpack.c.b16 %v3296, %v3295
        %v3342 = vpack.c.b16 %v3298, %v3297
        %v3343 = vpack.c.b16 %v3300, %v3299
        %v3344 = vpack.c.b16 %v3302, %v3301
        %v3345 = vpack.c.b16 %v3304, %v3303
        %v3346 = vpack.c.b16 %v3306, %v3305
        %v3347 = vpack.c.b16 %v3308, %v3307
        %v3348 = vpack.c.b16 %v3310, %v3309
        %v3349 = vpack.c.b16 %v3312, %v3311
        %v3350 = vpack.c.b16 %v3314, %v3313
        %v3351 = vpack.c.b16 %v3316, %v3315
        %v3352 = vpack.c.b16 %v3318, %v3317
        %v3353 = vpack.c.b16 %v3320, %v3319
        %v3354 = vpack.c.b16 %v3322, %v3321
        %v3355 = vpack.c.b16 %v3324, %v3323
        %v3356 = vpack.c.b16 %v3326, %v3325
        %v3357 = vpack.c.b16 %v3328, %v3327
        %v3358 = vpack.c.b16 %v3330, %v3329
        %v3359 = vpack.c.b16 %v3332, %v3331
        %v3360 = vpack.c.b16 %v3334, %v3333
        %v3361 = vpack.c.b16 %v3336, %v3335
        %v3362 = vpack.c.b16 %v3338, %v3337
        %3387 = vmatprep.subr.bf16.mxu0 0
        %3388 = vmatpush1.bf16.msra.mxu0 %v3339
        %3389 = vmatprep.subr.bf16.mxu0 0
        %3390 = vmatpush1.bf16.msra.mxu0 %v3340
        %3391 = vmatprep.subr.bf16.mxu0 0
        %3392 = vmatpush1.bf16.msra.mxu0 %v3341
        %3393 = vmatprep.subr.bf16.mxu0 0
        %3394 = vmatpush1.bf16.msra.mxu0 %v3342
        %3395 = vmatprep.subr.bf16.mxu0 0
        %3396 = vmatpush1.bf16.msra.mxu0 %v3343
        %3397 = vmatprep.subr.bf16.mxu0 0
        %3398 = vmatpush1.bf16.msra.mxu0 %v3344
        %3399 = vmatprep.subr.bf16.mxu0 0
        %3400 = vmatpush1.bf16.msra.mxu0 %v3345
        %3401 = vmatprep.subr.bf16.mxu0 0
        %3402 = vmatpush1.bf16.msra.mxu0 %v3346
        %3403 = vmatprep.subr.bf16.mxu0 0
        %3404 = vmatpush1.bf16.msra.mxu0 %v3347
        %3405 = vmatprep.subr.bf16.mxu0 0
        %3406 = vmatpush1.bf16.msra.mxu0 %v3348
        %3407 = vmatprep.subr.bf16.mxu0 0
        %3408 = vmatpush1.bf16.msra.mxu0 %v3349
        %3409 = vmatprep.subr.bf16.mxu0 0
        %3410 = vmatpush1.bf16.msra.mxu0 %v3350
        %3411 = vmatprep.subr.bf16.mxu0 0
        %3412 = vmatpush1.bf16.msra.mxu0 %v3351
        %3413 = vmatprep.subr.bf16.mxu0 0
        %3414 = vmatpush1.bf16.msra.mxu0 %v3352
        %3415 = vmatprep.subr.bf16.mxu0 0
        %3416 = vmatpush1.bf16.msra.mxu0 %v3353
        %3417 = vmatprep.subr.bf16.mxu0 0
        %3418 = vmatpush1.bf16.msra.mxu0 %v3354
        %3419 = vmatprep.mubr.bf16.mxu0 %v3220
        %3420 = vmatmul.mubr.bf16.gmra.mrb[0].mxu0 %v3219
        %v3421 = vpop.f32.mrb[0].mxu0
        %v3422 = vadd.f32 0.0, %v3421
        %v3423 = vpop.f32.mrb[0].mxu0
        %v3424 = vpop.f32.mrb[0].mxu0
        %v3425 = vadd.f32 0.0, %v3424
        %v3426 = vpop.f32.mrb[0].mxu0
        %3427 = vmatprep.mubr.bf16.mxu0 %v3223
        %3428 = vmatmul.mubr.bf16.gmra.mrb[0].mxu0 %v3222
        %v3429 = vpop.f32.mrb[0].mxu0
        %v3430 = vadd.f32 0.0, %v3429
        %v3431 = vpop.f32.mrb[0].mxu0
        %v3432 = vpop.f32.mrb[0].mxu0
        %v3433 = vadd.f32 0.0, %v3432
        %v3434 = vpop.f32.mrb[0].mxu0
        %3435 = vmatprep.mubr.bf16.mxu0 %v3226
        %3436 = vmatmul.mubr.bf16.gmra.mrb[0].mxu0 %v3225
        %v3437 = vpop.f32.mrb[0].mxu0
        %v3438 = vadd.f32 0.0, %v3437
        %v3439 = vpop.f32.mrb[0].mxu0
        %v3440 = vpop.f32.mrb[0].mxu0
        %v3441 = vadd.f32 0.0, %v3440
        %v3442 = vpop.f32.mrb[0].mxu0
        %3443 = vmatprep.mubr.bf16.mxu0 %v3229
        %3444 = vmatmul.mubr.bf16.gmra.mrb[0].mxu0 %v3228
        %v3445 = vpop.f32.mrb[0].mxu0
        %v3446 = vadd.f32 0.0, %v3445
        %v3447 = vpop.f32.mrb[0].mxu0
        %v3448 = vpop.f32.mrb[0].mxu0
        %v3449 = vadd.f32 0.0, %v3448
        %v3450 = vpop.f32.mrb[0].mxu0
        %3451 = vdwg.mxu0
        %3452 = vmatprep.subr.bf16.mxu0 0
        %3453 = vmatpush1.bf16.msra.mxu0 %v3355
        %3454 = vmatprep.subr.bf16.mxu0 0
        %3455 = vmatpush1.bf16.msra.mxu0 %v3356
        %3456 = vmatprep.subr.bf16.mxu0 0
        %3457 = vmatpush1.bf16.msra.mxu0 %v3357
        %3458 = vmatprep.subr.bf16.mxu0 0
        %3459 = vmatpush1.bf16.msra.mxu0 %v3358
        %3460 = vmatprep.subr.bf16.mxu0 0
        %3461 = vmatpush1.bf16.msra.mxu0 %v3359
        %3462 = vmatprep.subr.bf16.mxu0 0
        %3463 = vmatpush1.bf16.msra.mxu0 %v3360
        %3464 = vmatprep.subr.bf16.mxu0 0
        %3465 = vmatpush1.bf16.msra.mxu0 %v3361
        %3466 = vmatprep.subr.bf16.mxu0 0
        %3467 = vmatpush1.bf16.msra.mxu0 %v3362
        %3468 = vmatprep.subr.bf16.mxu0 0
        %3469 = vmatpush1.bf16.msra.mxu0 0
        %3470 = vmatprep.subr.bf16.mxu0 0
        %3471 = vmatpush1.bf16.msra.mxu0 0
        %3472 = vmatprep.subr.bf16.mxu0 0
        %3473 = vmatpush1.bf16.msra.mxu0 0
        %3474 = vmatprep.subr.bf16.mxu0 0
        %3475 = vmatpush1.bf16.msra.mxu0 0
        %3476 = vmatprep.subr.bf16.mxu0 0
        %3477 = vmatpush1.bf16.msra.mxu0 0
        %3478 = vmatprep.subr.bf16.mxu0 0
        %3479 = vmatpush1.bf16.msra.mxu0 0
        %3480 = vmatprep.subr.bf16.mxu0 0
        %3481 = vmatpush1.bf16.msra.mxu0 0
        %3482 = vmatprep.subr.bf16.mxu0 0
        %3483 = vmatpush1.bf16.msra.mxu0 0
        %3484 = vmatprep.mubr.bf16.mxu0 0
        %3485 = vmatmul.mubr.bf16.gmra.mrb[0].mxu0 %v3221
        %v3486 = vpop.f32.mrb[0].mxu0
        %v3487 = vadd.f32 %v3422, %v3486
        %v3488 = vpop.f32.mrb[0].mxu0
        %v3489 = vpop.f32.mrb[0].mxu0
        %v3490 = vadd.f32 %v3425, %v3489
        %v3491 = vpop.f32.mrb[0].mxu0
        %3492 = vmatprep.mubr.bf16.mxu0 0
        %3493 = vmatmul.mubr.bf16.gmra.mrb[0].mxu0 %v3224
        %v3494 = vpop.f32.mrb[0].mxu0
        %v3495 = vadd.f32 %v3430, %v3494
        %v3496 = vpop.f32.mrb[0].mxu0
        %v3497 = vpop.f32.mrb[0].mxu0
        %v3498 = vadd.f32 %v3433, %v3497
        %v3499 = vpop.f32.mrb[0].mxu0
        %3500 = vmatprep.mubr.bf16.mxu0 0
        %3501 = vmatmul.mubr.bf16.gmra.mrb[0].mxu0 %v3227
        %v3502 = vpop.f32.mrb[0].mxu0
        %v3503 = vadd.f32 %v3438, %v3502
        %v3504 = vpop.f32.mrb[0].mxu0
        %v3505 = vpop.f32.mrb[0].mxu0
        %v3506 = vadd.f32 %v3441, %v3505
        %v3507 = vpop.f32.mrb[0].mxu0
        %3508 = vmatprep.mubr.bf16.mxu0 0
        %3509 = vmatmul.mubr.bf16.gmra.mrb[0].mxu0 %v3230
        %v3510 = vpop.f32.mrb[0].mxu0
        %v3511 = vadd.f32 %v3446, %v3510
        %v3512 = vpop.f32.mrb[0].mxu0
        %v3513 = vpop.f32.mrb[0].mxu0
        %v3514 = vadd.f32 %v3449, %v3513
        %v3515 = vpop.f32.mrb[0].mxu0
        %3516 = vdwg.mxu0
        %v3517 = vadd.f32 %v3003, %v3487
        %v3518 = vadd.f32 %v3006, %v3490
        %v3519 = vadd.f32 %v3011, %v3495
        %v3520 = vadd.f32 %v3014, %v3498
        %v3521 = vadd.f32 %v3019, %v3503
        %v3522 = vadd.f32 %v3022, %v3506
        %v3523 = vadd.f32 %v3027, %v3511
        %v3524 = vadd.f32 %v3030, %v3514
        %v3525 = vadd.f32 %v3517, %v3518
        %v3526 = vadd.f32 %v3525, %v3519
        %v3527 = vadd.f32 %v3526, %v3520
        %v3528 = vadd.f32 %v3527, %v3521
        %v3529 = vadd.f32 %v3528, %v3522
        %v3530 = vadd.f32 %v3529, %v3523
        %v3531 = vadd.f32 %v3530, %v3524
        %v3532 = vrot.slane %v3531, 4
        %v3533 = vadd.f32 %v3531, %v3532
        %v3534 = vrot.slane %v3533, 2
        %v3535 = vadd.f32 %v3533, %v3534
        %v3536 = vrot.slane %v3535, 1
        %v3537 = vadd.f32 %v3535, %v3536
        %v3538 = vmul.f32 %v3517, %v3517
        %v3539 = vmul.f32 %v3518, %v3518
        %v3540 = vmul.f32 %v3519, %v3519
        %v3541 = vmul.f32 %v3520, %v3520
        %v3542 = vmul.f32 %v3521, %v3521
        %v3543 = vmul.f32 %v3522, %v3522
        %v3544 = vmul.f32 %v3523, %v3523
        %v3545 = vmul.f32 %v3524, %v3524
        %v3546 = vadd.f32 %v3538, %v3539
        %v3547 = vadd.f32 %v3546, %v3540
        %v3548 = vadd.f32 %v3547, %v3541
        %v3549 = vadd.f32 %v3548, %v3542
        %v3550 = vadd.f32 %v3549, %v3543
        %v3551 = vadd.f32 %v3550, %v3544
        %v3552 = vadd.f32 %v3551, %v3545
        %v3553 = vrot.slane %v3552, 4
        %v3554 = vadd.f32 %v3552, %v3553
        %v3555 = vrot.slane %v3554, 2
        %v3556 = vadd.f32 %v3554, %v3555
        %v3557 = vrot.slane %v3556, 1
        %v3558 = vadd.f32 %v3556, %v3557
        %v3559 = vmul.f32 %v3537, 0.015625
        %v3560 = vmul.f32 %v3558, 0.015625
        %v3561 = vmul.f32 %v3559, %v3559
        %v3562 = vsub.f32 %v3560, %v3561
        %v3563 = vmax.f32 %v3562, 0.0
        %v3564 = vsub.f32 %v3517, %v3559
        %v3565 = vsub.f32 %v3518, %v3559
        %v3566 = vsub.f32 %v3519, %v3559
        %v3567 = vsub.f32 %v3520, %v3559
        %v3568 = vsub.f32 %v3521, %v3559
        %v3569 = vsub.f32 %v3522, %v3559
        %v3570 = vsub.f32 %v3523, %v3559
        %v3571 = vsub.f32 %v3524, %v3559
        %v3572 = vadd.f32 %v3563, 1e-05
        %v3573 = vrsqrt.pop %v3572
        %v3574 = vmul.f32 %v3564, %v3573
        %v3575 = vmul.f32 %v3565, %v3573
        %v3576 = vmul.f32 %v3566, %v3573
        %v3577 = vmul.f32 %v3567, %v3573
        %v3578 = vmul.f32 %v3568, %v3573
        %v3579 = vmul.f32 %v3569, %v3573
        %v3580 = vmul.f32 %v3570, %v3573
        %v3581 = vmul.f32 %v3571, %v3573
        %v3582 = vld [vmem:[%s168] sm:$0xff]
        %v3583 = vld [vmem:[%s168 + $0x8] sm:$0xff]
        %v3584 = vld [vmem:[%s168 + $0x10] sm:$0xff]
        %v3585 = vld [vmem:[%s168 + $0x18] sm:$0xff]
        %v3586 = vld [vmem:[%s168 + $0x20] sm:$0xff]
        %v3587 = vld [vmem:[%s168 + $0x28] sm:$0xff]
        %v3588 = vld [vmem:[%s168 + $0x30] sm:$0xff]
        %v3589 = vld [vmem:[%s168 + $0x38] sm:$0xff]
        %v3590 = vadd.f32 %v3574, %v3582
        %v3591 = vadd.f32 %v3575, %v3583
        %v3592 = vadd.f32 %v3576, %v3584
        %v3593 = vadd.f32 %v3577, %v3585
        %v3594 = vadd.f32 %v3578, %v3586
        %v3595 = vadd.f32 %v3579, %v3587
        %v3596 = vadd.f32 %v3580, %v3588
        %v3597 = vadd.f32 %v3581, %v3589
        %v3598 = vmax.f32 %v3590, 0.0
        %v3599 = vmax.f32 %v3591, 0.0
        %v3600 = vmax.f32 %v3592, 0.0
        %v3601 = vmax.f32 %v3593, 0.0
        %v3602 = vmax.f32 %v3594, 0.0
        %v3603 = vmax.f32 %v3595, 0.0
        %v3604 = vmax.f32 %v3596, 0.0
        %v3605 = vmax.f32 %v3597, 0.0
        %3606 = vst [vmem:[%s163] sm:$0xff] %v3598
        %3607 = vst [vmem:[%s163 + $0x8] sm:$0xff] %v3599
        %3608 = vst [vmem:[%s163 + $0x10] sm:$0xff] %v3600
        %3609 = vst [vmem:[%s163 + $0x18] sm:$0xff] %v3601
        %3610 = vst [vmem:[%s163 + $0x20] sm:$0xff] %v3602
        %3611 = vst [vmem:[%s163 + $0x28] sm:$0xff] %v3603
        %3612 = vst [vmem:[%s163 + $0x30] sm:$0xff] %v3604
        %3613 = vst [vmem:[%s163 + $0x38] sm:$0xff] %v3605
        %s3614 = sand.u32 %s93, 1
        %s3615 = scalar_lea.sflag [#allocation5], %s3614
        %s3616 = sand.u32 %s93, 1
        %s3617 = smul.addr %s3616, 64
        %s3618 = scalar_lea.vmem [#allocation4], %s3617
        // Predicated region
        $region33: #{resnet_layer_forward.3} parent=31 // pred_check
          %p3619 = pneg %p103
        $region34: #{resnet_layer_forward.3} parent=31 // pred_check_branch
          %3621 = sbr.rel (%p3619) target = $region36
        $region35: #{resnet_layer_forward.3} parent=31 // pred_region
          %s3623 = ssub.s32 1024, 1024
          %3624 = vsyncadd %s3615, %s3623
          %s3625 = smul.addr %s17, 8
          %s3626 = smul.addr %s3625, 128
          %s3627 = scalar_lea.hbm %s3, %s3626
          %s3628 = sshll.u32 %s3618, 4
          %s3629 = int_to_ptr.vmem [resolvable:$true] %s3628
          %3634 = dma.vmem_to_hbm [thread:$0]  %s3629, 1024, %s3627, %s3615, 128, 128, 8
        $region36: #{resnet_layer_forward.3} parent=31 // pred_fallthru
          _
      $region32: #{resnet_layer_forward.3} parent=5 // pred_fallthru
        _
      %p3635 = scmp.le.s32.totalorder 2, %s12
      // Predicated region
      $region37: #{resnet_layer_forward.3} parent=5 // pred_check
        %p3636 = pneg %p3635
      $region38: #{resnet_layer_forward.3} parent=5 // pred_check_branch
        %3638 = sbr.rel (%p3636) target = $region40
      $region39: #{resnet_layer_forward.3} parent=5 // pred_region
        %s3639 = ssub.s32 %s12, 2
        // Predicated region
        $region41: #{resnet_layer_forward.3} parent=39 // pred_check
          %p3640 = pneg %p109
        $region42: #{resnet_layer_forward.3} parent=39 // pred_check_branch
          %3642 = sbr.rel (%p3640) target = $region44
        $region43: #{resnet_layer_forward.3} parent=39 // pred_region
          %s3643 = sand.u32 %s94, 1
          %s3644 = scalar_lea.sflag [#allocation5], %s3643
          %s3645 = sand.u32 %s94, 1
          %s3646 = smul.addr %s3645, 64
          %s3647 = scalar_lea.vmem [#allocation4], %s3646
          %3648 = dma.done %s3644, 1024
        $region44: #{resnet_layer_forward.3} parent=39 // pred_fallthru
          _
      $region40: #{resnet_layer_forward.3} parent=5 // pred_fallthru
        _
    $region6: #{resnet_layer_forward.3} parent=1 // loop_footer
      %s16 = sadd.s32 1, %s12
    $region7: #{resnet_layer_forward.3} parent=1 // loop_footer_branch
      %11 = sbr.rel target = $region3
    $region8: #{resnet_layer_forward.3} parent=1 // loop_exit
      _
    %3649 = vsyncpa [#allocation5], 1
    %s3650 = scalar_lea.sflag [#allocation5], 1
    %3651 = vsyncpa %s3650, 1

// kernel: resnet_layer_forward.2
$region0: #{resnet_layer_forward.2}
  #allocation0 [shape = 'u32[]', space=smem, size = 0x4, offset = 0x4, fixed_abs, tag = 'smem constant byte address 0x4 - core index']
  #allocation1 [shape = 'u32[144,128]{1,0:T(1,128)}', space=vmem, size = 0x12000, scoped, tag = 'internal scratch']
  #allocation2 [shape = 'bf16[18,9,128]{2,1,0:T(8,128)(2,1)}', space=vmem, size = 0x12000, scoped, tag = 'scratch operand']
  #allocation3 [shape = 'bf16[18,8,128]{2,1,0:T(8,128)(2,1)}', space=vmem, size = 0x9000, scoped, tag = 'scratch operand']
  #allocation4 [shape = 'bf16[10,10,128]{2,1,0:T(8,128)(2,1)}', space=vmem, size = 0xa000, scoped, tag = 'scratch operand']
  %s0 = inlined_call_operand.vmem [shape: f32[2,16,8,128], index: 0, kind: input, shape index: {}]
  %s1 = inlined_call_operand.vmem [shape: f32[2,16,8,128], index: 1, kind: input, shape index: {}]
  %s2 = inlined_call_operand.vmem [shape: bf16[3,384,128], index: 2, kind: input, shape index: {}]
  %s3 = inlined_call_operand.vmem [shape: bf16[3,384,128], index: 3, kind: input, shape index: {}]
  %s4 = inlined_call_operand.vmem [shape: bf16[128,128], index: 4, kind: input, shape index: {}]
  %s5 = inlined_call_operand.vmem [shape: f32[1,128], index: 5, kind: input, shape index: {}]
  %s6 = inlined_call_operand.vmem [shape: f32[1,128], index: 6, kind: input, shape index: {}]
  %s7 = inlined_call_operand.vmem [shape: f32[2,8,8,128], index: 7, kind: output, shape index: {}]
  %s8 = sld [smem:[#allocation0]]
  $region61: #{resnet_layer_forward.2} parent=0
    _
  %s10 = ssub.s32 1, %s8
  %s11 = scalar_select 0, %s10, %s8
  loop: start=0, step=1, limit=4
  $region2: #{resnet_layer_forward.2} parent=0 // loop_pre_header
    _
  $region3: #{resnet_layer_forward.2} parent=0 // loop_header
    %s13 = sphi 0, %s17
    %p14 = scmp.ge.s32.totalorder %s13, 4
    %s23 = sphi 0, %s25
    %s26 = sphi 0, %s23
    %s27 = sphi 0, %s26
    %s43 = sphi 0, %s27
    %s49 = sphi 0, %s51
    %s52 = sphi 0, %s49
    %s53 = sphi 0, %s52
    %s69 = sphi 0, %s53
    %s73 = sphi 0, %s73
    %s75 = sphi 0, %s73
    %s76 = sphi 0, %s75
    %s90 = sphi 0, %s76
    %s94 = sphi 0, %s94
    %s96 = sphi 0, %s94
    %s97 = sphi 0, %s96
    %s111 = sphi 0, %s97
    %s115 = sphi 0, %s115
    %s117 = sphi 0, %s115
    %s118 = sphi 0, %s117
    %s132 = sphi 0, %s118
    %s136 = sphi 0, %s136
    %s138 = sphi 0, %s136
    %s139 = sphi 0, %s138
    %s153 = sphi 0, %s139
    %s157 = sphi 0, %s157
    %s159 = sphi 0, %s157
    %s160 = sphi 0, %s159
    %s174 = sphi 0, %s160
    %s180 = sphi 0, %s182
    %s183 = sphi 0, %s180
    %s184 = sphi 0, %s183
    %s200 = sphi 0, %s184
  $region4: #{resnet_layer_forward.2} parent=0 // loop_header_branch
    %16 = sbr.rel (%p14) target = $region8
  $region5: #{resnet_layer_forward.2} parent=0 // loop_body
    %s18 = ssub.s32 %s13, 1
    %s19 = ssub.s32 %s13, 2
    %s20 = sadd.s32 %s13, 1
    %s21 = ssub.s32 %s13, %s20
    %p22 = scmp.eq.s32.totalorder %s21, 0
    %s24 = sadd.s32 %s23, 1
    %s25 = scalar_select %p22, %s23, %s24
    %p28 = pneg %p22
    %p29 = scmp.eq.s32.totalorder %s13, 1
    %p30 = por %p28, %p29
    %p31 = scmp.ne.s32.totalorder %s23, %s26
    %p32 = scmp.eq.s32.totalorder %s13, 0
    %p33 = por %p31, %p32
    %p34 = scmp.ne.s32.totalorder %s23, %s26
    %p35 = scmp.eq.s32.totalorder %s18, 1
    %p36 = por %p34, %p35
    %p37 = scmp.ne.s32.totalorder %s26, %s27
    %p38 = scmp.eq.s32.totalorder %s18, 0
    %p39 = por %p37, %p38
    %p40 = scmp.ne.s32.totalorder %s26, %s27
    %p41 = scmp.eq.s32.totalorder %s19, 1
    %p42 = por %p40, %p41
    %p44 = scmp.ne.s32.totalorder %s27, %s43
    %p45 = scmp.eq.s32.totalorder %s19, 0
    %p46 = por %p44, %p45
    %s47 = ssub.s32 %s13, %s20
    %p48 = scmp.eq.s32.totalorder %s47, 0
    %s50 = sadd.s32 %s49, 1
    %s51 = scalar_select %p48, %s49, %s50
    %p54 = pneg %p48
    %p55 = scmp.eq.s32.totalorder %s13, 1
    %p56 = por %p54, %p55
    %p57 = scmp.ne.s32.totalorder %s49, %s52
    %p58 = scmp.eq.s32.totalorder %s13, 0
    %p59 = por %p57, %p58
    %p60 = scmp.ne.s32.totalorder %s49, %s52
    %p61 = scmp.eq.s32.totalorder %s18, 1
    %p62 = por %p60, %p61
    %p63 = scmp.ne.s32.totalorder %s52, %s53
    %p64 = scmp.eq.s32.totalorder %s18, 0
    %p65 = por %p63, %p64
    %p66 = scmp.ne.s32.totalorder %s52, %s53
    %p67 = scmp.eq.s32.totalorder %s19, 1
    %p68 = por %p66, %p67
    %p70 = scmp.ne.s32.totalorder %s53, %s69
    %p71 = scmp.eq.s32.totalorder %s19, 0
    %p72 = por %p70, %p71
    %s74 = sadd.s32 %s73, 1
    %p77 = scmp.eq.s32.totalorder %s13, 1
    %p78 = scmp.ne.s32.totalorder %s73, %s75
    %p79 = scmp.eq.s32.totalorder %s13, 0
    %p80 = por %p78, %p79
    %p81 = scmp.ne.s32.totalorder %s73, %s75
    %p82 = scmp.eq.s32.totalorder %s18, 1
    %p83 = por %p81, %p82
    %p84 = scmp.ne.s32.totalorder %s75, %s76
    %p85 = scmp.eq.s32.totalorder %s18, 0
    %p86 = por %p84, %p85
    %p87 = scmp.ne.s32.totalorder %s75, %s76
    %p88 = scmp.eq.s32.totalorder %s19, 1
    %p89 = por %p87, %p88
    %p91 = scmp.ne.s32.totalorder %s76, %s90
    %p92 = scmp.eq.s32.totalorder %s19, 0
    %p93 = por %p91, %p92
    %s95 = sadd.s32 %s94, 1
    %p98 = scmp.eq.s32.totalorder %s13, 1
    %p99 = scmp.ne.s32.totalorder %s94, %s96
    %p100 = scmp.eq.s32.totalorder %s13, 0
    %p101 = por %p99, %p100
    %p102 = scmp.ne.s32.totalorder %s94, %s96
    %p103 = scmp.eq.s32.totalorder %s18, 1
    %p104 = por %p102, %p103
    %p105 = scmp.ne.s32.totalorder %s96, %s97
    %p106 = scmp.eq.s32.totalorder %s18, 0
    %p107 = por %p105, %p106
    %p108 = scmp.ne.s32.totalorder %s96, %s97
    %p109 = scmp.eq.s32.totalorder %s19, 1
    %p110 = por %p108, %p109
    %p112 = scmp.ne.s32.totalorder %s97, %s111
    %p113 = scmp.eq.s32.totalorder %s19, 0
    %p114 = por %p112, %p113
    %s116 = sadd.s32 %s115, 1
    %p119 = scmp.eq.s32.totalorder %s13, 1
    %p120 = scmp.ne.s32.totalorder %s115, %s117
    %p121 = scmp.eq.s32.totalorder %s13, 0
    %p122 = por %p120, %p121
    %p123 = scmp.ne.s32.totalorder %s115, %s117
    %p124 = scmp.eq.s32.totalorder %s18, 1
    %p125 = por %p123, %p124
    %p126 = scmp.ne.s32.totalorder %s117, %s118
    %p127 = scmp.eq.s32.totalorder %s18, 0
    %p128 = por %p126, %p127
    %p129 = scmp.ne.s32.totalorder %s117, %s118
    %p130 = scmp.eq.s32.totalorder %s19, 1
    %p131 = por %p129, %p130
    %p133 = scmp.ne.s32.totalorder %s118, %s132
    %p134 = scmp.eq.s32.totalorder %s19, 0
    %p135 = por %p133, %p134
    %s137 = sadd.s32 %s136, 1
    %p140 = scmp.eq.s32.totalorder %s13, 1
    %p141 = scmp.ne.s32.totalorder %s136, %s138
    %p142 = scmp.eq.s32.totalorder %s13, 0
    %p143 = por %p141, %p142
    %p144 = scmp.ne.s32.totalorder %s136, %s138
    %p145 = scmp.eq.s32.totalorder %s18, 1
    %p146 = por %p144, %p145
    %p147 = scmp.ne.s32.totalorder %s138, %s139
    %p148 = scmp.eq.s32.totalorder %s18, 0
    %p149 = por %p147, %p148
    %p150 = scmp.ne.s32.totalorder %s138, %s139
    %p151 = scmp.eq.s32.totalorder %s19, 1
    %p152 = por %p150, %p151
    %p154 = scmp.ne.s32.totalorder %s139, %s153
    %p155 = scmp.eq.s32.totalorder %s19, 0
    %p156 = por %p154, %p155
    %s158 = sadd.s32 %s157, 1
    %p161 = scmp.eq.s32.totalorder %s13, 1
    %p162 = scmp.ne.s32.totalorder %s157, %s159
    %p163 = scmp.eq.s32.totalorder %s13, 0
    %p164 = por %p162, %p163
    %p165 = scmp.ne.s32.totalorder %s157, %s159
    %p166 = scmp.eq.s32.totalorder %s18, 1
    %p167 = por %p165, %p166
    %p168 = scmp.ne.s32.totalorder %s159, %s160
    %p169 = scmp.eq.s32.totalorder %s18, 0
    %p170 = por %p168, %p169
    %p171 = scmp.ne.s32.totalorder %s159, %s160
    %p172 = scmp.eq.s32.totalorder %s19, 1
    %p173 = por %p171, %p172
    %p175 = scmp.ne.s32.totalorder %s160, %s174
    %p176 = scmp.eq.s32.totalorder %s19, 0
    %p177 = por %p175, %p176
    %s178 = ssub.s32 %s13, %s20
    %p179 = scmp.eq.s32.totalorder %s178, 0
    %s181 = sadd.s32 %s180, 1
    %s182 = scalar_select %p179, %s180, %s181
    %p185 = pneg %p179
    %p186 = scmp.eq.s32.totalorder %s13, 1
    %p187 = por %p185, %p186
    %p188 = scmp.ne.s32.totalorder %s180, %s183
    %p189 = scmp.eq.s32.totalorder %s13, 0
    %p190 = por %p188, %p189
    %p191 = scmp.ne.s32.totalorder %s180, %s183
    %p192 = scmp.eq.s32.totalorder %s18, 1
    %p193 = por %p191, %p192
    %p194 = scmp.ne.s32.totalorder %s183, %s184
    %p195 = scmp.eq.s32.totalorder %s18, 0
    %p196 = por %p194, %p195
    %p197 = scmp.ne.s32.totalorder %s183, %s184
    %p198 = scmp.eq.s32.totalorder %s19, 1
    %p199 = por %p197, %p198
    %p201 = scmp.ne.s32.totalorder %s184, %s200
    %p202 = scmp.eq.s32.totalorder %s19, 0
    %p203 = por %p201, %p202
    %p204 = scmp.le.s32.totalorder 1, %s13
    %p205 = scmp.lt.s32.totalorder %s13, 3
    %p206 = pnand %p204, %p205
    %p207 = pneg %p206
    // Predicated region
    $region9: #{resnet_layer_forward.2} parent=5 // pred_check
      _
    $region10: #{resnet_layer_forward.2} parent=5 // pred_check_branch
      %209 = sbr.rel (%p206) target = $region12
    $region11: #{resnet_layer_forward.2} parent=5 // pred_region
      %s210 = ssub.s32 %s13, 1
      // Predicated region
      $region13: #{resnet_layer_forward.2} parent=11 // pred_check
        %p211 = pneg %p86
      $region14: #{resnet_layer_forward.2} parent=11 // pred_check_branch
        %213 = sbr.rel (%p211) target = $region16
      $region15: #{resnet_layer_forward.2} parent=11 // pred_region
        _
      $region16: #{resnet_layer_forward.2} parent=11 // pred_fallthru
        _
      // Predicated region
      $region17: #{resnet_layer_forward.2} parent=11 // pred_check
        %p214 = pneg %p107
      $region18: #{resnet_layer_forward.2} parent=11 // pred_check_branch
        %216 = sbr.rel (%p214) target = $region20
      $region19: #{resnet_layer_forward.2} parent=11 // pred_region
        _
      $region20: #{resnet_layer_forward.2} parent=11 // pred_fallthru
        _
      // Predicated region
      $region21: #{resnet_layer_forward.2} parent=11 // pred_check
        %p217 = pneg %p128
      $region22: #{resnet_layer_forward.2} parent=11 // pred_check_branch
        %219 = sbr.rel (%p217) target = $region24
      $region23: #{resnet_layer_forward.2} parent=11 // pred_region
        _
      $region24: #{resnet_layer_forward.2} parent=11 // pred_fallthru
        _
      // Predicated region
      $region25: #{resnet_layer_forward.2} parent=11 // pred_check
        %p220 = pneg %p149
      $region26: #{resnet_layer_forward.2} parent=11 // pred_check_branch
        %222 = sbr.rel (%p220) target = $region28
      $region27: #{resnet_layer_forward.2} parent=11 // pred_region
        _
      $region28: #{resnet_layer_forward.2} parent=11 // pred_fallthru
        _
      // Predicated region
      $region29: #{resnet_layer_forward.2} parent=11 // pred_check
        %p223 = pneg %p170
      $region30: #{resnet_layer_forward.2} parent=11 // pred_check_branch
        %225 = sbr.rel (%p223) target = $region32
      $region31: #{resnet_layer_forward.2} parent=11 // pred_region
        _
      $region32: #{resnet_layer_forward.2} parent=11 // pred_fallthru
        _
    $region12: #{resnet_layer_forward.2} parent=5 // pred_fallthru
      _
    %p226 = scmp.lt.s32.totalorder %s13, 2
    // Predicated region
    $region33: #{resnet_layer_forward.2} parent=5 // pred_check
      %p227 = pneg %p226
    $region34: #{resnet_layer_forward.2} parent=5 // pred_check_branch
      %229 = sbr.rel (%p227) target = $region36
    $region35: #{resnet_layer_forward.2} parent=5 // pred_region
      // Predicated region
      $region37: #{resnet_layer_forward.2} parent=35 // pred_check
        %p230 = pneg %p33
      $region38: #{resnet_layer_forward.2} parent=35 // pred_check_branch
        %232 = sbr.rel (%p230) target = $region40
      $region39: #{resnet_layer_forward.2} parent=35 // pred_region
        %p233 = scmp.lt.s32.totalorder %s13, 1
        %s234 = scalar_select %p233, %s13, 1
        %s235 = smul.addr %s234, 16
        %s236 = smul.addr %s235, 8
        %s237 = scalar_lea.vmem %s0, %s236
      $region40: #{resnet_layer_forward.2} parent=35 // pred_fallthru
        _
      // Predicated region
      $region41: #{resnet_layer_forward.2} parent=35 // pred_check
        %p238 = pneg %p59
      $region42: #{resnet_layer_forward.2} parent=35 // pred_check_branch
        %240 = sbr.rel (%p238) target = $region44
      $region43: #{resnet_layer_forward.2} parent=35 // pred_region
        %p241 = scmp.lt.s32.totalorder %s13, 1
        %s242 = scalar_select %p241, %s13, 1
        %s243 = smul.addr %s242, 16
        %s244 = smul.addr %s243, 8
        %s245 = scalar_lea.vmem %s1, %s244
      $region44: #{resnet_layer_forward.2} parent=35 // pred_fallthru
        _
    $region36: #{resnet_layer_forward.2} parent=5 // pred_fallthru
      _
    %p246 = scmp.le.s32.totalorder 1, %s13
    %p247 = scmp.lt.s32.totalorder %s13, 3
    %p248 = pnand %p246, %p247
    %p249 = pneg %p248
    // Predicated region
    $region45: #{resnet_layer_forward.2} parent=5 // pred_check
      _
    $region46: #{resnet_layer_forward.2} parent=5 // pred_check_branch
      %251 = sbr.rel (%p248) target = $region48
    $region47: #{resnet_layer_forward.2} parent=5 // pred_region
      %s252 = ssub.s32 %s13, 1
      %p253 = scmp.lt.s32.totalorder %s18, 1
      %s254 = scalar_select %p253, %s18, 1
      %s255 = smul.addr %s254, 16
      %s256 = smul.addr %s255, 8
      %s257 = scalar_lea.vmem %s0, %s256
      %p258 = pneg %p39
      %p259 = pneg %p36
      %p260 = scmp.lt.s32.totalorder %s18, 1
      %s261 = scalar_select %p260, %s18, 1
      %s262 = smul.addr %s261, 16
      %s263 = smul.addr %s262, 8
      %s264 = scalar_lea.vmem %s1, %s263
      %p265 = pneg %p65
      %p266 = pneg %p62
      %p267 = pneg %p86
      %p268 = pneg %p83
      %p269 = pneg %p107
      %p270 = pneg %p104
      %p271 = pneg %p128
      %p272 = pneg %p125
      %p273 = pneg %p149
      %p274 = pneg %p146
      %p275 = pneg %p170
      %p276 = pneg %p167
      %p277 = pneg %p196
      %p278 = pneg %p193
      %p279 = scmp.lt.s32.totalorder %s18, 1
      %s280 = scalar_select %p279, %s18, 1
      %s281 = smul.addr %s280, 8
      %s282 = smul.addr %s281, 8
      %s283 = scalar_lea.vmem %s7, %s282
      %p284 = scmp.lt.s32.totalorder %s18, 1
      %s285 = scalar_select %p284, %s18, 1
      %s286 = smul.addr %s285, 16
      %s287 = smul.addr %s286, 8
      %s288 = scalar_lea.vmem %s0, %s287
      %p289 = scmp.lt.s32.totalorder %s18, 1
      %s290 = scalar_select %p289, %s18, 1
      %s291 = smul.addr %s290, 16
      %s292 = smul.addr %s291, 8
      %s293 = scalar_lea.vmem %s1, %s292
      %p294 = scmp.lt.s32.totalorder %s18, 1
      %s295 = scalar_select %p294, %s18, 1
      %s296 = smul.addr %s295, 8
      %s297 = smul.addr %s296, 8
      %s298 = scalar_lea.vmem %s7, %s297
      %300 = vst [vmem:[#allocation2] sm:$0xf] 0
      %vm301 = vcmask 1040384
      %vm302 = vsmask.f32 256
      %vm303 = vmand %vm301, %vm302
      %v304 = vld [vmem:[#allocation2 + $0x4] sm:$0x1]
      %v305 = vsel %vm303, 0, %v304
      %306 = vst [vmem:[#allocation2 + $0x4] sm:$0x1] %v305
      %307 = vst [vmem:[#allocation2 + $0x8] sm:$0xf] 0
      %v308 = vld [vmem:[#allocation2 + $0xc] sm:$0x1]
      %v309 = vsel %vm303, 0, %v308
      %310 = vst [vmem:[#allocation2 + $0xc] sm:$0x1] %v309
      %311 = vst [vmem:[#allocation2 + $0x10] sm:$0xf] 0
      %v312 = vld [vmem:[#allocation2 + $0x14] sm:$0x1]
      %v313 = vsel %vm303, 0, %v312
      %314 = vst [vmem:[#allocation2 + $0x14] sm:$0x1] %v313
      %315 = vst [vmem:[#allocation2 + $0x18] sm:$0xf] 0
      %v316 = vld [vmem:[#allocation2 + $0x1c] sm:$0x1]
      %v317 = vsel %vm303, 0, %v316
      %318 = vst [vmem:[#allocation2 + $0x1c] sm:$0x1] %v317
      %319 = vst [vmem:[#allocation2 + $0x20] sm:$0xf] 0
      %v320 = vld [vmem:[#allocation2 + $0x24] sm:$0x1]
      %v321 = vsel %vm303, 0, %v320
      %322 = vst [vmem:[#allocation2 + $0x24] sm:$0x1] %v321
      %323 = vst [vmem:[#allocation2 + $0x28] sm:$0xf] 0
      %v324 = vld [vmem:[#allocation2 + $0x2c] sm:$0x1]
      %v325 = vsel %vm303, 0, %v324
      %326 = vst [vmem:[#allocation2 + $0x2c] sm:$0x1] %v325
      %327 = vst [vmem:[#allocation2 + $0x30] sm:$0xf] 0
      %v328 = vld [vmem:[#allocation2 + $0x34] sm:$0x1]
      %v329 = vsel %vm303, 0, %v328
      %330 = vst [vmem:[#allocation2 + $0x34] sm:$0x1] %v329
      %331 = vst [vmem:[#allocation2 + $0x38] sm:$0xf] 0
      %v332 = vld [vmem:[#allocation2 + $0x3c] sm:$0x1]
      %v333 = vsel %vm303, 0, %v332
      %334 = vst [vmem:[#allocation2 + $0x3c] sm:$0x1] %v333
      %335 = vst [vmem:[#allocation2 + $0x40] sm:$0xf] 0
      %v336 = vld [vmem:[#allocation2 + $0x44] sm:$0x1]
      %v337 = vsel %vm303, 0, %v336
      %338 = vst [vmem:[#allocation2 + $0x44] sm:$0x1] %v337
      %339 = vst [vmem:[#allocation2 + $0x48] sm:$0xf] 0
      %v340 = vld [vmem:[#allocation2 + $0x4c] sm:$0x1]
      %v341 = vsel %vm303, 0, %v340
      %342 = vst [vmem:[#allocation2 + $0x4c] sm:$0x1] %v341
      %343 = vst [vmem:[#allocation2 + $0x50] sm:$0xf] 0
      %v344 = vld [vmem:[#allocation2 + $0x54] sm:$0x1]
      %v345 = vsel %vm303, 0, %v344
      %346 = vst [vmem:[#allocation2 + $0x54] sm:$0x1] %v345
      %347 = vst [vmem:[#allocation2 + $0x58] sm:$0xf] 0
      %v348 = vld [vmem:[#allocation2 + $0x5c] sm:$0x1]
      %v349 = vsel %vm303, 0, %v348
      %350 = vst [vmem:[#allocation2 + $0x5c] sm:$0x1] %v349
      %351 = vst [vmem:[#allocation2 + $0x60] sm:$0xf] 0
      %v352 = vld [vmem:[#allocation2 + $0x64] sm:$0x1]
      %v353 = vsel %vm303, 0, %v352
      %354 = vst [vmem:[#allocation2 + $0x64] sm:$0x1] %v353
      %355 = vst [vmem:[#allocation2 + $0x68] sm:$0xf] 0
      %v356 = vld [vmem:[#allocation2 + $0x6c] sm:$0x1]
      %v357 = vsel %vm303, 0, %v356
      %358 = vst [vmem:[#allocation2 + $0x6c] sm:$0x1] %v357
      %359 = vst [vmem:[#allocation2 + $0x70] sm:$0xf] 0
      %v360 = vld [vmem:[#allocation2 + $0x74] sm:$0x1]
      %v361 = vsel %vm303, 0, %v360
      %362 = vst [vmem:[#allocation2 + $0x74] sm:$0x1] %v361
      %363 = vst [vmem:[#allocation2 + $0x78] sm:$0xf] 0
      %v364 = vld [vmem:[#allocation2 + $0x7c] sm:$0x1]
      %v365 = vsel %vm303, 0, %v364
      %366 = vst [vmem:[#allocation2 + $0x7c] sm:$0x1] %v365
      %367 = vst [vmem:[#allocation2 + $0x80] sm:$0xf] 0
      %v368 = vld [vmem:[#allocation2 + $0x84] sm:$0x1]
      %v369 = vsel %vm303, 0, %v368
      %370 = vst [vmem:[#allocation2 + $0x84] sm:$0x1] %v369
      %371 = vst [vmem:[#allocation2 + $0x88] sm:$0xf] 0
      %v372 = vld [vmem:[#allocation2 + $0x8c] sm:$0x1]
      %v373 = vsel %vm303, 0, %v372
      %374 = vst [vmem:[#allocation2 + $0x8c] sm:$0x1] %v373
      %375 = vst [vmem:[#allocation3] sm:$0xf] 0
      %376 = vst [vmem:[#allocation3 + $0x4] sm:$0xf] 0
      %377 = vst [vmem:[#allocation3 + $0x8] sm:$0xf] 0
      %378 = vst [vmem:[#allocation3 + $0xc] sm:$0xf] 0
      %379 = vst [vmem:[#allocation3 + $0x10] sm:$0xf] 0
      %380 = vst [vmem:[#allocation3 + $0x14] sm:$0xf] 0
      %381 = vst [vmem:[#allocation3 + $0x18] sm:$0xf] 0
      %382 = vst [vmem:[#allocation3 + $0x1c] sm:$0xf] 0
      %383 = vst [vmem:[#allocation3 + $0x20] sm:$0xf] 0
      %384 = vst [vmem:[#allocation3 + $0x24] sm:$0xf] 0
      %385 = vst [vmem:[#allocation3 + $0x28] sm:$0xf] 0
      %386 = vst [vmem:[#allocation3 + $0x2c] sm:$0xf] 0
      %387 = vst [vmem:[#allocation3 + $0x30] sm:$0xf] 0
      %388 = vst [vmem:[#allocation3 + $0x34] sm:$0xf] 0
      %389 = vst [vmem:[#allocation3 + $0x38] sm:$0xf] 0
      %390 = vst [vmem:[#allocation3 + $0x3c] sm:$0xf] 0
      %391 = vst [vmem:[#allocation3 + $0x40] sm:$0xf] 0
      %392 = vst [vmem:[#allocation3 + $0x44] sm:$0xf] 0
      %v393 = vld [vmem:[%s293] sm:$0xff]
      %v394 = vld [vmem:[%s293 + $0x8] sm:$0xff]
      %v395 = vld [vmem:[%s293 + $0x10] sm:$0xff]
      %v396 = vld [vmem:[%s293 + $0x18] sm:$0xff]
      %v397 = vld [vmem:[%s293 + $0x20] sm:$0xff]
      %v398 = vld [vmem:[%s293 + $0x28] sm:$0xff]
      %v399 = vld [vmem:[%s293 + $0x30] sm:$0xff]
      %v400 = vld [vmem:[%s293 + $0x38] sm:$0xff]
      %v401 = vld [vmem:[%s293 + $0x40] sm:$0xff]
      %v402 = vld [vmem:[%s293 + $0x48] sm:$0xff]
      %v403 = vld [vmem:[%s293 + $0x50] sm:$0xff]
      %v404 = vld [vmem:[%s293 + $0x58] sm:$0xff]
      %v405 = vld [vmem:[%s293 + $0x60] sm:$0xff]
      %v406 = vld [vmem:[%s293 + $0x68] sm:$0xff]
      %v407 = vld [vmem:[%s293 + $0x70] sm:$0xff]
      %v408 = vld [vmem:[%s293 + $0x78] sm:$0xff]
      %v409 = vpack.c.bf16 %v393, %v393
      %v410 = vpack.c.bf16 %v394, %v394
      %v411 = vpack.c.bf16 %v395, %v395
      %v412 = vpack.c.bf16 %v396, %v396
      %v413 = vpack.c.bf16 %v397, %v397
      %v414 = vpack.c.bf16 %v398, %v398
      %v415 = vpack.c.bf16 %v399, %v399
      %v416 = vpack.c.bf16 %v400, %v400
      %v417 = vpack.c.bf16 %v401, %v401
      %v418 = vpack.c.bf16 %v402, %v402
      %v419 = vpack.c.bf16 %v403, %v403
      %v420 = vpack.c.bf16 %v404, %v404
      %v421 = vpack.c.bf16 %v405, %v405
      %v422 = vpack.c.bf16 %v406, %v406
      %v423 = vpack.c.bf16 %v407, %v407
      %v424 = vpack.c.bf16 %v408, %v408
      %v441 = vunpack.c.l.b16 %v409
      %v442 = vunpack.c.l.b16 %v410
      %v443 = vunpack.c.l.b16 %v411
      %v444 = vunpack.c.l.b16 %v412
      %v445 = vunpack.c.l.b16 %v413
      %v446 = vunpack.c.l.b16 %v414
      %v447 = vunpack.c.l.b16 %v415
      %v448 = vunpack.c.l.b16 %v416
      %v449 = vunpack.c.l.b16 %v417
      %v450 = vunpack.c.l.b16 %v418
      %v451 = vunpack.c.l.b16 %v419
      %v452 = vunpack.c.l.b16 %v420
      %v453 = vunpack.c.l.b16 %v421
      %v454 = vunpack.c.l.b16 %v422
      %v455 = vunpack.c.l.b16 %v423
      %v456 = vunpack.c.l.b16 %v424
      %v457 = vpack.c.b16 %v441, %v441
      %v458 = vpack.c.b16 %v442, %v442
      %v459 = vpack.c.b16 %v443, %v443
      %v460 = vpack.c.b16 %v444, %v444
      %v461 = vpack.c.b16 %v445, %v445
      %v462 = vpack.c.b16 %v446, %v446
      %v463 = vpack.c.b16 %v447, %v447
      %v464 = vpack.c.b16 %v448, %v448
      %v465 = vpack.c.b16 %v449, %v449
      %v466 = vpack.c.b16 %v450, %v450
      %v467 = vpack.c.b16 %v451, %v451
      %v468 = vpack.c.b16 %v452, %v452
      %v469 = vpack.c.b16 %v453, %v453
      %v470 = vpack.c.b16 %v454, %v454
      %v471 = vpack.c.b16 %v455, %v455
      %v472 = vpack.c.b16 %v456, %v456
      %v474 = vshrl.u32 %v457, 16
      %v476 = vrot.slane %v474, 7
      %v477 = vshll.u32 %v457, 16
      %v479 = vor.u32 %v476, %v477
      %v480 = vrot.slane %v476, 4
      %v482 = vshrl.u32 %v458, 16
      %v484 = vrot.slane %v482, 7
      %v485 = vshll.u32 %v458, 16
      %v487 = vor.u32 %v484, %v485
      %v488 = vrot.slane %v484, 4
      %v490 = vshrl.u32 %v459, 16
      %v492 = vrot.slane %v490, 7
      %v493 = vshll.u32 %v459, 16
      %v495 = vor.u32 %v492, %v493
      %v496 = vrot.slane %v492, 4
      %v498 = vshrl.u32 %v460, 16
      %v500 = vrot.slane %v498, 7
      %v501 = vshll.u32 %v460, 16
      %v503 = vor.u32 %v500, %v501
      %v504 = vrot.slane %v500, 4
      %v506 = vshrl.u32 %v461, 16
      %v508 = vrot.slane %v506, 7
      %v509 = vshll.u32 %v461, 16
      %v511 = vor.u32 %v508, %v509
      %v512 = vrot.slane %v508, 4
      %v514 = vshrl.u32 %v462, 16
      %v516 = vrot.slane %v514, 7
      %v517 = vshll.u32 %v462, 16
      %v519 = vor.u32 %v516, %v517
      %v520 = vrot.slane %v516, 4
      %v522 = vshrl.u32 %v463, 16
      %v524 = vrot.slane %v522, 7
      %v525 = vshll.u32 %v463, 16
      %v527 = vor.u32 %v524, %v525
      %v528 = vrot.slane %v524, 4
      %v530 = vshrl.u32 %v464, 16
      %v532 = vrot.slane %v530, 7
      %v533 = vshll.u32 %v464, 16
      %v535 = vor.u32 %v532, %v533
      %v536 = vrot.slane %v532, 4
      %v538 = vshrl.u32 %v465, 16
      %v540 = vrot.slane %v538, 7
      %v541 = vshll.u32 %v465, 16
      %v543 = vor.u32 %v540, %v541
      %v544 = vrot.slane %v540, 4
      %v546 = vshrl.u32 %v466, 16
      %v548 = vrot.slane %v546, 7
      %v549 = vshll.u32 %v466, 16
      %v551 = vor.u32 %v548, %v549
      %v552 = vrot.slane %v548, 4
      %v554 = vshrl.u32 %v467, 16
      %v556 = vrot.slane %v554, 7
      %v557 = vshll.u32 %v467, 16
      %v559 = vor.u32 %v556, %v557
      %v560 = vrot.slane %v556, 4
      %v562 = vshrl.u32 %v468, 16
      %v564 = vrot.slane %v562, 7
      %v565 = vshll.u32 %v468, 16
      %v567 = vor.u32 %v564, %v565
      %v568 = vrot.slane %v564, 4
      %v570 = vshrl.u32 %v469, 16
      %v572 = vrot.slane %v570, 7
      %v573 = vshll.u32 %v469, 16
      %v575 = vor.u32 %v572, %v573
      %v576 = vrot.slane %v572, 4
      %v578 = vshrl.u32 %v470, 16
      %v580 = vrot.slane %v578, 7
      %v581 = vshll.u32 %v470, 16
      %v583 = vor.u32 %v580, %v581
      %v584 = vrot.slane %v580, 4
      %v586 = vshrl.u32 %v471, 16
      %v588 = vrot.slane %v586, 7
      %v589 = vshll.u32 %v471, 16
      %v591 = vor.u32 %v588, %v589
      %v592 = vrot.slane %v588, 4
      %v594 = vshrl.u32 %v472, 16
      %v596 = vrot.slane %v594, 7
      %v597 = vshll.u32 %v472, 16
      %v599 = vor.u32 %v596, %v597
      %v600 = vrot.slane %v596, 4
      %s633 = scalar_lea.vmem [#allocation2], 8
      %vm634 = vcmask 1043456
      %vm635 = vsmask.f32 7938
      %vm636 = vmand %vm634, %vm635
      %v637 = vld [vmem:[%s633] sm:$0xf]
      %v638 = vsel %vm636, %v479, %v637
      %639 = vst [vmem:[%s633] sm:$0xf] %v638
      %v640 = vld [vmem:[%s633 + $0x4] sm:$0x1]
      %v641 = vsel %vm303, %v480, %v640
      %642 = vst [vmem:[%s633 + $0x4] sm:$0x1] %v641
      %v643 = vld [vmem:[%s633 + $0x8] sm:$0xf]
      %v644 = vsel %vm636, %v487, %v643
      %645 = vst [vmem:[%s633 + $0x8] sm:$0xf] %v644
      %v646 = vld [vmem:[%s633 + $0xc] sm:$0x1]
      %v647 = vsel %vm303, %v488, %v646
      %648 = vst [vmem:[%s633 + $0xc] sm:$0x1] %v647
      %v649 = vld [vmem:[%s633 + $0x10] sm:$0xf]
      %v650 = vsel %vm636, %v495, %v649
      %651 = vst [vmem:[%s633 + $0x10] sm:$0xf] %v650
      %v652 = vld [vmem:[%s633 + $0x14] sm:$0x1]
      %v653 = vsel %vm303, %v496, %v652
      %654 = vst [vmem:[%s633 + $0x14] sm:$0x1] %v653
      %v655 = vld [vmem:[%s633 + $0x18] sm:$0xf]
      %v656 = vsel %vm636, %v503, %v655
      %657 = vst [vmem:[%s633 + $0x18] sm:$0xf] %v656
      %v658 = vld [vmem:[%s633 + $0x1c] sm:$0x1]
      %v659 = vsel %vm303, %v504, %v658
      %660 = vst [vmem:[%s633 + $0x1c] sm:$0x1] %v659
      %v661 = vld [vmem:[%s633 + $0x20] sm:$0xf]
      %v662 = vsel %vm636, %v511, %v661
      %663 = vst [vmem:[%s633 + $0x20] sm:$0xf] %v662
      %v664 = vld [vmem:[%s633 + $0x24] sm:$0x1]
      %v665 = vsel %vm303, %v512, %v664
      %666 = vst [vmem:[%s633 + $0x24] sm:$0x1] %v665
      %v667 = vld [vmem:[%s633 + $0x28] sm:$0xf]
      %v668 = vsel %vm636, %v519, %v667
      %669 = vst [vmem:[%s633 + $0x28] sm:$0xf] %v668
      %v670 = vld [vmem:[%s633 + $0x2c] sm:$0x1]
      %v671 = vsel %vm303, %v520, %v670
      %672 = vst [vmem:[%s633 + $0x2c] sm:$0x1] %v671
      %v673 = vld [vmem:[%s633 + $0x30] sm:$0xf]
      %v674 = vsel %vm636, %v527, %v673
      %675 = vst [vmem:[%s633 + $0x30] sm:$0xf] %v674
      %v676 = vld [vmem:[%s633 + $0x34] sm:$0x1]
      %v677 = vsel %vm303, %v528, %v676
      %678 = vst [vmem:[%s633 + $0x34] sm:$0x1] %v677
      %v679 = vld [vmem:[%s633 + $0x38] sm:$0xf]
      %v680 = vsel %vm636, %v535, %v679
      %681 = vst [vmem:[%s633 + $0x38] sm:$0xf] %v680
      %v682 = vld [vmem:[%s633 + $0x3c] sm:$0x1]
      %v683 = vsel %vm303, %v536, %v682
      %684 = vst [vmem:[%s633 + $0x3c] sm:$0x1] %v683
      %v685 = vld [vmem:[%s633 + $0x40] sm:$0xf]
      %v686 = vsel %vm636, %v543, %v685
      %687 = vst [vmem:[%s633 + $0x40] sm:$0xf] %v686
      %v688 = vld [vmem:[%s633 + $0x44] sm:$0x1]
      %v689 = vsel %vm303, %v544, %v688
      %690 = vst [vmem:[%s633 + $0x44] sm:$0x1] %v689
      %v691 = vld [vmem:[%s633 + $0x48] sm:$0xf]
      %v692 = vsel %vm636, %v551, %v691
      %693 = vst [vmem:[%s633 + $0x48] sm:$0xf] %v692
      %v694 = vld [vmem:[%s633 + $0x4c] sm:$0x1]
      %v695 = vsel %vm303, %v552, %v694
      %696 = vst [vmem:[%s633 + $0x4c] sm:$0x1] %v695
      %v697 = vld [vmem:[%s633 + $0x50] sm:$0xf]
      %v698 = vsel %vm636, %v559, %v697
      %699 = vst [vmem:[%s633 + $0x50] sm:$0xf] %v698
      %v700 = vld [vmem:[%s633 + $0x54] sm:$0x1]
      %v701 = vsel %vm303, %v560, %v700
      %702 = vst [vmem:[%s633 + $0x54] sm:$0x1] %v701
      %v703 = vld [vmem:[%s633 + $0x58] sm:$0xf]
      %v704 = vsel %vm636, %v567, %v703
      %705 = vst [vmem:[%s633 + $0x58] sm:$0xf] %v704
      %v706 = vld [vmem:[%s633 + $0x5c] sm:$0x1]
      %v707 = vsel %vm303, %v568, %v706
      %708 = vst [vmem:[%s633 + $0x5c] sm:$0x1] %v707
      %v709 = vld [vmem:[%s633 + $0x60] sm:$0xf]
      %v710 = vsel %vm636, %v575, %v709
      %711 = vst [vmem:[%s633 + $0x60] sm:$0xf] %v710
      %v712 = vld [vmem:[%s633 + $0x64] sm:$0x1]
      %v713 = vsel %vm303, %v576, %v712
      %714 = vst [vmem:[%s633 + $0x64] sm:$0x1] %v713
      %v715 = vld [vmem:[%s633 + $0x68] sm:$0xf]
      %v716 = vsel %vm636, %v583, %v715
      %717 = vst [vmem:[%s633 + $0x68] sm:$0xf] %v716
      %v718 = vld [vmem:[%s633 + $0x6c] sm:$0x1]
      %v719 = vsel %vm303, %v584, %v718
      %720 = vst [vmem:[%s633 + $0x6c] sm:$0x1] %v719
      %v721 = vld [vmem:[%s633 + $0x70] sm:$0xf]
      %v722 = vsel %vm636, %v591, %v721
      %723 = vst [vmem:[%s633 + $0x70] sm:$0xf] %v722
      %v724 = vld [vmem:[%s633 + $0x74] sm:$0x1]
      %v725 = vsel %vm303, %v592, %v724
      %726 = vst [vmem:[%s633 + $0x74] sm:$0x1] %v725
      %v727 = vld [vmem:[%s633 + $0x78] sm:$0xf]
      %v728 = vsel %vm636, %v599, %v727
      %729 = vst [vmem:[%s633 + $0x78] sm:$0xf] %v728
      %v730 = vld [vmem:[%s633 + $0x7c] sm:$0x1]
      %v731 = vsel %vm303, %v600, %v730
      %732 = vst [vmem:[%s633 + $0x7c] sm:$0x1] %v731
      %v733 = vld [vmem:[%s288] sm:$0xff]
      %v734 = vld [vmem:[%s288 + $0x8] sm:$0xff]
      %v735 = vld [vmem:[%s288 + $0x10] sm:$0xff]
      %v736 = vld [vmem:[%s288 + $0x18] sm:$0xff]
      %v737 = vld [vmem:[%s288 + $0x20] sm:$0xff]
      %v738 = vld [vmem:[%s288 + $0x28] sm:$0xff]
      %v739 = vld [vmem:[%s288 + $0x30] sm:$0xff]
      %v740 = vld [vmem:[%s288 + $0x38] sm:$0xff]
      %v741 = vld [vmem:[%s288 + $0x40] sm:$0xff]
      %v742 = vld [vmem:[%s288 + $0x48] sm:$0xff]
      %v743 = vld [vmem:[%s288 + $0x50] sm:$0xff]
      %v744 = vld [vmem:[%s288 + $0x58] sm:$0xff]
      %v745 = vld [vmem:[%s288 + $0x60] sm:$0xff]
      %v746 = vld [vmem:[%s288 + $0x68] sm:$0xff]
      %v747 = vld [vmem:[%s288 + $0x70] sm:$0xff]
      %v748 = vld [vmem:[%s288 + $0x78] sm:$0xff]
      %v749 = vpack.c.bf16 %v733, %v733
      %v750 = vpack.c.bf16 %v734, %v734
      %v751 = vpack.c.bf16 %v735, %v735
      %v752 = vpack.c.bf16 %v736, %v736
      %v753 = vpack.c.bf16 %v737, %v737
      %v754 = vpack.c.bf16 %v738, %v738
      %v755 = vpack.c.bf16 %v739, %v739
      %v756 = vpack.c.bf16 %v740, %v740
      %v757 = vpack.c.bf16 %v741, %v741
      %v758 = vpack.c.bf16 %v742, %v742
      %v759 = vpack.c.bf16 %v743, %v743
      %v760 = vpack.c.bf16 %v744, %v744
      %v761 = vpack.c.bf16 %v745, %v745
      %v762 = vpack.c.bf16 %v746, %v746
      %v763 = vpack.c.bf16 %v747, %v747
      %v764 = vpack.c.bf16 %v748, %v748
      %s765 = scalar_lea.vmem [#allocation3], 4
      %766 = vst [vmem:[%s765] sm:$0xf] %v749
      %767 = vst [vmem:[%s765 + $0x4] sm:$0xf] %v750
      %768 = vst [vmem:[%s765 + $0x8] sm:$0xf] %v751
      %769 = vst [vmem:[%s765 + $0xc] sm:$0xf] %v752
      %770 = vst [vmem:[%s765 + $0x10] sm:$0xf] %v753
      %771 = vst [vmem:[%s765 + $0x14] sm:$0xf] %v754
      %772 = vst [vmem:[%s765 + $0x18] sm:$0xf] %v755
      %773 = vst [vmem:[%s765 + $0x1c] sm:$0xf] %v756
      %774 = vst [vmem:[%s765 + $0x20] sm:$0xf] %v757
      %775 = vst [vmem:[%s765 + $0x24] sm:$0xf] %v758
      %776 = vst [vmem:[%s765 + $0x28] sm:$0xf] %v759
      %777 = vst [vmem:[%s765 + $0x2c] sm:$0xf] %v760
      %778 = vst [vmem:[%s765 + $0x30] sm:$0xf] %v761
      %779 = vst [vmem:[%s765 + $0x34] sm:$0xf] %v762
      %780 = vst [vmem:[%s765 + $0x38] sm:$0xf] %v763
      %781 = vst [vmem:[%s765 + $0x3c] sm:$0xf] %v764
      %v782 = vld [vmem:[#allocation2] sm:$0xf]
      %v783 = vld [vmem:[#allocation2 + $0x4] sm:$0x1]
      %v784 = vld [vmem:[#allocation2 + $0x10] sm:$0xf]
      %v785 = vld [vmem:[#allocation2 + $0x14] sm:$0x1]
      %v786 = vld [vmem:[#allocation2 + $0x20] sm:$0xf]
      %v787 = vld [vmem:[#allocation2 + $0x24] sm:$0x1]
      %v788 = vld [vmem:[#allocation2 + $0x30] sm:$0xf]
      %v789 = vld [vmem:[#allocation2 + $0x34] sm:$0x1]
      %v790 = vld [vmem:[#allocation2 + $0x40] sm:$0xf]
      %v791 = vld [vmem:[#allocation2 + $0x44] sm:$0x1]
      %v792 = vld [vmem:[#allocation2 + $0x50] sm:$0xf]
      %v793 = vld [vmem:[#allocation2 + $0x54] sm:$0x1]
      %v794 = vld [vmem:[#allocation2 + $0x60] sm:$0xf]
      %v795 = vld [vmem:[#allocation2 + $0x64] sm:$0x1]
      %v796 = vld [vmem:[#allocation2 + $0x70] sm:$0xf]
      %v797 = vld [vmem:[#allocation2 + $0x74] sm:$0x1]
      %v798 = vld [vmem:[#allocation3] sm:$0xf]
      %v799 = vld [vmem:[#allocation3 + $0x8] sm:$0xf]
      %v800 = vld [vmem:[#allocation3 + $0x10] sm:$0xf]
      %v801 = vld [vmem:[#allocation3 + $0x18] sm:$0xf]
      %v802 = vld [vmem:[#allocation3 + $0x20] sm:$0xf]
      %v803 = vld [vmem:[#allocation3 + $0x28] sm:$0xf]
      %v804 = vld [vmem:[#allocation3 + $0x30] sm:$0xf]
      %v805 = vld [vmem:[#allocation3 + $0x38] sm:$0xf]
      %v822 = vunpack.c.l.b16 %v782
      %v823 = vunpack.c.l.b16 %v783
      %v824 = vunpack.c.l.b16 %v784
      %v825 = vunpack.c.l.b16 %v785
      %v826 = vunpack.c.l.b16 %v786
      %v827 = vunpack.c.l.b16 %v787
      %v828 = vunpack.c.l.b16 %v788
      %v829 = vunpack.c.l.b16 %v789
      %v830 = vunpack.c.l.b16 %v790
      %v831 = vunpack.c.l.b16 %v791
      %v832 = vunpack.c.l.b16 %v792
      %v833 = vunpack.c.l.b16 %v793
      %v834 = vunpack.c.l.b16 %v794
      %v835 = vunpack.c.l.b16 %v795
      %v836 = vunpack.c.l.b16 %v796
      %v837 = vunpack.c.l.b16 %v797
      %v838 = vpack.c.b16 %v823, %v822
      %v839 = vpack.c.b16 %v825, %v824
      %v840 = vpack.c.b16 %v827, %v826
      %v841 = vpack.c.b16 %v829, %v828
      %v842 = vpack.c.b16 %v831, %v830
      %v843 = vpack.c.b16 %v833, %v832
      %v844 = vpack.c.b16 %v835, %v834
      %v845 = vpack.c.b16 %v837, %v836
      %v847 = vshrl.u32 %v838, 16
      %v849 = vshll.u32 %v838, 16
      %v851 = vrot.slane %v849, 1
      %v852 = vor.u32 %v847, %v851
      %v854 = vshrl.u32 %v839, 16
      %v856 = vshll.u32 %v839, 16
      %v858 = vrot.slane %v856, 1
      %v859 = vor.u32 %v854, %v858
      %v861 = vshrl.u32 %v840, 16
      %v863 = vshll.u32 %v840, 16
      %v865 = vrot.slane %v863, 1
      %v866 = vor.u32 %v861, %v865
      %v868 = vshrl.u32 %v841, 16
      %v870 = vshll.u32 %v841, 16
      %v872 = vrot.slane %v870, 1
      %v873 = vor.u32 %v868, %v872
      %v875 = vshrl.u32 %v842, 16
      %v877 = vshll.u32 %v842, 16
      %v879 = vrot.slane %v877, 1
      %v880 = vor.u32 %v875, %v879
      %v882 = vshrl.u32 %v843, 16
      %v884 = vshll.u32 %v843, 16
      %v886 = vrot.slane %v884, 1
      %v887 = vor.u32 %v882, %v886
      %v889 = vshrl.u32 %v844, 16
      %v891 = vshll.u32 %v844, 16
      %v893 = vrot.slane %v891, 1
      %v894 = vor.u32 %v889, %v893
      %v896 = vshrl.u32 %v845, 16
      %v898 = vshll.u32 %v845, 16
      %v900 = vrot.slane %v898, 1
      %v901 = vor.u32 %v896, %v900
      %v910 = vunpack.c.l.b16 %v798
      %v911 = vunpack.c.l.b16 %v852
      %v912 = vunpack.c.l.b16 %v799
      %v913 = vunpack.c.l.b16 %v859
      %v914 = vunpack.c.l.b16 %v800
      %v915 = vunpack.c.l.b16 %v866
      %v916 = vunpack.c.l.b16 %v801
      %v917 = vunpack.c.l.b16 %v873
      %v918 = vunpack.c.l.b16 %v802
      %v919 = vunpack.c.l.b16 %v880
      %v920 = vunpack.c.l.b16 %v803
      %v921 = vunpack.c.l.b16 %v887
      %v922 = vunpack.c.l.b16 %v804
      %v923 = vunpack.c.l.b16 %v894
      %v924 = vunpack.c.l.b16 %v805
      %v925 = vunpack.c.l.b16 %v901
      %v926 = vld [vmem:[%s2] sm:$0xf]
      %v927 = vld [vmem:[%s2 + $0x4] sm:$0xf]
      %v928 = vld [vmem:[%s2 + $0x8] sm:$0xf]
      %v929 = vld [vmem:[%s2 + $0xc] sm:$0xf]
      %v930 = vld [vmem:[%s2 + $0x10] sm:$0xf]
      %v931 = vld [vmem:[%s2 + $0x14] sm:$0xf]
      %v932 = vld [vmem:[%s2 + $0x18] sm:$0xf]
      %v933 = vld [vmem:[%s2 + $0x1c] sm:$0xf]
      %v934 = vld [vmem:[%s2 + $0x20] sm:$0xf]
      %v935 = vld [vmem:[%s2 + $0x24] sm:$0xf]
      %v936 = vld [vmem:[%s2 + $0x28] sm:$0xf]
      %v937 = vld [vmem:[%s2 + $0x2c] sm:$0xf]
      %v938 = vld [vmem:[%s2 + $0x30] sm:$0xf]
      %v939 = vld [vmem:[%s2 + $0x34] sm:$0xf]
      %v940 = vld [vmem:[%s2 + $0x38] sm:$0xf]
      %v941 = vld [vmem:[%s2 + $0x3c] sm:$0xf]
      %v942 = vld [vmem:[%s2 + $0x40] sm:$0xf]
      %v943 = vld [vmem:[%s2 + $0x44] sm:$0xf]
      %v944 = vld [vmem:[%s2 + $0x48] sm:$0xf]
      %v945 = vld [vmem:[%s2 + $0x4c] sm:$0xf]
      %v946 = vld [vmem:[%s2 + $0x50] sm:$0xf]
      %v947 = vld [vmem:[%s2 + $0x54] sm:$0xf]
      %v948 = vld [vmem:[%s2 + $0x58] sm:$0xf]
      %v949 = vld [vmem:[%s2 + $0x5c] sm:$0xf]
      %v950 = vld [vmem:[%s2 + $0x60] sm:$0xf]
      %v951 = vld [vmem:[%s2 + $0x64] sm:$0xf]
      %v952 = vld [vmem:[%s2 + $0x68] sm:$0xf]
      %v953 = vld [vmem:[%s2 + $0x6c] sm:$0xf]
      %v954 = vld [vmem:[%s2 + $0x70] sm:$0xf]
      %v955 = vld [vmem:[%s2 + $0x74] sm:$0xf]
      %v956 = vld [vmem:[%s2 + $0x78] sm:$0xf]
      %v957 = vld [vmem:[%s2 + $0x7c] sm:$0xf]
      %v958 = vld [vmem:[%s2 + $0x80] sm:$0xf]
      %v959 = vld [vmem:[%s2 + $0x84] sm:$0xf]
      %v960 = vld [vmem:[%s2 + $0x88] sm:$0xf]
      %v961 = vld [vmem:[%s2 + $0x8c] sm:$0xf]
      %v962 = vld [vmem:[%s2 + $0x90] sm:$0xf]
      %v963 = vld [vmem:[%s2 + $0x94] sm:$0xf]
      %v964 = vld [vmem:[%s2 + $0x98] sm:$0xf]
      %v965 = vld [vmem:[%s2 + $0x9c] sm:$0xf]
      %v966 = vld [vmem:[%s2 + $0xa0] sm:$0xf]
      %v967 = vld [vmem:[%s2 + $0xa4] sm:$0xf]
      %v968 = vld [vmem:[%s2 + $0xa8] sm:$0xf]
      %v969 = vld [vmem:[%s2 + $0xac] sm:$0xf]
      %v970 = vld [vmem:[%s2 + $0xb0] sm:$0xf]
      %v971 = vld [vmem:[%s2 + $0xb4] sm:$0xf]
      %v972 = vld [vmem:[%s2 + $0xb8] sm:$0xf]
      %v973 = vld [vmem:[%s2 + $0xbc] sm:$0xf]
      %v974 = vld [vmem:[%s633] sm:$0xf]
      %v975 = vld [vmem:[%s633 + $0x4] sm:$0x1]
      %v976 = vld [vmem:[%s633 + $0x10] sm:$0xf]
      %v977 = vld [vmem:[%s633 + $0x14] sm:$0x1]
      %v978 = vld [vmem:[%s633 + $0x20] sm:$0xf]
      %v979 = vld [vmem:[%s633 + $0x24] sm:$0x1]
      %v980 = vld [vmem:[%s633 + $0x30] sm:$0xf]
      %v981 = vld [vmem:[%s633 + $0x34] sm:$0x1]
      %v982 = vld [vmem:[%s633 + $0x40] sm:$0xf]
      %v983 = vld [vmem:[%s633 + $0x44] sm:$0x1]
      %v984 = vld [vmem:[%s633 + $0x50] sm:$0xf]
      %v985 = vld [vmem:[%s633 + $0x54] sm:$0x1]
      %v986 = vld [vmem:[%s633 + $0x60] sm:$0xf]
      %v987 = vld [vmem:[%s633 + $0x64] sm:$0x1]
      %v988 = vld [vmem:[%s633 + $0x70] sm:$0xf]
      %v989 = vld [vmem:[%s633 + $0x74] sm:$0x1]
      %v990 = vld [vmem:[%s765] sm:$0xf]
      %v991 = vld [vmem:[%s765 + $0x8] sm:$0xf]
      %v992 = vld [vmem:[%s765 + $0x10] sm:$0xf]
      %v993 = vld [vmem:[%s765 + $0x18] sm:$0xf]
      %v994 = vld [vmem:[%s765 + $0x20] sm:$0xf]
      %v995 = vld [vmem:[%s765 + $0x28] sm:$0xf]
      %v996 = vld [vmem:[%s765 + $0x30] sm:$0xf]
      %v997 = vld [vmem:[%s765 + $0x38] sm:$0xf]
      %v1014 = vunpack.c.l.b16 %v974
      %v1015 = vunpack.c.l.b16 %v975
      %v1016 = vunpack.c.l.b16 %v976
      %v1017 = vunpack.c.l.b16 %v977
      %v1018 = vunpack.c.l.b16 %v978
      %v1019 = vunpack.c.l.b16 %v979
      %v1020 = vunpack.c.l.b16 %v980
      %v1021 = vunpack.c.l.b16 %v981
      %v1022 = vunpack.c.l.b16 %v982
      %v1023 = vunpack.c.l.b16 %v983
      %v1024 = vunpack.c.l.b16 %v984
      %v1025 = vunpack.c.l.b16 %v985
      %v1026 = vunpack.c.l.b16 %v986
      %v1027 = vunpack.c.l.b16 %v987
      %v1028 = vunpack.c.l.b16 %v988
      %v1029 = vunpack.c.l.b16 %v989
      %v1030 = vpack.c.b16 %v1015, %v1014
      %v1031 = vpack.c.b16 %v1017, %v1016
      %v1032 = vpack.c.b16 %v1019, %v1018
      %v1033 = vpack.c.b16 %v1021, %v1020
      %v1034 = vpack.c.b16 %v1023, %v1022
      %v1035 = vpack.c.b16 %v1025, %v1024
      %v1036 = vpack.c.b16 %v1027, %v1026
      %v1037 = vpack.c.b16 %v1029, %v1028
      %v1039 = vshrl.u32 %v1030, 16
      %v1041 = vshll.u32 %v1030, 16
      %v1043 = vrot.slane %v1041, 1
      %v1044 = vor.u32 %v1039, %v1043
      %v1046 = vshrl.u32 %v1031, 16
      %v1048 = vshll.u32 %v1031, 16
      %v1050 = vrot.slane %v1048, 1
      %v1051 = vor.u32 %v1046, %v1050
      %v1053 = vshrl.u32 %v1032, 16
      %v1055 = vshll.u32 %v1032, 16
      %v1057 = vrot.slane %v1055, 1
      %v1058 = vor.u32 %v1053, %v1057
      %v1060 = vshrl.u32 %v1033, 16
      %v1062 = vshll.u32 %v1033, 16
      %v1064 = vrot.slane %v1062, 1
      %v1065 = vor.u32 %v1060, %v1064
      %v1067 = vshrl.u32 %v1034, 16
      %v1069 = vshll.u32 %v1034, 16
      %v1071 = vrot.slane %v1069, 1
      %v1072 = vor.u32 %v1067, %v1071
      %v1074 = vshrl.u32 %v1035, 16
      %v1076 = vshll.u32 %v1035, 16
      %v1078 = vrot.slane %v1076, 1
      %v1079 = vor.u32 %v1074, %v1078
      %v1081 = vshrl.u32 %v1036, 16
      %v1083 = vshll.u32 %v1036, 16
      %v1085 = vrot.slane %v1083, 1
      %v1086 = vor.u32 %v1081, %v1085
      %v1088 = vshrl.u32 %v1037, 16
      %v1090 = vshll.u32 %v1037, 16
      %v1092 = vrot.slane %v1090, 1
      %v1093 = vor.u32 %v1088, %v1092
      %v1102 = vunpack.c.l.b16 %v990
      %v1103 = vunpack.c.l.b16 %v1044
      %v1104 = vunpack.c.l.b16 %v991
      %v1105 = vunpack.c.l.b16 %v1051
      %v1106 = vunpack.c.l.b16 %v992
      %v1107 = vunpack.c.l.b16 %v1058
      %v1108 = vunpack.c.l.b16 %v993
      %v1109 = vunpack.c.l.b16 %v1065
      %v1110 = vunpack.c.l.b16 %v994
      %v1111 = vunpack.c.l.b16 %v1072
      %v1112 = vunpack.c.l.b16 %v995
      %v1113 = vunpack.c.l.b16 %v1079
      %v1114 = vunpack.c.l.b16 %v996
      %v1115 = vunpack.c.l.b16 %v1086
      %v1116 = vunpack.c.l.b16 %v997
      %v1117 = vunpack.c.l.b16 %v1093
      %s1118 = scalar_lea.vmem %s2, 192
      %v1119 = vld [vmem:[%s1118] sm:$0xf]
      %v1120 = vld [vmem:[%s1118 + $0x4] sm:$0xf]
      %v1121 = vld [vmem:[%s1118 + $0x8] sm:$0xf]
      %v1122 = vld [vmem:[%s1118 + $0xc] sm:$0xf]
      %v1123 = vld [vmem:[%s1118 + $0x10] sm:$0xf]
      %v1124 = vld [vmem:[%s1118 + $0x14] sm:$0xf]
      %v1125 = vld [vmem:[%s1118 + $0x18] sm:$0xf]
      %v1126 = vld [vmem:[%s1118 + $0x1c] sm:$0xf]
      %v1127 = vld [vmem:[%s1118 + $0x20] sm:$0xf]
      %v1128 = vld [vmem:[%s1118 + $0x24] sm:$0xf]
      %v1129 = vld [vmem:[%s1118 + $0x28] sm:$0xf]
      %v1130 = vld [vmem:[%s1118 + $0x2c] sm:$0xf]
      %v1131 = vld [vmem:[%s1118 + $0x30] sm:$0xf]
      %v1132 = vld [vmem:[%s1118 + $0x34] sm:$0xf]
      %v1133 = vld [vmem:[%s1118 + $0x38] sm:$0xf]
      %v1134 = vld [vmem:[%s1118 + $0x3c] sm:$0xf]
      %v1135 = vld [vmem:[%s1118 + $0x40] sm:$0xf]
      %v1136 = vld [vmem:[%s1118 + $0x44] sm:$0xf]
      %v1137 = vld [vmem:[%s1118 + $0x48] sm:$0xf]
      %v1138 = vld [vmem:[%s1118 + $0x4c] sm:$0xf]
      %v1139 = vld [vmem:[%s1118 + $0x50] sm:$0xf]
      %v1140 = vld [vmem:[%s1118 + $0x54] sm:$0xf]
      %v1141 = vld [vmem:[%s1118 + $0x58] sm:$0xf]
      %v1142 = vld [vmem:[%s1118 + $0x5c] sm:$0xf]
      %v1143 = vld [vmem:[%s1118 + $0x60] sm:$0xf]
      %v1144 = vld [vmem:[%s1118 + $0x64] sm:$0xf]
      %v1145 = vld [vmem:[%s1118 + $0x68] sm:$0xf]
      %v1146 = vld [vmem:[%s1118 + $0x6c] sm:$0xf]
      %v1147 = vld [vmem:[%s1118 + $0x70] sm:$0xf]
      %v1148 = vld [vmem:[%s1118 + $0x74] sm:$0xf]
      %v1149 = vld [vmem:[%s1118 + $0x78] sm:$0xf]
      %v1150 = vld [vmem:[%s1118 + $0x7c] sm:$0xf]
      %v1151 = vld [vmem:[%s1118 + $0x80] sm:$0xf]
      %v1152 = vld [vmem:[%s1118 + $0x84] sm:$0xf]
      %v1153 = vld [vmem:[%s1118 + $0x88] sm:$0xf]
      %v1154 = vld [vmem:[%s1118 + $0x8c] sm:$0xf]
      %v1155 = vld [vmem:[%s1118 + $0x90] sm:$0xf]
      %v1156 = vld [vmem:[%s1118 + $0x94] sm:$0xf]
      %v1157 = vld [vmem:[%s1118 + $0x98] sm:$0xf]
      %v1158 = vld [vmem:[%s1118 + $0x9c] sm:$0xf]
      %v1159 = vld [vmem:[%s1118 + $0xa0] sm:$0xf]
      %v1160 = vld [vmem:[%s1118 + $0xa4] sm:$0xf]
      %v1161 = vld [vmem:[%s1118 + $0xa8] sm:$0xf]
      %v1162 = vld [vmem:[%s1118 + $0xac] sm:$0xf]
      %v1163 = vld [vmem:[%s1118 + $0xb0] sm:$0xf]
      %v1164 = vld [vmem:[%s1118 + $0xb4] sm:$0xf]
      %v1165 = vld [vmem:[%s1118 + $0xb8] sm:$0xf]
      %v1166 = vld [vmem:[%s1118 + $0xbc] sm:$0xf]
      %v1167 = vpack.c.b16 %v1016, %v1014
      %v1168 = vpack.c.b16 %v1104, %v1102
      %v1169 = vpack.c.b16 %v1105, %v1103
      %v1170 = vpack.c.b16 %v1020, %v1018
      %v1171 = vpack.c.b16 %v1108, %v1106
      %v1172 = vpack.c.b16 %v1109, %v1107
      %v1173 = vpack.c.b16 %v1024, %v1022
      %v1174 = vpack.c.b16 %v1112, %v1110
      %v1175 = vpack.c.b16 %v1113, %v1111
      %v1176 = vpack.c.b16 %v1028, %v1026
      %v1177 = vpack.c.b16 %v1116, %v1114
      %v1178 = vpack.c.b16 %v1117, %v1115
      %v1239 = vunpack.c.l.b16 %v1119
      %v1240 = vunpack.c.l.b16 %v1120
      %v1241 = vunpack.c.l.b16 %v1121
      %v1242 = vunpack.c.l.b16 %v1122
      %v1243 = vunpack.c.l.b16 %v1123
      %v1244 = vunpack.c.l.b16 %v1124
      %v1245 = vunpack.c.l.b16 %v1125
      %v1246 = vunpack.c.l.b16 %v1126
      %v1247 = vunpack.c.l.b16 %v1127
      %v1248 = vunpack.c.l.b16 %v1128
      %v1249 = vunpack.c.l.b16 %v1129
      %v1250 = vunpack.c.l.b16 %v1130
      %v1251 = vunpack.c.l.b16 %v1131
      %v1252 = vunpack.c.l.b16 %v1132
      %v1253 = vunpack.c.l.b16 %v1133
      %v1254 = vunpack.c.l.b16 %v1134
      %v1255 = vunpack.c.l.b16 %v1135
      %v1256 = vunpack.c.l.b16 %v1136
      %v1257 = vunpack.c.l.b16 %v1137
      %v1258 = vunpack.c.l.b16 %v1138
      %v1259 = vunpack.c.l.b16 %v1139
      %v1260 = vunpack.c.l.b16 %v1140
      %v1261 = vunpack.c.l.b16 %v1141
      %v1262 = vunpack.c.l.b16 %v1142
      %v1263 = vunpack.c.l.b16 %v1143
      %v1264 = vunpack.c.l.b16 %v1144
      %v1265 = vunpack.c.l.b16 %v1145
      %v1266 = vunpack.c.l.b16 %v1146
      %v1267 = vunpack.c.l.b16 %v1147
      %v1268 = vunpack.c.l.b16 %v1148
      %v1269 = vunpack.c.l.b16 %v1149
      %v1270 = vunpack.c.l.b16 %v1150
      %v1271 = vunpack.c.l.b16 %v1151
      %v1272 = vunpack.c.l.b16 %v1152
      %v1273 = vunpack.c.l.b16 %v1153
      %v1274 = vunpack.c.l.b16 %v1154
      %v1275 = vunpack.c.l.b16 %v1155
      %v1276 = vunpack.c.l.b16 %v1156
      %v1277 = vunpack.c.l.b16 %v1157
      %v1278 = vunpack.c.l.b16 %v1158
      %v1279 = vunpack.c.l.b16 %v1159
      %v1280 = vunpack.c.l.b16 %v1160
      %v1281 = vunpack.c.l.b16 %v1161
      %v1282 = vunpack.c.l.b16 %v1162
      %v1283 = vunpack.c.l.b16 %v1163
      %v1284 = vunpack.c.l.b16 %v1164
      %v1285 = vunpack.c.l.b16 %v1165
      %v1286 = vunpack.c.l.b16 %v1166
      %v1287 = vpack.c.b16 %v1240, %v1239
      %v1288 = vpack.c.b16 %v1242, %v1241
      %v1289 = vpack.c.b16 %v1244, %v1243
      %v1290 = vpack.c.b16 %v1246, %v1245
      %v1291 = vpack.c.b16 %v1248, %v1247
      %v1292 = vpack.c.b16 %v1250, %v1249
      %v1293 = vpack.c.b16 %v1252, %v1251
      %v1294 = vpack.c.b16 %v1254, %v1253
      %v1295 = vpack.c.b16 %v1256, %v1255
      %v1296 = vpack.c.b16 %v1258, %v1257
      %v1297 = vpack.c.b16 %v1260, %v1259
      %v1298 = vpack.c.b16 %v1262, %v1261
      %v1299 = vpack.c.b16 %v1264, %v1263
      %v1300 = vpack.c.b16 %v1266, %v1265
      %v1301 = vpack.c.b16 %v1268, %v1267
      %v1302 = vpack.c.b16 %v1270, %v1269
      %v1303 = vpack.c.b16 %v1272, %v1271
      %v1304 = vpack.c.b16 %v1274, %v1273
      %v1305 = vpack.c.b16 %v1276, %v1275
      %v1306 = vpack.c.b16 %v1278, %v1277
      %v1307 = vpack.c.b16 %v1280, %v1279
      %v1308 = vpack.c.b16 %v1282, %v1281
      %v1309 = vpack.c.b16 %v1284, %v1283
      %v1310 = vpack.c.b16 %v1286, %v1285
      %1335 = vmatprep.subr.bf16.mxu0 0
      %1336 = vmatpush1.bf16.msra.mxu0 %v1287
      %1337 = vmatprep.subr.bf16.mxu0 0
      %1338 = vmatpush1.bf16.msra.mxu0 %v1288
      %1339 = vmatprep.subr.bf16.mxu0 0
      %1340 = vmatpush1.bf16.msra.mxu0 %v1289
      %1341 = vmatprep.subr.bf16.mxu0 0
      %1342 = vmatpush1.bf16.msra.mxu0 %v1290
      %1343 = vmatprep.subr.bf16.mxu0 0
      %1344 = vmatpush1.bf16.msra.mxu0 %v1291
      %1345 = vmatprep.subr.bf16.mxu0 0
      %1346 = vmatpush1.bf16.msra.mxu0 %v1292
      %1347 = vmatprep.subr.bf16.mxu0 0
      %1348 = vmatpush1.bf16.msra.mxu0 %v1293
      %1349 = vmatprep.subr.bf16.mxu0 0
      %1350 = vmatpush1.bf16.msra.mxu0 %v1294
      %1351 = vmatprep.subr.bf16.mxu0 0
      %1352 = vmatpush1.bf16.msra.mxu0 %v1295
      %1353 = vmatprep.subr.bf16.mxu0 0
      %1354 = vmatpush1.bf16.msra.mxu0 %v1296
      %1355 = vmatprep.subr.bf16.mxu0 0
      %1356 = vmatpush1.bf16.msra.mxu0 %v1297
      %1357 = vmatprep.subr.bf16.mxu0 0
      %1358 = vmatpush1.bf16.msra.mxu0 %v1298
      %1359 = vmatprep.subr.bf16.mxu0 0
      %1360 = vmatpush1.bf16.msra.mxu0 %v1299
      %1361 = vmatprep.subr.bf16.mxu0 0
      %1362 = vmatpush1.bf16.msra.mxu0 %v1300
      %1363 = vmatprep.subr.bf16.mxu0 0
      %1364 = vmatpush1.bf16.msra.mxu0 %v1301
      %1365 = vmatprep.subr.bf16.mxu0 0
      %1366 = vmatpush1.bf16.msra.mxu0 %v1302
      %1367 = vmatprep.mubr.bf16.mxu0 %v1168
      %1368 = vmatmul.mubr.bf16.gmra.mrb[0].mxu0 %v1167
      %v1369 = vpop.f32.mrb[0].mxu0
      %v1370 = vadd.f32 0.0, %v1369
      %v1371 = vpop.f32.mrb[0].mxu0
      %v1372 = vpop.f32.mrb[0].mxu0
      %v1373 = vadd.f32 0.0, %v1372
      %v1374 = vpop.f32.mrb[0].mxu0
      %1375 = vmatprep.mubr.bf16.mxu0 %v1171
      %1376 = vmatmul.mubr.bf16.gmra.mrb[0].mxu0 %v1170
      %v1377 = vpop.f32.mrb[0].mxu0
      %v1378 = vadd.f32 0.0, %v1377
      %v1379 = vpop.f32.mrb[0].mxu0
      %v1380 = vpop.f32.mrb[0].mxu0
      %v1381 = vadd.f32 0.0, %v1380
      %v1382 = vpop.f32.mrb[0].mxu0
      %1383 = vmatprep.mubr.bf16.mxu0 %v1174
      %1384 = vmatmul.mubr.bf16.gmra.mrb[0].mxu0 %v1173
      %v1385 = vpop.f32.mrb[0].mxu0
      %v1386 = vadd.f32 0.0, %v1385
      %v1387 = vpop.f32.mrb[0].mxu0
      %v1388 = vpop.f32.mrb[0].mxu0
      %v1389 = vadd.f32 0.0, %v1388
      %v1390 = vpop.f32.mrb[0].mxu0
      %1391 = vmatprep.mubr.bf16.mxu0 %v1177
      %1392 = vmatmul.mubr.bf16.gmra.mrb[0].mxu0 %v1176
      %v1393 = vpop.f32.mrb[0].mxu0
      %v1394 = vadd.f32 0.0, %v1393
      %v1395 = vpop.f32.mrb[0].mxu0
      %v1396 = vpop.f32.mrb[0].mxu0
      %v1397 = vadd.f32 0.0, %v1396
      %v1398 = vpop.f32.mrb[0].mxu0
      %1399 = vdwg.mxu0
      %1400 = vmatprep.subr.bf16.mxu0 0
      %1401 = vmatpush1.bf16.msra.mxu0 %v1303
      %1402 = vmatprep.subr.bf16.mxu0 0
      %1403 = vmatpush1.bf16.msra.mxu0 %v1304
      %1404 = vmatprep.subr.bf16.mxu0 0
      %1405 = vmatpush1.bf16.msra.mxu0 %v1305
      %1406 = vmatprep.subr.bf16.mxu0 0
      %1407 = vmatpush1.bf16.msra.mxu0 %v1306
      %1408 = vmatprep.subr.bf16.mxu0 0
      %1409 = vmatpush1.bf16.msra.mxu0 %v1307
      %1410 = vmatprep.subr.bf16.mxu0 0
      %1411 = vmatpush1.bf16.msra.mxu0 %v1308
      %1412 = vmatprep.subr.bf16.mxu0 0
      %1413 = vmatpush1.bf16.msra.mxu0 %v1309
      %1414 = vmatprep.subr.bf16.mxu0 0
      %1415 = vmatpush1.bf16.msra.mxu0 %v1310
      %1416 = vmatprep.subr.bf16.mxu0 0
      %1417 = vmatpush1.bf16.msra.mxu0 0
      %1418 = vmatprep.subr.bf16.mxu0 0
      %1419 = vmatpush1.bf16.msra.mxu0 0
      %1420 = vmatprep.subr.bf16.mxu0 0
      %1421 = vmatpush1.bf16.msra.mxu0 0
      %1422 = vmatprep.subr.bf16.mxu0 0
      %1423 = vmatpush1.bf16.msra.mxu0 0
      %1424 = vmatprep.subr.bf16.mxu0 0
      %1425 = vmatpush1.bf16.msra.mxu0 0
      %1426 = vmatprep.subr.bf16.mxu0 0
      %1427 = vmatpush1.bf16.msra.mxu0 0
      %1428 = vmatprep.subr.bf16.mxu0 0
      %1429 = vmatpush1.bf16.msra.mxu0 0
      %1430 = vmatprep.subr.bf16.mxu0 0
      %1431 = vmatpush1.bf16.msra.mxu0 0
      %1432 = vmatprep.mubr.bf16.mxu0 0
      %1433 = vmatmul.mubr.bf16.gmra.mrb[0].mxu0 %v1169
      %v1434 = vpop.f32.mrb[0].mxu0
      %v1435 = vadd.f32 %v1370, %v1434
      %v1436 = vpop.f32.mrb[0].mxu0
      %v1437 = vpop.f32.mrb[0].mxu0
      %v1438 = vadd.f32 %v1373, %v1437
      %v1439 = vpop.f32.mrb[0].mxu0
      %1440 = vmatprep.mubr.bf16.mxu0 0
      %1441 = vmatmul.mubr.bf16.gmra.mrb[0].mxu0 %v1172
      %v1442 = vpop.f32.mrb[0].mxu0
      %v1443 = vadd.f32 %v1378, %v1442
      %v1444 = vpop.f32.mrb[0].mxu0
      %v1445 = vpop.f32.mrb[0].mxu0
      %v1446 = vadd.f32 %v1381, %v1445
      %v1447 = vpop.f32.mrb[0].mxu0
      %1448 = vmatprep.mubr.bf16.mxu0 0
      %1449 = vmatmul.mubr.bf16.gmra.mrb[0].mxu0 %v1175
      %v1450 = vpop.f32.mrb[0].mxu0
      %v1451 = vadd.f32 %v1386, %v1450
      %v1452 = vpop.f32.mrb[0].mxu0
      %v1453 = vpop.f32.mrb[0].mxu0
      %v1454 = vadd.f32 %v1389, %v1453
      %v1455 = vpop.f32.mrb[0].mxu0
      %1456 = vmatprep.mubr.bf16.mxu0 0
      %1457 = vmatmul.mubr.bf16.gmra.mrb[0].mxu0 %v1178
      %v1458 = vpop.f32.mrb[0].mxu0
      %v1459 = vadd.f32 %v1394, %v1458
      %v1460 = vpop.f32.mrb[0].mxu0
      %v1461 = vpop.f32.mrb[0].mxu0
      %v1462 = vadd.f32 %v1397, %v1461
      %v1463 = vpop.f32.mrb[0].mxu0
      %1464 = vdwg.mxu0
      %v1465 = vpack.c.b16 %v824, %v822
      %v1466 = vpack.c.b16 %v912, %v910
      %v1467 = vpack.c.b16 %v913, %v911
      %v1468 = vpack.c.b16 %v828, %v826
      %v1469 = vpack.c.b16 %v916, %v914
      %v1470 = vpack.c.b16 %v917, %v915
      %v1471 = vpack.c.b16 %v832, %v830
      %v1472 = vpack.c.b16 %v920, %v918
      %v1473 = vpack.c.b16 %v921, %v919
      %v1474 = vpack.c.b16 %v836, %v834
      %v1475 = vpack.c.b16 %v924, %v922
      %v1476 = vpack.c.b16 %v925, %v923
      %v1537 = vunpack.c.l.b16 %v926
      %v1538 = vunpack.c.l.b16 %v927
      %v1539 = vunpack.c.l.b16 %v928
      %v1540 = vunpack.c.l.b16 %v929
      %v1541 = vunpack.c.l.b16 %v930
      %v1542 = vunpack.c.l.b16 %v931
      %v1543 = vunpack.c.l.b16 %v932
      %v1544 = vunpack.c.l.b16 %v933
      %v1545 = vunpack.c.l.b16 %v934
      %v1546 = vunpack.c.l.b16 %v935
      %v1547 = vunpack.c.l.b16 %v936
      %v1548 = vunpack.c.l.b16 %v937
      %v1549 = vunpack.c.l.b16 %v938
      %v1550 = vunpack.c.l.b16 %v939
      %v1551 = vunpack.c.l.b16 %v940
      %v1552 = vunpack.c.l.b16 %v941
      %v1553 = vunpack.c.l.b16 %v942
      %v1554 = vunpack.c.l.b16 %v943
      %v1555 = vunpack.c.l.b16 %v944
      %v1556 = vunpack.c.l.b16 %v945
      %v1557 = vunpack.c.l.b16 %v946
      %v1558 = vunpack.c.l.b16 %v947
      %v1559 = vunpack.c.l.b16 %v948
      %v1560 = vunpack.c.l.b16 %v949
      %v1561 = vunpack.c.l.b16 %v950
      %v1562 = vunpack.c.l.b16 %v951
      %v1563 = vunpack.c.l.b16 %v952
      %v1564 = vunpack.c.l.b16 %v953
      %v1565 = vunpack.c.l.b16 %v954
      %v1566 = vunpack.c.l.b16 %v955
      %v1567 = vunpack.c.l.b16 %v956
      %v1568 = vunpack.c.l.b16 %v957
      %v1569 = vunpack.c.l.b16 %v958
      %v1570 = vunpack.c.l.b16 %v959
      %v1571 = vunpack.c.l.b16 %v960
      %v1572 = vunpack.c.l.b16 %v961
      %v1573 = vunpack.c.l.b16 %v962
      %v1574 = vunpack.c.l.b16 %v963
      %v1575 = vunpack.c.l.b16 %v964
      %v1576 = vunpack.c.l.b16 %v965
      %v1577 = vunpack.c.l.b16 %v966
      %v1578 = vunpack.c.l.b16 %v967
      %v1579 = vunpack.c.l.b16 %v968
      %v1580 = vunpack.c.l.b16 %v969
      %v1581 = vunpack.c.l.b16 %v970
      %v1582 = vunpack.c.l.b16 %v971
      %v1583 = vunpack.c.l.b16 %v972
      %v1584 = vunpack.c.l.b16 %v973
      %v1585 = vpack.c.b16 %v1538, %v1537
      %v1586 = vpack.c.b16 %v1540, %v1539
      %v1587 = vpack.c.b16 %v1542, %v1541
      %v1588 = vpack.c.b16 %v1544, %v1543
      %v1589 = vpack.c.b16 %v1546, %v1545
      %v1590 = vpack.c.b16 %v1548, %v1547
      %v1591 = vpack.c.b16 %v1550, %v1549
      %v1592 = vpack.c.b16 %v1552, %v1551
      %v1593 = vpack.c.b16 %v1554, %v1553
      %v1594 = vpack.c.b16 %v1556, %v1555
      %v1595 = vpack.c.b16 %v1558, %v1557
      %v1596 = vpack.c.b16 %v1560, %v1559
      %v1597 = vpack.c.b16 %v1562, %v1561
      %v1598 = vpack.c.b16 %v1564, %v1563
      %v1599 = vpack.c.b16 %v1566, %v1565
      %v1600 = vpack.c.b16 %v1568, %v1567
      %v1601 = vpack.c.b16 %v1570, %v1569
      %v1602 = vpack.c.b16 %v1572, %v1571
      %v1603 = vpack.c.b16 %v1574, %v1573
      %v1604 = vpack.c.b16 %v1576, %v1575
      %v1605 = vpack.c.b16 %v1578, %v1577
      %v1606 = vpack.c.b16 %v1580, %v1579
      %v1607 = vpack.c.b16 %v1582, %v1581
      %v1608 = vpack.c.b16 %v1584, %v1583
      %1633 = vmatprep.subr.bf16.mxu0 0
      %1634 = vmatpush1.bf16.msra.mxu0 %v1585
      %1635 = vmatprep.subr.bf16.mxu0 0
      %1636 = vmatpush1.bf16.msra.mxu0 %v1586
      %1637 = vmatprep.subr.bf16.mxu0 0
      %1638 = vmatpush1.bf16.msra.mxu0 %v1587
      %1639 = vmatprep.subr.bf16.mxu0 0
      %1640 = vmatpush1.bf16.msra.mxu0 %v1588
      %1641 = vmatprep.subr.bf16.mxu0 0
      %1642 = vmatpush1.bf16.msra.mxu0 %v1589
      %1643 = vmatprep.subr.bf16.mxu0 0
      %1644 = vmatpush1.bf16.msra.mxu0 %v1590
      %1645 = vmatprep.subr.bf16.mxu0 0
      %1646 = vmatpush1.bf16.msra.mxu0 %v1591
      %1647 = vmatprep.subr.bf16.mxu0 0
      %1648 = vmatpush1.bf16.msra.mxu0 %v1592
      %1649 = vmatprep.subr.bf16.mxu0 0
      %1650 = vmatpush1.bf16.msra.mxu0 %v1593
      %1651 = vmatprep.subr.bf16.mxu0 0
      %1652 = vmatpush1.bf16.msra.mxu0 %v1594
      %1653 = vmatprep.subr.bf16.mxu0 0
      %1654 = vmatpush1.bf16.msra.mxu0 %v1595
      %1655 = vmatprep.subr.bf16.mxu0 0
      %1656 = vmatpush1.bf16.msra.mxu0 %v1596
      %1657 = vmatprep.subr.bf16.mxu0 0
      %1658 = vmatpush1.bf16.msra.mxu0 %v1597
      %1659 = vmatprep.subr.bf16.mxu0 0
      %1660 = vmatpush1.bf16.msra.mxu0 %v1598
      %1661 = vmatprep.subr.bf16.mxu0 0
      %1662 = vmatpush1.bf16.msra.mxu0 %v1599
      %1663 = vmatprep.subr.bf16.mxu0 0
      %1664 = vmatpush1.bf16.msra.mxu0 %v1600
      %1665 = vmatprep.mubr.bf16.mxu0 %v1466
      %1666 = vmatmul.mubr.bf16.gmra.mrb[0].mxu0 %v1465
      %v1667 = vpop.f32.mrb[0].mxu0
      %v1668 = vadd.f32 %v1435, %v1667
      %v1669 = vpop.f32.mrb[0].mxu0
      %v1670 = vpop.f32.mrb[0].mxu0
      %v1671 = vadd.f32 %v1438, %v1670
      %v1672 = vpop.f32.mrb[0].mxu0
      %1673 = vmatprep.mubr.bf16.mxu0 %v1469
      %1674 = vmatmul.mubr.bf16.gmra.mrb[0].mxu0 %v1468
      %v1675 = vpop.f32.mrb[0].mxu0
      %v1676 = vadd.f32 %v1443, %v1675
      %v1677 = vpop.f32.mrb[0].mxu0
      %v1678 = vpop.f32.mrb[0].mxu0
      %v1679 = vadd.f32 %v1446, %v1678
      %v1680 = vpop.f32.mrb[0].mxu0
      %1681 = vmatprep.mubr.bf16.mxu0 %v1472
      %1682 = vmatmul.mubr.bf16.gmra.mrb[0].mxu0 %v1471
      %v1683 = vpop.f32.mrb[0].mxu0
      %v1684 = vadd.f32 %v1451, %v1683
      %v1685 = vpop.f32.mrb[0].mxu0
      %v1686 = vpop.f32.mrb[0].mxu0
      %v1687 = vadd.f32 %v1454, %v1686
      %v1688 = vpop.f32.mrb[0].mxu0
      %1689 = vmatprep.mubr.bf16.mxu0 %v1475
      %1690 = vmatmul.mubr.bf16.gmra.mrb[0].mxu0 %v1474
      %v1691 = vpop.f32.mrb[0].mxu0
      %v1692 = vadd.f32 %v1459, %v1691
      %v1693 = vpop.f32.mrb[0].mxu0
      %v1694 = vpop.f32.mrb[0].mxu0
      %v1695 = vadd.f32 %v1462, %v1694
      %v1696 = vpop.f32.mrb[0].mxu0
      %1697 = vdwg.mxu0
      %1698 = vmatprep.subr.bf16.mxu0 0
      %1699 = vmatpush1.bf16.msra.mxu0 %v1601
      %1700 = vmatprep.subr.bf16.mxu0 0
      %1701 = vmatpush1.bf16.msra.mxu0 %v1602
      %1702 = vmatprep.subr.bf16.mxu0 0
      %1703 = vmatpush1.bf16.msra.mxu0 %v1603
      %1704 = vmatprep.subr.bf16.mxu0 0
      %1705 = vmatpush1.bf16.msra.mxu0 %v1604
      %1706 = vmatprep.subr.bf16.mxu0 0
      %1707 = vmatpush1.bf16.msra.mxu0 %v1605
      %1708 = vmatprep.subr.bf16.mxu0 0
      %1709 = vmatpush1.bf16.msra.mxu0 %v1606
      %1710 = vmatprep.subr.bf16.mxu0 0
      %1711 = vmatpush1.bf16.msra.mxu0 %v1607
      %1712 = vmatprep.subr.bf16.mxu0 0
      %1713 = vmatpush1.bf16.msra.mxu0 %v1608
      %1714 = vmatprep.subr.bf16.mxu0 0
      %1715 = vmatpush1.bf16.msra.mxu0 0
      %1716 = vmatprep.subr.bf16.mxu0 0
      %1717 = vmatpush1.bf16.msra.mxu0 0
      %1718 = vmatprep.subr.bf16.mxu0 0
      %1719 = vmatpush1.bf16.msra.mxu0 0
      %1720 = vmatprep.subr.bf16.mxu0 0
      %1721 = vmatpush1.bf16.msra.mxu0 0
      %1722 = vmatprep.subr.bf16.mxu0 0
      %1723 = vmatpush1.bf16.msra.mxu0 0
      %1724 = vmatprep.subr.bf16.mxu0 0
      %1725 = vmatpush1.bf16.msra.mxu0 0
      %1726 = vmatprep.subr.bf16.mxu0 0
      %1727 = vmatpush1.bf16.msra.mxu0 0
      %1728 = vmatprep.subr.bf16.mxu0 0
      %1729 = vmatpush1.bf16.msra.mxu0 0
      %1730 = vmatprep.mubr.bf16.mxu0 0
      %1731 = vmatmul.mubr.bf16.gmra.mrb[0].mxu0 %v1467
      %v1732 = vpop.f32.mrb[0].mxu0
      %v1733 = vadd.f32 %v1668, %v1732
      %v1734 = vpop.f32.mrb[0].mxu0
      %v1735 = vpop.f32.mrb[0].mxu0
      %v1736 = vadd.f32 %v1671, %v1735
      %v1737 = vpop.f32.mrb[0].mxu0
      %1738 = vmatprep.mubr.bf16.mxu0 0
      %1739 = vmatmul.mubr.bf16.gmra.mrb[0].mxu0 %v1470
      %v1740 = vpop.f32.mrb[0].mxu0
      %v1741 = vadd.f32 %v1676, %v1740
      %v1742 = vpop.f32.mrb[0].mxu0
      %v1743 = vpop.f32.mrb[0].mxu0
      %v1744 = vadd.f32 %v1679, %v1743
      %v1745 = vpop.f32.mrb[0].mxu0
      %1746 = vmatprep.mubr.bf16.mxu0 0
      %1747 = vmatmul.mubr.bf16.gmra.mrb[0].mxu0 %v1473
      %v1748 = vpop.f32.mrb[0].mxu0
      %v1749 = vadd.f32 %v1684, %v1748
      %v1750 = vpop.f32.mrb[0].mxu0
      %v1751 = vpop.f32.mrb[0].mxu0
      %v1752 = vadd.f32 %v1687, %v1751
      %v1753 = vpop.f32.mrb[0].mxu0
      %1754 = vmatprep.mubr.bf16.mxu0 0
      %1755 = vmatmul.mubr.bf16.gmra.mrb[0].mxu0 %v1476
      %v1756 = vpop.f32.mrb[0].mxu0
      %v1757 = vadd.f32 %v1692, %v1756
      %v1758 = vpop.f32.mrb[0].mxu0
      %v1759 = vpop.f32.mrb[0].mxu0
      %v1760 = vadd.f32 %v1695, %v1759
      %v1761 = vpop.f32.mrb[0].mxu0
      %1762 = vdwg.mxu0
      %s1763 = scalar_lea.vmem [#allocation2], 16
      %v1764 = vld [vmem:[%s1763] sm:$0xf]
      %v1765 = vld [vmem:[%s1763 + $0x4] sm:$0x1]
      %v1766 = vld [vmem:[%s1763 + $0x10] sm:$0xf]
      %v1767 = vld [vmem:[%s1763 + $0x14] sm:$0x1]
      %v1768 = vld [vmem:[%s1763 + $0x20] sm:$0xf]
      %v1769 = vld [vmem:[%s1763 + $0x24] sm:$0x1]
      %v1770 = vld [vmem:[%s1763 + $0x30] sm:$0xf]
      %v1771 = vld [vmem:[%s1763 + $0x34] sm:$0x1]
      %v1772 = vld [vmem:[%s1763 + $0x40] sm:$0xf]
      %v1773 = vld [vmem:[%s1763 + $0x44] sm:$0x1]
      %v1774 = vld [vmem:[%s1763 + $0x50] sm:$0xf]
      %v1775 = vld [vmem:[%s1763 + $0x54] sm:$0x1]
      %v1776 = vld [vmem:[%s1763 + $0x60] sm:$0xf]
      %v1777 = vld [vmem:[%s1763 + $0x64] sm:$0x1]
      %v1778 = vld [vmem:[%s1763 + $0x70] sm:$0xf]
      %v1779 = vld [vmem:[%s1763 + $0x74] sm:$0x1]
      %s1780 = scalar_lea.vmem [#allocation3], 8
      %v1781 = vld [vmem:[%s1780] sm:$0xf]
      %v1782 = vld [vmem:[%s1780 + $0x8] sm:$0xf]
      %v1783 = vld [vmem:[%s1780 + $0x10] sm:$0xf]
      %v1784 = vld [vmem:[%s1780 + $0x18] sm:$0xf]
      %v1785 = vld [vmem:[%s1780 + $0x20] sm:$0xf]
      %v1786 = vld [vmem:[%s1780 + $0x28] sm:$0xf]
      %v1787 = vld [vmem:[%s1780 + $0x30] sm:$0xf]
      %v1788 = vld [vmem:[%s1780 + $0x38] sm:$0xf]
      %v1805 = vunpack.c.l.b16 %v1764
      %v1806 = vunpack.c.l.b16 %v1765
      %v1807 = vunpack.c.l.b16 %v1766
      %v1808 = vunpack.c.l.b16 %v1767
      %v1809 = vunpack.c.l.b16 %v1768
      %v1810 = vunpack.c.l.b16 %v1769
      %v1811 = vunpack.c.l.b16 %v1770
      %v1812 = vunpack.c.l.b16 %v1771
      %v1813 = vunpack.c.l.b16 %v1772
      %v1814 = vunpack.c.l.b16 %v1773
      %v1815 = vunpack.c.l.b16 %v1774
      %v1816 = vunpack.c.l.b16 %v1775
      %v1817 = vunpack.c.l.b16 %v1776
      %v1818 = vunpack.c.l.b16 %v1777
      %v1819 = vunpack.c.l.b16 %v1778
      %v1820 = vunpack.c.l.b16 %v1779
      %v1821 = vpack.c.b16 %v1806, %v1805
      %v1822 = vpack.c.b16 %v1808, %v1807
      %v1823 = vpack.c.b16 %v1810, %v1809
      %v1824 = vpack.c.b16 %v1812, %v1811
      %v1825 = vpack.c.b16 %v1814, %v1813
      %v1826 = vpack.c.b16 %v1816, %v1815
      %v1827 = vpack.c.b16 %v1818, %v1817
      %v1828 = vpack.c.b16 %v1820, %v1819
      %v1830 = vshrl.u32 %v1821, 16
      %v1832 = vshll.u32 %v1821, 16
      %v1834 = vrot.slane %v1832, 1
      %v1835 = vor.u32 %v1830, %v1834
      %v1837 = vshrl.u32 %v1822, 16
      %v1839 = vshll.u32 %v1822, 16
      %v1841 = vrot.slane %v1839, 1
      %v1842 = vor.u32 %v1837, %v1841
      %v1844 = vshrl.u32 %v1823, 16
      %v1846 = vshll.u32 %v1823, 16
      %v1848 = vrot.slane %v1846, 1
      %v1849 = vor.u32 %v1844, %v1848
      %v1851 = vshrl.u32 %v1824, 16
      %v1853 = vshll.u32 %v1824, 16
      %v1855 = vrot.slane %v1853, 1
      %v1856 = vor.u32 %v1851, %v1855
      %v1858 = vshrl.u32 %v1825, 16
      %v1860 = vshll.u32 %v1825, 16
      %v1862 = vrot.slane %v1860, 1
      %v1863 = vor.u32 %v1858, %v1862
      %v1865 = vshrl.u32 %v1826, 16
      %v1867 = vshll.u32 %v1826, 16
      %v1869 = vrot.slane %v1867, 1
      %v1870 = vor.u32 %v1865, %v1869
      %v1872 = vshrl.u32 %v1827, 16
      %v1874 = vshll.u32 %v1827, 16
      %v1876 = vrot.slane %v1874, 1
      %v1877 = vor.u32 %v1872, %v1876
      %v1879 = vshrl.u32 %v1828, 16
      %v1881 = vshll.u32 %v1828, 16
      %v1883 = vrot.slane %v1881, 1
      %v1884 = vor.u32 %v1879, %v1883
      %v1893 = vunpack.c.l.b16 %v1781
      %v1894 = vunpack.c.l.b16 %v1835
      %v1895 = vunpack.c.l.b16 %v1782
      %v1896 = vunpack.c.l.b16 %v1842
      %v1897 = vunpack.c.l.b16 %v1783
      %v1898 = vunpack.c.l.b16 %v1849
      %v1899 = vunpack.c.l.b16 %v1784
      %v1900 = vunpack.c.l.b16 %v1856
      %v1901 = vunpack.c.l.b16 %v1785
      %v1902 = vunpack.c.l.b16 %v1863
      %v1903 = vunpack.c.l.b16 %v1786
      %v1904 = vunpack.c.l.b16 %v1870
      %v1905 = vunpack.c.l.b16 %v1787
      %v1906 = vunpack.c.l.b16 %v1877
      %v1907 = vunpack.c.l.b16 %v1788
      %v1908 = vunpack.c.l.b16 %v1884
      %s1909 = scalar_lea.vmem %s2, 384
      %v1910 = vld [vmem:[%s1909] sm:$0xf]
      %v1911 = vld [vmem:[%s1909 + $0x4] sm:$0xf]
      %v1912 = vld [vmem:[%s1909 + $0x8] sm:$0xf]
      %v1913 = vld [vmem:[%s1909 + $0xc] sm:$0xf]
      %v1914 = vld [vmem:[%s1909 + $0x10] sm:$0xf]
      %v1915 = vld [vmem:[%s1909 + $0x14] sm:$0xf]
      %v1916 = vld [vmem:[%s1909 + $0x18] sm:$0xf]
      %v1917 = vld [vmem:[%s1909 + $0x1c] sm:$0xf]
      %v1918 = vld [vmem:[%s1909 + $0x20] sm:$0xf]
      %v1919 = vld [vmem:[%s1909 + $0x24] sm:$0xf]
      %v1920 = vld [vmem:[%s1909 + $0x28] sm:$0xf]
      %v1921 = vld [vmem:[%s1909 + $0x2c] sm:$0xf]
      %v1922 = vld [vmem:[%s1909 + $0x30] sm:$0xf]
      %v1923 = vld [vmem:[%s1909 + $0x34] sm:$0xf]
      %v1924 = vld [vmem:[%s1909 + $0x38] sm:$0xf]
      %v1925 = vld [vmem:[%s1909 + $0x3c] sm:$0xf]
      %v1926 = vld [vmem:[%s1909 + $0x40] sm:$0xf]
      %v1927 = vld [vmem:[%s1909 + $0x44] sm:$0xf]
      %v1928 = vld [vmem:[%s1909 + $0x48] sm:$0xf]
      %v1929 = vld [vmem:[%s1909 + $0x4c] sm:$0xf]
      %v1930 = vld [vmem:[%s1909 + $0x50] sm:$0xf]
      %v1931 = vld [vmem:[%s1909 + $0x54] sm:$0xf]
      %v1932 = vld [vmem:[%s1909 + $0x58] sm:$0xf]
      %v1933 = vld [vmem:[%s1909 + $0x5c] sm:$0xf]
      %v1934 = vld [vmem:[%s1909 + $0x60] sm:$0xf]
      %v1935 = vld [vmem:[%s1909 + $0x64] sm:$0xf]
      %v1936 = vld [vmem:[%s1909 + $0x68] sm:$0xf]
      %v1937 = vld [vmem:[%s1909 + $0x6c] sm:$0xf]
      %v1938 = vld [vmem:[%s1909 + $0x70] sm:$0xf]
      %v1939 = vld [vmem:[%s1909 + $0x74] sm:$0xf]
      %v1940 = vld [vmem:[%s1909 + $0x78] sm:$0xf]
      %v1941 = vld [vmem:[%s1909 + $0x7c] sm:$0xf]
      %v1942 = vld [vmem:[%s1909 + $0x80] sm:$0xf]
      %v1943 = vld [vmem:[%s1909 + $0x84] sm:$0xf]
      %v1944 = vld [vmem:[%s1909 + $0x88] sm:$0xf]
      %v1945 = vld [vmem:[%s1909 + $0x8c] sm:$0xf]
      %v1946 = vld [vmem:[%s1909 + $0x90] sm:$0xf]
      %v1947 = vld [vmem:[%s1909 + $0x94] sm:$0xf]
      %v1948 = vld [vmem:[%s1909 + $0x98] sm:$0xf]
      %v1949 = vld [vmem:[%s1909 + $0x9c] sm:$0xf]
      %v1950 = vld [vmem:[%s1909 + $0xa0] sm:$0xf]
      %v1951 = vld [vmem:[%s1909 + $0xa4] sm:$0xf]
      %v1952 = vld [vmem:[%s1909 + $0xa8] sm:$0xf]
      %v1953 = vld [vmem:[%s1909 + $0xac] sm:$0xf]
      %v1954 = vld [vmem:[%s1909 + $0xb0] sm:$0xf]
      %v1955 = vld [vmem:[%s1909 + $0xb4] sm:$0xf]
      %v1956 = vld [vmem:[%s1909 + $0xb8] sm:$0xf]
      %v1957 = vld [vmem:[%s1909 + $0xbc] sm:$0xf]
      %v1958 = vpack.c.b16 %v1807, %v1805
      %v1959 = vpack.c.b16 %v1895, %v1893
      %v1960 = vpack.c.b16 %v1896, %v1894
      %v1961 = vpack.c.b16 %v1811, %v1809
      %v1962 = vpack.c.b16 %v1899, %v1897
      %v1963 = vpack.c.b16 %v1900, %v1898
      %v1964 = vpack.c.b16 %v1815, %v1813
      %v1965 = vpack.c.b16 %v1903, %v1901
      %v1966 = vpack.c.b16 %v1904, %v1902
      %v1967 = vpack.c.b16 %v1819, %v1817
      %v1968 = vpack.c.b16 %v1907, %v1905
      %v1969 = vpack.c.b16 %v1908, %v1906
      %v2030 = vunpack.c.l.b16 %v1910
      %v2031 = vunpack.c.l.b16 %v1911
      %v2032 = vunpack.c.l.b16 %v1912
      %v2033 = vunpack.c.l.b16 %v1913
      %v2034 = vunpack.c.l.b16 %v1914
      %v2035 = vunpack.c.l.b16 %v1915
      %v2036 = vunpack.c.l.b16 %v1916
      %v2037 = vunpack.c.l.b16 %v1917
      %v2038 = vunpack.c.l.b16 %v1918
      %v2039 = vunpack.c.l.b16 %v1919
      %v2040 = vunpack.c.l.b16 %v1920
      %v2041 = vunpack.c.l.b16 %v1921
      %v2042 = vunpack.c.l.b16 %v1922
      %v2043 = vunpack.c.l.b16 %v1923
      %v2044 = vunpack.c.l.b16 %v1924
      %v2045 = vunpack.c.l.b16 %v1925
      %v2046 = vunpack.c.l.b16 %v1926
      %v2047 = vunpack.c.l.b16 %v1927
      %v2048 = vunpack.c.l.b16 %v1928
      %v2049 = vunpack.c.l.b16 %v1929
      %v2050 = vunpack.c.l.b16 %v1930
      %v2051 = vunpack.c.l.b16 %v1931
      %v2052 = vunpack.c.l.b16 %v1932
      %v2053 = vunpack.c.l.b16 %v1933
      %v2054 = vunpack.c.l.b16 %v1934
      %v2055 = vunpack.c.l.b16 %v1935
      %v2056 = vunpack.c.l.b16 %v1936
      %v2057 = vunpack.c.l.b16 %v1937
      %v2058 = vunpack.c.l.b16 %v1938
      %v2059 = vunpack.c.l.b16 %v1939
      %v2060 = vunpack.c.l.b16 %v1940
      %v2061 = vunpack.c.l.b16 %v1941
      %v2062 = vunpack.c.l.b16 %v1942
      %v2063 = vunpack.c.l.b16 %v1943
      %v2064 = vunpack.c.l.b16 %v1944
      %v2065 = vunpack.c.l.b16 %v1945
      %v2066 = vunpack.c.l.b16 %v1946
      %v2067 = vunpack.c.l.b16 %v1947
      %v2068 = vunpack.c.l.b16 %v1948
      %v2069 = vunpack.c.l.b16 %v1949
      %v2070 = vunpack.c.l.b16 %v1950
      %v2071 = vunpack.c.l.b16 %v1951
      %v2072 = vunpack.c.l.b16 %v1952
      %v2073 = vunpack.c.l.b16 %v1953
      %v2074 = vunpack.c.l.b16 %v1954
      %v2075 = vunpack.c.l.b16 %v1955
      %v2076 = vunpack.c.l.b16 %v1956
      %v2077 = vunpack.c.l.b16 %v1957
      %v2078 = vpack.c.b16 %v2031, %v2030
      %v2079 = vpack.c.b16 %v2033, %v2032
      %v2080 = vpack.c.b16 %v2035, %v2034
      %v2081 = vpack.c.b16 %v2037, %v2036
      %v2082 = vpack.c.b16 %v2039, %v2038
      %v2083 = vpack.c.b16 %v2041, %v2040
      %v2084 = vpack.c.b16 %v2043, %v2042
      %v2085 = vpack.c.b16 %v2045, %v2044
      %v2086 = vpack.c.b16 %v2047, %v2046
      %v2087 = vpack.c.b16 %v2049, %v2048
      %v2088 = vpack.c.b16 %v2051, %v2050
      %v2089 = vpack.c.b16 %v2053, %v2052
      %v2090 = vpack.c.b16 %v2055, %v2054
      %v2091 = vpack.c.b16 %v2057, %v2056
      %v2092 = vpack.c.b16 %v2059, %v2058
      %v2093 = vpack.c.b16 %v2061, %v2060
      %v2094 = vpack.c.b16 %v2063, %v2062
      %v2095 = vpack.c.b16 %v2065, %v2064
      %v2096 = vpack.c.b16 %v2067, %v2066
      %v2097 = vpack.c.b16 %v2069, %v2068
      %v2098 = vpack.c.b16 %v2071, %v2070
      %v2099 = vpack.c.b16 %v2073, %v2072
      %v2100 = vpack.c.b16 %v2075, %v2074
      %v2101 = vpack.c.b16 %v2077, %v2076
      %2126 = vmatprep.subr.bf16.mxu0 0
      %2127 = vmatpush1.bf16.msra.mxu0 %v2078
      %2128 = vmatprep.subr.bf16.mxu0 0
      %2129 = vmatpush1.bf16.msra.mxu0 %v2079
      %2130 = vmatprep.subr.bf16.mxu0 0
      %2131 = vmatpush1.bf16.msra.mxu0 %v2080
      %2132 = vmatprep.subr.bf16.mxu0 0
      %2133 = vmatpush1.bf16.msra.mxu0 %v2081
      %2134 = vmatprep.subr.bf16.mxu0 0
      %2135 = vmatpush1.bf16.msra.mxu0 %v2082
      %2136 = vmatprep.subr.bf16.mxu0 0
      %2137 = vmatpush1.bf16.msra.mxu0 %v2083
      %2138 = vmatprep.subr.bf16.mxu0 0
      %2139 = vmatpush1.bf16.msra.mxu0 %v2084
      %2140 = vmatprep.subr.bf16.mxu0 0
      %2141 = vmatpush1.bf16.msra.mxu0 %v2085
      %2142 = vmatprep.subr.bf16.mxu0 0
      %2143 = vmatpush1.bf16.msra.mxu0 %v2086
      %2144 = vmatprep.subr.bf16.mxu0 0
      %2145 = vmatpush1.bf16.msra.mxu0 %v2087
      %2146 = vmatprep.subr.bf16.mxu0 0
      %2147 = vmatpush1.bf16.msra.mxu0 %v2088
      %2148 = vmatprep.subr.bf16.mxu0 0
      %2149 = vmatpush1.bf16.msra.mxu0 %v2089
      %2150 = vmatprep.subr.bf16.mxu0 0
      %2151 = vmatpush1.bf16.msra.mxu0 %v2090
      %2152 = vmatprep.subr.bf16.mxu0 0
      %2153 = vmatpush1.bf16.msra.mxu0 %v2091
      %2154 = vmatprep.subr.bf16.mxu0 0
      %2155 = vmatpush1.bf16.msra.mxu0 %v2092
      %2156 = vmatprep.subr.bf16.mxu0 0
      %2157 = vmatpush1.bf16.msra.mxu0 %v2093
      %2158 = vmatprep.mubr.bf16.mxu0 %v1959
      %2159 = vmatmul.mubr.bf16.gmra.mrb[0].mxu0 %v1958
      %v2160 = vpop.f32.mrb[0].mxu0
      %v2161 = vadd.f32 0.0, %v2160
      %v2162 = vpop.f32.mrb[0].mxu0
      %v2163 = vpop.f32.mrb[0].mxu0
      %v2164 = vadd.f32 0.0, %v2163
      %v2165 = vpop.f32.mrb[0].mxu0
      %2166 = vmatprep.mubr.bf16.mxu0 %v1962
      %2167 = vmatmul.mubr.bf16.gmra.mrb[0].mxu0 %v1961
      %v2168 = vpop.f32.mrb[0].mxu0
      %v2169 = vadd.f32 0.0, %v2168
      %v2170 = vpop.f32.mrb[0].mxu0
      %v2171 = vpop.f32.mrb[0].mxu0
      %v2172 = vadd.f32 0.0, %v2171
      %v2173 = vpop.f32.mrb[0].mxu0
      %2174 = vmatprep.mubr.bf16.mxu0 %v1965
      %2175 = vmatmul.mubr.bf16.gmra.mrb[0].mxu0 %v1964
      %v2176 = vpop.f32.mrb[0].mxu0
      %v2177 = vadd.f32 0.0, %v2176
      %v2178 = vpop.f32.mrb[0].mxu0
      %v2179 = vpop.f32.mrb[0].mxu0
      %v2180 = vadd.f32 0.0, %v2179
      %v2181 = vpop.f32.mrb[0].mxu0
      %2182 = vmatprep.mubr.bf16.mxu0 %v1968
      %2183 = vmatmul.mubr.bf16.gmra.mrb[0].mxu0 %v1967
      %v2184 = vpop.f32.mrb[0].mxu0
      %v2185 = vadd.f32 0.0, %v2184
      %v2186 = vpop.f32.mrb[0].mxu0
      %v2187 = vpop.f32.mrb[0].mxu0
      %v2188 = vadd.f32 0.0, %v2187
      %v2189 = vpop.f32.mrb[0].mxu0
      %2190 = vdwg.mxu0
      %2191 = vmatprep.subr.bf16.mxu0 0
      %2192 = vmatpush1.bf16.msra.mxu0 %v2094
      %2193 = vmatprep.subr.bf16.mxu0 0
      %2194 = vmatpush1.bf16.msra.mxu0 %v2095
      %2195 = vmatprep.subr.bf16.mxu0 0
      %2196 = vmatpush1.bf16.msra.mxu0 %v2096
      %2197 = vmatprep.subr.bf16.mxu0 0
      %2198 = vmatpush1.bf16.msra.mxu0 %v2097
      %2199 = vmatprep.subr.bf16.mxu0 0
      %2200 = vmatpush1.bf16.msra.mxu0 %v2098
      %2201 = vmatprep.subr.bf16.mxu0 0
      %2202 = vmatpush1.bf16.msra.mxu0 %v2099
      %2203 = vmatprep.subr.bf16.mxu0 0
      %2204 = vmatpush1.bf16.msra.mxu0 %v2100
      %2205 = vmatprep.subr.bf16.mxu0 0
      %2206 = vmatpush1.bf16.msra.mxu0 %v2101
      %2207 = vmatprep.subr.bf16.mxu0 0
      %2208 = vmatpush1.bf16.msra.mxu0 0
      %2209 = vmatprep.subr.bf16.mxu0 0
      %2210 = vmatpush1.bf16.msra.mxu0 0
      %2211 = vmatprep.subr.bf16.mxu0 0
      %2212 = vmatpush1.bf16.msra.mxu0 0
      %2213 = vmatprep.subr.bf16.mxu0 0
      %2214 = vmatpush1.bf16.msra.mxu0 0
      %2215 = vmatprep.subr.bf16.mxu0 0
      %2216 = vmatpush1.bf16.msra.mxu0 0
      %2217 = vmatprep.subr.bf16.mxu0 0
      %2218 = vmatpush1.bf16.msra.mxu0 0
      %2219 = vmatprep.subr.bf16.mxu0 0
      %2220 = vmatpush1.bf16.msra.mxu0 0
      %2221 = vmatprep.subr.bf16.mxu0 0
      %2222 = vmatpush1.bf16.msra.mxu0 0
      %2223 = vmatprep.mubr.bf16.mxu0 0
      %2224 = vmatmul.mubr.bf16.gmra.mrb[0].mxu0 %v1960
      %v2225 = vpop.f32.mrb[0].mxu0
      %v2226 = vadd.f32 %v2161, %v2225
      %v2227 = vpop.f32.mrb[0].mxu0
      %v2228 = vpop.f32.mrb[0].mxu0
      %v2229 = vadd.f32 %v2164, %v2228
      %v2230 = vpop.f32.mrb[0].mxu0
      %2231 = vmatprep.mubr.bf16.mxu0 0
      %2232 = vmatmul.mubr.bf16.gmra.mrb[0].mxu0 %v1963
      %v2233 = vpop.f32.mrb[0].mxu0
      %v2234 = vadd.f32 %v2169, %v2233
      %v2235 = vpop.f32.mrb[0].mxu0
      %v2236 = vpop.f32.mrb[0].mxu0
      %v2237 = vadd.f32 %v2172, %v2236
      %v2238 = vpop.f32.mrb[0].mxu0
      %2239 = vmatprep.mubr.bf16.mxu0 0
      %2240 = vmatmul.mubr.bf16.gmra.mrb[0].mxu0 %v1966
      %v2241 = vpop.f32.mrb[0].mxu0
      %v2242 = vadd.f32 %v2177, %v2241
      %v2243 = vpop.f32.mrb[0].mxu0
      %v2244 = vpop.f32.mrb[0].mxu0
      %v2245 = vadd.f32 %v2180, %v2244
      %v2246 = vpop.f32.mrb[0].mxu0
      %2247 = vmatprep.mubr.bf16.mxu0 0
      %2248 = vmatmul.mubr.bf16.gmra.mrb[0].mxu0 %v1969
      %v2249 = vpop.f32.mrb[0].mxu0
      %v2250 = vadd.f32 %v2185, %v2249
      %v2251 = vpop.f32.mrb[0].mxu0
      %v2252 = vpop.f32.mrb[0].mxu0
      %v2253 = vadd.f32 %v2188, %v2252
      %v2254 = vpop.f32.mrb[0].mxu0
      %2255 = vdwg.mxu0
      %v2256 = vadd.f32 %v1733, %v2226
      %v2257 = vadd.f32 %v1736, %v2229
      %v2258 = vadd.f32 %v1741, %v2234
      %v2259 = vadd.f32 %v1744, %v2237
      %v2260 = vadd.f32 %v1749, %v2242
      %v2261 = vadd.f32 %v1752, %v2245
      %v2262 = vadd.f32 %v1757, %v2250
      %v2263 = vadd.f32 %v1760, %v2253
      %v2264 = vadd.f32 %v2256, %v2257
      %v2265 = vadd.f32 %v2264, %v2258
      %v2266 = vadd.f32 %v2265, %v2259
      %v2267 = vadd.f32 %v2266, %v2260
      %v2268 = vadd.f32 %v2267, %v2261
      %v2269 = vadd.f32 %v2268, %v2262
      %v2270 = vadd.f32 %v2269, %v2263
      %v2271 = vrot.slane %v2270, 4
      %v2272 = vadd.f32 %v2270, %v2271
      %v2273 = vrot.slane %v2272, 2
      %v2274 = vadd.f32 %v2272, %v2273
      %v2275 = vrot.slane %v2274, 1
      %v2276 = vadd.f32 %v2274, %v2275
      %v2277 = vmul.f32 %v2256, %v2256
      %v2278 = vmul.f32 %v2257, %v2257
      %v2279 = vmul.f32 %v2258, %v2258
      %v2280 = vmul.f32 %v2259, %v2259
      %v2281 = vmul.f32 %v2260, %v2260
      %v2282 = vmul.f32 %v2261, %v2261
      %v2283 = vmul.f32 %v2262, %v2262
      %v2284 = vmul.f32 %v2263, %v2263
      %v2285 = vadd.f32 %v2277, %v2278
      %v2286 = vadd.f32 %v2285, %v2279
      %v2287 = vadd.f32 %v2286, %v2280
      %v2288 = vadd.f32 %v2287, %v2281
      %v2289 = vadd.f32 %v2288, %v2282
      %v2290 = vadd.f32 %v2289, %v2283
      %v2291 = vadd.f32 %v2290, %v2284
      %v2292 = vrot.slane %v2291, 4
      %v2293 = vadd.f32 %v2291, %v2292
      %v2294 = vrot.slane %v2293, 2
      %v2295 = vadd.f32 %v2293, %v2294
      %v2296 = vrot.slane %v2295, 1
      %v2297 = vadd.f32 %v2295, %v2296
      %v2298 = vmul.f32 %v2276, 0.015625
      %v2299 = vmul.f32 %v2297, 0.015625
      %v2300 = vmul.f32 %v2298, %v2298
      %v2301 = vsub.f32 %v2299, %v2300
      %v2302 = vmax.f32 %v2301, 0.0
      %v2303 = vsub.f32 %v2256, %v2298
      %v2304 = vsub.f32 %v2257, %v2298
      %v2305 = vsub.f32 %v2258, %v2298
      %v2306 = vsub.f32 %v2259, %v2298
      %v2307 = vsub.f32 %v2260, %v2298
      %v2308 = vsub.f32 %v2261, %v2298
      %v2309 = vsub.f32 %v2262, %v2298
      %v2310 = vsub.f32 %v2263, %v2298
      %v2311 = vadd.f32 %v2302, 1e-05
      %v2312 = vrsqrt.pop %v2311
      %v2313 = vmul.f32 %v2303, %v2312
      %v2314 = vmul.f32 %v2304, %v2312
      %v2315 = vmul.f32 %v2305, %v2312
      %v2316 = vmul.f32 %v2306, %v2312
      %v2317 = vmul.f32 %v2307, %v2312
      %v2318 = vmul.f32 %v2308, %v2312
      %v2319 = vmul.f32 %v2309, %v2312
      %v2320 = vmul.f32 %v2310, %v2312
      %v2321 = vmax.f32 %v2313, 0.0
      %v2322 = vmax.f32 %v2314, 0.0
      %v2323 = vmax.f32 %v2315, 0.0
      %v2324 = vmax.f32 %v2316, 0.0
      %v2325 = vmax.f32 %v2317, 0.0
      %v2326 = vmax.f32 %v2318, 0.0
      %v2327 = vmax.f32 %v2319, 0.0
      %v2328 = vmax.f32 %v2320, 0.0
      %2329 = vst [vmem:[#allocation4] sm:$0xf] 0
      %2330 = vst [vmem:[#allocation4 + $0x4] sm:$0x1] 0
      %2331 = vst [vmem:[#allocation4 + $0x8] sm:$0xf] 0
      %2332 = vst [vmem:[#allocation4 + $0xc] sm:$0x1] 0
      %2333 = vst [vmem:[#allocation4 + $0x10] sm:$0xf] 0
      %2334 = vst [vmem:[#allocation4 + $0x14] sm:$0x1] 0
      %2335 = vst [vmem:[#allocation4 + $0x18] sm:$0xf] 0
      %2336 = vst [vmem:[#allocation4 + $0x1c] sm:$0x1] 0
      %2337 = vst [vmem:[#allocation4 + $0x20] sm:$0xf] 0
      %2338 = vst [vmem:[#allocation4 + $0x24] sm:$0x1] 0
      %2339 = vst [vmem:[#allocation4 + $0x28] sm:$0xf] 0
      %2340 = vst [vmem:[#allocation4 + $0x2c] sm:$0x1] 0
      %2341 = vst [vmem:[#allocation4 + $0x30] sm:$0xf] 0
      %2342 = vst [vmem:[#allocation4 + $0x34] sm:$0x1] 0
      %2343 = vst [vmem:[#allocation4 + $0x38] sm:$0xf] 0
      %2344 = vst [vmem:[#allocation4 + $0x3c] sm:$0x1] 0
      %2345 = vst [vmem:[#allocation4 + $0x40] sm:$0xf] 0
      %2346 = vst [vmem:[#allocation4 + $0x44] sm:$0x1] 0
      %2347 = vst [vmem:[#allocation4 + $0x48] sm:$0xf] 0
      %2348 = vst [vmem:[#allocation4 + $0x4c] sm:$0x1] 0
      %v2349 = vpack.c.bf16 %v2321, %v2321
      %v2350 = vpack.c.bf16 %v2322, %v2322
      %v2351 = vpack.c.bf16 %v2323, %v2323
      %v2352 = vpack.c.bf16 %v2324, %v2324
      %v2353 = vpack.c.bf16 %v2325, %v2325
      %v2354 = vpack.c.bf16 %v2326, %v2326
      %v2355 = vpack.c.bf16 %v2327, %v2327
      %v2356 = vpack.c.bf16 %v2328, %v2328
      %v2365 = vunpack.c.l.b16 %v2349
      %v2366 = vunpack.c.l.b16 %v2350
      %v2367 = vunpack.c.l.b16 %v2351
      %v2368 = vunpack.c.l.b16 %v2352
      %v2369 = vunpack.c.l.b16 %v2353
      %v2370 = vunpack.c.l.b16 %v2354
      %v2371 = vunpack.c.l.b16 %v2355
      %v2372 = vunpack.c.l.b16 %v2356
      %v2373 = vpack.c.b16 %v2365, %v2365
      %v2374 = vpack.c.b16 %v2366, %v2366
      %v2375 = vpack.c.b16 %v2367, %v2367
      %v2376 = vpack.c.b16 %v2368, %v2368
      %v2377 = vpack.c.b16 %v2369, %v2369
      %v2378 = vpack.c.b16 %v2370, %v2370
      %v2379 = vpack.c.b16 %v2371, %v2371
      %v2380 = vpack.c.b16 %v2372, %v2372
      %v2382 = vshrl.u32 %v2373, 16
      %v2384 = vrot.slane %v2382, 7
      %v2385 = vshll.u32 %v2373, 16
      %v2387 = vor.u32 %v2384, %v2385
      %v2388 = vrot.slane %v2384, 4
      %v2390 = vshrl.u32 %v2374, 16
      %v2392 = vrot.slane %v2390, 7
      %v2393 = vshll.u32 %v2374, 16
      %v2395 = vor.u32 %v2392, %v2393
      %v2396 = vrot.slane %v2392, 4
      %v2398 = vshrl.u32 %v2375, 16
      %v2400 = vrot.slane %v2398, 7
      %v2401 = vshll.u32 %v2375, 16
      %v2403 = vor.u32 %v2400, %v2401
      %v2404 = vrot.slane %v2400, 4
      %v2406 = vshrl.u32 %v2376, 16
      %v2408 = vrot.slane %v2406, 7
      %v2409 = vshll.u32 %v2376, 16
      %v2411 = vor.u32 %v2408, %v2409
      %v2412 = vrot.slane %v2408, 4
      %v2414 = vshrl.u32 %v2377, 16
      %v2416 = vrot.slane %v2414, 7
      %v2417 = vshll.u32 %v2377, 16
      %v2419 = vor.u32 %v2416, %v2417
      %v2420 = vrot.slane %v2416, 4
      %v2422 = vshrl.u32 %v2378, 16
      %v2424 = vrot.slane %v2422, 7
      %v2425 = vshll.u32 %v2378, 16
      %v2427 = vor.u32 %v2424, %v2425
      %v2428 = vrot.slane %v2424, 4
      %v2430 = vshrl.u32 %v2379, 16
      %v2432 = vrot.slane %v2430, 7
      %v2433 = vshll.u32 %v2379, 16
      %v2435 = vor.u32 %v2432, %v2433
      %v2436 = vrot.slane %v2432, 4
      %v2438 = vshrl.u32 %v2380, 16
      %v2440 = vrot.slane %v2438, 7
      %v2441 = vshll.u32 %v2380, 16
      %v2443 = vor.u32 %v2440, %v2441
      %v2444 = vrot.slane %v2440, 4
      %s2461 = scalar_lea.vmem [#allocation4], 8
      %v2462 = vld [vmem:[%s2461] sm:$0xf]
      %v2463 = vsel %vm636, %v2387, %v2462
      %2464 = vst [vmem:[%s2461] sm:$0xf] %v2463
      %v2465 = vld [vmem:[%s2461 + $0x4] sm:$0x1]
      %v2466 = vsel %vm303, %v2388, %v2465
      %2467 = vst [vmem:[%s2461 + $0x4] sm:$0x1] %v2466
      %v2468 = vld [vmem:[%s2461 + $0x8] sm:$0xf]
      %v2469 = vsel %vm636, %v2395, %v2468
      %2470 = vst [vmem:[%s2461 + $0x8] sm:$0xf] %v2469
      %v2471 = vld [vmem:[%s2461 + $0xc] sm:$0x1]
      %v2472 = vsel %vm303, %v2396, %v2471
      %2473 = vst [vmem:[%s2461 + $0xc] sm:$0x1] %v2472
      %v2474 = vld [vmem:[%s2461 + $0x10] sm:$0xf]
      %v2475 = vsel %vm636, %v2403, %v2474
      %2476 = vst [vmem:[%s2461 + $0x10] sm:$0xf] %v2475
      %v2477 = vld [vmem:[%s2461 + $0x14] sm:$0x1]
      %v2478 = vsel %vm303, %v2404, %v2477
      %2479 = vst [vmem:[%s2461 + $0x14] sm:$0x1] %v2478
      %v2480 = vld [vmem:[%s2461 + $0x18] sm:$0xf]
      %v2481 = vsel %vm636, %v2411, %v2480
      %2482 = vst [vmem:[%s2461 + $0x18] sm:$0xf] %v2481
      %v2483 = vld [vmem:[%s2461 + $0x1c] sm:$0x1]
      %v2484 = vsel %vm303, %v2412, %v2483
      %2485 = vst [vmem:[%s2461 + $0x1c] sm:$0x1] %v2484
      %v2486 = vld [vmem:[%s2461 + $0x20] sm:$0xf]
      %v2487 = vsel %vm636, %v2419, %v2486
      %2488 = vst [vmem:[%s2461 + $0x20] sm:$0xf] %v2487
      %v2489 = vld [vmem:[%s2461 + $0x24] sm:$0x1]
      %v2490 = vsel %vm303, %v2420, %v2489
      %2491 = vst [vmem:[%s2461 + $0x24] sm:$0x1] %v2490
      %v2492 = vld [vmem:[%s2461 + $0x28] sm:$0xf]
      %v2493 = vsel %vm636, %v2427, %v2492
      %2494 = vst [vmem:[%s2461 + $0x28] sm:$0xf] %v2493
      %v2495 = vld [vmem:[%s2461 + $0x2c] sm:$0x1]
      %v2496 = vsel %vm303, %v2428, %v2495
      %2497 = vst [vmem:[%s2461 + $0x2c] sm:$0x1] %v2496
      %v2498 = vld [vmem:[%s2461 + $0x30] sm:$0xf]
      %v2499 = vsel %vm636, %v2435, %v2498
      %2500 = vst [vmem:[%s2461 + $0x30] sm:$0xf] %v2499
      %v2501 = vld [vmem:[%s2461 + $0x34] sm:$0x1]
      %v2502 = vsel %vm303, %v2436, %v2501
      %2503 = vst [vmem:[%s2461 + $0x34] sm:$0x1] %v2502
      %v2504 = vld [vmem:[%s2461 + $0x38] sm:$0xf]
      %v2505 = vsel %vm636, %v2443, %v2504
      %2506 = vst [vmem:[%s2461 + $0x38] sm:$0xf] %v2505
      %v2507 = vld [vmem:[%s2461 + $0x3c] sm:$0x1]
      %v2508 = vsel %vm303, %v2444, %v2507
      %2509 = vst [vmem:[%s2461 + $0x3c] sm:$0x1] %v2508
      %v2510 = vld [vmem:[#allocation4] sm:$0xf]
      %v2511 = vld [vmem:[#allocation4 + $0x4] sm:$0x1]
      %v2512 = vld [vmem:[#allocation4 + $0x8] sm:$0xf]
      %v2513 = vld [vmem:[#allocation4 + $0xc] sm:$0x1]
      %v2514 = vld [vmem:[#allocation4 + $0x10] sm:$0xf]
      %v2515 = vld [vmem:[#allocation4 + $0x14] sm:$0x1]
      %v2516 = vld [vmem:[#allocation4 + $0x18] sm:$0xf]
      %v2517 = vld [vmem:[#allocation4 + $0x1c] sm:$0x1]
      %v2518 = vld [vmem:[#allocation4 + $0x20] sm:$0xf]
      %v2519 = vld [vmem:[#allocation4 + $0x24] sm:$0x1]
      %v2520 = vld [vmem:[#allocation4 + $0x28] sm:$0xf]
      %v2521 = vld [vmem:[#allocation4 + $0x2c] sm:$0x1]
      %v2522 = vld [vmem:[#allocation4 + $0x30] sm:$0xf]
      %v2523 = vld [vmem:[#allocation4 + $0x34] sm:$0x1]
      %v2524 = vld [vmem:[#allocation4 + $0x38] sm:$0xf]
      %v2525 = vld [vmem:[#allocation4 + $0x3c] sm:$0x1]
      %v2542 = vunpack.c.l.b16 %v2510
      %v2543 = vunpack.c.l.b16 %v2511
      %v2544 = vunpack.c.l.b16 %v2512
      %v2545 = vunpack.c.l.b16 %v2513
      %v2546 = vunpack.c.l.b16 %v2514
      %v2547 = vunpack.c.l.b16 %v2515
      %v2548 = vunpack.c.l.b16 %v2516
      %v2549 = vunpack.c.l.b16 %v2517
      %v2550 = vunpack.c.l.b16 %v2518
      %v2551 = vunpack.c.l.b16 %v2519
      %v2552 = vunpack.c.l.b16 %v2520
      %v2553 = vunpack.c.l.b16 %v2521
      %v2554 = vunpack.c.l.b16 %v2522
      %v2555 = vunpack.c.l.b16 %v2523
      %v2556 = vunpack.c.l.b16 %v2524
      %v2557 = vunpack.c.l.b16 %v2525
      %v2558 = vpack.c.b16 %v2543, %v2542
      %v2559 = vpack.c.b16 %v2545, %v2544
      %v2560 = vpack.c.b16 %v2547, %v2546
      %v2561 = vpack.c.b16 %v2549, %v2548
      %v2562 = vpack.c.b16 %v2551, %v2550
      %v2563 = vpack.c.b16 %v2553, %v2552
      %v2564 = vpack.c.b16 %v2555, %v2554
      %v2565 = vpack.c.b16 %v2557, %v2556
      %v2567 = vshrl.u32 %v2558, 16
      %v2569 = vshll.u32 %v2558, 16
      %v2571 = vrot.slane %v2569, 1
      %v2572 = vor.u32 %v2567, %v2571
      %v2574 = vshrl.u32 %v2559, 16
      %v2576 = vshll.u32 %v2559, 16
      %v2578 = vrot.slane %v2576, 1
      %v2579 = vor.u32 %v2574, %v2578
      %v2581 = vshrl.u32 %v2560, 16
      %v2583 = vshll.u32 %v2560, 16
      %v2585 = vrot.slane %v2583, 1
      %v2586 = vor.u32 %v2581, %v2585
      %v2588 = vshrl.u32 %v2561, 16
      %v2590 = vshll.u32 %v2561, 16
      %v2592 = vrot.slane %v2590, 1
      %v2593 = vor.u32 %v2588, %v2592
      %v2595 = vshrl.u32 %v2562, 16
      %v2597 = vshll.u32 %v2562, 16
      %v2599 = vrot.slane %v2597, 1
      %v2600 = vor.u32 %v2595, %v2599
      %v2602 = vshrl.u32 %v2563, 16
      %v2604 = vshll.u32 %v2563, 16
      %v2606 = vrot.slane %v2604, 1
      %v2607 = vor.u32 %v2602, %v2606
      %v2609 = vshrl.u32 %v2564, 16
      %v2611 = vshll.u32 %v2564, 16
      %v2613 = vrot.slane %v2611, 1
      %v2614 = vor.u32 %v2609, %v2613
      %v2616 = vshrl.u32 %v2565, 16
      %v2618 = vshll.u32 %v2565, 16
      %v2620 = vrot.slane %v2618, 1
      %v2621 = vor.u32 %v2616, %v2620
      %v2622 = vrot.slane %v2558, 1
      %v2623 = vrot.slane %v2559, 1
      %v2624 = vrot.slane %v2560, 1
      %v2625 = vrot.slane %v2561, 1
      %v2626 = vrot.slane %v2562, 1
      %v2627 = vrot.slane %v2563, 1
      %v2628 = vrot.slane %v2564, 1
      %v2629 = vrot.slane %v2565, 1
      %v2630 = vunpack.c.l.b16 %v2572
      %v2631 = vunpack.c.l.b16 %v2622
      %v2632 = vunpack.c.l.b16 %v2579
      %v2633 = vunpack.c.l.b16 %v2623
      %v2634 = vunpack.c.l.b16 %v2586
      %v2635 = vunpack.c.l.b16 %v2624
      %v2636 = vunpack.c.l.b16 %v2593
      %v2637 = vunpack.c.l.b16 %v2625
      %v2638 = vunpack.c.l.b16 %v2600
      %v2639 = vunpack.c.l.b16 %v2626
      %v2640 = vunpack.c.l.b16 %v2607
      %v2641 = vunpack.c.l.b16 %v2627
      %v2642 = vunpack.c.l.b16 %v2614
      %v2643 = vunpack.c.l.b16 %v2628
      %v2644 = vunpack.c.l.b16 %v2621
      %v2645 = vunpack.c.l.b16 %v2629
      %v2646 = vld [vmem:[%s3] sm:$0xf]
      %v2647 = vld [vmem:[%s3 + $0x4] sm:$0xf]
      %v2648 = vld [vmem:[%s3 + $0x8] sm:$0xf]
      %v2649 = vld [vmem:[%s3 + $0xc] sm:$0xf]
      %v2650 = vld [vmem:[%s3 + $0x10] sm:$0xf]
      %v2651 = vld [vmem:[%s3 + $0x14] sm:$0xf]
      %v2652 = vld [vmem:[%s3 + $0x18] sm:$0xf]
      %v2653 = vld [vmem:[%s3 + $0x1c] sm:$0xf]
      %v2654 = vld [vmem:[%s3 + $0x20] sm:$0xf]
      %v2655 = vld [vmem:[%s3 + $0x24] sm:$0xf]
      %v2656 = vld [vmem:[%s3 + $0x28] sm:$0xf]
      %v2657 = vld [vmem:[%s3 + $0x2c] sm:$0xf]
      %v2658 = vld [vmem:[%s3 + $0x30] sm:$0xf]
      %v2659 = vld [vmem:[%s3 + $0x34] sm:$0xf]
      %v2660 = vld [vmem:[%s3 + $0x38] sm:$0xf]
      %v2661 = vld [vmem:[%s3 + $0x3c] sm:$0xf]
      %v2662 = vld [vmem:[%s3 + $0x40] sm:$0xf]
      %v2663 = vld [vmem:[%s3 + $0x44] sm:$0xf]
      %v2664 = vld [vmem:[%s3 + $0x48] sm:$0xf]
      %v2665 = vld [vmem:[%s3 + $0x4c] sm:$0xf]
      %v2666 = vld [vmem:[%s3 + $0x50] sm:$0xf]
      %v2667 = vld [vmem:[%s3 + $0x54] sm:$0xf]
      %v2668 = vld [vmem:[%s3 + $0x58] sm:$0xf]
      %v2669 = vld [vmem:[%s3 + $0x5c] sm:$0xf]
      %v2670 = vld [vmem:[%s3 + $0x60] sm:$0xf]
      %v2671 = vld [vmem:[%s3 + $0x64] sm:$0xf]
      %v2672 = vld [vmem:[%s3 + $0x68] sm:$0xf]
      %v2673 = vld [vmem:[%s3 + $0x6c] sm:$0xf]
      %v2674 = vld [vmem:[%s3 + $0x70] sm:$0xf]
      %v2675 = vld [vmem:[%s3 + $0x74] sm:$0xf]
      %v2676 = vld [vmem:[%s3 + $0x78] sm:$0xf]
      %v2677 = vld [vmem:[%s3 + $0x7c] sm:$0xf]
      %v2678 = vld [vmem:[%s3 + $0x80] sm:$0xf]
      %v2679 = vld [vmem:[%s3 + $0x84] sm:$0xf]
      %v2680 = vld [vmem:[%s3 + $0x88] sm:$0xf]
      %v2681 = vld [vmem:[%s3 + $0x8c] sm:$0xf]
      %v2682 = vld [vmem:[%s3 + $0x90] sm:$0xf]
      %v2683 = vld [vmem:[%s3 + $0x94] sm:$0xf]
      %v2684 = vld [vmem:[%s3 + $0x98] sm:$0xf]
      %v2685 = vld [vmem:[%s3 + $0x9c] sm:$0xf]
      %v2686 = vld [vmem:[%s3 + $0xa0] sm:$0xf]
      %v2687 = vld [vmem:[%s3 + $0xa4] sm:$0xf]
      %v2688 = vld [vmem:[%s3 + $0xa8] sm:$0xf]
      %v2689 = vld [vmem:[%s3 + $0xac] sm:$0xf]
      %v2690 = vld [vmem:[%s3 + $0xb0] sm:$0xf]
      %v2691 = vld [vmem:[%s3 + $0xb4] sm:$0xf]
      %v2692 = vld [vmem:[%s3 + $0xb8] sm:$0xf]
      %v2693 = vld [vmem:[%s3 + $0xbc] sm:$0xf]
      %v2694 = vld [vmem:[%s2461] sm:$0xf]
      %v2695 = vld [vmem:[%s2461 + $0x4] sm:$0x1]
      %v2696 = vld [vmem:[%s2461 + $0x8] sm:$0xf]
      %v2697 = vld [vmem:[%s2461 + $0xc] sm:$0x1]
      %v2698 = vld [vmem:[%s2461 + $0x10] sm:$0xf]
      %v2699 = vld [vmem:[%s2461 + $0x14] sm:$0x1]
      %v2700 = vld [vmem:[%s2461 + $0x18] sm:$0xf]
      %v2701 = vld [vmem:[%s2461 + $0x1c] sm:$0x1]
      %v2702 = vld [vmem:[%s2461 + $0x20] sm:$0xf]
      %v2703 = vld [vmem:[%s2461 + $0x24] sm:$0x1]
      %v2704 = vld [vmem:[%s2461 + $0x28] sm:$0xf]
      %v2705 = vld [vmem:[%s2461 + $0x2c] sm:$0x1]
      %v2706 = vld [vmem:[%s2461 + $0x30] sm:$0xf]
      %v2707 = vld [vmem:[%s2461 + $0x34] sm:$0x1]
      %v2708 = vld [vmem:[%s2461 + $0x38] sm:$0xf]
      %v2709 = vld [vmem:[%s2461 + $0x3c] sm:$0x1]
      %v2726 = vunpack.c.l.b16 %v2694
      %v2727 = vunpack.c.l.b16 %v2695
      %v2728 = vunpack.c.l.b16 %v2696
      %v2729 = vunpack.c.l.b16 %v2697
      %v2730 = vunpack.c.l.b16 %v2698
      %v2731 = vunpack.c.l.b16 %v2699
      %v2732 = vunpack.c.l.b16 %v2700
      %v2733 = vunpack.c.l.b16 %v2701
      %v2734 = vunpack.c.l.b16 %v2702
      %v2735 = vunpack.c.l.b16 %v2703
      %v2736 = vunpack.c.l.b16 %v2704
      %v2737 = vunpack.c.l.b16 %v2705
      %v2738 = vunpack.c.l.b16 %v2706
      %v2739 = vunpack.c.l.b16 %v2707
      %v2740 = vunpack.c.l.b16 %v2708
      %v2741 = vunpack.c.l.b16 %v2709
      %v2742 = vpack.c.b16 %v2727, %v2726
      %v2743 = vpack.c.b16 %v2729, %v2728
      %v2744 = vpack.c.b16 %v2731, %v2730
      %v2745 = vpack.c.b16 %v2733, %v2732
      %v2746 = vpack.c.b16 %v2735, %v2734
      %v2747 = vpack.c.b16 %v2737, %v2736
      %v2748 = vpack.c.b16 %v2739, %v2738
      %v2749 = vpack.c.b16 %v2741, %v2740
      %v2751 = vshrl.u32 %v2742, 16
      %v2753 = vshll.u32 %v2742, 16
      %v2755 = vrot.slane %v2753, 1
      %v2756 = vor.u32 %v2751, %v2755
      %v2758 = vshrl.u32 %v2743, 16
      %v2760 = vshll.u32 %v2743, 16
      %v2762 = vrot.slane %v2760, 1
      %v2763 = vor.u32 %v2758, %v2762
      %v2765 = vshrl.u32 %v2744, 16
      %v2767 = vshll.u32 %v2744, 16
      %v2769 = vrot.slane %v2767, 1
      %v2770 = vor.u32 %v2765, %v2769
      %v2772 = vshrl.u32 %v2745, 16
      %v2774 = vshll.u32 %v2745, 16
      %v2776 = vrot.slane %v2774, 1
      %v2777 = vor.u32 %v2772, %v2776
      %v2779 = vshrl.u32 %v2746, 16
      %v2781 = vshll.u32 %v2746, 16
      %v2783 = vrot.slane %v2781, 1
      %v2784 = vor.u32 %v2779, %v2783
      %v2786 = vshrl.u32 %v2747, 16
      %v2788 = vshll.u32 %v2747, 16
      %v2790 = vrot.slane %v2788, 1
      %v2791 = vor.u32 %v2786, %v2790
      %v2793 = vshrl.u32 %v2748, 16
      %v2795 = vshll.u32 %v2748, 16
      %v2797 = vrot.slane %v2795, 1
      %v2798 = vor.u32 %v2793, %v2797
      %v2800 = vshrl.u32 %v2749, 16
      %v2802 = vshll.u32 %v2749, 16
      %v2804 = vrot.slane %v2802, 1
      %v2805 = vor.u32 %v2800, %v2804
      %v2806 = vrot.slane %v2742, 1
      %v2807 = vrot.slane %v2743, 1
      %v2808 = vrot.slane %v2744, 1
      %v2809 = vrot.slane %v2745, 1
      %v2810 = vrot.slane %v2746, 1
      %v2811 = vrot.slane %v2747, 1
      %v2812 = vrot.slane %v2748, 1
      %v2813 = vrot.slane %v2749, 1
      %v2814 = vunpack.c.l.b16 %v2756
      %v2815 = vunpack.c.l.b16 %v2806
      %v2816 = vunpack.c.l.b16 %v2763
      %v2817 = vunpack.c.l.b16 %v2807
      %v2818 = vunpack.c.l.b16 %v2770
      %v2819 = vunpack.c.l.b16 %v2808
      %v2820 = vunpack.c.l.b16 %v2777
      %v2821 = vunpack.c.l.b16 %v2809
      %v2822 = vunpack.c.l.b16 %v2784
      %v2823 = vunpack.c.l.b16 %v2810
      %v2824 = vunpack.c.l.b16 %v2791
      %v2825 = vunpack.c.l.b16 %v2811
      %v2826 = vunpack.c.l.b16 %v2798
      %v2827 = vunpack.c.l.b16 %v2812
      %v2828 = vunpack.c.l.b16 %v2805
      %v2829 = vunpack.c.l.b16 %v2813
      %s2830 = scalar_lea.vmem %s3, 192
      %v2831 = vld [vmem:[%s2830] sm:$0xf]
      %v2832 = vld [vmem:[%s2830 + $0x4] sm:$0xf]
      %v2833 = vld [vmem:[%s2830 + $0x8] sm:$0xf]
      %v2834 = vld [vmem:[%s2830 + $0xc] sm:$0xf]
      %v2835 = vld [vmem:[%s2830 + $0x10] sm:$0xf]
      %v2836 = vld [vmem:[%s2830 + $0x14] sm:$0xf]
      %v2837 = vld [vmem:[%s2830 + $0x18] sm:$0xf]
      %v2838 = vld [vmem:[%s2830 + $0x1c] sm:$0xf]
      %v2839 = vld [vmem:[%s2830 + $0x20] sm:$0xf]
      %v2840 = vld [vmem:[%s2830 + $0x24] sm:$0xf]
      %v2841 = vld [vmem:[%s2830 + $0x28] sm:$0xf]
      %v2842 = vld [vmem:[%s2830 + $0x2c] sm:$0xf]
      %v2843 = vld [vmem:[%s2830 + $0x30] sm:$0xf]
      %v2844 = vld [vmem:[%s2830 + $0x34] sm:$0xf]
      %v2845 = vld [vmem:[%s2830 + $0x38] sm:$0xf]
      %v2846 = vld [vmem:[%s2830 + $0x3c] sm:$0xf]
      %v2847 = vld [vmem:[%s2830 + $0x40] sm:$0xf]
      %v2848 = vld [vmem:[%s2830 + $0x44] sm:$0xf]
      %v2849 = vld [vmem:[%s2830 + $0x48] sm:$0xf]
      %v2850 = vld [vmem:[%s2830 + $0x4c] sm:$0xf]
      %v2851 = vld [vmem:[%s2830 + $0x50] sm:$0xf]
      %v2852 = vld [vmem:[%s2830 + $0x54] sm:$0xf]
      %v2853 = vld [vmem:[%s2830 + $0x58] sm:$0xf]
      %v2854 = vld [vmem:[%s2830 + $0x5c] sm:$0xf]
      %v2855 = vld [vmem:[%s2830 + $0x60] sm:$0xf]
      %v2856 = vld [vmem:[%s2830 + $0x64] sm:$0xf]
      %v2857 = vld [vmem:[%s2830 + $0x68] sm:$0xf]
      %v2858 = vld [vmem:[%s2830 + $0x6c] sm:$0xf]
      %v2859 = vld [vmem:[%s2830 + $0x70] sm:$0xf]
      %v2860 = vld [vmem:[%s2830 + $0x74] sm:$0xf]
      %v2861 = vld [vmem:[%s2830 + $0x78] sm:$0xf]
      %v2862 = vld [vmem:[%s2830 + $0x7c] sm:$0xf]
      %v2863 = vld [vmem:[%s2830 + $0x80] sm:$0xf]
      %v2864 = vld [vmem:[%s2830 + $0x84] sm:$0xf]
      %v2865 = vld [vmem:[%s2830 + $0x88] sm:$0xf]
      %v2866 = vld [vmem:[%s2830 + $0x8c] sm:$0xf]
      %v2867 = vld [vmem:[%s2830 + $0x90] sm:$0xf]
      %v2868 = vld [vmem:[%s2830 + $0x94] sm:$0xf]
      %v2869 = vld [vmem:[%s2830 + $0x98] sm:$0xf]
      %v2870 = vld [vmem:[%s2830 + $0x9c] sm:$0xf]
      %v2871 = vld [vmem:[%s2830 + $0xa0] sm:$0xf]
      %v2872 = vld [vmem:[%s2830 + $0xa4] sm:$0xf]
      %v2873 = vld [vmem:[%s2830 + $0xa8] sm:$0xf]
      %v2874 = vld [vmem:[%s2830 + $0xac] sm:$0xf]
      %v2875 = vld [vmem:[%s2830 + $0xb0] sm:$0xf]
      %v2876 = vld [vmem:[%s2830 + $0xb4] sm:$0xf]
      %v2877 = vld [vmem:[%s2830 + $0xb8] sm:$0xf]
      %v2878 = vld [vmem:[%s2830 + $0xbc] sm:$0xf]
      %v2879 = vpack.c.b16 %v2728, %v2726
      %v2880 = vpack.c.b16 %v2816, %v2814
      %v2881 = vpack.c.b16 %v2817, %v2815
      %v2882 = vpack.c.b16 %v2732, %v2730
      %v2883 = vpack.c.b16 %v2820, %v2818
      %v2884 = vpack.c.b16 %v2821, %v2819
      %v2885 = vpack.c.b16 %v2736, %v2734
      %v2886 = vpack.c.b16 %v2824, %v2822
      %v2887 = vpack.c.b16 %v2825, %v2823
      %v2888 = vpack.c.b16 %v2740, %v2738
      %v2889 = vpack.c.b16 %v2828, %v2826
      %v2890 = vpack.c.b16 %v2829, %v2827
      %v2951 = vunpack.c.l.b16 %v2831
      %v2952 = vunpack.c.l.b16 %v2832
      %v2953 = vunpack.c.l.b16 %v2833
      %v2954 = vunpack.c.l.b16 %v2834
      %v2955 = vunpack.c.l.b16 %v2835
      %v2956 = vunpack.c.l.b16 %v2836
      %v2957 = vunpack.c.l.b16 %v2837
      %v2958 = vunpack.c.l.b16 %v2838
      %v2959 = vunpack.c.l.b16 %v2839
      %v2960 = vunpack.c.l.b16 %v2840
      %v2961 = vunpack.c.l.b16 %v2841
      %v2962 = vunpack.c.l.b16 %v2842
      %v2963 = vunpack.c.l.b16 %v2843
      %v2964 = vunpack.c.l.b16 %v2844
      %v2965 = vunpack.c.l.b16 %v2845
      %v2966 = vunpack.c.l.b16 %v2846
      %v2967 = vunpack.c.l.b16 %v2847
      %v2968 = vunpack.c.l.b16 %v2848
      %v2969 = vunpack.c.l.b16 %v2849
      %v2970 = vunpack.c.l.b16 %v2850
      %v2971 = vunpack.c.l.b16 %v2851
      %v2972 = vunpack.c.l.b16 %v2852
      %v2973 = vunpack.c.l.b16 %v2853
      %v2974 = vunpack.c.l.b16 %v2854
      %v2975 = vunpack.c.l.b16 %v2855
      %v2976 = vunpack.c.l.b16 %v2856
      %v2977 = vunpack.c.l.b16 %v2857
      %v2978 = vunpack.c.l.b16 %v2858
      %v2979 = vunpack.c.l.b16 %v2859
      %v2980 = vunpack.c.l.b16 %v2860
      %v2981 = vunpack.c.l.b16 %v2861
      %v2982 = vunpack.c.l.b16 %v2862
      %v2983 = vunpack.c.l.b16 %v2863
      %v2984 = vunpack.c.l.b16 %v2864
      %v2985 = vunpack.c.l.b16 %v2865
      %v2986 = vunpack.c.l.b16 %v2866
      %v2987 = vunpack.c.l.b16 %v2867
      %v2988 = vunpack.c.l.b16 %v2868
      %v2989 = vunpack.c.l.b16 %v2869
      %v2990 = vunpack.c.l.b16 %v2870
      %v2991 = vunpack.c.l.b16 %v2871
      %v2992 = vunpack.c.l.b16 %v2872
      %v2993 = vunpack.c.l.b16 %v2873
      %v2994 = vunpack.c.l.b16 %v2874
      %v2995 = vunpack.c.l.b16 %v2875
      %v2996 = vunpack.c.l.b16 %v2876
      %v2997 = vunpack.c.l.b16 %v2877
      %v2998 = vunpack.c.l.b16 %v2878
      %v2999 = vpack.c.b16 %v2952, %v2951
      %v3000 = vpack.c.b16 %v2954, %v2953
      %v3001 = vpack.c.b16 %v2956, %v2955
      %v3002 = vpack.c.b16 %v2958, %v2957
      %v3003 = vpack.c.b16 %v2960, %v2959
      %v3004 = vpack.c.b16 %v2962, %v2961
      %v3005 = vpack.c.b16 %v2964, %v2963
      %v3006 = vpack.c.b16 %v2966, %v2965
      %v3007 = vpack.c.b16 %v2968, %v2967
      %v3008 = vpack.c.b16 %v2970, %v2969
      %v3009 = vpack.c.b16 %v2972, %v2971
      %v3010 = vpack.c.b16 %v2974, %v2973
      %v3011 = vpack.c.b16 %v2976, %v2975
      %v3012 = vpack.c.b16 %v2978, %v2977
      %v3013 = vpack.c.b16 %v2980, %v2979
      %v3014 = vpack.c.b16 %v2982, %v2981
      %v3015 = vpack.c.b16 %v2984, %v2983
      %v3016 = vpack.c.b16 %v2986, %v2985
      %v3017 = vpack.c.b16 %v2988, %v2987
      %v3018 = vpack.c.b16 %v2990, %v2989
      %v3019 = vpack.c.b16 %v2992, %v2991
      %v3020 = vpack.c.b16 %v2994, %v2993
      %v3021 = vpack.c.b16 %v2996, %v2995
      %v3022 = vpack.c.b16 %v2998, %v2997
      %3047 = vmatprep.subr.bf16.mxu0 0
      %3048 = vmatpush1.bf16.msra.mxu0 %v2999
      %3049 = vmatprep.subr.bf16.mxu0 0
      %3050 = vmatpush1.bf16.msra.mxu0 %v3000
      %3051 = vmatprep.subr.bf16.mxu0 0
      %3052 = vmatpush1.bf16.msra.mxu0 %v3001
      %3053 = vmatprep.subr.bf16.mxu0 0
      %3054 = vmatpush1.bf16.msra.mxu0 %v3002
      %3055 = vmatprep.subr.bf16.mxu0 0
      %3056 = vmatpush1.bf16.msra.mxu0 %v3003
      %3057 = vmatprep.subr.bf16.mxu0 0
      %3058 = vmatpush1.bf16.msra.mxu0 %v3004
      %3059 = vmatprep.subr.bf16.mxu0 0
      %3060 = vmatpush1.bf16.msra.mxu0 %v3005
      %3061 = vmatprep.subr.bf16.mxu0 0
      %3062 = vmatpush1.bf16.msra.mxu0 %v3006
      %3063 = vmatprep.subr.bf16.mxu0 0
      %3064 = vmatpush1.bf16.msra.mxu0 %v3007
      %3065 = vmatprep.subr.bf16.mxu0 0
      %3066 = vmatpush1.bf16.msra.mxu0 %v3008
      %3067 = vmatprep.subr.bf16.mxu0 0
      %3068 = vmatpush1.bf16.msra.mxu0 %v3009
      %3069 = vmatprep.subr.bf16.mxu0 0
      %3070 = vmatpush1.bf16.msra.mxu0 %v3010
      %3071 = vmatprep.subr.bf16.mxu0 0
      %3072 = vmatpush1.bf16.msra.mxu0 %v3011
      %3073 = vmatprep.subr.bf16.mxu0 0
      %3074 = vmatpush1.bf16.msra.mxu0 %v3012
      %3075 = vmatprep.subr.bf16.mxu0 0
      %3076 = vmatpush1.bf16.msra.mxu0 %v3013
      %3077 = vmatprep.subr.bf16.mxu0 0
      %3078 = vmatpush1.bf16.msra.mxu0 %v3014
      %3079 = vmatprep.mubr.bf16.mxu0 %v2880
      %3080 = vmatmul.mubr.bf16.gmra.mrb[0].mxu0 %v2879
      %v3081 = vpop.f32.mrb[0].mxu0
      %v3082 = vadd.f32 0.0, %v3081
      %v3083 = vpop.f32.mrb[0].mxu0
      %v3084 = vpop.f32.mrb[0].mxu0
      %v3085 = vadd.f32 0.0, %v3084
      %v3086 = vpop.f32.mrb[0].mxu0
      %3087 = vmatprep.mubr.bf16.mxu0 %v2883
      %3088 = vmatmul.mubr.bf16.gmra.mrb[0].mxu0 %v2882
      %v3089 = vpop.f32.mrb[0].mxu0
      %v3090 = vadd.f32 0.0, %v3089
      %v3091 = vpop.f32.mrb[0].mxu0
      %v3092 = vpop.f32.mrb[0].mxu0
      %v3093 = vadd.f32 0.0, %v3092
      %v3094 = vpop.f32.mrb[0].mxu0
      %3095 = vmatprep.mubr.bf16.mxu0 %v2886
      %3096 = vmatmul.mubr.bf16.gmra.mrb[0].mxu0 %v2885
      %v3097 = vpop.f32.mrb[0].mxu0
      %v3098 = vadd.f32 0.0, %v3097
      %v3099 = vpop.f32.mrb[0].mxu0
      %v3100 = vpop.f32.mrb[0].mxu0
      %v3101 = vadd.f32 0.0, %v3100
      %v3102 = vpop.f32.mrb[0].mxu0
      %3103 = vmatprep.mubr.bf16.mxu0 %v2889
      %3104 = vmatmul.mubr.bf16.gmra.mrb[0].mxu0 %v2888
      %v3105 = vpop.f32.mrb[0].mxu0
      %v3106 = vadd.f32 0.0, %v3105
      %v3107 = vpop.f32.mrb[0].mxu0
      %v3108 = vpop.f32.mrb[0].mxu0
      %v3109 = vadd.f32 0.0, %v3108
      %v3110 = vpop.f32.mrb[0].mxu0
      %3111 = vdwg.mxu0
      %3112 = vmatprep.subr.bf16.mxu0 0
      %3113 = vmatpush1.bf16.msra.mxu0 %v3015
      %3114 = vmatprep.subr.bf16.mxu0 0
      %3115 = vmatpush1.bf16.msra.mxu0 %v3016
      %3116 = vmatprep.subr.bf16.mxu0 0
      %3117 = vmatpush1.bf16.msra.mxu0 %v3017
      %3118 = vmatprep.subr.bf16.mxu0 0
      %3119 = vmatpush1.bf16.msra.mxu0 %v3018
      %3120 = vmatprep.subr.bf16.mxu0 0
      %3121 = vmatpush1.bf16.msra.mxu0 %v3019
      %3122 = vmatprep.subr.bf16.mxu0 0
      %3123 = vmatpush1.bf16.msra.mxu0 %v3020
      %3124 = vmatprep.subr.bf16.mxu0 0
      %3125 = vmatpush1.bf16.msra.mxu0 %v3021
      %3126 = vmatprep.subr.bf16.mxu0 0
      %3127 = vmatpush1.bf16.msra.mxu0 %v3022
      %3128 = vmatprep.subr.bf16.mxu0 0
      %3129 = vmatpush1.bf16.msra.mxu0 0
      %3130 = vmatprep.subr.bf16.mxu0 0
      %3131 = vmatpush1.bf16.msra.mxu0 0
      %3132 = vmatprep.subr.bf16.mxu0 0
      %3133 = vmatpush1.bf16.msra.mxu0 0
      %3134 = vmatprep.subr.bf16.mxu0 0
      %3135 = vmatpush1.bf16.msra.mxu0 0
      %3136 = vmatprep.subr.bf16.mxu0 0
      %3137 = vmatpush1.bf16.msra.mxu0 0
      %3138 = vmatprep.subr.bf16.mxu0 0
      %3139 = vmatpush1.bf16.msra.mxu0 0
      %3140 = vmatprep.subr.bf16.mxu0 0
      %3141 = vmatpush1.bf16.msra.mxu0 0
      %3142 = vmatprep.subr.bf16.mxu0 0
      %3143 = vmatpush1.bf16.msra.mxu0 0
      %3144 = vmatprep.mubr.bf16.mxu0 0
      %3145 = vmatmul.mubr.bf16.gmra.mrb[0].mxu0 %v2881
      %v3146 = vpop.f32.mrb[0].mxu0
      %v3147 = vadd.f32 %v3082, %v3146
      %v3148 = vpop.f32.mrb[0].mxu0
      %v3149 = vpop.f32.mrb[0].mxu0
      %v3150 = vadd.f32 %v3085, %v3149
      %v3151 = vpop.f32.mrb[0].mxu0
      %3152 = vmatprep.mubr.bf16.mxu0 0
      %3153 = vmatmul.mubr.bf16.gmra.mrb[0].mxu0 %v2884
      %v3154 = vpop.f32.mrb[0].mxu0
      %v3155 = vadd.f32 %v3090, %v3154
      %v3156 = vpop.f32.mrb[0].mxu0
      %v3157 = vpop.f32.mrb[0].mxu0
      %v3158 = vadd.f32 %v3093, %v3157
      %v3159 = vpop.f32.mrb[0].mxu0
      %3160 = vmatprep.mubr.bf16.mxu0 0
      %3161 = vmatmul.mubr.bf16.gmra.mrb[0].mxu0 %v2887
      %v3162 = vpop.f32.mrb[0].mxu0
      %v3163 = vadd.f32 %v3098, %v3162
      %v3164 = vpop.f32.mrb[0].mxu0
      %v3165 = vpop.f32.mrb[0].mxu0
      %v3166 = vadd.f32 %v3101, %v3165
      %v3167 = vpop.f32.mrb[0].mxu0
      %3168 = vmatprep.mubr.bf16.mxu0 0
      %3169 = vmatmul.mubr.bf16.gmra.mrb[0].mxu0 %v2890
      %v3170 = vpop.f32.mrb[0].mxu0
      %v3171 = vadd.f32 %v3106, %v3170
      %v3172 = vpop.f32.mrb[0].mxu0
      %v3173 = vpop.f32.mrb[0].mxu0
      %v3174 = vadd.f32 %v3109, %v3173
      %v3175 = vpop.f32.mrb[0].mxu0
      %3176 = vdwg.mxu0
      %v3177 = vpack.c.b16 %v2544, %v2542
      %v3178 = vpack.c.b16 %v2632, %v2630
      %v3179 = vpack.c.b16 %v2633, %v2631
      %v3180 = vpack.c.b16 %v2548, %v2546
      %v3181 = vpack.c.b16 %v2636, %v2634
      %v3182 = vpack.c.b16 %v2637, %v2635
      %v3183 = vpack.c.b16 %v2552, %v2550
      %v3184 = vpack.c.b16 %v2640, %v2638
      %v3185 = vpack.c.b16 %v2641, %v2639
      %v3186 = vpack.c.b16 %v2556, %v2554
      %v3187 = vpack.c.b16 %v2644, %v2642
      %v3188 = vpack.c.b16 %v2645, %v2643
      %v3249 = vunpack.c.l.b16 %v2646
      %v3250 = vunpack.c.l.b16 %v2647
      %v3251 = vunpack.c.l.b16 %v2648
      %v3252 = vunpack.c.l.b16 %v2649
      %v3253 = vunpack.c.l.b16 %v2650
      %v3254 = vunpack.c.l.b16 %v2651
      %v3255 = vunpack.c.l.b16 %v2652
      %v3256 = vunpack.c.l.b16 %v2653
      %v3257 = vunpack.c.l.b16 %v2654
      %v3258 = vunpack.c.l.b16 %v2655
      %v3259 = vunpack.c.l.b16 %v2656
      %v3260 = vunpack.c.l.b16 %v2657
      %v3261 = vunpack.c.l.b16 %v2658
      %v3262 = vunpack.c.l.b16 %v2659
      %v3263 = vunpack.c.l.b16 %v2660
      %v3264 = vunpack.c.l.b16 %v2661
      %v3265 = vunpack.c.l.b16 %v2662
      %v3266 = vunpack.c.l.b16 %v2663
      %v3267 = vunpack.c.l.b16 %v2664
      %v3268 = vunpack.c.l.b16 %v2665
      %v3269 = vunpack.c.l.b16 %v2666
      %v3270 = vunpack.c.l.b16 %v2667
      %v3271 = vunpack.c.l.b16 %v2668
      %v3272 = vunpack.c.l.b16 %v2669
      %v3273 = vunpack.c.l.b16 %v2670
      %v3274 = vunpack.c.l.b16 %v2671
      %v3275 = vunpack.c.l.b16 %v2672
      %v3276 = vunpack.c.l.b16 %v2673
      %v3277 = vunpack.c.l.b16 %v2674
      %v3278 = vunpack.c.l.b16 %v2675
      %v3279 = vunpack.c.l.b16 %v2676
      %v3280 = vunpack.c.l.b16 %v2677
      %v3281 = vunpack.c.l.b16 %v2678
      %v3282 = vunpack.c.l.b16 %v2679
      %v3283 = vunpack.c.l.b16 %v2680
      %v3284 = vunpack.c.l.b16 %v2681
      %v3285 = vunpack.c.l.b16 %v2682
      %v3286 = vunpack.c.l.b16 %v2683
      %v3287 = vunpack.c.l.b16 %v2684
      %v3288 = vunpack.c.l.b16 %v2685
      %v3289 = vunpack.c.l.b16 %v2686
      %v3290 = vunpack.c.l.b16 %v2687
      %v3291 = vunpack.c.l.b16 %v2688
      %v3292 = vunpack.c.l.b16 %v2689
      %v3293 = vunpack.c.l.b16 %v2690
      %v3294 = vunpack.c.l.b16 %v2691
      %v3295 = vunpack.c.l.b16 %v2692
      %v3296 = vunpack.c.l.b16 %v2693
      %v3297 = vpack.c.b16 %v3250, %v3249
      %v3298 = vpack.c.b16 %v3252, %v3251
      %v3299 = vpack.c.b16 %v3254, %v3253
      %v3300 = vpack.c.b16 %v3256, %v3255
      %v3301 = vpack.c.b16 %v3258, %v3257
      %v3302 = vpack.c.b16 %v3260, %v3259
      %v3303 = vpack.c.b16 %v3262, %v3261
      %v3304 = vpack.c.b16 %v3264, %v3263
      %v3305 = vpack.c.b16 %v3266, %v3265
      %v3306 = vpack.c.b16 %v3268, %v3267
      %v3307 = vpack.c.b16 %v3270, %v3269
      %v3308 = vpack.c.b16 %v3272, %v3271
      %v3309 = vpack.c.b16 %v3274, %v3273
      %v3310 = vpack.c.b16 %v3276, %v3275
      %v3311 = vpack.c.b16 %v3278, %v3277
      %v3312 = vpack.c.b16 %v3280, %v3279
      %v3313 = vpack.c.b16 %v3282, %v3281
      %v3314 = vpack.c.b16 %v3284, %v3283
      %v3315 = vpack.c.b16 %v3286, %v3285
      %v3316 = vpack.c.b16 %v3288, %v3287
      %v3317 = vpack.c.b16 %v3290, %v3289
      %v3318 = vpack.c.b16 %v3292, %v3291
      %v3319 = vpack.c.b16 %v3294, %v3293
      %v3320 = vpack.c.b16 %v3296, %v3295
      %3345 = vmatprep.subr.bf16.mxu0 0
      %3346 = vmatpush1.bf16.msra.mxu0 %v3297
      %3347 = vmatprep.subr.bf16.mxu0 0
      %3348 = vmatpush1.bf16.msra.mxu0 %v3298
      %3349 = vmatprep.subr.bf16.mxu0 0
      %3350 = vmatpush1.bf16.msra.mxu0 %v3299
      %3351 = vmatprep.subr.bf16.mxu0 0
      %3352 = vmatpush1.bf16.msra.mxu0 %v3300
      %3353 = vmatprep.subr.bf16.mxu0 0
      %3354 = vmatpush1.bf16.msra.mxu0 %v3301
      %3355 = vmatprep.subr.bf16.mxu0 0
      %3356 = vmatpush1.bf16.msra.mxu0 %v3302
      %3357 = vmatprep.subr.bf16.mxu0 0
      %3358 = vmatpush1.bf16.msra.mxu0 %v3303
      %3359 = vmatprep.subr.bf16.mxu0 0
      %3360 = vmatpush1.bf16.msra.mxu0 %v3304
      %3361 = vmatprep.subr.bf16.mxu0 0
      %3362 = vmatpush1.bf16.msra.mxu0 %v3305
      %3363 = vmatprep.subr.bf16.mxu0 0
      %3364 = vmatpush1.bf16.msra.mxu0 %v3306
      %3365 = vmatprep.subr.bf16.mxu0 0
      %3366 = vmatpush1.bf16.msra.mxu0 %v3307
      %3367 = vmatprep.subr.bf16.mxu0 0
      %3368 = vmatpush1.bf16.msra.mxu0 %v3308
      %3369 = vmatprep.subr.bf16.mxu0 0
      %3370 = vmatpush1.bf16.msra.mxu0 %v3309
      %3371 = vmatprep.subr.bf16.mxu0 0
      %3372 = vmatpush1.bf16.msra.mxu0 %v3310
      %3373 = vmatprep.subr.bf16.mxu0 0
      %3374 = vmatpush1.bf16.msra.mxu0 %v3311
      %3375 = vmatprep.subr.bf16.mxu0 0
      %3376 = vmatpush1.bf16.msra.mxu0 %v3312
      %3377 = vmatprep.mubr.bf16.mxu0 %v3178
      %3378 = vmatmul.mubr.bf16.gmra.mrb[0].mxu0 %v3177
      %v3379 = vpop.f32.mrb[0].mxu0
      %v3380 = vadd.f32 %v3147, %v3379
      %v3381 = vpop.f32.mrb[0].mxu0
      %v3382 = vpop.f32.mrb[0].mxu0
      %v3383 = vadd.f32 %v3150, %v3382
      %v3384 = vpop.f32.mrb[0].mxu0
      %3385 = vmatprep.mubr.bf16.mxu0 %v3181
      %3386 = vmatmul.mubr.bf16.gmra.mrb[0].mxu0 %v3180
      %v3387 = vpop.f32.mrb[0].mxu0
      %v3388 = vadd.f32 %v3155, %v3387
      %v3389 = vpop.f32.mrb[0].mxu0
      %v3390 = vpop.f32.mrb[0].mxu0
      %v3391 = vadd.f32 %v3158, %v3390
      %v3392 = vpop.f32.mrb[0].mxu0
      %3393 = vmatprep.mubr.bf16.mxu0 %v3184
      %3394 = vmatmul.mubr.bf16.gmra.mrb[0].mxu0 %v3183
      %v3395 = vpop.f32.mrb[0].mxu0
      %v3396 = vadd.f32 %v3163, %v3395
      %v3397 = vpop.f32.mrb[0].mxu0
      %v3398 = vpop.f32.mrb[0].mxu0
      %v3399 = vadd.f32 %v3166, %v3398
      %v3400 = vpop.f32.mrb[0].mxu0
      %3401 = vmatprep.mubr.bf16.mxu0 %v3187
      %3402 = vmatmul.mubr.bf16.gmra.mrb[0].mxu0 %v3186
      %v3403 = vpop.f32.mrb[0].mxu0
      %v3404 = vadd.f32 %v3171, %v3403
      %v3405 = vpop.f32.mrb[0].mxu0
      %v3406 = vpop.f32.mrb[0].mxu0
      %v3407 = vadd.f32 %v3174, %v3406
      %v3408 = vpop.f32.mrb[0].mxu0
      %3409 = vdwg.mxu0
      %3410 = vmatprep.subr.bf16.mxu0 0
      %3411 = vmatpush1.bf16.msra.mxu0 %v3313
      %3412 = vmatprep.subr.bf16.mxu0 0
      %3413 = vmatpush1.bf16.msra.mxu0 %v3314
      %3414 = vmatprep.subr.bf16.mxu0 0
      %3415 = vmatpush1.bf16.msra.mxu0 %v3315
      %3416 = vmatprep.subr.bf16.mxu0 0
      %3417 = vmatpush1.bf16.msra.mxu0 %v3316
      %3418 = vmatprep.subr.bf16.mxu0 0
      %3419 = vmatpush1.bf16.msra.mxu0 %v3317
      %3420 = vmatprep.subr.bf16.mxu0 0
      %3421 = vmatpush1.bf16.msra.mxu0 %v3318
      %3422 = vmatprep.subr.bf16.mxu0 0
      %3423 = vmatpush1.bf16.msra.mxu0 %v3319
      %3424 = vmatprep.subr.bf16.mxu0 0
      %3425 = vmatpush1.bf16.msra.mxu0 %v3320
      %3426 = vmatprep.subr.bf16.mxu0 0
      %3427 = vmatpush1.bf16.msra.mxu0 0
      %3428 = vmatprep.subr.bf16.mxu0 0
      %3429 = vmatpush1.bf16.msra.mxu0 0
      %3430 = vmatprep.subr.bf16.mxu0 0
      %3431 = vmatpush1.bf16.msra.mxu0 0
      %3432 = vmatprep.subr.bf16.mxu0 0
      %3433 = vmatpush1.bf16.msra.mxu0 0
      %3434 = vmatprep.subr.bf16.mxu0 0
      %3435 = vmatpush1.bf16.msra.mxu0 0
      %3436 = vmatprep.subr.bf16.mxu0 0
      %3437 = vmatpush1.bf16.msra.mxu0 0
      %3438 = vmatprep.subr.bf16.mxu0 0
      %3439 = vmatpush1.bf16.msra.mxu0 0
      %3440 = vmatprep.subr.bf16.mxu0 0
      %3441 = vmatpush1.bf16.msra.mxu0 0
      %3442 = vmatprep.mubr.bf16.mxu0 0
      %3443 = vmatmul.mubr.bf16.gmra.mrb[0].mxu0 %v3179
      %v3444 = vpop.f32.mrb[0].mxu0
      %v3445 = vadd.f32 %v3380, %v3444
      %v3446 = vpop.f32.mrb[0].mxu0
      %v3447 = vpop.f32.mrb[0].mxu0
      %v3448 = vadd.f32 %v3383, %v3447
      %v3449 = vpop.f32.mrb[0].mxu0
      %3450 = vmatprep.mubr.bf16.mxu0 0
      %3451 = vmatmul.mubr.bf16.gmra.mrb[0].mxu0 %v3182
      %v3452 = vpop.f32.mrb[0].mxu0
      %v3453 = vadd.f32 %v3388, %v3452
      %v3454 = vpop.f32.mrb[0].mxu0
      %v3455 = vpop.f32.mrb[0].mxu0
      %v3456 = vadd.f32 %v3391, %v3455
      %v3457 = vpop.f32.mrb[0].mxu0
      %3458 = vmatprep.mubr.bf16.mxu0 0
      %3459 = vmatmul.mubr.bf16.gmra.mrb[0].mxu0 %v3185
      %v3460 = vpop.f32.mrb[0].mxu0
      %v3461 = vadd.f32 %v3396, %v3460
      %v3462 = vpop.f32.mrb[0].mxu0
      %v3463 = vpop.f32.mrb[0].mxu0
      %v3464 = vadd.f32 %v3399, %v3463
      %v3465 = vpop.f32.mrb[0].mxu0
      %3466 = vmatprep.mubr.bf16.mxu0 0
      %3467 = vmatmul.mubr.bf16.gmra.mrb[0].mxu0 %v3188
      %v3468 = vpop.f32.mrb[0].mxu0
      %v3469 = vadd.f32 %v3404, %v3468
      %v3470 = vpop.f32.mrb[0].mxu0
      %v3471 = vpop.f32.mrb[0].mxu0
      %v3472 = vadd.f32 %v3407, %v3471
      %v3473 = vpop.f32.mrb[0].mxu0
      %3474 = vdwg.mxu0
      %s3475 = scalar_lea.vmem [#allocation4], 16
      %v3476 = vld [vmem:[%s3475] sm:$0xf]
      %v3477 = vld [vmem:[%s3475 + $0x4] sm:$0x1]
      %v3478 = vld [vmem:[%s3475 + $0x8] sm:$0xf]
      %v3479 = vld [vmem:[%s3475 + $0xc] sm:$0x1]
      %v3480 = vld [vmem:[%s3475 + $0x10] sm:$0xf]
      %v3481 = vld [vmem:[%s3475 + $0x14] sm:$0x1]
      %v3482 = vld [vmem:[%s3475 + $0x18] sm:$0xf]
      %v3483 = vld [vmem:[%s3475 + $0x1c] sm:$0x1]
      %v3484 = vld [vmem:[%s3475 + $0x20] sm:$0xf]
      %v3485 = vld [vmem:[%s3475 + $0x24] sm:$0x1]
      %v3486 = vld [vmem:[%s3475 + $0x28] sm:$0xf]
      %v3487 = vld [vmem:[%s3475 + $0x2c] sm:$0x1]
      %v3488 = vld [vmem:[%s3475 + $0x30] sm:$0xf]
      %v3489 = vld [vmem:[%s3475 + $0x34] sm:$0x1]
      %v3490 = vld [vmem:[%s3475 + $0x38] sm:$0xf]
      %v3491 = vld [vmem:[%s3475 + $0x3c] sm:$0x1]
      %v3508 = vunpack.c.l.b16 %v3476
      %v3509 = vunpack.c.l.b16 %v3477
      %v3510 = vunpack.c.l.b16 %v3478
      %v3511 = vunpack.c.l.b16 %v3479
      %v3512 = vunpack.c.l.b16 %v3480
      %v3513 = vunpack.c.l.b16 %v3481
      %v3514 = vunpack.c.l.b16 %v3482
      %v3515 = vunpack.c.l.b16 %v3483
      %v3516 = vunpack.c.l.b16 %v3484
      %v3517 = vunpack.c.l.b16 %v3485
      %v3518 = vunpack.c.l.b16 %v3486
      %v3519 = vunpack.c.l.b16 %v3487
      %v3520 = vunpack.c.l.b16 %v3488
      %v3521 = vunpack.c.l.b16 %v3489
      %v3522 = vunpack.c.l.b16 %v3490
      %v3523 = vunpack.c.l.b16 %v3491
      %v3524 = vpack.c.b16 %v3509, %v3508
      %v3525 = vpack.c.b16 %v3511, %v3510
      %v3526 = vpack.c.b16 %v3513, %v3512
      %v3527 = vpack.c.b16 %v3515, %v3514
      %v3528 = vpack.c.b16 %v3517, %v3516
      %v3529 = vpack.c.b16 %v3519, %v3518
      %v3530 = vpack.c.b16 %v3521, %v3520
      %v3531 = vpack.c.b16 %v3523, %v3522
      %v3533 = vshrl.u32 %v3524, 16
      %v3535 = vshll.u32 %v3524, 16
      %v3537 = vrot.slane %v3535, 1
      %v3538 = vor.u32 %v3533, %v3537
      %v3540 = vshrl.u32 %v3525, 16
      %v3542 = vshll.u32 %v3525, 16
      %v3544 = vrot.slane %v3542, 1
      %v3545 = vor.u32 %v3540, %v3544
      %v3547 = vshrl.u32 %v3526, 16
      %v3549 = vshll.u32 %v3526, 16
      %v3551 = vrot.slane %v3549, 1
      %v3552 = vor.u32 %v3547, %v3551
      %v3554 = vshrl.u32 %v3527, 16
      %v3556 = vshll.u32 %v3527, 16
      %v3558 = vrot.slane %v3556, 1
      %v3559 = vor.u32 %v3554, %v3558
      %v3561 = vshrl.u32 %v3528, 16
      %v3563 = vshll.u32 %v3528, 16
      %v3565 = vrot.slane %v3563, 1
      %v3566 = vor.u32 %v3561, %v3565
      %v3568 = vshrl.u32 %v3529, 16
      %v3570 = vshll.u32 %v3529, 16
      %v3572 = vrot.slane %v3570, 1
      %v3573 = vor.u32 %v3568, %v3572
      %v3575 = vshrl.u32 %v3530, 16
      %v3577 = vshll.u32 %v3530, 16
      %v3579 = vrot.slane %v3577, 1
      %v3580 = vor.u32 %v3575, %v3579
      %v3582 = vshrl.u32 %v3531, 16
      %v3584 = vshll.u32 %v3531, 16
      %v3586 = vrot.slane %v3584, 1
      %v3587 = vor.u32 %v3582, %v3586
      %v3588 = vrot.slane %v3524, 1
      %v3589 = vrot.slane %v3525, 1
      %v3590 = vrot.slane %v3526, 1
      %v3591 = vrot.slane %v3527, 1
      %v3592 = vrot.slane %v3528, 1
      %v3593 = vrot.slane %v3529, 1
      %v3594 = vrot.slane %v3530, 1
      %v3595 = vrot.slane %v3531, 1
      %v3596 = vunpack.c.l.b16 %v3538
      %v3597 = vunpack.c.l.b16 %v3588
      %v3598 = vunpack.c.l.b16 %v3545
      %v3599 = vunpack.c.l.b16 %v3589
      %v3600 = vunpack.c.l.b16 %v3552
      %v3601 = vunpack.c.l.b16 %v3590
      %v3602 = vunpack.c.l.b16 %v3559
      %v3603 = vunpack.c.l.b16 %v3591
      %v3604 = vunpack.c.l.b16 %v3566
      %v3605 = vunpack.c.l.b16 %v3592
      %v3606 = vunpack.c.l.b16 %v3573
      %v3607 = vunpack.c.l.b16 %v3593
      %v3608 = vunpack.c.l.b16 %v3580
      %v3609 = vunpack.c.l.b16 %v3594
      %v3610 = vunpack.c.l.b16 %v3587
      %v3611 = vunpack.c.l.b16 %v3595
      %s3612 = scalar_lea.vmem %s3, 384
      %v3613 = vld [vmem:[%s3612] sm:$0xf]
      %v3614 = vld [vmem:[%s3612 + $0x4] sm:$0xf]
      %v3615 = vld [vmem:[%s3612 + $0x8] sm:$0xf]
      %v3616 = vld [vmem:[%s3612 + $0xc] sm:$0xf]
      %v3617 = vld [vmem:[%s3612 + $0x10] sm:$0xf]
      %v3618 = vld [vmem:[%s3612 + $0x14] sm:$0xf]
      %v3619 = vld [vmem:[%s3612 + $0x18] sm:$0xf]
      %v3620 = vld [vmem:[%s3612 + $0x1c] sm:$0xf]
      %v3621 = vld [vmem:[%s3612 + $0x20] sm:$0xf]
      %v3622 = vld [vmem:[%s3612 + $0x24] sm:$0xf]
      %v3623 = vld [vmem:[%s3612 + $0x28] sm:$0xf]
      %v3624 = vld [vmem:[%s3612 + $0x2c] sm:$0xf]
      %v3625 = vld [vmem:[%s3612 + $0x30] sm:$0xf]
      %v3626 = vld [vmem:[%s3612 + $0x34] sm:$0xf]
      %v3627 = vld [vmem:[%s3612 + $0x38] sm:$0xf]
      %v3628 = vld [vmem:[%s3612 + $0x3c] sm:$0xf]
      %v3629 = vld [vmem:[%s3612 + $0x40] sm:$0xf]
      %v3630 = vld [vmem:[%s3612 + $0x44] sm:$0xf]
      %v3631 = vld [vmem:[%s3612 + $0x48] sm:$0xf]
      %v3632 = vld [vmem:[%s3612 + $0x4c] sm:$0xf]
      %v3633 = vld [vmem:[%s3612 + $0x50] sm:$0xf]
      %v3634 = vld [vmem:[%s3612 + $0x54] sm:$0xf]
      %v3635 = vld [vmem:[%s3612 + $0x58] sm:$0xf]
      %v3636 = vld [vmem:[%s3612 + $0x5c] sm:$0xf]
      %v3637 = vld [vmem:[%s3612 + $0x60] sm:$0xf]
      %v3638 = vld [vmem:[%s3612 + $0x64] sm:$0xf]
      %v3639 = vld [vmem:[%s3612 + $0x68] sm:$0xf]
      %v3640 = vld [vmem:[%s3612 + $0x6c] sm:$0xf]
      %v3641 = vld [vmem:[%s3612 + $0x70] sm:$0xf]
      %v3642 = vld [vmem:[%s3612 + $0x74] sm:$0xf]
      %v3643 = vld [vmem:[%s3612 + $0x78] sm:$0xf]
      %v3644 = vld [vmem:[%s3612 + $0x7c] sm:$0xf]
      %v3645 = vld [vmem:[%s3612 + $0x80] sm:$0xf]
      %v3646 = vld [vmem:[%s3612 + $0x84] sm:$0xf]
      %v3647 = vld [vmem:[%s3612 + $0x88] sm:$0xf]
      %v3648 = vld [vmem:[%s3612 + $0x8c] sm:$0xf]
      %v3649 = vld [vmem:[%s3612 + $0x90] sm:$0xf]
      %v3650 = vld [vmem:[%s3612 + $0x94] sm:$0xf]
      %v3651 = vld [vmem:[%s3612 + $0x98] sm:$0xf]
      %v3652 = vld [vmem:[%s3612 + $0x9c] sm:$0xf]
      %v3653 = vld [vmem:[%s3612 + $0xa0] sm:$0xf]
      %v3654 = vld [vmem:[%s3612 + $0xa4] sm:$0xf]
      %v3655 = vld [vmem:[%s3612 + $0xa8] sm:$0xf]
      %v3656 = vld [vmem:[%s3612 + $0xac] sm:$0xf]
      %v3657 = vld [vmem:[%s3612 + $0xb0] sm:$0xf]
      %v3658 = vld [vmem:[%s3612 + $0xb4] sm:$0xf]
      %v3659 = vld [vmem:[%s3612 + $0xb8] sm:$0xf]
      %v3660 = vld [vmem:[%s3612 + $0xbc] sm:$0xf]
      %v3661 = vpack.c.b16 %v3510, %v3508
      %v3662 = vpack.c.b16 %v3598, %v3596
      %v3663 = vpack.c.b16 %v3599, %v3597
      %v3664 = vpack.c.b16 %v3514, %v3512
      %v3665 = vpack.c.b16 %v3602, %v3600
      %v3666 = vpack.c.b16 %v3603, %v3601
      %v3667 = vpack.c.b16 %v3518, %v3516
      %v3668 = vpack.c.b16 %v3606, %v3604
      %v3669 = vpack.c.b16 %v3607, %v3605
      %v3670 = vpack.c.b16 %v3522, %v3520
      %v3671 = vpack.c.b16 %v3610, %v3608
      %v3672 = vpack.c.b16 %v3611, %v3609
      %v3733 = vunpack.c.l.b16 %v3613
      %v3734 = vunpack.c.l.b16 %v3614
      %v3735 = vunpack.c.l.b16 %v3615
      %v3736 = vunpack.c.l.b16 %v3616
      %v3737 = vunpack.c.l.b16 %v3617
      %v3738 = vunpack.c.l.b16 %v3618
      %v3739 = vunpack.c.l.b16 %v3619
      %v3740 = vunpack.c.l.b16 %v3620
      %v3741 = vunpack.c.l.b16 %v3621
      %v3742 = vunpack.c.l.b16 %v3622
      %v3743 = vunpack.c.l.b16 %v3623
      %v3744 = vunpack.c.l.b16 %v3624
      %v3745 = vunpack.c.l.b16 %v3625
      %v3746 = vunpack.c.l.b16 %v3626
      %v3747 = vunpack.c.l.b16 %v3627
      %v3748 = vunpack.c.l.b16 %v3628
      %v3749 = vunpack.c.l.b16 %v3629
      %v3750 = vunpack.c.l.b16 %v3630
      %v3751 = vunpack.c.l.b16 %v3631
      %v3752 = vunpack.c.l.b16 %v3632
      %v3753 = vunpack.c.l.b16 %v3633
      %v3754 = vunpack.c.l.b16 %v3634
      %v3755 = vunpack.c.l.b16 %v3635
      %v3756 = vunpack.c.l.b16 %v3636
      %v3757 = vunpack.c.l.b16 %v3637
      %v3758 = vunpack.c.l.b16 %v3638
      %v3759 = vunpack.c.l.b16 %v3639
      %v3760 = vunpack.c.l.b16 %v3640
      %v3761 = vunpack.c.l.b16 %v3641
      %v3762 = vunpack.c.l.b16 %v3642
      %v3763 = vunpack.c.l.b16 %v3643
      %v3764 = vunpack.c.l.b16 %v3644
      %v3765 = vunpack.c.l.b16 %v3645
      %v3766 = vunpack.c.l.b16 %v3646
      %v3767 = vunpack.c.l.b16 %v3647
      %v3768 = vunpack.c.l.b16 %v3648
      %v3769 = vunpack.c.l.b16 %v3649
      %v3770 = vunpack.c.l.b16 %v3650
      %v3771 = vunpack.c.l.b16 %v3651
      %v3772 = vunpack.c.l.b16 %v3652
      %v3773 = vunpack.c.l.b16 %v3653
      %v3774 = vunpack.c.l.b16 %v3654
      %v3775 = vunpack.c.l.b16 %v3655
      %v3776 = vunpack.c.l.b16 %v3656
      %v3777 = vunpack.c.l.b16 %v3657
      %v3778 = vunpack.c.l.b16 %v3658
      %v3779 = vunpack.c.l.b16 %v3659
      %v3780 = vunpack.c.l.b16 %v3660
      %v3781 = vpack.c.b16 %v3734, %v3733
      %v3782 = vpack.c.b16 %v3736, %v3735
      %v3783 = vpack.c.b16 %v3738, %v3737
      %v3784 = vpack.c.b16 %v3740, %v3739
      %v3785 = vpack.c.b16 %v3742, %v3741
      %v3786 = vpack.c.b16 %v3744, %v3743
      %v3787 = vpack.c.b16 %v3746, %v3745
      %v3788 = vpack.c.b16 %v3748, %v3747
      %v3789 = vpack.c.b16 %v3750, %v3749
      %v3790 = vpack.c.b16 %v3752, %v3751
      %v3791 = vpack.c.b16 %v3754, %v3753
      %v3792 = vpack.c.b16 %v3756, %v3755
      %v3793 = vpack.c.b16 %v3758, %v3757
      %v3794 = vpack.c.b16 %v3760, %v3759
      %v3795 = vpack.c.b16 %v3762, %v3761
      %v3796 = vpack.c.b16 %v3764, %v3763
      %v3797 = vpack.c.b16 %v3766, %v3765
      %v3798 = vpack.c.b16 %v3768, %v3767
      %v3799 = vpack.c.b16 %v3770, %v3769
      %v3800 = vpack.c.b16 %v3772, %v3771
      %v3801 = vpack.c.b16 %v3774, %v3773
      %v3802 = vpack.c.b16 %v3776, %v3775
      %v3803 = vpack.c.b16 %v3778, %v3777
      %v3804 = vpack.c.b16 %v3780, %v3779
      %3829 = vmatprep.subr.bf16.mxu0 0
      %3830 = vmatpush1.bf16.msra.mxu0 %v3781
      %3831 = vmatprep.subr.bf16.mxu0 0
      %3832 = vmatpush1.bf16.msra.mxu0 %v3782
      %3833 = vmatprep.subr.bf16.mxu0 0
      %3834 = vmatpush1.bf16.msra.mxu0 %v3783
      %3835 = vmatprep.subr.bf16.mxu0 0
      %3836 = vmatpush1.bf16.msra.mxu0 %v3784
      %3837 = vmatprep.subr.bf16.mxu0 0
      %3838 = vmatpush1.bf16.msra.mxu0 %v3785
      %3839 = vmatprep.subr.bf16.mxu0 0
      %3840 = vmatpush1.bf16.msra.mxu0 %v3786
      %3841 = vmatprep.subr.bf16.mxu0 0
      %3842 = vmatpush1.bf16.msra.mxu0 %v3787
      %3843 = vmatprep.subr.bf16.mxu0 0
      %3844 = vmatpush1.bf16.msra.mxu0 %v3788
      %3845 = vmatprep.subr.bf16.mxu0 0
      %3846 = vmatpush1.bf16.msra.mxu0 %v3789
      %3847 = vmatprep.subr.bf16.mxu0 0
      %3848 = vmatpush1.bf16.msra.mxu0 %v3790
      %3849 = vmatprep.subr.bf16.mxu0 0
      %3850 = vmatpush1.bf16.msra.mxu0 %v3791
      %3851 = vmatprep.subr.bf16.mxu0 0
      %3852 = vmatpush1.bf16.msra.mxu0 %v3792
      %3853 = vmatprep.subr.bf16.mxu0 0
      %3854 = vmatpush1.bf16.msra.mxu0 %v3793
      %3855 = vmatprep.subr.bf16.mxu0 0
      %3856 = vmatpush1.bf16.msra.mxu0 %v3794
      %3857 = vmatprep.subr.bf16.mxu0 0
      %3858 = vmatpush1.bf16.msra.mxu0 %v3795
      %3859 = vmatprep.subr.bf16.mxu0 0
      %3860 = vmatpush1.bf16.msra.mxu0 %v3796
      %3861 = vmatprep.mubr.bf16.mxu0 %v3662
      %3862 = vmatmul.mubr.bf16.gmra.mrb[0].mxu0 %v3661
      %v3863 = vpop.f32.mrb[0].mxu0
      %v3864 = vadd.f32 0.0, %v3863
      %v3865 = vpop.f32.mrb[0].mxu0
      %v3866 = vpop.f32.mrb[0].mxu0
      %v3867 = vadd.f32 0.0, %v3866
      %v3868 = vpop.f32.mrb[0].mxu0
      %3869 = vmatprep.mubr.bf16.mxu0 %v3665
      %3870 = vmatmul.mubr.bf16.gmra.mrb[0].mxu0 %v3664
      %v3871 = vpop.f32.mrb[0].mxu0
      %v3872 = vadd.f32 0.0, %v3871
      %v3873 = vpop.f32.mrb[0].mxu0
      %v3874 = vpop.f32.mrb[0].mxu0
      %v3875 = vadd.f32 0.0, %v3874
      %v3876 = vpop.f32.mrb[0].mxu0
      %3877 = vmatprep.mubr.bf16.mxu0 %v3668
      %3878 = vmatmul.mubr.bf16.gmra.mrb[0].mxu0 %v3667
      %v3879 = vpop.f32.mrb[0].mxu0
      %v3880 = vadd.f32 0.0, %v3879
      %v3881 = vpop.f32.mrb[0].mxu0
      %v3882 = vpop.f32.mrb[0].mxu0
      %v3883 = vadd.f32 0.0, %v3882
      %v3884 = vpop.f32.mrb[0].mxu0
      %3885 = vmatprep.mubr.bf16.mxu0 %v3671
      %3886 = vmatmul.mubr.bf16.gmra.mrb[0].mxu0 %v3670
      %v3887 = vpop.f32.mrb[0].mxu0
      %v3888 = vadd.f32 0.0, %v3887
      %v3889 = vpop.f32.mrb[0].mxu0
      %v3890 = vpop.f32.mrb[0].mxu0
      %v3891 = vadd.f32 0.0, %v3890
      %v3892 = vpop.f32.mrb[0].mxu0
      %3893 = vdwg.mxu0
      %3894 = vmatprep.subr.bf16.mxu0 0
      %3895 = vmatpush1.bf16.msra.mxu0 %v3797
      %3896 = vmatprep.subr.bf16.mxu0 0
      %3897 = vmatpush1.bf16.msra.mxu0 %v3798
      %3898 = vmatprep.subr.bf16.mxu0 0
      %3899 = vmatpush1.bf16.msra.mxu0 %v3799
      %3900 = vmatprep.subr.bf16.mxu0 0
      %3901 = vmatpush1.bf16.msra.mxu0 %v3800
      %3902 = vmatprep.subr.bf16.mxu0 0
      %3903 = vmatpush1.bf16.msra.mxu0 %v3801
      %3904 = vmatprep.subr.bf16.mxu0 0
      %3905 = vmatpush1.bf16.msra.mxu0 %v3802
      %3906 = vmatprep.subr.bf16.mxu0 0
      %3907 = vmatpush1.bf16.msra.mxu0 %v3803
      %3908 = vmatprep.subr.bf16.mxu0 0
      %3909 = vmatpush1.bf16.msra.mxu0 %v3804
      %3910 = vmatprep.subr.bf16.mxu0 0
      %3911 = vmatpush1.bf16.msra.mxu0 0
      %3912 = vmatprep.subr.bf16.mxu0 0
      %3913 = vmatpush1.bf16.msra.mxu0 0
      %3914 = vmatprep.subr.bf16.mxu0 0
      %3915 = vmatpush1.bf16.msra.mxu0 0
      %3916 = vmatprep.subr.bf16.mxu0 0
      %3917 = vmatpush1.bf16.msra.mxu0 0
      %3918 = vmatprep.subr.bf16.mxu0 0
      %3919 = vmatpush1.bf16.msra.mxu0 0
      %3920 = vmatprep.subr.bf16.mxu0 0
      %3921 = vmatpush1.bf16.msra.mxu0 0
      %3922 = vmatprep.subr.bf16.mxu0 0
      %3923 = vmatpush1.bf16.msra.mxu0 0
      %3924 = vmatprep.subr.bf16.mxu0 0
      %3925 = vmatpush1.bf16.msra.mxu0 0
      %3926 = vmatprep.mubr.bf16.mxu0 0
      %3927 = vmatmul.mubr.bf16.gmra.mrb[0].mxu0 %v3663
      %v3928 = vpop.f32.mrb[0].mxu0
      %v3929 = vadd.f32 %v3864, %v3928
      %v3930 = vpop.f32.mrb[0].mxu0
      %v3931 = vpop.f32.mrb[0].mxu0
      %v3932 = vadd.f32 %v3867, %v3931
      %v3933 = vpop.f32.mrb[0].mxu0
      %3934 = vmatprep.mubr.bf16.mxu0 0
      %3935 = vmatmul.mubr.bf16.gmra.mrb[0].mxu0 %v3666
      %v3936 = vpop.f32.mrb[0].mxu0
      %v3937 = vadd.f32 %v3872, %v3936
      %v3938 = vpop.f32.mrb[0].mxu0
      %v3939 = vpop.f32.mrb[0].mxu0
      %v3940 = vadd.f32 %v3875, %v3939
      %v3941 = vpop.f32.mrb[0].mxu0
      %3942 = vmatprep.mubr.bf16.mxu0 0
      %3943 = vmatmul.mubr.bf16.gmra.mrb[0].mxu0 %v3669
      %v3944 = vpop.f32.mrb[0].mxu0
      %v3945 = vadd.f32 %v3880, %v3944
      %v3946 = vpop.f32.mrb[0].mxu0
      %v3947 = vpop.f32.mrb[0].mxu0
      %v3948 = vadd.f32 %v3883, %v3947
      %v3949 = vpop.f32.mrb[0].mxu0
      %3950 = vmatprep.mubr.bf16.mxu0 0
      %3951 = vmatmul.mubr.bf16.gmra.mrb[0].mxu0 %v3672
      %v3952 = vpop.f32.mrb[0].mxu0
      %v3953 = vadd.f32 %v3888, %v3952
      %v3954 = vpop.f32.mrb[0].mxu0
      %v3955 = vpop.f32.mrb[0].mxu0
      %v3956 = vadd.f32 %v3891, %v3955
      %v3957 = vpop.f32.mrb[0].mxu0
      %3958 = vdwg.mxu0
      %v3959 = vadd.f32 %v3445, %v3929
      %v3960 = vadd.f32 %v3448, %v3932
      %v3961 = vadd.f32 %v3453, %v3937
      %v3962 = vadd.f32 %v3456, %v3940
      %v3963 = vadd.f32 %v3461, %v3945
      %v3964 = vadd.f32 %v3464, %v3948
      %v3965 = vadd.f32 %v3469, %v3953
      %v3966 = vadd.f32 %v3472, %v3956
      %v3967 = vadd.f32 %v3959, %v3960
      %v3968 = vadd.f32 %v3967, %v3961
      %v3969 = vadd.f32 %v3968, %v3962
      %v3970 = vadd.f32 %v3969, %v3963
      %v3971 = vadd.f32 %v3970, %v3964
      %v3972 = vadd.f32 %v3971, %v3965
      %v3973 = vadd.f32 %v3972, %v3966
      %v3974 = vrot.slane %v3973, 4
      %v3975 = vadd.f32 %v3973, %v3974
      %v3976 = vrot.slane %v3975, 2
      %v3977 = vadd.f32 %v3975, %v3976
      %v3978 = vrot.slane %v3977, 1
      %v3979 = vadd.f32 %v3977, %v3978
      %v3980 = vmul.f32 %v3959, %v3959
      %v3981 = vmul.f32 %v3960, %v3960
      %v3982 = vmul.f32 %v3961, %v3961
      %v3983 = vmul.f32 %v3962, %v3962
      %v3984 = vmul.f32 %v3963, %v3963
      %v3985 = vmul.f32 %v3964, %v3964
      %v3986 = vmul.f32 %v3965, %v3965
      %v3987 = vmul.f32 %v3966, %v3966
      %v3988 = vadd.f32 %v3980, %v3981
      %v3989 = vadd.f32 %v3988, %v3982
      %v3990 = vadd.f32 %v3989, %v3983
      %v3991 = vadd.f32 %v3990, %v3984
      %v3992 = vadd.f32 %v3991, %v3985
      %v3993 = vadd.f32 %v3992, %v3986
      %v3994 = vadd.f32 %v3993, %v3987
      %v3995 = vrot.slane %v3994, 4
      %v3996 = vadd.f32 %v3994, %v3995
      %v3997 = vrot.slane %v3996, 2
      %v3998 = vadd.f32 %v3996, %v3997
      %v3999 = vrot.slane %v3998, 1
      %v4000 = vadd.f32 %v3998, %v3999
      %v4001 = vmul.f32 %v3979, 0.015625
      %v4002 = vmul.f32 %v4000, 0.015625
      %v4003 = vmul.f32 %v4001, %v4001
      %v4004 = vsub.f32 %v4002, %v4003
      %v4005 = vmax.f32 %v4004, 0.0
      %v4006 = vsub.f32 %v3959, %v4001
      %v4007 = vsub.f32 %v3960, %v4001
      %v4008 = vsub.f32 %v3961, %v4001
      %v4009 = vsub.f32 %v3962, %v4001
      %v4010 = vsub.f32 %v3963, %v4001
      %v4011 = vsub.f32 %v3964, %v4001
      %v4012 = vsub.f32 %v3965, %v4001
      %v4013 = vsub.f32 %v3966, %v4001
      %v4014 = vadd.f32 %v4005, 1e-05
      %v4015 = vrsqrt.pop %v4014
      %v4016 = vmul.f32 %v4006, %v4015
      %v4017 = vmul.f32 %v4007, %v4015
      %v4018 = vmul.f32 %v4008, %v4015
      %v4019 = vmul.f32 %v4009, %v4015
      %v4020 = vmul.f32 %v4010, %v4015
      %v4021 = vmul.f32 %v4011, %v4015
      %v4022 = vmul.f32 %v4012, %v4015
      %v4023 = vmul.f32 %v4013, %v4015
      %v4024 = vld [vmem:[%s288] sm:$0xff]
      %v4025 = vld [vmem:[%s288 + $0x10] sm:$0xff]
      %v4026 = vld [vmem:[%s288 + $0x20] sm:$0xff]
      %v4027 = vld [vmem:[%s288 + $0x30] sm:$0xff]
      %v4028 = vld [vmem:[%s288 + $0x40] sm:$0xff]
      %v4029 = vld [vmem:[%s288 + $0x50] sm:$0xff]
      %v4030 = vld [vmem:[%s288 + $0x60] sm:$0xff]
      %v4031 = vld [vmem:[%s288 + $0x70] sm:$0xff]
      %v4032 = vpack.c.bf16 %v4025, %v4024
      %v4033 = vpack.c.bf16 %v4027, %v4026
      %v4034 = vpack.c.bf16 %v4029, %v4028
      %v4035 = vpack.c.bf16 %v4031, %v4030
      %v4036 = vld [vmem:[%s4] sm:$0xf]
      %v4037 = vld [vmem:[%s4 + $0x4] sm:$0xf]
      %v4038 = vld [vmem:[%s4 + $0x8] sm:$0xf]
      %v4039 = vld [vmem:[%s4 + $0xc] sm:$0xf]
      %v4040 = vld [vmem:[%s4 + $0x10] sm:$0xf]
      %v4041 = vld [vmem:[%s4 + $0x14] sm:$0xf]
      %v4042 = vld [vmem:[%s4 + $0x18] sm:$0xf]
      %v4043 = vld [vmem:[%s4 + $0x1c] sm:$0xf]
      %v4044 = vld [vmem:[%s4 + $0x20] sm:$0xf]
      %v4045 = vld [vmem:[%s4 + $0x24] sm:$0xf]
      %v4046 = vld [vmem:[%s4 + $0x28] sm:$0xf]
      %v4047 = vld [vmem:[%s4 + $0x2c] sm:$0xf]
      %v4048 = vld [vmem:[%s4 + $0x30] sm:$0xf]
      %v4049 = vld [vmem:[%s4 + $0x34] sm:$0xf]
      %v4050 = vld [vmem:[%s4 + $0x38] sm:$0xf]
      %v4051 = vld [vmem:[%s4 + $0x3c] sm:$0xf]
      %v4068 = vunpack.c.l.b16 %v4036
      %v4069 = vunpack.c.l.b16 %v4037
      %v4070 = vunpack.c.l.b16 %v4038
      %v4071 = vunpack.c.l.b16 %v4039
      %v4072 = vunpack.c.l.b16 %v4040
      %v4073 = vunpack.c.l.b16 %v4041
      %v4074 = vunpack.c.l.b16 %v4042
      %v4075 = vunpack.c.l.b16 %v4043
      %v4076 = vunpack.c.l.b16 %v4044
      %v4077 = vunpack.c.l.b16 %v4045
      %v4078 = vunpack.c.l.b16 %v4046
      %v4079 = vunpack.c.l.b16 %v4047
      %v4080 = vunpack.c.l.b16 %v4048
      %v4081 = vunpack.c.l.b16 %v4049
      %v4082 = vunpack.c.l.b16 %v4050
      %v4083 = vunpack.c.l.b16 %v4051
      %v4084 = vpack.c.b16 %v4069, %v4068
      %v4085 = vpack.c.b16 %v4071, %v4070
      %v4086 = vpack.c.b16 %v4073, %v4072
      %v4087 = vpack.c.b16 %v4075, %v4074
      %v4088 = vpack.c.b16 %v4077, %v4076
      %v4089 = vpack.c.b16 %v4079, %v4078
      %v4090 = vpack.c.b16 %v4081, %v4080
      %v4091 = vpack.c.b16 %v4083, %v4082
      %4100 = vmatprep.subr.bf16.mxu0 0
      %4101 = vmatpush1.bf16.msra.mxu0 %v4084
      %4102 = vmatprep.subr.bf16.mxu0 0
      %4103 = vmatpush1.bf16.msra.mxu0 %v4085
      %4104 = vmatprep.subr.bf16.mxu0 0
      %4105 = vmatpush1.bf16.msra.mxu0 %v4086
      %4106 = vmatprep.subr.bf16.mxu0 0
      %4107 = vmatpush1.bf16.msra.mxu0 %v4087
      %4108 = vmatprep.subr.bf16.mxu0 0
      %4109 = vmatpush1.bf16.msra.mxu0 %v4088
      %4110 = vmatprep.subr.bf16.mxu0 0
      %4111 = vmatpush1.bf16.msra.mxu0 %v4089
      %4112 = vmatprep.subr.bf16.mxu0 0
      %4113 = vmatpush1.bf16.msra.mxu0 %v4090
      %4114 = vmatprep.subr.bf16.mxu0 0
      %4115 = vmatpush1.bf16.msra.mxu0 %v4091
      %4116 = vmatprep.subr.bf16.mxu0 0
      %4117 = vmatpush1.bf16.msra.mxu0 0
      %4118 = vmatprep.subr.bf16.mxu0 0
      %4119 = vmatpush1.bf16.msra.mxu0 0
      %4120 = vmatprep.subr.bf16.mxu0 0
      %4121 = vmatpush1.bf16.msra.mxu0 0
      %4122 = vmatprep.subr.bf16.mxu0 0
      %4123 = vmatpush1.bf16.msra.mxu0 0
      %4124 = vmatprep.subr.bf16.mxu0 0
      %4125 = vmatpush1.bf16.msra.mxu0 0
      %4126 = vmatprep.subr.bf16.mxu0 0
      %4127 = vmatpush1.bf16.msra.mxu0 0
      %4128 = vmatprep.subr.bf16.mxu0 0
      %4129 = vmatpush1.bf16.msra.mxu0 0
      %4130 = vmatprep.subr.bf16.mxu0 0
      %4131 = vmatpush1.bf16.msra.mxu0 0
      %4132 = vmatprep.mubr.bf16.mxu0 0
      %4133 = vmatmul.mubr.bf16.gmra.mrb[0].mxu0 %v4032
      %v4134 = vpop.f32.mrb[0].mxu0
      %v4135 = vadd.f32 0.0, %v4134
      %v4136 = vpop.f32.mrb[0].mxu0
      %v4137 = vpop.f32.mrb[0].mxu0
      %v4138 = vadd.f32 0.0, %v4137
      %v4139 = vpop.f32.mrb[0].mxu0
      %4140 = vmatprep.mubr.bf16.mxu0 0
      %4141 = vmatmul.mubr.bf16.gmra.mrb[0].mxu0 %v4033
      %v4142 = vpop.f32.mrb[0].mxu0
      %v4143 = vadd.f32 0.0, %v4142
      %v4144 = vpop.f32.mrb[0].mxu0
      %v4145 = vpop.f32.mrb[0].mxu0
      %v4146 = vadd.f32 0.0, %v4145
      %v4147 = vpop.f32.mrb[0].mxu0
      %4148 = vmatprep.mubr.bf16.mxu0 0
      %4149 = vmatmul.mubr.bf16.gmra.mrb[0].mxu0 %v4034
      %v4150 = vpop.f32.mrb[0].mxu0
      %v4151 = vadd.f32 0.0, %v4150
      %v4152 = vpop.f32.mrb[0].mxu0
      %v4153 = vpop.f32.mrb[0].mxu0
      %v4154 = vadd.f32 0.0, %v4153
      %v4155 = vpop.f32.mrb[0].mxu0
      %4156 = vmatprep.mubr.bf16.mxu0 0
      %4157 = vmatmul.mubr.bf16.gmra.mrb[0].mxu0 %v4035
      %v4158 = vpop.f32.mrb[0].mxu0
      %v4159 = vadd.f32 0.0, %v4158
      %v4160 = vpop.f32.mrb[0].mxu0
      %v4161 = vpop.f32.mrb[0].mxu0
      %v4162 = vadd.f32 0.0, %v4161
      %v4163 = vpop.f32.mrb[0].mxu0
      %4164 = vdwg.mxu0
      %v4165 = vld [vmem:[%s5] sm:$0x1]
      %v4167 = vlaneseq
      %v4168 = vshrl.u32 %v4167, 7
      %v4169 = vsub.s32 0, %v4168
      %v4170 = vrot.slane %v4165, %v4169
      %v4172 = vmul.f32 %v4135, %v4170
      %v4173 = vmul.f32 %v4138, %v4170
      %v4174 = vmul.f32 %v4143, %v4170
      %v4175 = vmul.f32 %v4146, %v4170
      %v4176 = vmul.f32 %v4151, %v4170
      %v4177 = vmul.f32 %v4154, %v4170
      %v4178 = vmul.f32 %v4159, %v4170
      %v4179 = vmul.f32 %v4162, %v4170
      %v4180 = vld [vmem:[%s6] sm:$0x1]
      %v4182 = vlaneseq
      %v4183 = vshrl.u32 %v4182, 7
      %v4184 = vsub.s32 0, %v4183
      %v4185 = vrot.slane %v4180, %v4184
      %v4187 = vadd.f32 %v4172, %v4185
      %v4188 = vadd.f32 %v4173, %v4185
      %v4189 = vadd.f32 %v4174, %v4185
      %v4190 = vadd.f32 %v4175, %v4185
      %v4191 = vadd.f32 %v4176, %v4185
      %v4192 = vadd.f32 %v4177, %v4185
      %v4193 = vadd.f32 %v4178, %v4185
      %v4194 = vadd.f32 %v4179, %v4185
      %v4195 = vadd.f32 %v4016, %v4187
      %v4196 = vadd.f32 %v4017, %v4188
      %v4197 = vadd.f32 %v4018, %v4189
      %v4198 = vadd.f32 %v4019, %v4190
      %v4199 = vadd.f32 %v4020, %v4191
      %v4200 = vadd.f32 %v4021, %v4192
      %v4201 = vadd.f32 %v4022, %v4193
      %v4202 = vadd.f32 %v4023, %v4194
      %v4203 = vmax.f32 %v4195, 0.0
      %v4204 = vmax.f32 %v4196, 0.0
      %v4205 = vmax.f32 %v4197, 0.0
      %v4206 = vmax.f32 %v4198, 0.0
      %v4207 = vmax.f32 %v4199, 0.0
      %v4208 = vmax.f32 %v4200, 0.0
      %v4209 = vmax.f32 %v4201, 0.0
      %v4210 = vmax.f32 %v4202, 0.0
      %4211 = vst [vmem:[%s298] sm:$0xff] %v4203
      %4212 = vst [vmem:[%s298 + $0x8] sm:$0xff] %v4204
      %4213 = vst [vmem:[%s298 + $0x10] sm:$0xff] %v4205
      %4214 = vst [vmem:[%s298 + $0x18] sm:$0xff] %v4206
      %4215 = vst [vmem:[%s298 + $0x20] sm:$0xff] %v4207
      %4216 = vst [vmem:[%s298 + $0x28] sm:$0xff] %v4208
      %4217 = vst [vmem:[%s298 + $0x30] sm:$0xff] %v4209
      %4218 = vst [vmem:[%s298 + $0x38] sm:$0xff] %v4210
      %p4219 = scmp.lt.s32.totalorder %s18, 1
      %s4220 = scalar_select %p4219, %s18, 1
      %s4221 = smul.addr %s4220, 8
      %s4222 = smul.addr %s4221, 8
      %s4223 = scalar_lea.vmem %s7, %s4222
      // Predicated region
      $region49: #{resnet_layer_forward.2} parent=47 // pred_check
        %p4224 = pneg %p193
      $region50: #{resnet_layer_forward.2} parent=47 // pred_check_branch
        %4226 = sbr.rel (%p4224) target = $region52
      $region51: #{resnet_layer_forward.2} parent=47 // pred_region
        _
      $region52: #{resnet_layer_forward.2} parent=47 // pred_fallthru
        _
    $region48: #{resnet_layer_forward.2} parent=5 // pred_fallthru
      _
    %p4227 = scmp.le.s32.totalorder 2, %s13
    // Predicated region
    $region53: #{resnet_layer_forward.2} parent=5 // pred_check
      %p4228 = pneg %p4227
    $region54: #{resnet_layer_forward.2} parent=5 // pred_check_branch
      %4230 = sbr.rel (%p4228) target = $region56
    $region55: #{resnet_layer_forward.2} parent=5 // pred_region
      %s4231 = ssub.s32 %s13, 2
      // Predicated region
      $region57: #{resnet_layer_forward.2} parent=55 // pred_check
        %p4232 = pneg %p199
      $region58: #{resnet_layer_forward.2} parent=55 // pred_check_branch
        %4234 = sbr.rel (%p4232) target = $region60
      $region59: #{resnet_layer_forward.2} parent=55 // pred_region
        %p4235 = scmp.lt.s32.totalorder %s19, 1
        %s4236 = scalar_select %p4235, %s19, 1
        %s4237 = smul.addr %s4236, 8
        %s4238 = smul.addr %s4237, 8
        %s4239 = scalar_lea.vmem %s7, %s4238
      $region60: #{resnet_layer_forward.2} parent=55 // pred_fallthru
        _
    $region56: #{resnet_layer_forward.2} parent=5 // pred_fallthru
      _
  $region6: #{resnet_layer_forward.2} parent=0 // loop_footer
    %s17 = sadd.s32 1, %s13
  $region7: #{resnet_layer_forward.2} parent=0 // loop_footer_branch
    %12 = sbr.rel target = $region3
  $region8: #{resnet_layer_forward.2} parent=0 // loop_exit
    _

</llo_original>
